<compile_context>
chip_gen: v7x
topology: tpu7x:2x2x1
jax: 0.10.0
libtpu: 0.0.40
codegen_flags: <defaults>
</compile_context>

<pallas_src>
import functools
import math

import jax
import jax.numpy as jnp
from jax.experimental import pallas as pl
from jax.experimental.pallas import tpu as pltpu

# ----------------------- small BERT-like configuration -----------------------
VOCAB        = 100
TYPE_VOCAB   = 2
MAX_POS      = 512
HIDDEN       = 128            # stand-in for 768
N_HEADS      = 4              # stand-in for 12
HEAD_DIM     = HIDDEN // N_HEADS
INTERMEDIATE = 512            # stand-in for 3072
N_LAYERS     = 2              # stand-in for 12
SEQ          = 128            # stand-in for max_length=512
BATCH        = 2
LN_EPS       = 1e-12
TM           = 128            # row tile for dense / layernorm kernels


# ----------------------------- in-kernel helpers ------------------------------
def _layernorm_f32(h, gamma, beta):
    mean = jnp.mean(h, axis=-1, keepdims=True)
    var = jnp.mean(jnp.square(h - mean), axis=-1, keepdims=True)
    return (h - mean) * jax.lax.rsqrt(var + LN_EPS) * gamma + beta


def _gelu_f32(y):
    # TODO(synk): HF bert-base uses exact erf GELU; tanh approximation kept for
    # guaranteed Mosaic lowering (fidelity-only difference).
    c = math.sqrt(2.0 / math.pi)
    return 0.5 * y * (1.0 + jnp.tanh(c * (y + 0.044715 * y * y * y)))


# ------------------------------ Pallas kernels -------------------------------
def dense_kernel(x_ref, w_ref, b_ref, o_ref, *, activation):
    """y = x @ w + b (bf16 MXU, f32 accumulate), optional GELU."""
    x = x_ref[...].astype(jnp.bfloat16)
    y = jnp.dot(x, w_ref[...], preferred_element_type=jnp.float32) + b_ref[...]
    if activation == "gelu":
        y = _gelu_f32(y)
    o_ref[...] = y.astype(o_ref.dtype)


def dense(x, w, b, activation=None, out_dtype=jnp.float32):
    """x: (M, K) @ w(bf16): (K, N) + b: (N,) -> (M, N)."""
    M, K = x.shape
    N = w.shape[1]
    assert M % TM == 0, "row count must be a multiple of TM"
    return pl.pallas_call(
        functools.partial(dense_kernel, activation=activation),
        out_shape=jax.ShapeDtypeStruct((M, N), out_dtype),
        grid_spec=pltpu.PrefetchScalarGridSpec(
            num_scalar_prefetch=0,
            grid=(M // TM,),
            in_specs=[
                pl.BlockSpec((TM, K), lambda i: (i, 0)),
                pl.BlockSpec((K, N), lambda i: (0, 0)),
                pl.BlockSpec((1, N), lambda i: (0, 0)),
            ],
            out_specs=pl.BlockSpec((TM, N), lambda i: (i, 0)),
        ),
        compiler_params=pltpu.CompilerParams(dimension_semantics=("parallel",)),
    )(x, w, b.reshape(1, N))


def dense_add_ln_kernel(x_ref, w_ref, b_ref, r_ref, g_ref, bb_ref, o_ref):
    """Fused: LayerNorm((x @ w + b) + residual)."""
    x = x_ref[...].astype(jnp.bfloat16)
    y = jnp.dot(x, w_ref[...], preferred_element_type=jnp.float32) + b_ref[...]
    h = y + r_ref[...]
    o_ref[...] = _layernorm_f32(h, g_ref[...], bb_ref[...])


def dense_add_ln(x, w, b, residual, gamma, beta):
    """x: (M, K) @ w(bf16): (K, N) + b, add residual (M, N) f32, LayerNorm."""
    M, K = x.shape
    N = w.shape[1]
    assert M % TM == 0, "row count must be a multiple of TM"
    return pl.pallas_call(
        dense_add_ln_kernel,
        out_shape=jax.ShapeDtypeStruct((M, N), jnp.float32),
        grid_spec=pltpu.PrefetchScalarGridSpec(
            num_scalar_prefetch=0,
            grid=(M // TM,),
            in_specs=[
                pl.BlockSpec((TM, K), lambda i: (i, 0)),
                pl.BlockSpec((K, N), lambda i: (0, 0)),
                pl.BlockSpec((1, N), lambda i: (0, 0)),
                pl.BlockSpec((TM, N), lambda i: (i, 0)),
                pl.BlockSpec((1, N), lambda i: (0, 0)),
                pl.BlockSpec((1, N), lambda i: (0, 0)),
            ],
            out_specs=pl.BlockSpec((TM, N), lambda i: (i, 0)),
        ),
        compiler_params=pltpu.CompilerParams(dimension_semantics=("parallel",)),
    )(x, w, b.reshape(1, N), residual, gamma.reshape(1, N), beta.reshape(1, N))


def ln_kernel(x_ref, g_ref, b_ref, o_ref):
    o_ref[...] = _layernorm_f32(x_ref[...], g_ref[...], b_ref[...])


def layernorm(x, gamma, beta):
    """Plain LayerNorm over last dim (used for the embedding output)."""
    M, H = x.shape
    assert M % TM == 0
    return pl.pallas_call(
        ln_kernel,
        out_shape=jax.ShapeDtypeStruct((M, H), jnp.float32),
        grid_spec=pltpu.PrefetchScalarGridSpec(
            num_scalar_prefetch=0,
            grid=(M // TM,),
            in_specs=[
                pl.BlockSpec((TM, H), lambda i: (i, 0)),
                pl.BlockSpec((1, H), lambda i: (0, 0)),
                pl.BlockSpec((1, H), lambda i: (0, 0)),
            ],
            out_specs=pl.BlockSpec((TM, H), lambda i: (i, 0)),
        ),
        compiler_params=pltpu.CompilerParams(dimension_semantics=("parallel",)),
    )(x, gamma.reshape(1, H), beta.reshape(1, H))


def attn_kernel(qkv_ref, m_ref, o_ref):
    """One batch per grid step.  qkv_ref: (S, 3H) bf16 packed [Q|K|V]; the
    1/sqrt(dh) scale is already folded into the Q projection weights.
    Heads are processed in an unrolled loop; the merged-head context is stored
    once as a lane-dense (S, H) tile."""
    qkv = qkv_ref[...]                                   # (S, 3H) bf16
    mask = m_ref[...]                                    # (1, S)  f32 additive
    ctx_heads = []
    for hd in range(N_HEADS):
        lo = hd * HEAD_DIM
        hi = lo + HEAD_DIM
        q = qkv[:, lo:hi]                                # (S, dh) bf16
        k = qkv[:, HIDDEN + lo:HIDDEN + hi]              # (S, dh) bf16
        v = qkv[:, 2 * HIDDEN + lo:2 * HIDDEN + hi]      # (S, dh) bf16
        # q . k over dh without materializing k.T
        s = jax.lax.dot_general(q, k, (((1,), (1,)), ((), ())),
                                preferred_element_type=jnp.float32)  # (S, S)
        s = s + mask
        s = s - jnp.max(s, axis=-1, keepdims=True)
        p = jnp.exp(s)
        p = p * pl.reciprocal(jnp.sum(p, axis=-1, keepdims=True), approx=True)
        ctx_heads.append(
            jnp.dot(p.astype(jnp.bfloat16), v,
                    preferred_element_type=jnp.float32))             # (S, dh)
    o_ref[...] = jnp.concatenate(ctx_heads, axis=-1).astype(o_ref.dtype)


def attention(qkv, mask_add):
    """qkv: (B, S, 3H) bf16 packed; mask_add: (B, 1, S) f32 additive mask.
    Returns merged-head context (B, S, H) bf16."""
    B, S, threeH = qkv.shape
    return pl.pallas_call(
        attn_kernel,
        out_shape=jax.ShapeDtypeStruct((B, S, HIDDEN), jnp.bfloat16),
        grid_spec=pltpu.PrefetchScalarGridSpec(
            num_scalar_prefetch=0,
            grid=(B,),
            in_specs=[
                pl.BlockSpec((None, S, threeH), lambda b: (b, 0, 0)),
                pl.BlockSpec((None, 1, S), lambda b: (b, 0, 0)),
            ],
            out_specs=pl.BlockSpec((None, S, HIDDEN), lambda b: (b, 0, 0)),
        ),
        compiler_params=pltpu.CompilerParams(dimension_semantics=("parallel",)),
    )(qkv, mask_add)


# --------------------------- parameter initialization ------------------------
def init_params(key):
    scale = 0.02
    keys = iter(jax.random.split(key, 4 + 6 * N_LAYERS))

    def nrm(shape):
        return scale * jax.random.normal(next(keys), shape, dtype=jnp.float32)

    inv_sqrt_dh = 1.0 / math.sqrt(HEAD_DIM)

    params = {
        "word_emb": nrm((VOCAB, HIDDEN)),
        "pos_emb":  nrm((MAX_POS, HIDDEN)),
        "type_emb": nrm((TYPE_VOCAB, HIDDEN)),
        "emb_ln_g": jnp.ones((HIDDEN,), jnp.float32),
        "emb_ln_b": jnp.zeros((HIDDEN,), jnp.float32),
        "layers":   [],
    }
    for _ in range(N_LAYERS):
        wq = nrm((HIDDEN, HIDDEN))
        wk = nrm((HIDDEN, HIDDEN))
        wv = nrm((HIDDEN, HIDDEN))
        bq = jnp.zeros((HIDDEN,), jnp.float32)
        bk = jnp.zeros((HIDDEN,), jnp.float32)
        bv = jnp.zeros((HIDDEN,), jnp.float32)
        # Fold the 1/sqrt(dh) attention scale into the Q projection (free).
        wqkv = jnp.concatenate([wq * inv_sqrt_dh, wk, wv], axis=1)
        bqkv = jnp.concatenate([bq * inv_sqrt_dh, bk, bv], axis=0)
        layer = {
            "wqkv": wqkv.astype(jnp.bfloat16),                      # (H, 3H)
            "bqkv": bqkv,                                           # (3H,)
            "wo": nrm((HIDDEN, HIDDEN)).astype(jnp.bfloat16),
            "bo": jnp.zeros((HIDDEN,), jnp.float32),
            "ln1_g": jnp.ones((HIDDEN,), jnp.float32),
            "ln1_b": jnp.zeros((HIDDEN,), jnp.float32),
            "w1": nrm((HIDDEN, INTERMEDIATE)).astype(jnp.bfloat16),
            "b1": jnp.zeros((INTERMEDIATE,), jnp.float32),
            "w2": nrm((INTERMEDIATE, HIDDEN)).astype(jnp.bfloat16),
            "b2": jnp.zeros((HIDDEN,), jnp.float32),
            "ln2_g": jnp.ones((HIDDEN,), jnp.float32),
            "ln2_b": jnp.zeros((HIDDEN,), jnp.float32),
        }
        params["layers"].append(layer)
    return params


# --------------------------------- encoder -----------------------------------
def encoder_forward(params, input_ids, token_type_ids, attention_mask):
    """Returns last_hidden_state of shape (B, S, HIDDEN)."""
    B, S = input_ids.shape
    M = B * S

    # Embedding lookups (gather = glue, in plain JAX), then LayerNorm in Pallas
    # (no fake all-zeros residual operand).
    positions = jnp.arange(S, dtype=jnp.int32)
    emb = (jnp.take(params["word_emb"], input_ids, axis=0)
           + jnp.take(params["pos_emb"], positions, axis=0)[None, :, :]
           + jnp.take(params["type_emb"], token_type_ids, axis=0))
    h = layernorm(emb.reshape(M, HIDDEN), params["emb_ln_g"], params["emb_ln_b"])

    # Additive padding mask, NOT replicated per head: (B, 1, S)
    mask_add = ((1.0 - attention_mask.astype(jnp.float32)) * -1e9).reshape(B, 1, S)

    for layer in params["layers"]:
        # Fused Q|K|V projection: one matmul, packed bf16 output.
        qkv = dense(h, layer["wqkv"], layer["bqkv"], out_dtype=jnp.bfloat16)  # (M, 3H)
        # Attention: heads handled in-kernel, merged-head lane-dense output.
        ctx = attention(qkv.reshape(B, S, 3 * HIDDEN), mask_add)              # (B, S, H)
        # Output projection fused with residual-add + LayerNorm.
        h = dense_add_ln(ctx.reshape(M, HIDDEN), layer["wo"], layer["bo"],
                         h, layer["ln1_g"], layer["ln1_b"])
        # FFN: GELU dense, then second dense fused with residual-add + LayerNorm.
        ff = dense(h, layer["w1"], layer["b1"], activation="gelu",
                   out_dtype=jnp.bfloat16)                                    # (M, I)
        h = dense_add_ln(ff, layer["w2"], layer["b2"],
                         h, layer["ln2_g"], layer["ln2_b"])

    return h.reshape(B, S, HIDDEN)


encoder_forward_jit = jax.jit(encoder_forward)


# ----------------------------------- main -------------------------------------
if __name__ == "__main__":
    key = jax.random.PRNGKey(0)
    k_params, k_ids = jax.random.split(key)

    params = init_params(k_params)

    # Synthetic "tokenized" inputs (what the HF tokenizer would produce).
    input_ids = jax.random.randint(k_ids, (BATCH, SEQ), 1, VOCAB, dtype=jnp.int32)
    token_type_ids = jnp.zeros((BATCH, SEQ), dtype=jnp.int32)
    # Simulate padding='max_length': second sequence has its last 32 positions padded.
    attention_mask = jnp.ones((BATCH, SEQ), dtype=jnp.int32)
    attention_mask = attention_mask.at[1, SEQ - 32:].set(0)

    last_hidden_state = encoder_forward_jit(params, input_ids, token_type_ids,
                                            attention_mask)
    last_hidden_state = jax.block_until_ready(last_hidden_state)

    assert last_hidden_state.shape == (BATCH, SEQ, HIDDEN)
    assert bool(jnp.all(jnp.isfinite(last_hidden_state)))
    print("KERNEL_OK")
</pallas_src>

<mosaic_0001>
module attributes {stable_mosaic.version = 11 : i64} {
  func.func @ln_kernel(%arg0: i32, %arg1: memref<128x128xf32, #tpu.memory_space<vmem>>, %arg2: memref<1x128xf32, #tpu.memory_space<vmem>>, %arg3: memref<1x128xf32, #tpu.memory_space<vmem>>, %arg4: memref<128x128xf32, #tpu.memory_space<vmem>>) attributes {dimension_semantics = [#tpu.dimension_semantics<parallel>], iteration_bounds = array<i64: 2>, scalar_prefetch = 0 : i64, scratch_operands = 0 : i64, tpu.core_type = #tpu.core_type<tc>, window_params = [{transform_indices = @transform_0, window_bounds = array<i64: 128, 128>}, {pipeline_mode = #tpu.pipeline_mode<synchronous>, transform_indices = @transform_1, window_bounds = array<i64: 1, 128>}, {pipeline_mode = #tpu.pipeline_mode<synchronous>, transform_indices = @transform_2, window_bounds = array<i64: 1, 128>}, {transform_indices = @transform_3, window_bounds = array<i64: 128, 128>}]} {
    %c0 = arith.constant 0 : index
    %c0_0 = arith.constant 0 : index
    %0 = vector.load %arg1[%c0, %c0_0] : memref<128x128xf32, #tpu.memory_space<vmem>>, vector<128x128xf32>
    %c0_1 = arith.constant 0 : index
    %c0_2 = arith.constant 0 : index
    %1 = vector.load %arg2[%c0_1, %c0_2] : memref<1x128xf32, #tpu.memory_space<vmem>>, vector<1x128xf32>
    %c0_3 = arith.constant 0 : index
    %c0_4 = arith.constant 0 : index
    %2 = vector.load %arg3[%c0_3, %c0_4] : memref<1x128xf32, #tpu.memory_space<vmem>>, vector<1x128xf32>
    %cst = arith.constant dense<0.000000e+00> : vector<128xf32>
    %3 = vector.multi_reduction <add>, %0, %cst [1] : vector<128x128xf32> to vector<128xf32>
    %4 = vector.shape_cast %3 : vector<128xf32> to vector<128x1xf32>
    %cst_5 = arith.constant 1.280000e+02 : f32
    %5 = vector.broadcast %cst_5 : f32 to vector<128x1xf32>
    %6 = arith.divf %4, %5 : vector<128x1xf32>
    %7 = vector.broadcast %6 : vector<128x1xf32> to vector<128x128xf32>
    %8 = arith.subf %0, %7 : vector<128x128xf32>
    %9 = arith.mulf %8, %8 : vector<128x128xf32>
    %cst_6 = arith.constant dense<0.000000e+00> : vector<128xf32>
    %10 = vector.multi_reduction <add>, %9, %cst_6 [1] : vector<128x128xf32> to vector<128xf32>
    %11 = vector.shape_cast %10 : vector<128xf32> to vector<128x1xf32>
    %cst_7 = arith.constant 1.280000e+02 : f32
    %12 = vector.broadcast %cst_7 : f32 to vector<128x1xf32>
    %13 = arith.divf %11, %12 : vector<128x1xf32>
    %14 = vector.broadcast %6 : vector<128x1xf32> to vector<128x128xf32>
    %15 = arith.subf %0, %14 : vector<128x128xf32>
    %cst_8 = arith.constant 9.99999996E-13 : f32
    %16 = vector.broadcast %cst_8 : f32 to vector<128x1xf32>
    %17 = arith.addf %13, %16 : vector<128x1xf32>
    %18 = math.rsqrt %17 : vector<128x1xf32>
    %19 = vector.broadcast %18 : vector<128x1xf32> to vector<128x128xf32>
    %20 = arith.mulf %15, %19 : vector<128x128xf32>
    %21 = vector.broadcast %1 : vector<1x128xf32> to vector<128x128xf32>
    %22 = arith.mulf %20, %21 : vector<128x128xf32>
    %23 = vector.broadcast %2 : vector<1x128xf32> to vector<128x128xf32>
    %24 = arith.addf %22, %23 : vector<128x128xf32>
    %c0_9 = arith.constant 0 : index
    %c0_10 = arith.constant 0 : index
    %25 = vector.load %arg4[%c0_9, %c0_10] : memref<128x128xf32, #tpu.memory_space<vmem>>, vector<128x128xf32>
    tpu.vector_store %arg4[%c0_9, %c0_10], %24 {strides = array<i32>} : memref<128x128xf32, #tpu.memory_space<vmem>>, vector<128x128xf32>,
    return
  }
  func.func @transform_0(%arg0: i32) -> (i32, i32) {
    %c0_i32 = arith.constant 0 : i32
    %c0_i32_0 = arith.constant 0 : i32
    return %arg0, %c0_i32 : i32, i32
  }
  func.func @transform_1(%arg0: i32) -> (i32, i32) {
    %c0_i32 = arith.constant 0 : i32
    %c0_i32_0 = arith.constant 0 : i32
    %c0_i32_1 = arith.constant 0 : i32
    return %c0_i32, %c0_i32_0 : i32, i32
  }
  func.func @transform_2(%arg0: i32) -> (i32, i32) {
    %c0_i32 = arith.constant 0 : i32
    %c0_i32_0 = arith.constant 0 : i32
    %c0_i32_1 = arith.constant 0 : i32
    return %c0_i32, %c0_i32_0 : i32, i32
  }
  func.func @transform_3(%arg0: i32) -> (i32, i32) {
    %c0_i32 = arith.constant 0 : i32
    %c0_i32_0 = arith.constant 0 : i32
    return %arg0, %c0_i32 : i32, i32
  }
}

module attributes {stable_mosaic.version = 11 : i64} {
  func.func @dense_kernel(%arg0: i32, %arg1: memref<128x128xf32, #tpu.memory_space<vmem>>, %arg2: memref<128x384xbf16, #tpu.memory_space<vmem>>, %arg3: memref<1x384xf32, #tpu.memory_space<vmem>>, %arg4: memref<128x384xbf16, #tpu.memory_space<vmem>>) attributes {dimension_semantics = [#tpu.dimension_semantics<parallel>], iteration_bounds = array<i64: 2>, scalar_prefetch = 0 : i64, scratch_operands = 0 : i64, tpu.core_type = #tpu.core_type<tc>, window_params = [{transform_indices = @transform_0, window_bounds = array<i64: 128, 128>}, {pipeline_mode = #tpu.pipeline_mode<synchronous>, transform_indices = @transform_1, window_bounds = array<i64: 128, 384>}, {pipeline_mode = #tpu.pipeline_mode<synchronous>, transform_indices = @transform_2, window_bounds = array<i64: 1, 384>}, {transform_indices = @transform_3, window_bounds = array<i64: 128, 384>}]} {
    %c0 = arith.constant 0 : index
    %c0_0 = arith.constant 0 : index
    %0 = vector.load %arg1[%c0, %c0_0] : memref<128x128xf32, #tpu.memory_space<vmem>>, vector<128x128xf32>
    %1 = arith.truncf %0 : vector<128x128xf32> to vector<128x128xbf16>
    %c0_1 = arith.constant 0 : index
    %c0_2 = arith.constant 0 : index
    %2 = vector.load %arg2[%c0_1, %c0_2] : memref<128x384xbf16, #tpu.memory_space<vmem>>, vector<128x384xbf16>
    %cst = arith.constant dense<0.000000e+00> : vector<128x384xf32>
    %3 = tpu.matmul %1, %2, %cst {dimension_numbers = #tpu.dot_dimension_numbers<[1], [0], [0], [1], [0, 0, 1, 1], [], []>} : vector<128x128xbf16>, vector<128x384xbf16>, vector<128x384xf32> -> vector<128x384xf32>
    %c0_3 = arith.constant 0 : index
    %c0_4 = arith.constant 0 : index
    %4 = vector.load %arg3[%c0_3, %c0_4] : memref<1x384xf32, #tpu.memory_space<vmem>>, vector<1x384xf32>
    %5 = vector.broadcast %4 : vector<1x384xf32> to vector<128x384xf32>
    %6 = arith.addf %3, %5 : vector<128x384xf32>
    %7 = arith.truncf %6 : vector<128x384xf32> to vector<128x384xbf16>
    %c0_5 = arith.constant 0 : index
    %c0_6 = arith.constant 0 : index
    %8 = vector.load %arg4[%c0_5, %c0_6] : memref<128x384xbf16, #tpu.memory_space<vmem>>, vector<128x384xbf16>
    tpu.vector_store %arg4[%c0_5, %c0_6], %7 {strides = array<i32>} : memref<128x384xbf16, #tpu.memory_space<vmem>>, vector<128x384xbf16>,
    return
  }
  func.func @transform_0(%arg0: i32) -> (i32, i32) {
    %c0_i32 = arith.constant 0 : i32
    %c0_i32_0 = arith.constant 0 : i32
    return %arg0, %c0_i32 : i32, i32
  }
  func.func @transform_1(%arg0: i32) -> (i32, i32) {
    %c0_i32 = arith.constant 0 : i32
    %c0_i32_0 = arith.constant 0 : i32
    %c0_i32_1 = arith.constant 0 : i32
    return %c0_i32, %c0_i32_0 : i32, i32
  }
  func.func @transform_2(%arg0: i32) -> (i32, i32) {
    %c0_i32 = arith.constant 0 : i32
    %c0_i32_0 = arith.constant 0 : i32
    %c0_i32_1 = arith.constant 0 : i32
    return %c0_i32, %c0_i32_0 : i32, i32
  }
  func.func @transform_3(%arg0: i32) -> (i32, i32) {
    %c0_i32 = arith.constant 0 : i32
    %c0_i32_0 = arith.constant 0 : i32
    return %arg0, %c0_i32 : i32, i32
  }
}

module attributes {stable_mosaic.version = 11 : i64} {
  func.func @attn_kernel(%arg0: i32, %arg1: memref<1x128x384xbf16, #tpu.memory_space<vmem>>, %arg2: memref<1x1x128xf32, #tpu.memory_space<vmem>>, %arg3: memref<1x128x128xbf16, #tpu.memory_space<vmem>>) attributes {dimension_semantics = [#tpu.dimension_semantics<parallel>], iteration_bounds = array<i64: 2>, scalar_prefetch = 0 : i64, scratch_operands = 0 : i64, tpu.core_type = #tpu.core_type<tc>, window_params = [{transform_indices = @transform_0, window_bounds = array<i64: 1, 128, 384>}, {transform_indices = @transform_1, window_bounds = array<i64: 1, 1, 128>}, {transform_indices = @transform_2, window_bounds = array<i64: 1, 128, 128>}]} {
    %c0 = arith.constant 0 : index
    %c0_0 = arith.constant 0 : index
    %c0_1 = arith.constant 0 : index
    %0 = vector.load %arg1[%c0, %c0_0, %c0_1] : memref<1x128x384xbf16, #tpu.memory_space<vmem>>, vector<1x128x384xbf16>
    %1 = vector.shape_cast %0 : vector<1x128x384xbf16> to vector<128x384xbf16>
    %c0_2 = arith.constant 0 : index
    %c0_3 = arith.constant 0 : index
    %c0_4 = arith.constant 0 : index
    %2 = vector.load %arg2[%c0_2, %c0_3, %c0_4] : memref<1x1x128xf32, #tpu.memory_space<vmem>>, vector<1x1x128xf32>
    %3 = vector.shape_cast %2 : vector<1x1x128xf32> to vector<1x128xf32>
    %4 = vector.extract_strided_slice %1 {offsets = [0, 0], sizes = [128, 32], strides = [1, 1]} : vector<128x384xbf16> to vector<128x32xbf16>
    %5 = vector.extract_strided_slice %1 {offsets = [0, 128], sizes = [128, 32], strides = [1, 1]} : vector<128x384xbf16> to vector<128x32xbf16>
    %6 = vector.extract_strided_slice %1 {offsets = [0, 256], sizes = [128, 32], strides = [1, 1]} : vector<128x384xbf16> to vector<128x32xbf16>
    %cst = arith.constant dense<0.000000e+00> : vector<128x128xf32>
    %7 = tpu.matmul %4, %5, %cst {dimension_numbers = #tpu.dot_dimension_numbers<[1], [1], [0], [0], [0, 0, 1, 0], [], []>} : vector<128x32xbf16>, vector<128x32xbf16>, vector<128x128xf32> -> vector<128x128xf32>
    %8 = vector.broadcast %3 : vector<1x128xf32> to vector<128x128xf32>
    %9 = arith.addf %7, %8 : vector<128x128xf32>
    %cst_5 = arith.constant dense<0xFF800000> : vector<128xf32>
    %10 = vector.multi_reduction <maximumf>, %9, %cst_5 [1] : vector<128x128xf32> to vector<128xf32>
    %11 = vector.shape_cast %10 : vector<128xf32> to vector<128x1xf32>
    %12 = vector.broadcast %11 : vector<128x1xf32> to vector<128x128xf32>
    %13 = arith.subf %9, %12 : vector<128x128xf32>
    %14 = math.exp %13 : vector<128x128xf32>
    %cst_6 = arith.constant dense<0.000000e+00> : vector<128xf32>
    %15 = vector.multi_reduction <add>, %14, %cst_6 [1] : vector<128x128xf32> to vector<128xf32>
    %16 = vector.shape_cast %15 : vector<128xf32> to vector<128x1xf32>
    %17 = tpu.reciprocal %16 {approx = true} : vector<128x1xf32> -> vector<128x1xf32>
    %18 = vector.broadcast %17 : vector<128x1xf32> to vector<128x128xf32>
    %19 = arith.mulf %14, %18 : vector<128x128xf32>
    %20 = arith.truncf %19 : vector<128x128xf32> to vector<128x128xbf16>
    %cst_7 = arith.constant dense<0.000000e+00> : vector<128x32xf32>
    %21 = tpu.matmul %20, %6, %cst_7 {dimension_numbers = #tpu.dot_dimension_numbers<[1], [0], [0], [1], [0, 0, 1, 1], [], []>} : vector<128x128xbf16>, vector<128x32xbf16>, vector<128x32xf32> -> vector<128x32xf32>
    %22 = vector.extract_strided_slice %1 {offsets = [0, 32], sizes = [128, 32], strides = [1, 1]} : vector<128x384xbf16> to vector<128x32xbf16>
    %23 = vector.extract_strided_slice %1 {offsets = [0, 160], sizes = [128, 32], strides = [1, 1]} : vector<128x384xbf16> to vector<128x32xbf16>
    %24 = vector.extract_strided_slice %1 {offsets = [0, 288], sizes = [128, 32], strides = [1, 1]} : vector<128x384xbf16> to vector<128x32xbf16>
    %cst_8 = arith.constant dense<0.000000e+00> : vector<128x128xf32>
    %25 = tpu.matmul %22, %23, %cst_8 {dimension_numbers = #tpu.dot_dimension_numbers<[1], [1], [0], [0], [0, 0, 1, 0], [], []>} : vector<128x32xbf16>, vector<128x32xbf16>, vector<128x128xf32> -> vector<128x128xf32>
    %26 = vector.broadcast %3 : vector<1x128xf32> to vector<128x128xf32>
    %27 = arith.addf %25, %26 : vector<128x128xf32>
    %cst_9 = arith.constant dense<0xFF800000> : vector<128xf32>
    %28 = vector.multi_reduction <maximumf>, %27, %cst_9 [1] : vector<128x128xf32> to vector<128xf32>
    %29 = vector.shape_cast %28 : vector<128xf32> to vector<128x1xf32>
    %30 = vector.broadcast %29 : vector<128x1xf32> to vector<128x128xf32>
    %31 = arith.subf %27, %30 : vector<128x128xf32>
    %32 = math.exp %31 : vector<128x128xf32>
    %cst_10 = arith.constant dense<0.000000e+00> : vector<128xf32>
    %33 = vector.multi_reduction <add>, %32, %cst_10 [1] : vector<128x128xf32> to vector<128xf32>
    %34 = vector.shape_cast %33 : vector<128xf32> to vector<128x1xf32>
    %35 = tpu.reciprocal %34 {approx = true} : vector<128x1xf32> -> vector<128x1xf32>
    %36 = vector.broadcast %35 : vector<128x1xf32> to vector<128x128xf32>
    %37 = arith.mulf %32, %36 : vector<128x128xf32>
    %38 = arith.truncf %37 : vector<128x128xf32> to vector<128x128xbf16>
    %cst_11 = arith.constant dense<0.000000e+00> : vector<128x32xf32>
    %39 = tpu.matmul %38, %24, %cst_11 {dimension_numbers = #tpu.dot_dimension_numbers<[1], [0], [0], [1], [0, 0, 1, 1], [], []>} : vector<128x128xbf16>, vector<128x32xbf16>, vector<128x32xf32> -> vector<128x32xf32>
    %40 = vector.extract_strided_slice %1 {offsets = [0, 64], sizes = [128, 32], strides = [1, 1]} : vector<128x384xbf16> to vector<128x32xbf16>
    %41 = vector.extract_strided_slice %1 {offsets = [0, 192], sizes = [128, 32], strides = [1, 1]} : vector<128x384xbf16> to vector<128x32xbf16>
    %42 = vector.extract_strided_slice %1 {offsets = [0, 320], sizes = [128, 32], strides = [1, 1]} : vector<128x384xbf16> to vector<128x32xbf16>
    %cst_12 = arith.constant dense<0.000000e+00> : vector<128x128xf32>
    %43 = tpu.matmul %40, %41, %cst_12 {dimension_numbers = #tpu.dot_dimension_numbers<[1], [1], [0], [0], [0, 0, 1, 0], [], []>} : vector<128x32xbf16>, vector<128x32xbf16>, vector<128x128xf32> -> vector<128x128xf32>
    %44 = vector.broadcast %3 : vector<1x128xf32> to vector<128x128xf32>
    %45 = arith.addf %43, %44 : vector<128x128xf32>
    %cst_13 = arith.constant dense<0xFF800000> : vector<128xf32>
    %46 = vector.multi_reduction <maximumf>, %45, %cst_13 [1] : vector<128x128xf32> to vector<128xf32>
    %47 = vector.shape_cast %46 : vector<128xf32> to vector<128x1xf32>
    %48 = vector.broadcast %47 : vector<128x1xf32> to vector<128x128xf32>
    %49 = arith.subf %45, %48 : vector<128x128xf32>
    %50 = math.exp %49 : vector<128x128xf32>
    %cst_14 = arith.constant dense<0.000000e+00> : vector<128xf32>
    %51 = vector.multi_reduction <add>, %50, %cst_14 [1] : vector<128x128xf32> to vector<128xf32>
    %52 = vector.shape_cast %51 : vector<128xf32> to vector<128x1xf32>
    %53 = tpu.reciprocal %52 {approx = true} : vector<128x1xf32> -> vector<128x1xf32>
    %54 = vector.broadcast %53 : vector<128x1xf32> to vector<128x128xf32>
    %55 = arith.mulf %50, %54 : vector<128x128xf32>
    %56 = arith.truncf %55 : vector<128x128xf32> to vector<128x128xbf16>
    %cst_15 = arith.constant dense<0.000000e+00> : vector<128x32xf32>
    %57 = tpu.matmul %56, %42, %cst_15 {dimension_numbers = #tpu.dot_dimension_numbers<[1], [0], [0], [1], [0, 0, 1, 1], [], []>} : vector<128x128xbf16>, vector<128x32xbf16>, vector<128x32xf32> -> vector<128x32xf32>
    %58 = vector.extract_strided_slice %1 {offsets = [0, 96], sizes = [128, 32], strides = [1, 1]} : vector<128x384xbf16> to vector<128x32xbf16>
    %59 = vector.extract_strided_slice %1 {offsets = [0, 224], sizes = [128, 32], strides = [1, 1]} : vector<128x384xbf16> to vector<128x32xbf16>
    %60 = vector.extract_strided_slice %1 {offsets = [0, 352], sizes = [128, 32], strides = [1, 1]} : vector<128x384xbf16> to vector<128x32xbf16>
    %cst_16 = arith.constant dense<0.000000e+00> : vector<128x128xf32>
    %61 = tpu.matmul %58, %59, %cst_16 {dimension_numbers = #tpu.dot_dimension_numbers<[1], [1], [0], [0], [0, 0, 1, 0], [], []>} : vector<128x32xbf16>, vector<128x32xbf16>, vector<128x128xf32> -> vector<128x128xf32>
    %62 = vector.broadcast %3 : vector<1x128xf32> to vector<128x128xf32>
    %63 = arith.addf %61, %62 : vector<128x128xf32>
    %cst_17 = arith.constant dense<0xFF800000> : vector<128xf32>
    %64 = vector.multi_reduction <maximumf>, %63, %cst_17 [1] : vector<128x128xf32> to vector<128xf32>
    %65 = vector.shape_cast %64 : vector<128xf32> to vector<128x1xf32>
    %66 = vector.broadcast %65 : vector<128x1xf32> to vector<128x128xf32>
    %67 = arith.subf %63, %66 : vector<128x128xf32>
    %68 = math.exp %67 : vector<128x128xf32>
    %cst_18 = arith.constant dense<0.000000e+00> : vector<128xf32>
    %69 = vector.multi_reduction <add>, %68, %cst_18 [1] : vector<128x128xf32> to vector<128xf32>
    %70 = vector.shape_cast %69 : vector<128xf32> to vector<128x1xf32>
    %71 = tpu.reciprocal %70 {approx = true} : vector<128x1xf32> -> vector<128x1xf32>
    %72 = vector.broadcast %71 : vector<128x1xf32> to vector<128x128xf32>
    %73 = arith.mulf %68, %72 : vector<128x128xf32>
    %74 = arith.truncf %73 : vector<128x128xf32> to vector<128x128xbf16>
    %cst_19 = arith.constant dense<0.000000e+00> : vector<128x32xf32>
    %75 = tpu.matmul %74, %60, %cst_19 {dimension_numbers = #tpu.dot_dimension_numbers<[1], [0], [0], [1], [0, 0, 1, 1], [], []>} : vector<128x128xbf16>, vector<128x32xbf16>, vector<128x32xf32> -> vector<128x32xf32>
    %76 = tpu.concatenate %21, %39, %57, %75 in 1 : vector<128x32xf32>, vector<128x32xf32>, vector<128x32xf32>, vector<128x32xf32> -> vector<128x128xf32>
    %77 = arith.truncf %76 : vector<128x128xf32> to vector<128x128xbf16>
    %c0_20 = arith.constant 0 : index
    %c0_21 = arith.constant 0 : index
    %c0_22 = arith.constant 0 : index
    %78 = vector.load %arg3[%c0_20, %c0_21, %c0_22] : memref<1x128x128xbf16, #tpu.memory_space<vmem>>, vector<1x128x128xbf16>
    %79 = vector.shape_cast %78 : vector<1x128x128xbf16> to vector<128x128xbf16>
    %80 = vector.shape_cast %77 : vector<128x128xbf16> to vector<1x128x128xbf16>
    tpu.vector_store %arg3[%c0_20, %c0_21, %c0_22], %80 {strides = array<i32>} : memref<1x128x128xbf16, #tpu.memory_space<vmem>>, vector<1x128x128xbf16>,
    return
  }
  func.func @transform_0(%arg0: i32) -> (i32, i32, i32) {
    %c0_i32 = arith.constant 0 : i32
    %c0_i32_0 = arith.constant 0 : i32
    %c0_i32_1 = arith.constant 0 : i32
    return %arg0, %c0_i32, %c0_i32_0 : i32, i32, i32
  }
  func.func @transform_1(%arg0: i32) -> (i32, i32, i32) {
    %c0_i32 = arith.constant 0 : i32
    %c0_i32_0 = arith.constant 0 : i32
    %c0_i32_1 = arith.constant 0 : i32
    return %arg0, %c0_i32, %c0_i32_0 : i32, i32, i32
  }
  func.func @transform_2(%arg0: i32) -> (i32, i32, i32) {
    %c0_i32 = arith.constant 0 : i32
    %c0_i32_0 = arith.constant 0 : i32
    %c0_i32_1 = arith.constant 0 : i32
    return %arg0, %c0_i32, %c0_i32_0 : i32, i32, i32
  }
}

module attributes {stable_mosaic.version = 11 : i64} {
  func.func @dense_add_ln_kernel(%arg0: i32, %arg1: memref<128x128xbf16, #tpu.memory_space<vmem>>, %arg2: memref<128x128xbf16, #tpu.memory_space<vmem>>, %arg3: memref<1x128xf32, #tpu.memory_space<vmem>>, %arg4: memref<128x128xf32, #tpu.memory_space<vmem>>, %arg5: memref<1x128xf32, #tpu.memory_space<vmem>>, %arg6: memref<1x128xf32, #tpu.memory_space<vmem>>, %arg7: memref<128x128xf32, #tpu.memory_space<vmem>>) attributes {dimension_semantics = [#tpu.dimension_semantics<parallel>], iteration_bounds = array<i64: 2>, scalar_prefetch = 0 : i64, scratch_operands = 0 : i64, tpu.core_type = #tpu.core_type<tc>, window_params = [{transform_indices = @transform_0, window_bounds = array<i64: 128, 128>}, {pipeline_mode = #tpu.pipeline_mode<synchronous>, transform_indices = @transform_1, window_bounds = array<i64: 128, 128>}, {pipeline_mode = #tpu.pipeline_mode<synchronous>, transform_indices = @transform_2, window_bounds = array<i64: 1, 128>}, {transform_indices = @transform_3, window_bounds = array<i64: 128, 128>}, {pipeline_mode = #tpu.pipeline_mode<synchronous>, transform_indices = @transform_4, window_bounds = array<i64: 1, 128>}, {pipeline_mode = #tpu.pipeline_mode<synchronous>, transform_indices = @transform_5, window_bounds = array<i64: 1, 128>}, {transform_indices = @transform_6, window_bounds = array<i64: 128, 128>}]} {
    %c0 = arith.constant 0 : index
    %c0_0 = arith.constant 0 : index
    %0 = vector.load %arg1[%c0, %c0_0] : memref<128x128xbf16, #tpu.memory_space<vmem>>, vector<128x128xbf16>
    %c0_1 = arith.constant 0 : index
    %c0_2 = arith.constant 0 : index
    %1 = vector.load %arg2[%c0_1, %c0_2] : memref<128x128xbf16, #tpu.memory_space<vmem>>, vector<128x128xbf16>
    %cst = arith.constant dense<0.000000e+00> : vector<128x128xf32>
    %2 = tpu.matmul %0, %1, %cst {dimension_numbers = #tpu.dot_dimension_numbers<[1], [0], [0], [1], [0, 0, 1, 1], [], []>} : vector<128x128xbf16>, vector<128x128xbf16>, vector<128x128xf32> -> vector<128x128xf32>
    %c0_3 = arith.constant 0 : index
    %c0_4 = arith.constant 0 : index
    %3 = vector.load %arg3[%c0_3, %c0_4] : memref<1x128xf32, #tpu.memory_space<vmem>>, vector<1x128xf32>
    %4 = vector.broadcast %3 : vector<1x128xf32> to vector<128x128xf32>
    %5 = arith.addf %2, %4 : vector<128x128xf32>
    %c0_5 = arith.constant 0 : index
    %c0_6 = arith.constant 0 : index
    %6 = vector.load %arg4[%c0_5, %c0_6] : memref<128x128xf32, #tpu.memory_space<vmem>>, vector<128x128xf32>
    %7 = arith.addf %5, %6 : vector<128x128xf32>
    %c0_7 = arith.constant 0 : index
    %c0_8 = arith.constant 0 : index
    %8 = vector.load %arg5[%c0_7, %c0_8] : memref<1x128xf32, #tpu.memory_space<vmem>>, vector<1x128xf32>
    %c0_9 = arith.constant 0 : index
    %c0_10 = arith.constant 0 : index
    %9 = vector.load %arg6[%c0_9, %c0_10] : memref<1x128xf32, #tpu.memory_space<vmem>>, vector<1x128xf32>
    %cst_11 = arith.constant dense<0.000000e+00> : vector<128xf32>
    %10 = vector.multi_reduction <add>, %7, %cst_11 [1] : vector<128x128xf32> to vector<128xf32>
    %11 = vector.shape_cast %10 : vector<128xf32> to vector<128x1xf32>
    %cst_12 = arith.constant 1.280000e+02 : f32
    %12 = vector.broadcast %cst_12 : f32 to vector<128x1xf32>
    %13 = arith.divf %11, %12 : vector<128x1xf32>
    %14 = vector.broadcast %13 : vector<128x1xf32> to vector<128x128xf32>
    %15 = arith.subf %7, %14 : vector<128x128xf32>
    %16 = arith.mulf %15, %15 : vector<128x128xf32>
    %cst_13 = arith.constant dense<0.000000e+00> : vector<128xf32>
    %17 = vector.multi_reduction <add>, %16, %cst_13 [1] : vector<128x128xf32> to vector<128xf32>
    %18 = vector.shape_cast %17 : vector<128xf32> to vector<128x1xf32>
    %cst_14 = arith.constant 1.280000e+02 : f32
    %19 = vector.broadcast %cst_14 : f32 to vector<128x1xf32>
    %20 = arith.divf %18, %19 : vector<128x1xf32>
    %21 = vector.broadcast %13 : vector<128x1xf32> to vector<128x128xf32>
    %22 = arith.subf %7, %21 : vector<128x128xf32>
    %cst_15 = arith.constant 9.99999996E-13 : f32
    %23 = vector.broadcast %cst_15 : f32 to vector<128x1xf32>
    %24 = arith.addf %20, %23 : vector<128x1xf32>
    %25 = math.rsqrt %24 : vector<128x1xf32>
    %26 = vector.broadcast %25 : vector<128x1xf32> to vector<128x128xf32>
    %27 = arith.mulf %22, %26 : vector<128x128xf32>
    %28 = vector.broadcast %8 : vector<1x128xf32> to vector<128x128xf32>
    %29 = arith.mulf %27, %28 : vector<128x128xf32>
    %30 = vector.broadcast %9 : vector<1x128xf32> to vector<128x128xf32>
    %31 = arith.addf %29, %30 : vector<128x128xf32>
    %c0_16 = arith.constant 0 : index
    %c0_17 = arith.constant 0 : index
    %32 = vector.load %arg7[%c0_16, %c0_17] : memref<128x128xf32, #tpu.memory_space<vmem>>, vector<128x128xf32>
    tpu.vector_store %arg7[%c0_16, %c0_17], %31 {strides = array<i32>} : memref<128x128xf32, #tpu.memory_space<vmem>>, vector<128x128xf32>,
    return
  }
  func.func @transform_0(%arg0: i32) -> (i32, i32) {
    %c0_i32 = arith.constant 0 : i32
    %c0_i32_0 = arith.constant 0 : i32
    return %arg0, %c0_i32 : i32, i32
  }
  func.func @transform_1(%arg0: i32) -> (i32, i32) {
    %c0_i32 = arith.constant 0 : i32
    %c0_i32_0 = arith.constant 0 : i32
    %c0_i32_1 = arith.constant 0 : i32
    return %c0_i32, %c0_i32_0 : i32, i32
  }
  func.func @transform_2(%arg0: i32) -> (i32, i32) {
    %c0_i32 = arith.constant 0 : i32
    %c0_i32_0 = arith.constant 0 : i32
    %c0_i32_1 = arith.constant 0 : i32
    return %c0_i32, %c0_i32_0 : i32, i32
  }
  func.func @transform_3(%arg0: i32) -> (i32, i32) {
    %c0_i32 = arith.constant 0 : i32
    %c0_i32_0 = arith.constant 0 : i32
    return %arg0, %c0_i32 : i32, i32
  }
  func.func @transform_4(%arg0: i32) -> (i32, i32) {
    %c0_i32 = arith.constant 0 : i32
    %c0_i32_0 = arith.constant 0 : i32
    %c0_i32_1 = arith.constant 0 : i32
    return %c0_i32, %c0_i32_0 : i32, i32
  }
  func.func @transform_5(%arg0: i32) -> (i32, i32) {
    %c0_i32 = arith.constant 0 : i32
    %c0_i32_0 = arith.constant 0 : i32
    %c0_i32_1 = arith.constant 0 : i32
    return %c0_i32, %c0_i32_0 : i32, i32
  }
  func.func @transform_6(%arg0: i32) -> (i32, i32) {
    %c0_i32 = arith.constant 0 : i32
    %c0_i32_0 = arith.constant 0 : i32
    return %arg0, %c0_i32 : i32, i32
  }
}

module attributes {stable_mosaic.version = 11 : i64} {
  func.func @dense_kernel(%arg0: i32, %arg1: memref<128x128xf32, #tpu.memory_space<vmem>>, %arg2: memref<128x512xbf16, #tpu.memory_space<vmem>>, %arg3: memref<1x512xf32, #tpu.memory_space<vmem>>, %arg4: memref<128x512xbf16, #tpu.memory_space<vmem>>) attributes {dimension_semantics = [#tpu.dimension_semantics<parallel>], iteration_bounds = array<i64: 2>, scalar_prefetch = 0 : i64, scratch_operands = 0 : i64, tpu.core_type = #tpu.core_type<tc>, window_params = [{transform_indices = @transform_0, window_bounds = array<i64: 128, 128>}, {pipeline_mode = #tpu.pipeline_mode<synchronous>, transform_indices = @transform_1, window_bounds = array<i64: 128, 512>}, {pipeline_mode = #tpu.pipeline_mode<synchronous>, transform_indices = @transform_2, window_bounds = array<i64: 1, 512>}, {transform_indices = @transform_3, window_bounds = array<i64: 128, 512>}]} {
    %c0 = arith.constant 0 : index
    %c0_0 = arith.constant 0 : index
    %0 = vector.load %arg1[%c0, %c0_0] : memref<128x128xf32, #tpu.memory_space<vmem>>, vector<128x128xf32>
    %1 = arith.truncf %0 : vector<128x128xf32> to vector<128x128xbf16>
    %c0_1 = arith.constant 0 : index
    %c0_2 = arith.constant 0 : index
    %2 = vector.load %arg2[%c0_1, %c0_2] : memref<128x512xbf16, #tpu.memory_space<vmem>>, vector<128x512xbf16>
    %cst = arith.constant dense<0.000000e+00> : vector<128x512xf32>
    %3 = tpu.matmul %1, %2, %cst {dimension_numbers = #tpu.dot_dimension_numbers<[1], [0], [0], [1], [0, 0, 1, 1], [], []>} : vector<128x128xbf16>, vector<128x512xbf16>, vector<128x512xf32> -> vector<128x512xf32>
    %c0_3 = arith.constant 0 : index
    %c0_4 = arith.constant 0 : index
    %4 = vector.load %arg3[%c0_3, %c0_4] : memref<1x512xf32, #tpu.memory_space<vmem>>, vector<1x512xf32>
    %5 = vector.broadcast %4 : vector<1x512xf32> to vector<128x512xf32>
    %6 = arith.addf %3, %5 : vector<128x512xf32>
    %cst_5 = arith.constant 5.000000e-01 : f32
    %7 = vector.broadcast %cst_5 : f32 to vector<128x512xf32>
    %8 = arith.mulf %7, %6 : vector<128x512xf32>
    %cst_6 = arith.constant 4.471500e-02 : f32
    %9 = vector.broadcast %cst_6 : f32 to vector<128x512xf32>
    %10 = arith.mulf %9, %6 : vector<128x512xf32>
    %11 = arith.mulf %10, %6 : vector<128x512xf32>
    %12 = arith.mulf %11, %6 : vector<128x512xf32>
    %13 = arith.addf %6, %12 : vector<128x512xf32>
    %cst_7 = arith.constant 0.797884583 : f32
    %14 = vector.broadcast %cst_7 : f32 to vector<128x512xf32>
    %15 = arith.mulf %14, %13 : vector<128x512xf32>
    %16 = math.tanh %15 : vector<128x512xf32>
    %cst_8 = arith.constant 1.000000e+00 : f32
    %17 = vector.broadcast %cst_8 : f32 to vector<128x512xf32>
    %18 = arith.addf %17, %16 : vector<128x512xf32>
    %19 = arith.mulf %8, %18 : vector<128x512xf32>
    %20 = arith.truncf %19 : vector<128x512xf32> to vector<128x512xbf16>
    %c0_9 = arith.constant 0 : index
    %c0_10 = arith.constant 0 : index
    %21 = vector.load %arg4[%c0_9, %c0_10] : memref<128x512xbf16, #tpu.memory_space<vmem>>, vector<128x512xbf16>
    tpu.vector_store %arg4[%c0_9, %c0_10], %20 {strides = array<i32>} : memref<128x512xbf16, #tpu.memory_space<vmem>>, vector<128x512xbf16>,
    return
  }
  func.func @transform_0(%arg0: i32) -> (i32, i32) {
    %c0_i32 = arith.constant 0 : i32
    %c0_i32_0 = arith.constant 0 : i32
    return %arg0, %c0_i32 : i32, i32
  }
  func.func @transform_1(%arg0: i32) -> (i32, i32) {
    %c0_i32 = arith.constant 0 : i32
    %c0_i32_0 = arith.constant 0 : i32
    %c0_i32_1 = arith.constant 0 : i32
    return %c0_i32, %c0_i32_0 : i32, i32
  }
  func.func @transform_2(%arg0: i32) -> (i32, i32) {
    %c0_i32 = arith.constant 0 : i32
    %c0_i32_0 = arith.constant 0 : i32
    %c0_i32_1 = arith.constant 0 : i32
    return %c0_i32, %c0_i32_0 : i32, i32
  }
  func.func @transform_3(%arg0: i32) -> (i32, i32) {
    %c0_i32 = arith.constant 0 : i32
    %c0_i32_0 = arith.constant 0 : i32
    return %arg0, %c0_i32 : i32, i32
  }
}

module attributes {stable_mosaic.version = 11 : i64} {
  func.func @dense_add_ln_kernel(%arg0: i32, %arg1: memref<128x512xbf16, #tpu.memory_space<vmem>>, %arg2: memref<512x128xbf16, #tpu.memory_space<vmem>>, %arg3: memref<1x128xf32, #tpu.memory_space<vmem>>, %arg4: memref<128x128xf32, #tpu.memory_space<vmem>>, %arg5: memref<1x128xf32, #tpu.memory_space<vmem>>, %arg6: memref<1x128xf32, #tpu.memory_space<vmem>>, %arg7: memref<128x128xf32, #tpu.memory_space<vmem>>) attributes {dimension_semantics = [#tpu.dimension_semantics<parallel>], iteration_bounds = array<i64: 2>, scalar_prefetch = 0 : i64, scratch_operands = 0 : i64, tpu.core_type = #tpu.core_type<tc>, window_params = [{transform_indices = @transform_0, window_bounds = array<i64: 128, 512>}, {pipeline_mode = #tpu.pipeline_mode<synchronous>, transform_indices = @transform_1, window_bounds = array<i64: 512, 128>}, {pipeline_mode = #tpu.pipeline_mode<synchronous>, transform_indices = @transform_2, window_bounds = array<i64: 1, 128>}, {transform_indices = @transform_3, window_bounds = array<i64: 128, 128>}, {pipeline_mode = #tpu.pipeline_mode<synchronous>, transform_indices = @transform_4, window_bounds = array<i64: 1, 128>}, {pipeline_mode = #tpu.pipeline_mode<synchronous>, transform_indices = @transform_5, window_bounds = array<i64: 1, 128>}, {transform_indices = @transform_6, window_bounds = array<i64: 128, 128>}]} {
    %c0 = arith.constant 0 : index
    %c0_0 = arith.constant 0 : index
    %0 = vector.load %arg1[%c0, %c0_0] : memref<128x512xbf16, #tpu.memory_space<vmem>>, vector<128x512xbf16>
    %c0_1 = arith.constant 0 : index
    %c0_2 = arith.constant 0 : index
    %1 = vector.load %arg2[%c0_1, %c0_2] : memref<512x128xbf16, #tpu.memory_space<vmem>>, vector<512x128xbf16>
    %cst = arith.constant dense<0.000000e+00> : vector<128x128xf32>
    %2 = tpu.matmul %0, %1, %cst {dimension_numbers = #tpu.dot_dimension_numbers<[1], [0], [0], [1], [0, 0, 1, 1], [], []>} : vector<128x512xbf16>, vector<512x128xbf16>, vector<128x128xf32> -> vector<128x128xf32>
    %c0_3 = arith.constant 0 : index
    %c0_4 = arith.constant 0 : index
    %3 = vector.load %arg3[%c0_3, %c0_4] : memref<1x128xf32, #tpu.memory_space<vmem>>, vector<1x128xf32>
    %4 = vector.broadcast %3 : vector<1x128xf32> to vector<128x128xf32>
    %5 = arith.addf %2, %4 : vector<128x128xf32>
    %c0_5 = arith.constant 0 : index
    %c0_6 = arith.constant 0 : index
    %6 = vector.load %arg4[%c0_5, %c0_6] : memref<128x128xf32, #tpu.memory_space<vmem>>, vector<128x128xf32>
    %7 = arith.addf %5, %6 : vector<128x128xf32>
    %c0_7 = arith.constant 0 : index
    %c0_8 = arith.constant 0 : index
    %8 = vector.load %arg5[%c0_7, %c0_8] : memref<1x128xf32, #tpu.memory_space<vmem>>, vector<1x128xf32>
    %c0_9 = arith.constant 0 : index
    %c0_10 = arith.constant 0 : index
    %9 = vector.load %arg6[%c0_9, %c0_10] : memref<1x128xf32, #tpu.memory_space<vmem>>, vector<1x128xf32>
    %cst_11 = arith.constant dense<0.000000e+00> : vector<128xf32>
    %10 = vector.multi_reduction <add>, %7, %cst_11 [1] : vector<128x128xf32> to vector<128xf32>
    %11 = vector.shape_cast %10 : vector<128xf32> to vector<128x1xf32>
    %cst_12 = arith.constant 1.280000e+02 : f32
    %12 = vector.broadcast %cst_12 : f32 to vector<128x1xf32>
    %13 = arith.divf %11, %12 : vector<128x1xf32>
    %14 = vector.broadcast %13 : vector<128x1xf32> to vector<128x128xf32>
    %15 = arith.subf %7, %14 : vector<128x128xf32>
    %16 = arith.mulf %15, %15 : vector<128x128xf32>
    %cst_13 = arith.constant dense<0.000000e+00> : vector<128xf32>
    %17 = vector.multi_reduction <add>, %16, %cst_13 [1] : vector<128x128xf32> to vector<128xf32>
    %18 = vector.shape_cast %17 : vector<128xf32> to vector<128x1xf32>
    %cst_14 = arith.constant 1.280000e+02 : f32
    %19 = vector.broadcast %cst_14 : f32 to vector<128x1xf32>
    %20 = arith.divf %18, %19 : vector<128x1xf32>
    %21 = vector.broadcast %13 : vector<128x1xf32> to vector<128x128xf32>
    %22 = arith.subf %7, %21 : vector<128x128xf32>
    %cst_15 = arith.constant 9.99999996E-13 : f32
    %23 = vector.broadcast %cst_15 : f32 to vector<128x1xf32>
    %24 = arith.addf %20, %23 : vector<128x1xf32>
    %25 = math.rsqrt %24 : vector<128x1xf32>
    %26 = vector.broadcast %25 : vector<128x1xf32> to vector<128x128xf32>
    %27 = arith.mulf %22, %26 : vector<128x128xf32>
    %28 = vector.broadcast %8 : vector<1x128xf32> to vector<128x128xf32>
    %29 = arith.mulf %27, %28 : vector<128x128xf32>
    %30 = vector.broadcast %9 : vector<1x128xf32> to vector<128x128xf32>
    %31 = arith.addf %29, %30 : vector<128x128xf32>
    %c0_16 = arith.constant 0 : index
    %c0_17 = arith.constant 0 : index
    %32 = vector.load %arg7[%c0_16, %c0_17] : memref<128x128xf32, #tpu.memory_space<vmem>>, vector<128x128xf32>
    tpu.vector_store %arg7[%c0_16, %c0_17], %31 {strides = array<i32>} : memref<128x128xf32, #tpu.memory_space<vmem>>, vector<128x128xf32>,
    return
  }
  func.func @transform_0(%arg0: i32) -> (i32, i32) {
    %c0_i32 = arith.constant 0 : i32
    %c0_i32_0 = arith.constant 0 : i32
    return %arg0, %c0_i32 : i32, i32
  }
  func.func @transform_1(%arg0: i32) -> (i32, i32) {
    %c0_i32 = arith.constant 0 : i32
    %c0_i32_0 = arith.constant 0 : i32
    %c0_i32_1 = arith.constant 0 : i32
    return %c0_i32, %c0_i32_0 : i32, i32
  }
  func.func @transform_2(%arg0: i32) -> (i32, i32) {
    %c0_i32 = arith.constant 0 : i32
    %c0_i32_0 = arith.constant 0 : i32
    %c0_i32_1 = arith.constant 0 : i32
    return %c0_i32, %c0_i32_0 : i32, i32
  }
  func.func @transform_3(%arg0: i32) -> (i32, i32) {
    %c0_i32 = arith.constant 0 : i32
    %c0_i32_0 = arith.constant 0 : i32
    return %arg0, %c0_i32 : i32, i32
  }
  func.func @transform_4(%arg0: i32) -> (i32, i32) {
    %c0_i32 = arith.constant 0 : i32
    %c0_i32_0 = arith.constant 0 : i32
    %c0_i32_1 = arith.constant 0 : i32
    return %c0_i32, %c0_i32_0 : i32, i32
  }
  func.func @transform_5(%arg0: i32) -> (i32, i32) {
    %c0_i32 = arith.constant 0 : i32
    %c0_i32_0 = arith.constant 0 : i32
    %c0_i32_1 = arith.constant 0 : i32
    return %c0_i32, %c0_i32_0 : i32, i32
  }
  func.func @transform_6(%arg0: i32) -> (i32, i32) {
    %c0_i32 = arith.constant 0 : i32
    %c0_i32_0 = arith.constant 0 : i32
    return %arg0, %c0_i32 : i32, i32
  }
}

module attributes {stable_mosaic.version = 11 : i64} {
  func.func @dense_add_ln_kernel(%arg0: i32, %arg1: memref<128x512xbf16, #tpu.memory_space<vmem>>, %arg2: memref<512x128xbf16, #tpu.memory_space<vmem>>, %arg3: memref<1x128xf32, #tpu.memory_space<vmem>>, %arg4: memref<128x128xf32, #tpu.memory_space<vmem>>, %arg5: memref<1x128xf32, #tpu.memory_space<vmem>>, %arg6: memref<1x128xf32, #tpu.memory_space<vmem>>, %arg7: memref<128x128xf32, #tpu.memory_space<vmem>>) attributes {dimension_semantics = [#tpu.dimension_semantics<parallel>], iteration_bounds = array<i64: 2>, scalar_prefetch = 0 : i64, scratch_operands = 0 : i64, tpu.core_type = #tpu.core_type<tc>, window_params = [{transform_indices = @transform_0, window_bounds = array<i64: 128, 512>}, {pipeline_mode = #tpu.pipeline_mode<synchronous>, transform_indices = @transform_1, window_bounds = array<i64: 512, 128>}, {pipeline_mode = #tpu.pipeline_mode<synchronous>, transform_indices = @transform_2, window_bounds = array<i64: 1, 128>}, {transform_indices = @transform_3, window_bounds = array<i64: 128, 128>}, {pipeline_mode = #tpu.pipeline_mode<synchronous>, transform_indices = @transform_4, window_bounds = array<i64: 1, 128>}, {pipeline_mode = #tpu.pipeline_mode<synchronous>, transform_indices = @transform_5, window_bounds = array<i64: 1, 128>}, {transform_indices = @transform_6, window_bounds = array<i64: 128, 128>}]} {
    %c0 = arith.constant 0 : index
    %c0_0 = arith.constant 0 : index
    %0 = vector.load %arg1[%c0, %c0_0] : memref<128x512xbf16, #tpu.memory_space<vmem>>, vector<128x512xbf16>
    %c0_1 = arith.constant 0 : index
    %c0_2 = arith.constant 0 : index
    %1 = vector.load %arg2[%c0_1, %c0_2] : memref<512x128xbf16, #tpu.memory_space<vmem>>, vector<512x128xbf16>
    %cst = arith.constant dense<0.000000e+00> : vector<128x128xf32>
    %2 = tpu.matmul %0, %1, %cst {dimension_numbers = #tpu.dot_dimension_numbers<[1], [0], [0], [1], [0, 0, 1, 1], [], []>} : vector<128x512xbf16>, vector<512x128xbf16>, vector<128x128xf32> -> vector<128x128xf32>
    %c0_3 = arith.constant 0 : index
    %c0_4 = arith.constant 0 : index
    %3 = vector.load %arg3[%c0_3, %c0_4] : memref<1x128xf32, #tpu.memory_space<vmem>>, vector<1x128xf32>
    %4 = vector.broadcast %3 : vector<1x128xf32> to vector<128x128xf32>
    %5 = arith.addf %2, %4 : vector<128x128xf32>
    %c0_5 = arith.constant 0 : index
    %c0_6 = arith.constant 0 : index
    %6 = vector.load %arg4[%c0_5, %c0_6] : memref<128x128xf32, #tpu.memory_space<vmem>>, vector<128x128xf32>
    %7 = arith.addf %5, %6 : vector<128x128xf32>
    %c0_7 = arith.constant 0 : index
    %c0_8 = arith.constant 0 : index
    %8 = vector.load %arg5[%c0_7, %c0_8] : memref<1x128xf32, #tpu.memory_space<vmem>>, vector<1x128xf32>
    %c0_9 = arith.constant 0 : index
    %c0_10 = arith.constant 0 : index
    %9 = vector.load %arg6[%c0_9, %c0_10] : memref<1x128xf32, #tpu.memory_space<vmem>>, vector<1x128xf32>
    %cst_11 = arith.constant dense<0.000000e+00> : vector<128xf32>
    %10 = vector.multi_reduction <add>, %7, %cst_11 [1] : vector<128x128xf32> to vector<128xf32>
    %11 = vector.shape_cast %10 : vector<128xf32> to vector<128x1xf32>
    %cst_12 = arith.constant 1.280000e+02 : f32
    %12 = vector.broadcast %cst_12 : f32 to vector<128x1xf32>
    %13 = arith.divf %11, %12 : vector<128x1xf32>
    %14 = vector.broadcast %13 : vector<128x1xf32> to vector<128x128xf32>
    %15 = arith.subf %7, %14 : vector<128x128xf32>
    %16 = arith.mulf %15, %15 : vector<128x128xf32>
    %cst_13 = arith.constant dense<0.000000e+00> : vector<128xf32>
    %17 = vector.multi_reduction <add>, %16, %cst_13 [1] : vector<128x128xf32> to vector<128xf32>
    %18 = vector.shape_cast %17 : vector<128xf32> to vector<128x1xf32>
    %cst_14 = arith.constant 1.280000e+02 : f32
    %19 = vector.broadcast %cst_14 : f32 to vector<128x1xf32>
    %20 = arith.divf %18, %19 : vector<128x1xf32>
    %21 = vector.broadcast %13 : vector<128x1xf32> to vector<128x128xf32>
    %22 = arith.subf %7, %21 : vector<128x128xf32>
    %cst_15 = arith.constant 9.99999996E-13 : f32
    %23 = vector.broadcast %cst_15 : f32 to vector<128x1xf32>
    %24 = arith.addf %20, %23 : vector<128x1xf32>
    %25 = math.rsqrt %24 : vector<128x1xf32>
    %26 = vector.broadcast %25 : vector<128x1xf32> to vector<128x128xf32>
    %27 = arith.mulf %22, %26 : vector<128x128xf32>
    %28 = vector.broadcast %8 : vector<1x128xf32> to vector<128x128xf32>
    %29 = arith.mulf %27, %28 : vector<128x128xf32>
    %30 = vector.broadcast %9 : vector<1x128xf32> to vector<128x128xf32>
    %31 = arith.addf %29, %30 : vector<128x128xf32>
    %c0_16 = arith.constant 0 : index
    %c0_17 = arith.constant 0 : index
    %32 = vector.load %arg7[%c0_16, %c0_17] : memref<128x128xf32, #tpu.memory_space<vmem>>, vector<128x128xf32>
    tpu.vector_store %arg7[%c0_16, %c0_17], %31 {strides = array<i32>} : memref<128x128xf32, #tpu.memory_space<vmem>>, vector<128x128xf32>,
    return
  }
  func.func @transform_0(%arg0: i32) -> (i32, i32) {
    %c0_i32 = arith.constant 0 : i32
    %c0_i32_0 = arith.constant 0 : i32
    return %arg0, %c0_i32 : i32, i32
  }
  func.func @transform_1(%arg0: i32) -> (i32, i32) {
    %c0_i32 = arith.constant 0 : i32
    %c0_i32_0 = arith.constant 0 : i32
    %c0_i32_1 = arith.constant 0 : i32
    return %c0_i32, %c0_i32_0 : i32, i32
  }
  func.func @transform_2(%arg0: i32) -> (i32, i32) {
    %c0_i32 = arith.constant 0 : i32
    %c0_i32_0 = arith.constant 0 : i32
    %c0_i32_1 = arith.constant 0 : i32
    return %c0_i32, %c0_i32_0 : i32, i32
  }
  func.func @transform_3(%arg0: i32) -> (i32, i32) {
    %c0_i32 = arith.constant 0 : i32
    %c0_i32_0 = arith.constant 0 : i32
    return %arg0, %c0_i32 : i32, i32
  }
  func.func @transform_4(%arg0: i32) -> (i32, i32) {
    %c0_i32 = arith.constant 0 : i32
    %c0_i32_0 = arith.constant 0 : i32
    %c0_i32_1 = arith.constant 0 : i32
    return %c0_i32, %c0_i32_0 : i32, i32
  }
  func.func @transform_5(%arg0: i32) -> (i32, i32) {
    %c0_i32 = arith.constant 0 : i32
    %c0_i32_0 = arith.constant 0 : i32
    %c0_i32_1 = arith.constant 0 : i32
    return %c0_i32, %c0_i32_0 : i32, i32
  }
  func.func @transform_6(%arg0: i32) -> (i32, i32) {
    %c0_i32 = arith.constant 0 : i32
    %c0_i32_0 = arith.constant 0 : i32
    return %arg0, %c0_i32 : i32, i32
  }
}

</mosaic_0001>

<llo_original>
// kernel: encoder_forward.11
$region0: #{encoder_forward.11}
  #allocation0 [shape = 'u32[]', space=smem, size = 0x4, offset = 0x4, fixed_abs, tag = 'smem constant byte address 0x4 - core index']
  #allocation1 [shape = 'u32[144,128]{1,0:T(1,128)}', space=vmem, size = 0x12000, scoped, tag = 'internal scratch']
  %s0 = inlined_call_operand.vmem [shape: f32[256,128], index: 0, kind: input, shape index: {}]
  %s1 = inlined_call_operand.vmem [shape: f32[1,128], index: 1, kind: input, shape index: {}]
  %s2 = inlined_call_operand.vmem [shape: f32[1,128], index: 2, kind: input, shape index: {}]
  %s3 = inlined_call_operand.vmem [shape: f32[256,128], index: 3, kind: output, shape index: {}]
  %s4 = sld [smem:[#allocation0]]
  $region45: #{encoder_forward.11} parent=0
    _
  %s6 = ssub.s32 1, %s4
  %s7 = scalar_select 0, %s6, %s4
  loop: start=0, step=1, limit=4
  $region2: #{encoder_forward.11} parent=0 // loop_pre_header
    _
  $region3: #{encoder_forward.11} parent=0 // loop_header
    %s9 = sphi 0, %s13
    %p10 = scmp.ge.s32.totalorder %s9, 4
    %s19 = sphi 0, %s21
    %s22 = sphi 0, %s19
    %s23 = sphi 0, %s22
    %s39 = sphi 0, %s23
    %s43 = sphi 0, %s43
    %s45 = sphi 0, %s43
    %s46 = sphi 0, %s45
    %s60 = sphi 0, %s46
    %s64 = sphi 0, %s64
    %s66 = sphi 0, %s64
    %s67 = sphi 0, %s66
    %s81 = sphi 0, %s67
    %s87 = sphi 0, %s89
    %s90 = sphi 0, %s87
    %s91 = sphi 0, %s90
    %s107 = sphi 0, %s91
  $region4: #{encoder_forward.11} parent=0 // loop_header_branch
    %12 = sbr.rel (%p10) target = $region8
  $region5: #{encoder_forward.11} parent=0 // loop_body
    %s14 = ssub.s32 %s9, 1
    %s15 = ssub.s32 %s9, 2
    %s16 = sadd.s32 %s9, 1
    %s17 = ssub.s32 %s9, %s16
    %p18 = scmp.eq.s32.totalorder %s17, 0
    %s20 = sadd.s32 %s19, 1
    %s21 = scalar_select %p18, %s19, %s20
    %p24 = pneg %p18
    %p25 = scmp.eq.s32.totalorder %s9, 1
    %p26 = por %p24, %p25
    %p27 = scmp.ne.s32.totalorder %s19, %s22
    %p28 = scmp.eq.s32.totalorder %s9, 0
    %p29 = por %p27, %p28
    %p30 = scmp.ne.s32.totalorder %s19, %s22
    %p31 = scmp.eq.s32.totalorder %s14, 1
    %p32 = por %p30, %p31
    %p33 = scmp.ne.s32.totalorder %s22, %s23
    %p34 = scmp.eq.s32.totalorder %s14, 0
    %p35 = por %p33, %p34
    %p36 = scmp.ne.s32.totalorder %s22, %s23
    %p37 = scmp.eq.s32.totalorder %s15, 1
    %p38 = por %p36, %p37
    %p40 = scmp.ne.s32.totalorder %s23, %s39
    %p41 = scmp.eq.s32.totalorder %s15, 0
    %p42 = por %p40, %p41
    %s44 = sadd.s32 %s43, 1
    %p47 = scmp.eq.s32.totalorder %s9, 1
    %p48 = scmp.ne.s32.totalorder %s43, %s45
    %p49 = scmp.eq.s32.totalorder %s9, 0
    %p50 = por %p48, %p49
    %p51 = scmp.ne.s32.totalorder %s43, %s45
    %p52 = scmp.eq.s32.totalorder %s14, 1
    %p53 = por %p51, %p52
    %p54 = scmp.ne.s32.totalorder %s45, %s46
    %p55 = scmp.eq.s32.totalorder %s14, 0
    %p56 = por %p54, %p55
    %p57 = scmp.ne.s32.totalorder %s45, %s46
    %p58 = scmp.eq.s32.totalorder %s15, 1
    %p59 = por %p57, %p58
    %p61 = scmp.ne.s32.totalorder %s46, %s60
    %p62 = scmp.eq.s32.totalorder %s15, 0
    %p63 = por %p61, %p62
    %s65 = sadd.s32 %s64, 1
    %p68 = scmp.eq.s32.totalorder %s9, 1
    %p69 = scmp.ne.s32.totalorder %s64, %s66
    %p70 = scmp.eq.s32.totalorder %s9, 0
    %p71 = por %p69, %p70
    %p72 = scmp.ne.s32.totalorder %s64, %s66
    %p73 = scmp.eq.s32.totalorder %s14, 1
    %p74 = por %p72, %p73
    %p75 = scmp.ne.s32.totalorder %s66, %s67
    %p76 = scmp.eq.s32.totalorder %s14, 0
    %p77 = por %p75, %p76
    %p78 = scmp.ne.s32.totalorder %s66, %s67
    %p79 = scmp.eq.s32.totalorder %s15, 1
    %p80 = por %p78, %p79
    %p82 = scmp.ne.s32.totalorder %s67, %s81
    %p83 = scmp.eq.s32.totalorder %s15, 0
    %p84 = por %p82, %p83
    %s85 = ssub.s32 %s9, %s16
    %p86 = scmp.eq.s32.totalorder %s85, 0
    %s88 = sadd.s32 %s87, 1
    %s89 = scalar_select %p86, %s87, %s88
    %p92 = pneg %p86
    %p93 = scmp.eq.s32.totalorder %s9, 1
    %p94 = por %p92, %p93
    %p95 = scmp.ne.s32.totalorder %s87, %s90
    %p96 = scmp.eq.s32.totalorder %s9, 0
    %p97 = por %p95, %p96
    %p98 = scmp.ne.s32.totalorder %s87, %s90
    %p99 = scmp.eq.s32.totalorder %s14, 1
    %p100 = por %p98, %p99
    %p101 = scmp.ne.s32.totalorder %s90, %s91
    %p102 = scmp.eq.s32.totalorder %s14, 0
    %p103 = por %p101, %p102
    %p104 = scmp.ne.s32.totalorder %s90, %s91
    %p105 = scmp.eq.s32.totalorder %s15, 1
    %p106 = por %p104, %p105
    %p108 = scmp.ne.s32.totalorder %s91, %s107
    %p109 = scmp.eq.s32.totalorder %s15, 0
    %p110 = por %p108, %p109
    %p111 = scmp.le.s32.totalorder 1, %s9
    %p112 = scmp.lt.s32.totalorder %s9, 3
    %p113 = pnand %p111, %p112
    %p114 = pneg %p113
    // Predicated region
    $region9: #{encoder_forward.11} parent=5 // pred_check
      _
    $region10: #{encoder_forward.11} parent=5 // pred_check_branch
      %116 = sbr.rel (%p113) target = $region12
    $region11: #{encoder_forward.11} parent=5 // pred_region
      %s117 = ssub.s32 %s9, 1
      // Predicated region
      $region13: #{encoder_forward.11} parent=11 // pred_check
        %p118 = pneg %p56
      $region14: #{encoder_forward.11} parent=11 // pred_check_branch
        %120 = sbr.rel (%p118) target = $region16
      $region15: #{encoder_forward.11} parent=11 // pred_region
        _
      $region16: #{encoder_forward.11} parent=11 // pred_fallthru
        _
      // Predicated region
      $region17: #{encoder_forward.11} parent=11 // pred_check
        %p121 = pneg %p77
      $region18: #{encoder_forward.11} parent=11 // pred_check_branch
        %123 = sbr.rel (%p121) target = $region20
      $region19: #{encoder_forward.11} parent=11 // pred_region
        _
      $region20: #{encoder_forward.11} parent=11 // pred_fallthru
        _
    $region12: #{encoder_forward.11} parent=5 // pred_fallthru
      _
    %p124 = scmp.lt.s32.totalorder %s9, 2
    // Predicated region
    $region21: #{encoder_forward.11} parent=5 // pred_check
      %p125 = pneg %p124
    $region22: #{encoder_forward.11} parent=5 // pred_check_branch
      %127 = sbr.rel (%p125) target = $region24
    $region23: #{encoder_forward.11} parent=5 // pred_region
      // Predicated region
      $region25: #{encoder_forward.11} parent=23 // pred_check
        %p128 = pneg %p29
      $region26: #{encoder_forward.11} parent=23 // pred_check_branch
        %130 = sbr.rel (%p128) target = $region28
      $region27: #{encoder_forward.11} parent=23 // pred_region
        %s131 = smul.u32 16, %s9
        %p132 = scmp.lt.s32.totalorder %s131, 31
        %s133 = scalar_select %p132, %s131, 31
        %s134 = smul.addr %s133, 8
        %s135 = scalar_lea.vmem %s0, %s134
        %s136 = smul.u32 16, %s9
      $region28: #{encoder_forward.11} parent=23 // pred_fallthru
        _
    $region24: #{encoder_forward.11} parent=5 // pred_fallthru
      _
    %p137 = scmp.le.s32.totalorder 1, %s9
    %p138 = scmp.lt.s32.totalorder %s9, 3
    %p139 = pnand %p137, %p138
    %p140 = pneg %p139
    // Predicated region
    $region29: #{encoder_forward.11} parent=5 // pred_check
      _
    $region30: #{encoder_forward.11} parent=5 // pred_check_branch
      %142 = sbr.rel (%p139) target = $region32
    $region31: #{encoder_forward.11} parent=5 // pred_region
      %s143 = ssub.s32 %s9, 1
      %s144 = smul.u32 16, %s14
      %p145 = scmp.lt.s32.totalorder %s144, 31
      %s146 = scalar_select %p145, %s144, 31
      %s147 = smul.addr %s146, 8
      %s148 = scalar_lea.vmem %s0, %s147
      %p149 = pneg %p35
      %p150 = pneg %p32
      %p151 = pneg %p56
      %p152 = pneg %p53
      %p153 = pneg %p77
      %p154 = pneg %p74
      %p155 = pneg %p103
      %p156 = pneg %p100
      %s157 = smul.u32 16, %s14
      %p158 = scmp.lt.s32.totalorder %s157, 31
      %s159 = scalar_select %p158, %s157, 31
      %s160 = smul.addr %s159, 8
      %s161 = scalar_lea.vmem %s3, %s160
      %s162 = smul.u32 16, %s14
      %p163 = scmp.lt.s32.totalorder %s162, 31
      %s164 = scalar_select %p163, %s162, 31
      %s165 = smul.addr %s164, 8
      %s166 = scalar_lea.vmem %s0, %s165
      %s167 = smul.u32 16, %s14
      %s168 = smul.u32 16, %s14
      %p169 = scmp.lt.s32.totalorder %s168, 31
      %s170 = scalar_select %p169, %s168, 31
      %s171 = smul.addr %s170, 8
      %s172 = scalar_lea.vmem %s3, %s171
      %s173 = smul.u32 16, %s14
      %v174 = vld [vmem:[%s166] sm:$0xff]
      %v175 = vld [vmem:[%s166 + $0x8] sm:$0xff]
      %v176 = vld [vmem:[%s166 + $0x10] sm:$0xff]
      %v177 = vld [vmem:[%s166 + $0x18] sm:$0xff]
      %v178 = vld [vmem:[%s166 + $0x20] sm:$0xff]
      %v179 = vld [vmem:[%s166 + $0x28] sm:$0xff]
      %v180 = vld [vmem:[%s166 + $0x30] sm:$0xff]
      %v181 = vld [vmem:[%s166 + $0x38] sm:$0xff]
      %v182 = vld [vmem:[%s166 + $0x40] sm:$0xff]
      %v183 = vld [vmem:[%s166 + $0x48] sm:$0xff]
      %v184 = vld [vmem:[%s166 + $0x50] sm:$0xff]
      %v185 = vld [vmem:[%s166 + $0x58] sm:$0xff]
      %v186 = vld [vmem:[%s166 + $0x60] sm:$0xff]
      %v187 = vld [vmem:[%s166 + $0x68] sm:$0xff]
      %v188 = vld [vmem:[%s166 + $0x70] sm:$0xff]
      %v189 = vld [vmem:[%s166 + $0x78] sm:$0xff]
      %v190 = vld [vmem:[%s1] sm:$0x1]
      %v191 = vld [vmem:[%s2] sm:$0x1]
      %192 = vadd.xlane.f32.xlu0 %v174
      %v193 = vpop.xlane.xlu0 %192
      %194 = vadd.xlane.f32.xlu0 %v175
      %v195 = vpop.xlane.xlu0 %194
      %196 = vadd.xlane.f32.xlu0 %v176
      %v197 = vpop.xlane.xlu0 %196
      %198 = vadd.xlane.f32.xlu0 %v177
      %v199 = vpop.xlane.xlu0 %198
      %200 = vadd.xlane.f32.xlu0 %v178
      %v201 = vpop.xlane.xlu0 %200
      %202 = vadd.xlane.f32.xlu0 %v179
      %v203 = vpop.xlane.xlu0 %202
      %204 = vadd.xlane.f32.xlu0 %v180
      %v205 = vpop.xlane.xlu0 %204
      %206 = vadd.xlane.f32.xlu0 %v181
      %v207 = vpop.xlane.xlu0 %206
      %208 = vadd.xlane.f32.xlu0 %v182
      %v209 = vpop.xlane.xlu0 %208
      %210 = vadd.xlane.f32.xlu0 %v183
      %v211 = vpop.xlane.xlu0 %210
      %212 = vadd.xlane.f32.xlu0 %v184
      %v213 = vpop.xlane.xlu0 %212
      %214 = vadd.xlane.f32.xlu0 %v185
      %v215 = vpop.xlane.xlu0 %214
      %216 = vadd.xlane.f32.xlu0 %v186
      %v217 = vpop.xlane.xlu0 %216
      %218 = vadd.xlane.f32.xlu0 %v187
      %v219 = vpop.xlane.xlu0 %218
      %220 = vadd.xlane.f32.xlu0 %v188
      %v221 = vpop.xlane.xlu0 %220
      %222 = vadd.xlane.f32.xlu0 %v189
      %v223 = vpop.xlane.xlu0 %222
      %v224 = vrcp.pop 128.0
      %v225 = vmul.f32 %v193, %v224
      %v226 = vmul.f32 %v195, %v224
      %v227 = vmul.f32 %v197, %v224
      %v228 = vmul.f32 %v199, %v224
      %v229 = vmul.f32 %v201, %v224
      %v230 = vmul.f32 %v203, %v224
      %v231 = vmul.f32 %v205, %v224
      %v232 = vmul.f32 %v207, %v224
      %v233 = vmul.f32 %v209, %v224
      %v234 = vmul.f32 %v211, %v224
      %v235 = vmul.f32 %v213, %v224
      %v236 = vmul.f32 %v215, %v224
      %v237 = vmul.f32 %v217, %v224
      %v238 = vmul.f32 %v219, %v224
      %v239 = vmul.f32 %v221, %v224
      %v240 = vmul.f32 %v223, %v224
      %v241 = vsub.f32 %v174, %v225
      %v242 = vsub.f32 %v175, %v226
      %v243 = vsub.f32 %v176, %v227
      %v244 = vsub.f32 %v177, %v228
      %v245 = vsub.f32 %v178, %v229
      %v246 = vsub.f32 %v179, %v230
      %v247 = vsub.f32 %v180, %v231
      %v248 = vsub.f32 %v181, %v232
      %v249 = vsub.f32 %v182, %v233
      %v250 = vsub.f32 %v183, %v234
      %v251 = vsub.f32 %v184, %v235
      %v252 = vsub.f32 %v185, %v236
      %v253 = vsub.f32 %v186, %v237
      %v254 = vsub.f32 %v187, %v238
      %v255 = vsub.f32 %v188, %v239
      %v256 = vsub.f32 %v189, %v240
      %v257 = vmul.f32 %v241, %v241
      %v258 = vmul.f32 %v242, %v242
      %v259 = vmul.f32 %v243, %v243
      %v260 = vmul.f32 %v244, %v244
      %v261 = vmul.f32 %v245, %v245
      %v262 = vmul.f32 %v246, %v246
      %v263 = vmul.f32 %v247, %v247
      %v264 = vmul.f32 %v248, %v248
      %v265 = vmul.f32 %v249, %v249
      %v266 = vmul.f32 %v250, %v250
      %v267 = vmul.f32 %v251, %v251
      %v268 = vmul.f32 %v252, %v252
      %v269 = vmul.f32 %v253, %v253
      %v270 = vmul.f32 %v254, %v254
      %v271 = vmul.f32 %v255, %v255
      %v272 = vmul.f32 %v256, %v256
      %273 = vadd.xlane.f32.xlu0 %v257
      %v274 = vpop.xlane.xlu0 %273
      %275 = vadd.xlane.f32.xlu0 %v258
      %v276 = vpop.xlane.xlu0 %275
      %277 = vadd.xlane.f32.xlu0 %v259
      %v278 = vpop.xlane.xlu0 %277
      %279 = vadd.xlane.f32.xlu0 %v260
      %v280 = vpop.xlane.xlu0 %279
      %281 = vadd.xlane.f32.xlu0 %v261
      %v282 = vpop.xlane.xlu0 %281
      %283 = vadd.xlane.f32.xlu0 %v262
      %v284 = vpop.xlane.xlu0 %283
      %285 = vadd.xlane.f32.xlu0 %v263
      %v286 = vpop.xlane.xlu0 %285
      %287 = vadd.xlane.f32.xlu0 %v264
      %v288 = vpop.xlane.xlu0 %287
      %289 = vadd.xlane.f32.xlu0 %v265
      %v290 = vpop.xlane.xlu0 %289
      %291 = vadd.xlane.f32.xlu0 %v266
      %v292 = vpop.xlane.xlu0 %291
      %293 = vadd.xlane.f32.xlu0 %v267
      %v294 = vpop.xlane.xlu0 %293
      %295 = vadd.xlane.f32.xlu0 %v268
      %v296 = vpop.xlane.xlu0 %295
      %297 = vadd.xlane.f32.xlu0 %v269
      %v298 = vpop.xlane.xlu0 %297
      %299 = vadd.xlane.f32.xlu0 %v270
      %v300 = vpop.xlane.xlu0 %299
      %301 = vadd.xlane.f32.xlu0 %v271
      %v302 = vpop.xlane.xlu0 %301
      %303 = vadd.xlane.f32.xlu0 %v272
      %v304 = vpop.xlane.xlu0 %303
      %v305 = vmul.f32 %v274, %v224
      %v306 = vmul.f32 %v276, %v224
      %v307 = vmul.f32 %v278, %v224
      %v308 = vmul.f32 %v280, %v224
      %v309 = vmul.f32 %v282, %v224
      %v310 = vmul.f32 %v284, %v224
      %v311 = vmul.f32 %v286, %v224
      %v312 = vmul.f32 %v288, %v224
      %v313 = vmul.f32 %v290, %v224
      %v314 = vmul.f32 %v292, %v224
      %v315 = vmul.f32 %v294, %v224
      %v316 = vmul.f32 %v296, %v224
      %v317 = vmul.f32 %v298, %v224
      %v318 = vmul.f32 %v300, %v224
      %v319 = vmul.f32 %v302, %v224
      %v320 = vmul.f32 %v304, %v224
      %v321 = vadd.f32 %v305, 1e-12
      %v322 = vadd.f32 %v306, 1e-12
      %v323 = vadd.f32 %v307, 1e-12
      %v324 = vadd.f32 %v308, 1e-12
      %v325 = vadd.f32 %v309, 1e-12
      %v326 = vadd.f32 %v310, 1e-12
      %v327 = vadd.f32 %v311, 1e-12
      %v328 = vadd.f32 %v312, 1e-12
      %v329 = vadd.f32 %v313, 1e-12
      %v330 = vadd.f32 %v314, 1e-12
      %v331 = vadd.f32 %v315, 1e-12
      %v332 = vadd.f32 %v316, 1e-12
      %v333 = vadd.f32 %v317, 1e-12
      %v334 = vadd.f32 %v318, 1e-12
      %v335 = vadd.f32 %v319, 1e-12
      %v336 = vadd.f32 %v320, 1e-12
      %v337 = vrsqrt.pop %v321
      %v338 = vrsqrt.pop %v322
      %v339 = vrsqrt.pop %v323
      %v340 = vrsqrt.pop %v324
      %v341 = vrsqrt.pop %v325
      %v342 = vrsqrt.pop %v326
      %v343 = vrsqrt.pop %v327
      %v344 = vrsqrt.pop %v328
      %v345 = vrsqrt.pop %v329
      %v346 = vrsqrt.pop %v330
      %v347 = vrsqrt.pop %v331
      %v348 = vrsqrt.pop %v332
      %v349 = vrsqrt.pop %v333
      %v350 = vrsqrt.pop %v334
      %v351 = vrsqrt.pop %v335
      %v352 = vrsqrt.pop %v336
      %v353 = vmul.f32 %v241, %v337
      %v354 = vmul.f32 %v242, %v338
      %v355 = vmul.f32 %v243, %v339
      %v356 = vmul.f32 %v244, %v340
      %v357 = vmul.f32 %v245, %v341
      %v358 = vmul.f32 %v246, %v342
      %v359 = vmul.f32 %v247, %v343
      %v360 = vmul.f32 %v248, %v344
      %v361 = vmul.f32 %v249, %v345
      %v362 = vmul.f32 %v250, %v346
      %v363 = vmul.f32 %v251, %v347
      %v364 = vmul.f32 %v252, %v348
      %v365 = vmul.f32 %v253, %v349
      %v366 = vmul.f32 %v254, %v350
      %v367 = vmul.f32 %v255, %v351
      %v368 = vmul.f32 %v256, %v352
      %v370 = vlaneseq
      %v371 = vshrl.u32 %v370, 7
      %v372 = vsub.s32 0, %v371
      %v373 = vrot.slane %v190, %v372
      %v375 = vmul.f32 %v353, %v373
      %v376 = vmul.f32 %v354, %v373
      %v377 = vmul.f32 %v355, %v373
      %v378 = vmul.f32 %v356, %v373
      %v379 = vmul.f32 %v357, %v373
      %v380 = vmul.f32 %v358, %v373
      %v381 = vmul.f32 %v359, %v373
      %v382 = vmul.f32 %v360, %v373
      %v383 = vmul.f32 %v361, %v373
      %v384 = vmul.f32 %v362, %v373
      %v385 = vmul.f32 %v363, %v373
      %v386 = vmul.f32 %v364, %v373
      %v387 = vmul.f32 %v365, %v373
      %v388 = vmul.f32 %v366, %v373
      %v389 = vmul.f32 %v367, %v373
      %v390 = vmul.f32 %v368, %v373
      %v392 = vlaneseq
      %v393 = vshrl.u32 %v392, 7
      %v394 = vsub.s32 0, %v393
      %v395 = vrot.slane %v191, %v394
      %v397 = vadd.f32 %v375, %v395
      %v398 = vadd.f32 %v376, %v395
      %v399 = vadd.f32 %v377, %v395
      %v400 = vadd.f32 %v378, %v395
      %v401 = vadd.f32 %v379, %v395
      %v402 = vadd.f32 %v380, %v395
      %v403 = vadd.f32 %v381, %v395
      %v404 = vadd.f32 %v382, %v395
      %v405 = vadd.f32 %v383, %v395
      %v406 = vadd.f32 %v384, %v395
      %v407 = vadd.f32 %v385, %v395
      %v408 = vadd.f32 %v386, %v395
      %v409 = vadd.f32 %v387, %v395
      %v410 = vadd.f32 %v388, %v395
      %v411 = vadd.f32 %v389, %v395
      %v412 = vadd.f32 %v390, %v395
      %413 = vst [vmem:[%s172] sm:$0xff] %v397
      %414 = vst [vmem:[%s172 + $0x8] sm:$0xff] %v398
      %415 = vst [vmem:[%s172 + $0x10] sm:$0xff] %v399
      %416 = vst [vmem:[%s172 + $0x18] sm:$0xff] %v400
      %417 = vst [vmem:[%s172 + $0x20] sm:$0xff] %v401
      %418 = vst [vmem:[%s172 + $0x28] sm:$0xff] %v402
      %419 = vst [vmem:[%s172 + $0x30] sm:$0xff] %v403
      %420 = vst [vmem:[%s172 + $0x38] sm:$0xff] %v404
      %421 = vst [vmem:[%s172 + $0x40] sm:$0xff] %v405
      %422 = vst [vmem:[%s172 + $0x48] sm:$0xff] %v406
      %423 = vst [vmem:[%s172 + $0x50] sm:$0xff] %v407
      %424 = vst [vmem:[%s172 + $0x58] sm:$0xff] %v408
      %425 = vst [vmem:[%s172 + $0x60] sm:$0xff] %v409
      %426 = vst [vmem:[%s172 + $0x68] sm:$0xff] %v410
      %427 = vst [vmem:[%s172 + $0x70] sm:$0xff] %v411
      %428 = vst [vmem:[%s172 + $0x78] sm:$0xff] %v412
      %s429 = smul.u32 16, %s14
      %p430 = scmp.lt.s32.totalorder %s429, 31
      %s431 = scalar_select %p430, %s429, 31
      %s432 = smul.addr %s431, 8
      %s433 = scalar_lea.vmem %s3, %s432
      // Predicated region
      $region33: #{encoder_forward.11} parent=31 // pred_check
        %p434 = pneg %p100
      $region34: #{encoder_forward.11} parent=31 // pred_check_branch
        %436 = sbr.rel (%p434) target = $region36
      $region35: #{encoder_forward.11} parent=31 // pred_region
        %s437 = smul.u32 16, %s14
      $region36: #{encoder_forward.11} parent=31 // pred_fallthru
        _
    $region32: #{encoder_forward.11} parent=5 // pred_fallthru
      _
    %p438 = scmp.le.s32.totalorder 2, %s9
    // Predicated region
    $region37: #{encoder_forward.11} parent=5 // pred_check
      %p439 = pneg %p438
    $region38: #{encoder_forward.11} parent=5 // pred_check_branch
      %441 = sbr.rel (%p439) target = $region40
    $region39: #{encoder_forward.11} parent=5 // pred_region
      %s442 = ssub.s32 %s9, 2
      // Predicated region
      $region41: #{encoder_forward.11} parent=39 // pred_check
        %p443 = pneg %p106
      $region42: #{encoder_forward.11} parent=39 // pred_check_branch
        %445 = sbr.rel (%p443) target = $region44
      $region43: #{encoder_forward.11} parent=39 // pred_region
        %s446 = smul.u32 16, %s15
        %p447 = scmp.lt.s32.totalorder %s446, 31
        %s448 = scalar_select %p447, %s446, 31
        %s449 = smul.addr %s448, 8
        %s450 = scalar_lea.vmem %s3, %s449
      $region44: #{encoder_forward.11} parent=39 // pred_fallthru
        _
    $region40: #{encoder_forward.11} parent=5 // pred_fallthru
      _
  $region6: #{encoder_forward.11} parent=0 // loop_footer
    %s13 = sadd.s32 1, %s9
  $region7: #{encoder_forward.11} parent=0 // loop_footer_branch
    %8 = sbr.rel target = $region3
  $region8: #{encoder_forward.11} parent=0 // loop_exit
    _

// kernel: encoder_forward.12
$region0: #{encoder_forward.12}
  #allocation0 [shape = 'u32[]', space=smem, size = 0x4, offset = 0x4, fixed_abs, tag = 'smem constant byte address 0x4 - core index']
  #allocation1 [shape = 'u32[144,128]{1,0:T(1,128)}', space=vmem, size = 0x12000, scoped, tag = 'internal scratch']
  %s0 = inlined_call_operand.vmem [shape: f32[256,128], index: 0, kind: input, shape index: {}]
  %s1 = inlined_call_operand.vmem [shape: bf16[128,384], index: 1, kind: input, shape index: {}]
  %s2 = inlined_call_operand.vmem [shape: f32[1,384], index: 2, kind: input, shape index: {}]
  %s3 = inlined_call_operand.vmem [shape: bf16[256,384], index: 3, kind: output, shape index: {}]
  %s4 = sld [smem:[#allocation0]]
  $region45: #{encoder_forward.12} parent=0
    _
  %s6 = ssub.s32 1, %s4
  %s7 = scalar_select 0, %s6, %s4
  loop: start=0, step=1, limit=4
  $region2: #{encoder_forward.12} parent=0 // loop_pre_header
    _
  $region3: #{encoder_forward.12} parent=0 // loop_header
    %s9 = sphi 0, %s13
    %p10 = scmp.ge.s32.totalorder %s9, 4
    %s19 = sphi 0, %s21
    %s22 = sphi 0, %s19
    %s23 = sphi 0, %s22
    %s39 = sphi 0, %s23
    %s43 = sphi 0, %s43
    %s45 = sphi 0, %s43
    %s46 = sphi 0, %s45
    %s60 = sphi 0, %s46
    %s64 = sphi 0, %s64
    %s66 = sphi 0, %s64
    %s67 = sphi 0, %s66
    %s81 = sphi 0, %s67
    %s87 = sphi 0, %s89
    %s90 = sphi 0, %s87
    %s91 = sphi 0, %s90
    %s107 = sphi 0, %s91
  $region4: #{encoder_forward.12} parent=0 // loop_header_branch
    %12 = sbr.rel (%p10) target = $region8
  $region5: #{encoder_forward.12} parent=0 // loop_body
    %s14 = ssub.s32 %s9, 1
    %s15 = ssub.s32 %s9, 2
    %s16 = sadd.s32 %s9, 1
    %s17 = ssub.s32 %s9, %s16
    %p18 = scmp.eq.s32.totalorder %s17, 0
    %s20 = sadd.s32 %s19, 1
    %s21 = scalar_select %p18, %s19, %s20
    %p24 = pneg %p18
    %p25 = scmp.eq.s32.totalorder %s9, 1
    %p26 = por %p24, %p25
    %p27 = scmp.ne.s32.totalorder %s19, %s22
    %p28 = scmp.eq.s32.totalorder %s9, 0
    %p29 = por %p27, %p28
    %p30 = scmp.ne.s32.totalorder %s19, %s22
    %p31 = scmp.eq.s32.totalorder %s14, 1
    %p32 = por %p30, %p31
    %p33 = scmp.ne.s32.totalorder %s22, %s23
    %p34 = scmp.eq.s32.totalorder %s14, 0
    %p35 = por %p33, %p34
    %p36 = scmp.ne.s32.totalorder %s22, %s23
    %p37 = scmp.eq.s32.totalorder %s15, 1
    %p38 = por %p36, %p37
    %p40 = scmp.ne.s32.totalorder %s23, %s39
    %p41 = scmp.eq.s32.totalorder %s15, 0
    %p42 = por %p40, %p41
    %s44 = sadd.s32 %s43, 1
    %p47 = scmp.eq.s32.totalorder %s9, 1
    %p48 = scmp.ne.s32.totalorder %s43, %s45
    %p49 = scmp.eq.s32.totalorder %s9, 0
    %p50 = por %p48, %p49
    %p51 = scmp.ne.s32.totalorder %s43, %s45
    %p52 = scmp.eq.s32.totalorder %s14, 1
    %p53 = por %p51, %p52
    %p54 = scmp.ne.s32.totalorder %s45, %s46
    %p55 = scmp.eq.s32.totalorder %s14, 0
    %p56 = por %p54, %p55
    %p57 = scmp.ne.s32.totalorder %s45, %s46
    %p58 = scmp.eq.s32.totalorder %s15, 1
    %p59 = por %p57, %p58
    %p61 = scmp.ne.s32.totalorder %s46, %s60
    %p62 = scmp.eq.s32.totalorder %s15, 0
    %p63 = por %p61, %p62
    %s65 = sadd.s32 %s64, 1
    %p68 = scmp.eq.s32.totalorder %s9, 1
    %p69 = scmp.ne.s32.totalorder %s64, %s66
    %p70 = scmp.eq.s32.totalorder %s9, 0
    %p71 = por %p69, %p70
    %p72 = scmp.ne.s32.totalorder %s64, %s66
    %p73 = scmp.eq.s32.totalorder %s14, 1
    %p74 = por %p72, %p73
    %p75 = scmp.ne.s32.totalorder %s66, %s67
    %p76 = scmp.eq.s32.totalorder %s14, 0
    %p77 = por %p75, %p76
    %p78 = scmp.ne.s32.totalorder %s66, %s67
    %p79 = scmp.eq.s32.totalorder %s15, 1
    %p80 = por %p78, %p79
    %p82 = scmp.ne.s32.totalorder %s67, %s81
    %p83 = scmp.eq.s32.totalorder %s15, 0
    %p84 = por %p82, %p83
    %s85 = ssub.s32 %s9, %s16
    %p86 = scmp.eq.s32.totalorder %s85, 0
    %s88 = sadd.s32 %s87, 1
    %s89 = scalar_select %p86, %s87, %s88
    %p92 = pneg %p86
    %p93 = scmp.eq.s32.totalorder %s9, 1
    %p94 = por %p92, %p93
    %p95 = scmp.ne.s32.totalorder %s87, %s90
    %p96 = scmp.eq.s32.totalorder %s9, 0
    %p97 = por %p95, %p96
    %p98 = scmp.ne.s32.totalorder %s87, %s90
    %p99 = scmp.eq.s32.totalorder %s14, 1
    %p100 = por %p98, %p99
    %p101 = scmp.ne.s32.totalorder %s90, %s91
    %p102 = scmp.eq.s32.totalorder %s14, 0
    %p103 = por %p101, %p102
    %p104 = scmp.ne.s32.totalorder %s90, %s91
    %p105 = scmp.eq.s32.totalorder %s15, 1
    %p106 = por %p104, %p105
    %p108 = scmp.ne.s32.totalorder %s91, %s107
    %p109 = scmp.eq.s32.totalorder %s15, 0
    %p110 = por %p108, %p109
    %p111 = scmp.le.s32.totalorder 1, %s9
    %p112 = scmp.lt.s32.totalorder %s9, 3
    %p113 = pnand %p111, %p112
    %p114 = pneg %p113
    // Predicated region
    $region9: #{encoder_forward.12} parent=5 // pred_check
      _
    $region10: #{encoder_forward.12} parent=5 // pred_check_branch
      %116 = sbr.rel (%p113) target = $region12
    $region11: #{encoder_forward.12} parent=5 // pred_region
      %s117 = ssub.s32 %s9, 1
      // Predicated region
      $region13: #{encoder_forward.12} parent=11 // pred_check
        %p118 = pneg %p56
      $region14: #{encoder_forward.12} parent=11 // pred_check_branch
        %120 = sbr.rel (%p118) target = $region16
      $region15: #{encoder_forward.12} parent=11 // pred_region
        _
      $region16: #{encoder_forward.12} parent=11 // pred_fallthru
        _
      // Predicated region
      $region17: #{encoder_forward.12} parent=11 // pred_check
        %p121 = pneg %p77
      $region18: #{encoder_forward.12} parent=11 // pred_check_branch
        %123 = sbr.rel (%p121) target = $region20
      $region19: #{encoder_forward.12} parent=11 // pred_region
        _
      $region20: #{encoder_forward.12} parent=11 // pred_fallthru
        _
    $region12: #{encoder_forward.12} parent=5 // pred_fallthru
      _
    %p124 = scmp.lt.s32.totalorder %s9, 2
    // Predicated region
    $region21: #{encoder_forward.12} parent=5 // pred_check
      %p125 = pneg %p124
    $region22: #{encoder_forward.12} parent=5 // pred_check_branch
      %127 = sbr.rel (%p125) target = $region24
    $region23: #{encoder_forward.12} parent=5 // pred_region
      // Predicated region
      $region25: #{encoder_forward.12} parent=23 // pred_check
        %p128 = pneg %p29
      $region26: #{encoder_forward.12} parent=23 // pred_check_branch
        %130 = sbr.rel (%p128) target = $region28
      $region27: #{encoder_forward.12} parent=23 // pred_region
        %s131 = smul.u32 16, %s9
        %p132 = scmp.lt.s32.totalorder %s131, 31
        %s133 = scalar_select %p132, %s131, 31
        %s134 = smul.addr %s133, 8
        %s135 = scalar_lea.vmem %s0, %s134
        %s136 = smul.u32 16, %s9
      $region28: #{encoder_forward.12} parent=23 // pred_fallthru
        _
    $region24: #{encoder_forward.12} parent=5 // pred_fallthru
      _
    %p137 = scmp.le.s32.totalorder 1, %s9
    %p138 = scmp.lt.s32.totalorder %s9, 3
    %p139 = pnand %p137, %p138
    %p140 = pneg %p139
    // Predicated region
    $region29: #{encoder_forward.12} parent=5 // pred_check
      _
    $region30: #{encoder_forward.12} parent=5 // pred_check_branch
      %142 = sbr.rel (%p139) target = $region32
    $region31: #{encoder_forward.12} parent=5 // pred_region
      %s143 = ssub.s32 %s9, 1
      %s144 = smul.u32 16, %s14
      %p145 = scmp.lt.s32.totalorder %s144, 31
      %s146 = scalar_select %p145, %s144, 31
      %s147 = smul.addr %s146, 8
      %s148 = scalar_lea.vmem %s0, %s147
      %p149 = pneg %p35
      %p150 = pneg %p32
      %p151 = pneg %p56
      %p152 = pneg %p53
      %p153 = pneg %p77
      %p154 = pneg %p74
      %p155 = pneg %p103
      %p156 = pneg %p100
      %s157 = smul.u32 16, %s14
      %p158 = scmp.lt.s32.totalorder %s157, 31
      %s159 = scalar_select %p158, %s157, 31
      %s160 = smul.addr %s159, 3
      %s161 = smul.addr %s160, 4
      %s162 = scalar_lea.vmem %s3, %s161
      %s163 = smul.u32 16, %s14
      %p164 = scmp.lt.s32.totalorder %s163, 31
      %s165 = scalar_select %p164, %s163, 31
      %s166 = smul.addr %s165, 8
      %s167 = scalar_lea.vmem %s0, %s166
      %s168 = smul.u32 16, %s14
      %s169 = smul.u32 16, %s14
      %p170 = scmp.lt.s32.totalorder %s169, 31
      %s171 = scalar_select %p170, %s169, 31
      %s172 = smul.addr %s171, 3
      %s173 = smul.addr %s172, 4
      %s174 = scalar_lea.vmem %s3, %s173
      %s175 = smul.u32 16, %s14
      %v177 = vld [vmem:[%s167] sm:$0xff]
      %v178 = vld [vmem:[%s167 + $0x8] sm:$0xff]
      %v179 = vld [vmem:[%s167 + $0x10] sm:$0xff]
      %v180 = vld [vmem:[%s167 + $0x18] sm:$0xff]
      %v181 = vld [vmem:[%s167 + $0x20] sm:$0xff]
      %v182 = vld [vmem:[%s167 + $0x28] sm:$0xff]
      %v183 = vld [vmem:[%s167 + $0x30] sm:$0xff]
      %v184 = vld [vmem:[%s167 + $0x38] sm:$0xff]
      %v185 = vld [vmem:[%s167 + $0x40] sm:$0xff]
      %v186 = vld [vmem:[%s167 + $0x48] sm:$0xff]
      %v187 = vld [vmem:[%s167 + $0x50] sm:$0xff]
      %v188 = vld [vmem:[%s167 + $0x58] sm:$0xff]
      %v189 = vld [vmem:[%s167 + $0x60] sm:$0xff]
      %v190 = vld [vmem:[%s167 + $0x68] sm:$0xff]
      %v191 = vld [vmem:[%s167 + $0x70] sm:$0xff]
      %v192 = vld [vmem:[%s167 + $0x78] sm:$0xff]
      %v193 = vpack.c.bf16 %v178, %v177
      %v194 = vpack.c.bf16 %v180, %v179
      %v195 = vpack.c.bf16 %v182, %v181
      %v196 = vpack.c.bf16 %v184, %v183
      %v197 = vpack.c.bf16 %v186, %v185
      %v198 = vpack.c.bf16 %v188, %v187
      %v199 = vpack.c.bf16 %v190, %v189
      %v200 = vpack.c.bf16 %v192, %v191
      %v201 = vld [vmem:[%s1] sm:$0xff]
      %v202 = vld [vmem:[%s1 + $0x8] sm:$0xf]
      %v203 = vld [vmem:[%s1 + $0xc] sm:$0xff]
      %v204 = vld [vmem:[%s1 + $0x14] sm:$0xf]
      %v205 = vld [vmem:[%s1 + $0x18] sm:$0xff]
      %v206 = vld [vmem:[%s1 + $0x20] sm:$0xf]
      %v207 = vld [vmem:[%s1 + $0x24] sm:$0xff]
      %v208 = vld [vmem:[%s1 + $0x2c] sm:$0xf]
      %v209 = vld [vmem:[%s1 + $0x30] sm:$0xff]
      %v210 = vld [vmem:[%s1 + $0x38] sm:$0xf]
      %v211 = vld [vmem:[%s1 + $0x3c] sm:$0xff]
      %v212 = vld [vmem:[%s1 + $0x44] sm:$0xf]
      %v213 = vld [vmem:[%s1 + $0x48] sm:$0xff]
      %v214 = vld [vmem:[%s1 + $0x50] sm:$0xf]
      %v215 = vld [vmem:[%s1 + $0x54] sm:$0xff]
      %v216 = vld [vmem:[%s1 + $0x5c] sm:$0xf]
      %v217 = vld [vmem:[%s1 + $0x60] sm:$0xff]
      %v218 = vld [vmem:[%s1 + $0x68] sm:$0xf]
      %v219 = vld [vmem:[%s1 + $0x6c] sm:$0xff]
      %v220 = vld [vmem:[%s1 + $0x74] sm:$0xf]
      %v221 = vld [vmem:[%s1 + $0x78] sm:$0xff]
      %v222 = vld [vmem:[%s1 + $0x80] sm:$0xf]
      %v223 = vld [vmem:[%s1 + $0x84] sm:$0xff]
      %v224 = vld [vmem:[%s1 + $0x8c] sm:$0xf]
      %v225 = vld [vmem:[%s1 + $0x90] sm:$0xff]
      %v226 = vld [vmem:[%s1 + $0x98] sm:$0xf]
      %v227 = vld [vmem:[%s1 + $0x9c] sm:$0xff]
      %v228 = vld [vmem:[%s1 + $0xa4] sm:$0xf]
      %v229 = vld [vmem:[%s1 + $0xa8] sm:$0xff]
      %v230 = vld [vmem:[%s1 + $0xb0] sm:$0xf]
      %v231 = vld [vmem:[%s1 + $0xb4] sm:$0xff]
      %v232 = vld [vmem:[%s1 + $0xbc] sm:$0xf]
      %v233 = vld [vmem:[%s2] sm:$0x7]
      %v235 = vlaneseq
      %v236 = vshrl.u32 %v235, 7
      %v237 = vsub.s32 0, %v236
      %v238 = vrot.slane %v233, %v237
      %v239 = vlaneseq
      %v240 = vshrl.u32 %v239, 7
      %v241 = vsub.s32 1, %v240
      %v242 = vrot.slane %v233, %v241
      %v243 = vlaneseq
      %v244 = vshrl.u32 %v243, 7
      %v245 = vsub.s32 2, %v244
      %v246 = vrot.slane %v233, %v245
      %v282 = vunpack.c.l.b16 %v201
      %v283 = vunpack.c.h.b16 %v201
      %v284 = vunpack.c.l.b16 %v202
      %v285 = vunpack.c.l.b16 %v203
      %v286 = vunpack.c.h.b16 %v203
      %v287 = vunpack.c.l.b16 %v204
      %v288 = vunpack.c.l.b16 %v205
      %v289 = vunpack.c.h.b16 %v205
      %v290 = vunpack.c.l.b16 %v206
      %v291 = vunpack.c.l.b16 %v207
      %v292 = vunpack.c.h.b16 %v207
      %v293 = vunpack.c.l.b16 %v208
      %v294 = vunpack.c.l.b16 %v209
      %v295 = vunpack.c.h.b16 %v209
      %v296 = vunpack.c.l.b16 %v210
      %v297 = vunpack.c.l.b16 %v211
      %v298 = vunpack.c.h.b16 %v211
      %v299 = vunpack.c.l.b16 %v212
      %v300 = vunpack.c.l.b16 %v213
      %v301 = vunpack.c.h.b16 %v213
      %v302 = vunpack.c.l.b16 %v214
      %v303 = vunpack.c.l.b16 %v215
      %v304 = vunpack.c.h.b16 %v215
      %v305 = vunpack.c.l.b16 %v216
      %v306 = vunpack.c.l.b16 %v217
      %v307 = vunpack.c.h.b16 %v217
      %v308 = vunpack.c.l.b16 %v218
      %v309 = vunpack.c.l.b16 %v219
      %v310 = vunpack.c.h.b16 %v219
      %v311 = vunpack.c.l.b16 %v220
      %v312 = vunpack.c.l.b16 %v221
      %v313 = vunpack.c.h.b16 %v221
      %v314 = vunpack.c.l.b16 %v222
      %v315 = vunpack.c.l.b16 %v223
      %v316 = vunpack.c.h.b16 %v223
      %v317 = vunpack.c.l.b16 %v224
      %v318 = vunpack.c.l.b16 %v225
      %v319 = vunpack.c.h.b16 %v225
      %v320 = vunpack.c.l.b16 %v226
      %v321 = vunpack.c.l.b16 %v227
      %v322 = vunpack.c.h.b16 %v227
      %v323 = vunpack.c.l.b16 %v228
      %v324 = vunpack.c.l.b16 %v229
      %v325 = vunpack.c.h.b16 %v229
      %v326 = vunpack.c.l.b16 %v230
      %v327 = vunpack.c.l.b16 %v231
      %v328 = vunpack.c.h.b16 %v231
      %v329 = vunpack.c.l.b16 %v232
      %v330 = vpack.c.b16 %v285, %v282
      %v331 = vpack.c.b16 %v286, %v283
      %v332 = vpack.c.b16 %v287, %v284
      %v333 = vpack.c.b16 %v291, %v288
      %v334 = vpack.c.b16 %v292, %v289
      %v335 = vpack.c.b16 %v293, %v290
      %v336 = vpack.c.b16 %v297, %v294
      %v337 = vpack.c.b16 %v298, %v295
      %v338 = vpack.c.b16 %v299, %v296
      %v339 = vpack.c.b16 %v303, %v300
      %v340 = vpack.c.b16 %v304, %v301
      %v341 = vpack.c.b16 %v305, %v302
      %v342 = vpack.c.b16 %v309, %v306
      %v343 = vpack.c.b16 %v310, %v307
      %v344 = vpack.c.b16 %v311, %v308
      %v345 = vpack.c.b16 %v315, %v312
      %v346 = vpack.c.b16 %v316, %v313
      %v347 = vpack.c.b16 %v317, %v314
      %v348 = vpack.c.b16 %v321, %v318
      %v349 = vpack.c.b16 %v322, %v319
      %v350 = vpack.c.b16 %v323, %v320
      %v351 = vpack.c.b16 %v327, %v324
      %v352 = vpack.c.b16 %v328, %v325
      %v353 = vpack.c.b16 %v329, %v326
      %378 = vmatprep.subr.bf16.mxu0 %v331
      %379 = vmatpush1.bf16.msra.mxu0 %v330
      %380 = vmatprep.subr.bf16.mxu0 %v334
      %381 = vmatpush1.bf16.msra.mxu0 %v333
      %382 = vmatprep.subr.bf16.mxu0 %v337
      %383 = vmatpush1.bf16.msra.mxu0 %v336
      %384 = vmatprep.subr.bf16.mxu0 %v340
      %385 = vmatpush1.bf16.msra.mxu0 %v339
      %386 = vmatprep.subr.bf16.mxu0 %v343
      %387 = vmatpush1.bf16.msra.mxu0 %v342
      %388 = vmatprep.subr.bf16.mxu0 %v346
      %389 = vmatpush1.bf16.msra.mxu0 %v345
      %390 = vmatprep.subr.bf16.mxu0 %v349
      %391 = vmatpush1.bf16.msra.mxu0 %v348
      %392 = vmatprep.subr.bf16.mxu0 %v352
      %393 = vmatpush1.bf16.msra.mxu0 %v351
      %394 = vmatprep.subr.bf16.mxu0 0
      %395 = vmatpush1.bf16.msra.mxu0 0
      %396 = vmatprep.subr.bf16.mxu0 0
      %397 = vmatpush1.bf16.msra.mxu0 0
      %398 = vmatprep.subr.bf16.mxu0 0
      %399 = vmatpush1.bf16.msra.mxu0 0
      %400 = vmatprep.subr.bf16.mxu0 0
      %401 = vmatpush1.bf16.msra.mxu0 0
      %402 = vmatprep.subr.bf16.mxu0 0
      %403 = vmatpush1.bf16.msra.mxu0 0
      %404 = vmatprep.subr.bf16.mxu0 0
      %405 = vmatpush1.bf16.msra.mxu0 0
      %406 = vmatprep.subr.bf16.mxu0 0
      %407 = vmatpush1.bf16.msra.mxu0 0
      %408 = vmatprep.subr.bf16.mxu0 0
      %409 = vmatpush1.bf16.msra.mxu0 0
      %410 = vmatprep.mubr.bf16.mxu0 0
      %411 = vmatmul.mubr.bf16.gmra.mrb[0].mxu0 %v193
      %v412 = vpop.f32.mrb[0].mxu0
      %v413 = vadd.f32 %v238, %v412
      %v414 = vpop.f32.mrb[0].mxu0
      %v415 = vadd.f32 %v242, %v414
      %v416 = vpop.f32.mrb[0].mxu0
      %v417 = vadd.f32 %v238, %v416
      %v418 = vpop.f32.mrb[0].mxu0
      %v419 = vadd.f32 %v242, %v418
      %420 = vmatprep.mubr.bf16.mxu0 0
      %421 = vmatmul.mubr.bf16.gmra.mrb[0].mxu0 %v194
      %v422 = vpop.f32.mrb[0].mxu0
      %v423 = vadd.f32 %v238, %v422
      %v424 = vpop.f32.mrb[0].mxu0
      %v425 = vadd.f32 %v242, %v424
      %v426 = vpop.f32.mrb[0].mxu0
      %v427 = vadd.f32 %v238, %v426
      %v428 = vpop.f32.mrb[0].mxu0
      %v429 = vadd.f32 %v242, %v428
      %430 = vmatprep.mubr.bf16.mxu0 0
      %431 = vmatmul.mubr.bf16.gmra.mrb[0].mxu0 %v195
      %v432 = vpop.f32.mrb[0].mxu0
      %v433 = vadd.f32 %v238, %v432
      %v434 = vpop.f32.mrb[0].mxu0
      %v435 = vadd.f32 %v242, %v434
      %v436 = vpop.f32.mrb[0].mxu0
      %v437 = vadd.f32 %v238, %v436
      %v438 = vpop.f32.mrb[0].mxu0
      %v439 = vadd.f32 %v242, %v438
      %440 = vmatprep.mubr.bf16.mxu0 0
      %441 = vmatmul.mubr.bf16.gmra.mrb[0].mxu0 %v196
      %v442 = vpop.f32.mrb[0].mxu0
      %v443 = vadd.f32 %v238, %v442
      %v444 = vpop.f32.mrb[0].mxu0
      %v445 = vadd.f32 %v242, %v444
      %v446 = vpop.f32.mrb[0].mxu0
      %v447 = vadd.f32 %v238, %v446
      %v448 = vpop.f32.mrb[0].mxu0
      %v449 = vadd.f32 %v242, %v448
      %450 = vmatprep.mubr.bf16.mxu0 0
      %451 = vmatmul.mubr.bf16.gmra.mrb[0].mxu0 %v197
      %v452 = vpop.f32.mrb[0].mxu0
      %v453 = vadd.f32 %v238, %v452
      %v454 = vpop.f32.mrb[0].mxu0
      %v455 = vadd.f32 %v242, %v454
      %v456 = vpop.f32.mrb[0].mxu0
      %v457 = vadd.f32 %v238, %v456
      %v458 = vpop.f32.mrb[0].mxu0
      %v459 = vadd.f32 %v242, %v458
      %460 = vmatprep.mubr.bf16.mxu0 0
      %461 = vmatmul.mubr.bf16.gmra.mrb[0].mxu0 %v198
      %v462 = vpop.f32.mrb[0].mxu0
      %v463 = vadd.f32 %v238, %v462
      %v464 = vpop.f32.mrb[0].mxu0
      %v465 = vadd.f32 %v242, %v464
      %v466 = vpop.f32.mrb[0].mxu0
      %v467 = vadd.f32 %v238, %v466
      %v468 = vpop.f32.mrb[0].mxu0
      %v469 = vadd.f32 %v242, %v468
      %470 = vmatprep.mubr.bf16.mxu0 0
      %471 = vmatmul.mubr.bf16.gmra.mrb[0].mxu0 %v199
      %v472 = vpop.f32.mrb[0].mxu0
      %v473 = vadd.f32 %v238, %v472
      %v474 = vpop.f32.mrb[0].mxu0
      %v475 = vadd.f32 %v242, %v474
      %v476 = vpop.f32.mrb[0].mxu0
      %v477 = vadd.f32 %v238, %v476
      %v478 = vpop.f32.mrb[0].mxu0
      %v479 = vadd.f32 %v242, %v478
      %480 = vmatprep.mubr.bf16.mxu0 0
      %481 = vmatmul.mubr.bf16.gmra.mrb[0].mxu0 %v200
      %v482 = vpop.f32.mrb[0].mxu0
      %v483 = vadd.f32 %v238, %v482
      %v484 = vpop.f32.mrb[0].mxu0
      %v485 = vadd.f32 %v242, %v484
      %v486 = vpop.f32.mrb[0].mxu0
      %v487 = vadd.f32 %v238, %v486
      %v488 = vpop.f32.mrb[0].mxu0
      %v489 = vadd.f32 %v242, %v488
      %490 = vdwg.mxu0
      %491 = vmatprep.subr.bf16.mxu0 0
      %492 = vmatpush1.bf16.msra.mxu0 %v332
      %493 = vmatprep.subr.bf16.mxu0 0
      %494 = vmatpush1.bf16.msra.mxu0 %v335
      %495 = vmatprep.subr.bf16.mxu0 0
      %496 = vmatpush1.bf16.msra.mxu0 %v338
      %497 = vmatprep.subr.bf16.mxu0 0
      %498 = vmatpush1.bf16.msra.mxu0 %v341
      %499 = vmatprep.subr.bf16.mxu0 0
      %500 = vmatpush1.bf16.msra.mxu0 %v344
      %501 = vmatprep.subr.bf16.mxu0 0
      %502 = vmatpush1.bf16.msra.mxu0 %v347
      %503 = vmatprep.subr.bf16.mxu0 0
      %504 = vmatpush1.bf16.msra.mxu0 %v350
      %505 = vmatprep.subr.bf16.mxu0 0
      %506 = vmatpush1.bf16.msra.mxu0 %v353
      %507 = vmatprep.subr.bf16.mxu0 0
      %508 = vmatpush1.bf16.msra.mxu0 0
      %509 = vmatprep.subr.bf16.mxu0 0
      %510 = vmatpush1.bf16.msra.mxu0 0
      %511 = vmatprep.subr.bf16.mxu0 0
      %512 = vmatpush1.bf16.msra.mxu0 0
      %513 = vmatprep.subr.bf16.mxu0 0
      %514 = vmatpush1.bf16.msra.mxu0 0
      %515 = vmatprep.subr.bf16.mxu0 0
      %516 = vmatpush1.bf16.msra.mxu0 0
      %517 = vmatprep.subr.bf16.mxu0 0
      %518 = vmatpush1.bf16.msra.mxu0 0
      %519 = vmatprep.subr.bf16.mxu0 0
      %520 = vmatpush1.bf16.msra.mxu0 0
      %521 = vmatprep.subr.bf16.mxu0 0
      %522 = vmatpush1.bf16.msra.mxu0 0
      %523 = vmatprep.mubr.bf16.mxu0 0
      %524 = vmatmul.mubr.bf16.gmra.mrb[0].mxu0 %v193
      %v525 = vpop.f32.mrb[0].mxu0
      %v526 = vadd.f32 %v246, %v525
      %v527 = vpop.f32.mrb[0].mxu0
      %v528 = vpop.f32.mrb[0].mxu0
      %v529 = vadd.f32 %v246, %v528
      %v530 = vpop.f32.mrb[0].mxu0
      %531 = vmatprep.mubr.bf16.mxu0 0
      %532 = vmatmul.mubr.bf16.gmra.mrb[0].mxu0 %v194
      %v533 = vpop.f32.mrb[0].mxu0
      %v534 = vadd.f32 %v246, %v533
      %v535 = vpop.f32.mrb[0].mxu0
      %v536 = vpop.f32.mrb[0].mxu0
      %v537 = vadd.f32 %v246, %v536
      %v538 = vpop.f32.mrb[0].mxu0
      %539 = vmatprep.mubr.bf16.mxu0 0
      %540 = vmatmul.mubr.bf16.gmra.mrb[0].mxu0 %v195
      %v541 = vpop.f32.mrb[0].mxu0
      %v542 = vadd.f32 %v246, %v541
      %v543 = vpop.f32.mrb[0].mxu0
      %v544 = vpop.f32.mrb[0].mxu0
      %v545 = vadd.f32 %v246, %v544
      %v546 = vpop.f32.mrb[0].mxu0
      %547 = vmatprep.mubr.bf16.mxu0 0
      %548 = vmatmul.mubr.bf16.gmra.mrb[0].mxu0 %v196
      %v549 = vpop.f32.mrb[0].mxu0
      %v550 = vadd.f32 %v246, %v549
      %v551 = vpop.f32.mrb[0].mxu0
      %v552 = vpop.f32.mrb[0].mxu0
      %v553 = vadd.f32 %v246, %v552
      %v554 = vpop.f32.mrb[0].mxu0
      %555 = vmatprep.mubr.bf16.mxu0 0
      %556 = vmatmul.mubr.bf16.gmra.mrb[0].mxu0 %v197
      %v557 = vpop.f32.mrb[0].mxu0
      %v558 = vadd.f32 %v246, %v557
      %v559 = vpop.f32.mrb[0].mxu0
      %v560 = vpop.f32.mrb[0].mxu0
      %v561 = vadd.f32 %v246, %v560
      %v562 = vpop.f32.mrb[0].mxu0
      %563 = vmatprep.mubr.bf16.mxu0 0
      %564 = vmatmul.mubr.bf16.gmra.mrb[0].mxu0 %v198
      %v565 = vpop.f32.mrb[0].mxu0
      %v566 = vadd.f32 %v246, %v565
      %v567 = vpop.f32.mrb[0].mxu0
      %v568 = vpop.f32.mrb[0].mxu0
      %v569 = vadd.f32 %v246, %v568
      %v570 = vpop.f32.mrb[0].mxu0
      %571 = vmatprep.mubr.bf16.mxu0 0
      %572 = vmatmul.mubr.bf16.gmra.mrb[0].mxu0 %v199
      %v573 = vpop.f32.mrb[0].mxu0
      %v574 = vadd.f32 %v246, %v573
      %v575 = vpop.f32.mrb[0].mxu0
      %v576 = vpop.f32.mrb[0].mxu0
      %v577 = vadd.f32 %v246, %v576
      %v578 = vpop.f32.mrb[0].mxu0
      %579 = vmatprep.mubr.bf16.mxu0 0
      %580 = vmatmul.mubr.bf16.gmra.mrb[0].mxu0 %v200
      %v581 = vpop.f32.mrb[0].mxu0
      %v582 = vadd.f32 %v246, %v581
      %v583 = vpop.f32.mrb[0].mxu0
      %v584 = vpop.f32.mrb[0].mxu0
      %v585 = vadd.f32 %v246, %v584
      %v586 = vpop.f32.mrb[0].mxu0
      %587 = vdwg.mxu0
      %v588 = vpack.c.bf16 %v417, %v413
      %v589 = vpack.c.bf16 %v419, %v415
      %v590 = vpack.c.bf16 %v529, %v526
      %v591 = vpack.c.bf16 %v427, %v423
      %v592 = vpack.c.bf16 %v429, %v425
      %v593 = vpack.c.bf16 %v537, %v534
      %v594 = vpack.c.bf16 %v437, %v433
      %v595 = vpack.c.bf16 %v439, %v435
      %v596 = vpack.c.bf16 %v545, %v542
      %v597 = vpack.c.bf16 %v447, %v443
      %v598 = vpack.c.bf16 %v449, %v445
      %v599 = vpack.c.bf16 %v553, %v550
      %v600 = vpack.c.bf16 %v457, %v453
      %v601 = vpack.c.bf16 %v459, %v455
      %v602 = vpack.c.bf16 %v561, %v558
      %v603 = vpack.c.bf16 %v467, %v463
      %v604 = vpack.c.bf16 %v469, %v465
      %v605 = vpack.c.bf16 %v569, %v566
      %v606 = vpack.c.bf16 %v477, %v473
      %v607 = vpack.c.bf16 %v479, %v475
      %v608 = vpack.c.bf16 %v577, %v574
      %v609 = vpack.c.bf16 %v487, %v483
      %v610 = vpack.c.bf16 %v489, %v485
      %v611 = vpack.c.bf16 %v585, %v582
      %v636 = vunpack.c.l.b16 %v588
      %v637 = vunpack.c.l.b16 %v589
      %v638 = vunpack.c.l.b16 %v590
      %v639 = vunpack.c.h.b16 %v588
      %v640 = vunpack.c.h.b16 %v589
      %v641 = vunpack.c.h.b16 %v590
      %v642 = vunpack.c.l.b16 %v591
      %v643 = vunpack.c.l.b16 %v592
      %v644 = vunpack.c.l.b16 %v593
      %v645 = vunpack.c.h.b16 %v591
      %v646 = vunpack.c.h.b16 %v592
      %v647 = vunpack.c.h.b16 %v593
      %v648 = vunpack.c.l.b16 %v594
      %v649 = vunpack.c.l.b16 %v595
      %v650 = vunpack.c.l.b16 %v596
      %v651 = vunpack.c.h.b16 %v594
      %v652 = vunpack.c.h.b16 %v595
      %v653 = vunpack.c.h.b16 %v596
      %v654 = vunpack.c.l.b16 %v597
      %v655 = vunpack.c.l.b16 %v598
      %v656 = vunpack.c.l.b16 %v599
      %v657 = vunpack.c.h.b16 %v597
      %v658 = vunpack.c.h.b16 %v598
      %v659 = vunpack.c.h.b16 %v599
      %v660 = vunpack.c.l.b16 %v600
      %v661 = vunpack.c.l.b16 %v601
      %v662 = vunpack.c.l.b16 %v602
      %v663 = vunpack.c.h.b16 %v600
      %v664 = vunpack.c.h.b16 %v601
      %v665 = vunpack.c.h.b16 %v602
      %v666 = vunpack.c.l.b16 %v603
      %v667 = vunpack.c.l.b16 %v604
      %v668 = vunpack.c.l.b16 %v605
      %v669 = vunpack.c.h.b16 %v603
      %v670 = vunpack.c.h.b16 %v604
      %v671 = vunpack.c.h.b16 %v605
      %v672 = vunpack.c.l.b16 %v606
      %v673 = vunpack.c.l.b16 %v607
      %v674 = vunpack.c.l.b16 %v608
      %v675 = vunpack.c.h.b16 %v606
      %v676 = vunpack.c.h.b16 %v607
      %v677 = vunpack.c.h.b16 %v608
      %v678 = vunpack.c.l.b16 %v609
      %v679 = vunpack.c.l.b16 %v610
      %v680 = vunpack.c.l.b16 %v611
      %v681 = vunpack.c.h.b16 %v609
      %v682 = vunpack.c.h.b16 %v610
      %v683 = vunpack.c.h.b16 %v611
      %v684 = vpack.c.b16 %v637, %v636
      %v685 = vpack.c.b16 %v638, %v638
      %v686 = vpack.c.b16 %v640, %v639
      %v687 = vpack.c.b16 %v641, %v641
      %v688 = vpack.c.b16 %v643, %v642
      %v689 = vpack.c.b16 %v644, %v644
      %v690 = vpack.c.b16 %v646, %v645
      %v691 = vpack.c.b16 %v647, %v647
      %v692 = vpack.c.b16 %v649, %v648
      %v693 = vpack.c.b16 %v650, %v650
      %v694 = vpack.c.b16 %v652, %v651
      %v695 = vpack.c.b16 %v653, %v653
      %v696 = vpack.c.b16 %v655, %v654
      %v697 = vpack.c.b16 %v656, %v656
      %v698 = vpack.c.b16 %v658, %v657
      %v699 = vpack.c.b16 %v659, %v659
      %v700 = vpack.c.b16 %v661, %v660
      %v701 = vpack.c.b16 %v662, %v662
      %v702 = vpack.c.b16 %v664, %v663
      %v703 = vpack.c.b16 %v665, %v665
      %v704 = vpack.c.b16 %v667, %v666
      %v705 = vpack.c.b16 %v668, %v668
      %v706 = vpack.c.b16 %v670, %v669
      %v707 = vpack.c.b16 %v671, %v671
      %v708 = vpack.c.b16 %v673, %v672
      %v709 = vpack.c.b16 %v674, %v674
      %v710 = vpack.c.b16 %v676, %v675
      %v711 = vpack.c.b16 %v677, %v677
      %v712 = vpack.c.b16 %v679, %v678
      %v713 = vpack.c.b16 %v680, %v680
      %v714 = vpack.c.b16 %v682, %v681
      %v715 = vpack.c.b16 %v683, %v683
      %748 = vst [vmem:[%s174] sm:$0xff] %v684
      %749 = vst [vmem:[%s174 + $0x8] sm:$0xf] %v685
      %750 = vst [vmem:[%s174 + $0xc] sm:$0xff] %v686
      %751 = vst [vmem:[%s174 + $0x14] sm:$0xf] %v687
      %752 = vst [vmem:[%s174 + $0x18] sm:$0xff] %v688
      %753 = vst [vmem:[%s174 + $0x20] sm:$0xf] %v689
      %754 = vst [vmem:[%s174 + $0x24] sm:$0xff] %v690
      %755 = vst [vmem:[%s174 + $0x2c] sm:$0xf] %v691
      %756 = vst [vmem:[%s174 + $0x30] sm:$0xff] %v692
      %757 = vst [vmem:[%s174 + $0x38] sm:$0xf] %v693
      %758 = vst [vmem:[%s174 + $0x3c] sm:$0xff] %v694
      %759 = vst [vmem:[%s174 + $0x44] sm:$0xf] %v695
      %760 = vst [vmem:[%s174 + $0x48] sm:$0xff] %v696
      %761 = vst [vmem:[%s174 + $0x50] sm:$0xf] %v697
      %762 = vst [vmem:[%s174 + $0x54] sm:$0xff] %v698
      %763 = vst [vmem:[%s174 + $0x5c] sm:$0xf] %v699
      %764 = vst [vmem:[%s174 + $0x60] sm:$0xff] %v700
      %765 = vst [vmem:[%s174 + $0x68] sm:$0xf] %v701
      %766 = vst [vmem:[%s174 + $0x6c] sm:$0xff] %v702
      %767 = vst [vmem:[%s174 + $0x74] sm:$0xf] %v703
      %768 = vst [vmem:[%s174 + $0x78] sm:$0xff] %v704
      %769 = vst [vmem:[%s174 + $0x80] sm:$0xf] %v705
      %770 = vst [vmem:[%s174 + $0x84] sm:$0xff] %v706
      %771 = vst [vmem:[%s174 + $0x8c] sm:$0xf] %v707
      %772 = vst [vmem:[%s174 + $0x90] sm:$0xff] %v708
      %773 = vst [vmem:[%s174 + $0x98] sm:$0xf] %v709
      %774 = vst [vmem:[%s174 + $0x9c] sm:$0xff] %v710
      %775 = vst [vmem:[%s174 + $0xa4] sm:$0xf] %v711
      %776 = vst [vmem:[%s174 + $0xa8] sm:$0xff] %v712
      %777 = vst [vmem:[%s174 + $0xb0] sm:$0xf] %v713
      %778 = vst [vmem:[%s174 + $0xb4] sm:$0xff] %v714
      %779 = vst [vmem:[%s174 + $0xbc] sm:$0xf] %v715
      %s780 = smul.u32 16, %s14
      %p781 = scmp.lt.s32.totalorder %s780, 31
      %s782 = scalar_select %p781, %s780, 31
      %s783 = smul.addr %s782, 3
      %s784 = smul.addr %s783, 4
      %s785 = scalar_lea.vmem %s3, %s784
      // Predicated region
      $region33: #{encoder_forward.12} parent=31 // pred_check
        %p786 = pneg %p100
      $region34: #{encoder_forward.12} parent=31 // pred_check_branch
        %788 = sbr.rel (%p786) target = $region36
      $region35: #{encoder_forward.12} parent=31 // pred_region
        %s789 = smul.u32 16, %s14
      $region36: #{encoder_forward.12} parent=31 // pred_fallthru
        _
    $region32: #{encoder_forward.12} parent=5 // pred_fallthru
      _
    %p790 = scmp.le.s32.totalorder 2, %s9
    // Predicated region
    $region37: #{encoder_forward.12} parent=5 // pred_check
      %p791 = pneg %p790
    $region38: #{encoder_forward.12} parent=5 // pred_check_branch
      %793 = sbr.rel (%p791) target = $region40
    $region39: #{encoder_forward.12} parent=5 // pred_region
      %s794 = ssub.s32 %s9, 2
      // Predicated region
      $region41: #{encoder_forward.12} parent=39 // pred_check
        %p795 = pneg %p106
      $region42: #{encoder_forward.12} parent=39 // pred_check_branch
        %797 = sbr.rel (%p795) target = $region44
      $region43: #{encoder_forward.12} parent=39 // pred_region
        %s798 = smul.u32 16, %s15
        %p799 = scmp.lt.s32.totalorder %s798, 31
        %s800 = scalar_select %p799, %s798, 31
        %s801 = smul.addr %s800, 3
        %s802 = smul.addr %s801, 4
        %s803 = scalar_lea.vmem %s3, %s802
      $region44: #{encoder_forward.12} parent=39 // pred_fallthru
        _
    $region40: #{encoder_forward.12} parent=5 // pred_fallthru
      _
  $region6: #{encoder_forward.12} parent=0 // loop_footer
    %s13 = sadd.s32 1, %s9
  $region7: #{encoder_forward.12} parent=0 // loop_footer_branch
    %8 = sbr.rel target = $region3
  $region8: #{encoder_forward.12} parent=0 // loop_exit
    _

// kernel: encoder_forward.14
$region0: #{encoder_forward.14}
  #allocation0 [shape = 'u32[]', space=smem, size = 0x4, offset = 0x4, fixed_abs, tag = 'smem constant byte address 0x4 - core index']
  #allocation1 [shape = 'u32[144,128]{1,0:T(1,128)}', space=vmem, size = 0x12000, scoped, tag = 'internal scratch']
  %s0 = inlined_call_operand.vmem [shape: bf16[256,128], index: 0, kind: input, shape index: {}]
  %s1 = inlined_call_operand.vmem [shape: bf16[128,128], index: 1, kind: input, shape index: {}]
  %s2 = inlined_call_operand.vmem [shape: f32[1,128], index: 2, kind: input, shape index: {}]
  %s3 = inlined_call_operand.vmem [shape: f32[256,128], index: 3, kind: input, shape index: {}]
  %s4 = inlined_call_operand.vmem [shape: f32[1,128], index: 4, kind: input, shape index: {}]
  %s5 = inlined_call_operand.vmem [shape: f32[1,128], index: 5, kind: input, shape index: {}]
  %s6 = inlined_call_operand.vmem [shape: f32[256,128], index: 6, kind: output, shape index: {}]
  %s7 = sld [smem:[#allocation0]]
  $region57: #{encoder_forward.14} parent=0
    _
  %s9 = ssub.s32 1, %s7
  %s10 = scalar_select 0, %s9, %s7
  loop: start=0, step=1, limit=4
  $region2: #{encoder_forward.14} parent=0 // loop_pre_header
    _
  $region3: #{encoder_forward.14} parent=0 // loop_header
    %s12 = sphi 0, %s16
    %p13 = scmp.ge.s32.totalorder %s12, 4
    %s22 = sphi 0, %s24
    %s25 = sphi 0, %s22
    %s26 = sphi 0, %s25
    %s42 = sphi 0, %s26
    %s46 = sphi 0, %s46
    %s48 = sphi 0, %s46
    %s49 = sphi 0, %s48
    %s63 = sphi 0, %s49
    %s67 = sphi 0, %s67
    %s69 = sphi 0, %s67
    %s70 = sphi 0, %s69
    %s84 = sphi 0, %s70
    %s90 = sphi 0, %s92
    %s93 = sphi 0, %s90
    %s94 = sphi 0, %s93
    %s110 = sphi 0, %s94
    %s114 = sphi 0, %s114
    %s116 = sphi 0, %s114
    %s117 = sphi 0, %s116
    %s131 = sphi 0, %s117
    %s135 = sphi 0, %s135
    %s137 = sphi 0, %s135
    %s138 = sphi 0, %s137
    %s152 = sphi 0, %s138
    %s158 = sphi 0, %s160
    %s161 = sphi 0, %s158
    %s162 = sphi 0, %s161
    %s178 = sphi 0, %s162
  $region4: #{encoder_forward.14} parent=0 // loop_header_branch
    %15 = sbr.rel (%p13) target = $region8
  $region5: #{encoder_forward.14} parent=0 // loop_body
    %s17 = ssub.s32 %s12, 1
    %s18 = ssub.s32 %s12, 2
    %s19 = sadd.s32 %s12, 1
    %s20 = ssub.s32 %s12, %s19
    %p21 = scmp.eq.s32.totalorder %s20, 0
    %s23 = sadd.s32 %s22, 1
    %s24 = scalar_select %p21, %s22, %s23
    %p27 = pneg %p21
    %p28 = scmp.eq.s32.totalorder %s12, 1
    %p29 = por %p27, %p28
    %p30 = scmp.ne.s32.totalorder %s22, %s25
    %p31 = scmp.eq.s32.totalorder %s12, 0
    %p32 = por %p30, %p31
    %p33 = scmp.ne.s32.totalorder %s22, %s25
    %p34 = scmp.eq.s32.totalorder %s17, 1
    %p35 = por %p33, %p34
    %p36 = scmp.ne.s32.totalorder %s25, %s26
    %p37 = scmp.eq.s32.totalorder %s17, 0
    %p38 = por %p36, %p37
    %p39 = scmp.ne.s32.totalorder %s25, %s26
    %p40 = scmp.eq.s32.totalorder %s18, 1
    %p41 = por %p39, %p40
    %p43 = scmp.ne.s32.totalorder %s26, %s42
    %p44 = scmp.eq.s32.totalorder %s18, 0
    %p45 = por %p43, %p44
    %s47 = sadd.s32 %s46, 1
    %p50 = scmp.eq.s32.totalorder %s12, 1
    %p51 = scmp.ne.s32.totalorder %s46, %s48
    %p52 = scmp.eq.s32.totalorder %s12, 0
    %p53 = por %p51, %p52
    %p54 = scmp.ne.s32.totalorder %s46, %s48
    %p55 = scmp.eq.s32.totalorder %s17, 1
    %p56 = por %p54, %p55
    %p57 = scmp.ne.s32.totalorder %s48, %s49
    %p58 = scmp.eq.s32.totalorder %s17, 0
    %p59 = por %p57, %p58
    %p60 = scmp.ne.s32.totalorder %s48, %s49
    %p61 = scmp.eq.s32.totalorder %s18, 1
    %p62 = por %p60, %p61
    %p64 = scmp.ne.s32.totalorder %s49, %s63
    %p65 = scmp.eq.s32.totalorder %s18, 0
    %p66 = por %p64, %p65
    %s68 = sadd.s32 %s67, 1
    %p71 = scmp.eq.s32.totalorder %s12, 1
    %p72 = scmp.ne.s32.totalorder %s67, %s69
    %p73 = scmp.eq.s32.totalorder %s12, 0
    %p74 = por %p72, %p73
    %p75 = scmp.ne.s32.totalorder %s67, %s69
    %p76 = scmp.eq.s32.totalorder %s17, 1
    %p77 = por %p75, %p76
    %p78 = scmp.ne.s32.totalorder %s69, %s70
    %p79 = scmp.eq.s32.totalorder %s17, 0
    %p80 = por %p78, %p79
    %p81 = scmp.ne.s32.totalorder %s69, %s70
    %p82 = scmp.eq.s32.totalorder %s18, 1
    %p83 = por %p81, %p82
    %p85 = scmp.ne.s32.totalorder %s70, %s84
    %p86 = scmp.eq.s32.totalorder %s18, 0
    %p87 = por %p85, %p86
    %s88 = ssub.s32 %s12, %s19
    %p89 = scmp.eq.s32.totalorder %s88, 0
    %s91 = sadd.s32 %s90, 1
    %s92 = scalar_select %p89, %s90, %s91
    %p95 = pneg %p89
    %p96 = scmp.eq.s32.totalorder %s12, 1
    %p97 = por %p95, %p96
    %p98 = scmp.ne.s32.totalorder %s90, %s93
    %p99 = scmp.eq.s32.totalorder %s12, 0
    %p100 = por %p98, %p99
    %p101 = scmp.ne.s32.totalorder %s90, %s93
    %p102 = scmp.eq.s32.totalorder %s17, 1
    %p103 = por %p101, %p102
    %p104 = scmp.ne.s32.totalorder %s93, %s94
    %p105 = scmp.eq.s32.totalorder %s17, 0
    %p106 = por %p104, %p105
    %p107 = scmp.ne.s32.totalorder %s93, %s94
    %p108 = scmp.eq.s32.totalorder %s18, 1
    %p109 = por %p107, %p108
    %p111 = scmp.ne.s32.totalorder %s94, %s110
    %p112 = scmp.eq.s32.totalorder %s18, 0
    %p113 = por %p111, %p112
    %s115 = sadd.s32 %s114, 1
    %p118 = scmp.eq.s32.totalorder %s12, 1
    %p119 = scmp.ne.s32.totalorder %s114, %s116
    %p120 = scmp.eq.s32.totalorder %s12, 0
    %p121 = por %p119, %p120
    %p122 = scmp.ne.s32.totalorder %s114, %s116
    %p123 = scmp.eq.s32.totalorder %s17, 1
    %p124 = por %p122, %p123
    %p125 = scmp.ne.s32.totalorder %s116, %s117
    %p126 = scmp.eq.s32.totalorder %s17, 0
    %p127 = por %p125, %p126
    %p128 = scmp.ne.s32.totalorder %s116, %s117
    %p129 = scmp.eq.s32.totalorder %s18, 1
    %p130 = por %p128, %p129
    %p132 = scmp.ne.s32.totalorder %s117, %s131
    %p133 = scmp.eq.s32.totalorder %s18, 0
    %p134 = por %p132, %p133
    %s136 = sadd.s32 %s135, 1
    %p139 = scmp.eq.s32.totalorder %s12, 1
    %p140 = scmp.ne.s32.totalorder %s135, %s137
    %p141 = scmp.eq.s32.totalorder %s12, 0
    %p142 = por %p140, %p141
    %p143 = scmp.ne.s32.totalorder %s135, %s137
    %p144 = scmp.eq.s32.totalorder %s17, 1
    %p145 = por %p143, %p144
    %p146 = scmp.ne.s32.totalorder %s137, %s138
    %p147 = scmp.eq.s32.totalorder %s17, 0
    %p148 = por %p146, %p147
    %p149 = scmp.ne.s32.totalorder %s137, %s138
    %p150 = scmp.eq.s32.totalorder %s18, 1
    %p151 = por %p149, %p150
    %p153 = scmp.ne.s32.totalorder %s138, %s152
    %p154 = scmp.eq.s32.totalorder %s18, 0
    %p155 = por %p153, %p154
    %s156 = ssub.s32 %s12, %s19
    %p157 = scmp.eq.s32.totalorder %s156, 0
    %s159 = sadd.s32 %s158, 1
    %s160 = scalar_select %p157, %s158, %s159
    %p163 = pneg %p157
    %p164 = scmp.eq.s32.totalorder %s12, 1
    %p165 = por %p163, %p164
    %p166 = scmp.ne.s32.totalorder %s158, %s161
    %p167 = scmp.eq.s32.totalorder %s12, 0
    %p168 = por %p166, %p167
    %p169 = scmp.ne.s32.totalorder %s158, %s161
    %p170 = scmp.eq.s32.totalorder %s17, 1
    %p171 = por %p169, %p170
    %p172 = scmp.ne.s32.totalorder %s161, %s162
    %p173 = scmp.eq.s32.totalorder %s17, 0
    %p174 = por %p172, %p173
    %p175 = scmp.ne.s32.totalorder %s161, %s162
    %p176 = scmp.eq.s32.totalorder %s18, 1
    %p177 = por %p175, %p176
    %p179 = scmp.ne.s32.totalorder %s162, %s178
    %p180 = scmp.eq.s32.totalorder %s18, 0
    %p181 = por %p179, %p180
    %p182 = scmp.le.s32.totalorder 1, %s12
    %p183 = scmp.lt.s32.totalorder %s12, 3
    %p184 = pnand %p182, %p183
    %p185 = pneg %p184
    // Predicated region
    $region9: #{encoder_forward.14} parent=5 // pred_check
      _
    $region10: #{encoder_forward.14} parent=5 // pred_check_branch
      %187 = sbr.rel (%p184) target = $region12
    $region11: #{encoder_forward.14} parent=5 // pred_region
      %s188 = ssub.s32 %s12, 1
      // Predicated region
      $region13: #{encoder_forward.14} parent=11 // pred_check
        %p189 = pneg %p59
      $region14: #{encoder_forward.14} parent=11 // pred_check_branch
        %191 = sbr.rel (%p189) target = $region16
      $region15: #{encoder_forward.14} parent=11 // pred_region
        _
      $region16: #{encoder_forward.14} parent=11 // pred_fallthru
        _
      // Predicated region
      $region17: #{encoder_forward.14} parent=11 // pred_check
        %p192 = pneg %p80
      $region18: #{encoder_forward.14} parent=11 // pred_check_branch
        %194 = sbr.rel (%p192) target = $region20
      $region19: #{encoder_forward.14} parent=11 // pred_region
        _
      $region20: #{encoder_forward.14} parent=11 // pred_fallthru
        _
      // Predicated region
      $region21: #{encoder_forward.14} parent=11 // pred_check
        %p195 = pneg %p127
      $region22: #{encoder_forward.14} parent=11 // pred_check_branch
        %197 = sbr.rel (%p195) target = $region24
      $region23: #{encoder_forward.14} parent=11 // pred_region
        _
      $region24: #{encoder_forward.14} parent=11 // pred_fallthru
        _
      // Predicated region
      $region25: #{encoder_forward.14} parent=11 // pred_check
        %p198 = pneg %p148
      $region26: #{encoder_forward.14} parent=11 // pred_check_branch
        %200 = sbr.rel (%p198) target = $region28
      $region27: #{encoder_forward.14} parent=11 // pred_region
        _
      $region28: #{encoder_forward.14} parent=11 // pred_fallthru
        _
    $region12: #{encoder_forward.14} parent=5 // pred_fallthru
      _
    %p201 = scmp.lt.s32.totalorder %s12, 2
    // Predicated region
    $region29: #{encoder_forward.14} parent=5 // pred_check
      %p202 = pneg %p201
    $region30: #{encoder_forward.14} parent=5 // pred_check_branch
      %204 = sbr.rel (%p202) target = $region32
    $region31: #{encoder_forward.14} parent=5 // pred_region
      // Predicated region
      $region33: #{encoder_forward.14} parent=31 // pred_check
        %p205 = pneg %p32
      $region34: #{encoder_forward.14} parent=31 // pred_check_branch
        %207 = sbr.rel (%p205) target = $region36
      $region35: #{encoder_forward.14} parent=31 // pred_region
        %s208 = smul.u32 16, %s12
        %p209 = scmp.lt.s32.totalorder %s208, 31
        %s210 = scalar_select %p209, %s208, 31
        %s211 = smul.addr %s210, 4
        %s212 = scalar_lea.vmem %s0, %s211
        %s213 = smul.u32 16, %s12
      $region36: #{encoder_forward.14} parent=31 // pred_fallthru
        _
      // Predicated region
      $region37: #{encoder_forward.14} parent=31 // pred_check
        %p214 = pneg %p100
      $region38: #{encoder_forward.14} parent=31 // pred_check_branch
        %216 = sbr.rel (%p214) target = $region40
      $region39: #{encoder_forward.14} parent=31 // pred_region
        %s217 = smul.u32 16, %s12
        %p218 = scmp.lt.s32.totalorder %s217, 31
        %s219 = scalar_select %p218, %s217, 31
        %s220 = smul.addr %s219, 8
        %s221 = scalar_lea.vmem %s3, %s220
        %s222 = smul.u32 16, %s12
      $region40: #{encoder_forward.14} parent=31 // pred_fallthru
        _
    $region32: #{encoder_forward.14} parent=5 // pred_fallthru
      _
    %p223 = scmp.le.s32.totalorder 1, %s12
    %p224 = scmp.lt.s32.totalorder %s12, 3
    %p225 = pnand %p223, %p224
    %p226 = pneg %p225
    // Predicated region
    $region41: #{encoder_forward.14} parent=5 // pred_check
      _
    $region42: #{encoder_forward.14} parent=5 // pred_check_branch
      %228 = sbr.rel (%p225) target = $region44
    $region43: #{encoder_forward.14} parent=5 // pred_region
      %s229 = ssub.s32 %s12, 1
      %s230 = smul.u32 16, %s17
      %p231 = scmp.lt.s32.totalorder %s230, 31
      %s232 = scalar_select %p231, %s230, 31
      %s233 = smul.addr %s232, 4
      %s234 = scalar_lea.vmem %s0, %s233
      %p235 = pneg %p38
      %p236 = pneg %p35
      %p237 = pneg %p59
      %p238 = pneg %p56
      %p239 = pneg %p80
      %p240 = pneg %p77
      %s241 = smul.u32 16, %s17
      %p242 = scmp.lt.s32.totalorder %s241, 31
      %s243 = scalar_select %p242, %s241, 31
      %s244 = smul.addr %s243, 8
      %s245 = scalar_lea.vmem %s3, %s244
      %p246 = pneg %p106
      %p247 = pneg %p103
      %p248 = pneg %p127
      %p249 = pneg %p124
      %p250 = pneg %p148
      %p251 = pneg %p145
      %p252 = pneg %p174
      %p253 = pneg %p171
      %s254 = smul.u32 16, %s17
      %p255 = scmp.lt.s32.totalorder %s254, 31
      %s256 = scalar_select %p255, %s254, 31
      %s257 = smul.addr %s256, 8
      %s258 = scalar_lea.vmem %s6, %s257
      %s259 = smul.u32 16, %s17
      %p260 = scmp.lt.s32.totalorder %s259, 31
      %s261 = scalar_select %p260, %s259, 31
      %s262 = smul.addr %s261, 4
      %s263 = scalar_lea.vmem %s0, %s262
      %s264 = smul.u32 16, %s17
      %s265 = smul.u32 16, %s17
      %p266 = scmp.lt.s32.totalorder %s265, 31
      %s267 = scalar_select %p266, %s265, 31
      %s268 = smul.addr %s267, 8
      %s269 = scalar_lea.vmem %s3, %s268
      %s270 = smul.u32 16, %s17
      %s271 = smul.u32 16, %s17
      %p272 = scmp.lt.s32.totalorder %s271, 31
      %s273 = scalar_select %p272, %s271, 31
      %s274 = smul.addr %s273, 8
      %s275 = scalar_lea.vmem %s6, %s274
      %s276 = smul.u32 16, %s17
      %v278 = vld [vmem:[%s263] sm:$0xf]
      %v279 = vld [vmem:[%s263 + $0x4] sm:$0xf]
      %v280 = vld [vmem:[%s263 + $0x8] sm:$0xf]
      %v281 = vld [vmem:[%s263 + $0xc] sm:$0xf]
      %v282 = vld [vmem:[%s263 + $0x10] sm:$0xf]
      %v283 = vld [vmem:[%s263 + $0x14] sm:$0xf]
      %v284 = vld [vmem:[%s263 + $0x18] sm:$0xf]
      %v285 = vld [vmem:[%s263 + $0x1c] sm:$0xf]
      %v286 = vld [vmem:[%s263 + $0x20] sm:$0xf]
      %v287 = vld [vmem:[%s263 + $0x24] sm:$0xf]
      %v288 = vld [vmem:[%s263 + $0x28] sm:$0xf]
      %v289 = vld [vmem:[%s263 + $0x2c] sm:$0xf]
      %v290 = vld [vmem:[%s263 + $0x30] sm:$0xf]
      %v291 = vld [vmem:[%s263 + $0x34] sm:$0xf]
      %v292 = vld [vmem:[%s263 + $0x38] sm:$0xf]
      %v293 = vld [vmem:[%s263 + $0x3c] sm:$0xf]
      %v294 = vld [vmem:[%s1] sm:$0xf]
      %v295 = vld [vmem:[%s1 + $0x4] sm:$0xf]
      %v296 = vld [vmem:[%s1 + $0x8] sm:$0xf]
      %v297 = vld [vmem:[%s1 + $0xc] sm:$0xf]
      %v298 = vld [vmem:[%s1 + $0x10] sm:$0xf]
      %v299 = vld [vmem:[%s1 + $0x14] sm:$0xf]
      %v300 = vld [vmem:[%s1 + $0x18] sm:$0xf]
      %v301 = vld [vmem:[%s1 + $0x1c] sm:$0xf]
      %v302 = vld [vmem:[%s1 + $0x20] sm:$0xf]
      %v303 = vld [vmem:[%s1 + $0x24] sm:$0xf]
      %v304 = vld [vmem:[%s1 + $0x28] sm:$0xf]
      %v305 = vld [vmem:[%s1 + $0x2c] sm:$0xf]
      %v306 = vld [vmem:[%s1 + $0x30] sm:$0xf]
      %v307 = vld [vmem:[%s1 + $0x34] sm:$0xf]
      %v308 = vld [vmem:[%s1 + $0x38] sm:$0xf]
      %v309 = vld [vmem:[%s1 + $0x3c] sm:$0xf]
      %v310 = vld [vmem:[%s2] sm:$0x1]
      %v312 = vlaneseq
      %v313 = vshrl.u32 %v312, 7
      %v314 = vsub.s32 0, %v313
      %v315 = vrot.slane %v310, %v314
      %v333 = vunpack.c.l.b16 %v278
      %v334 = vunpack.c.l.b16 %v279
      %v335 = vunpack.c.l.b16 %v280
      %v336 = vunpack.c.l.b16 %v281
      %v337 = vunpack.c.l.b16 %v282
      %v338 = vunpack.c.l.b16 %v283
      %v339 = vunpack.c.l.b16 %v284
      %v340 = vunpack.c.l.b16 %v285
      %v341 = vunpack.c.l.b16 %v286
      %v342 = vunpack.c.l.b16 %v287
      %v343 = vunpack.c.l.b16 %v288
      %v344 = vunpack.c.l.b16 %v289
      %v345 = vunpack.c.l.b16 %v290
      %v346 = vunpack.c.l.b16 %v291
      %v347 = vunpack.c.l.b16 %v292
      %v348 = vunpack.c.l.b16 %v293
      %v349 = vpack.c.b16 %v334, %v333
      %v350 = vpack.c.b16 %v336, %v335
      %v351 = vpack.c.b16 %v338, %v337
      %v352 = vpack.c.b16 %v340, %v339
      %v353 = vpack.c.b16 %v342, %v341
      %v354 = vpack.c.b16 %v344, %v343
      %v355 = vpack.c.b16 %v346, %v345
      %v356 = vpack.c.b16 %v348, %v347
      %v381 = vunpack.c.l.b16 %v294
      %v382 = vunpack.c.l.b16 %v295
      %v383 = vunpack.c.l.b16 %v296
      %v384 = vunpack.c.l.b16 %v297
      %v385 = vunpack.c.l.b16 %v298
      %v386 = vunpack.c.l.b16 %v299
      %v387 = vunpack.c.l.b16 %v300
      %v388 = vunpack.c.l.b16 %v301
      %v389 = vunpack.c.l.b16 %v302
      %v390 = vunpack.c.l.b16 %v303
      %v391 = vunpack.c.l.b16 %v304
      %v392 = vunpack.c.l.b16 %v305
      %v393 = vunpack.c.l.b16 %v306
      %v394 = vunpack.c.l.b16 %v307
      %v395 = vunpack.c.l.b16 %v308
      %v396 = vunpack.c.l.b16 %v309
      %v397 = vpack.c.b16 %v382, %v381
      %v398 = vpack.c.b16 %v384, %v383
      %v399 = vpack.c.b16 %v386, %v385
      %v400 = vpack.c.b16 %v388, %v387
      %v401 = vpack.c.b16 %v390, %v389
      %v402 = vpack.c.b16 %v392, %v391
      %v403 = vpack.c.b16 %v394, %v393
      %v404 = vpack.c.b16 %v396, %v395
      %413 = vmatprep.subr.bf16.mxu0 0
      %414 = vmatpush1.bf16.msra.mxu0 %v397
      %415 = vmatprep.subr.bf16.mxu0 0
      %416 = vmatpush1.bf16.msra.mxu0 %v398
      %417 = vmatprep.subr.bf16.mxu0 0
      %418 = vmatpush1.bf16.msra.mxu0 %v399
      %419 = vmatprep.subr.bf16.mxu0 0
      %420 = vmatpush1.bf16.msra.mxu0 %v400
      %421 = vmatprep.subr.bf16.mxu0 0
      %422 = vmatpush1.bf16.msra.mxu0 %v401
      %423 = vmatprep.subr.bf16.mxu0 0
      %424 = vmatpush1.bf16.msra.mxu0 %v402
      %425 = vmatprep.subr.bf16.mxu0 0
      %426 = vmatpush1.bf16.msra.mxu0 %v403
      %427 = vmatprep.subr.bf16.mxu0 0
      %428 = vmatpush1.bf16.msra.mxu0 %v404
      %429 = vmatprep.subr.bf16.mxu0 0
      %430 = vmatpush1.bf16.msra.mxu0 0
      %431 = vmatprep.subr.bf16.mxu0 0
      %432 = vmatpush1.bf16.msra.mxu0 0
      %433 = vmatprep.subr.bf16.mxu0 0
      %434 = vmatpush1.bf16.msra.mxu0 0
      %435 = vmatprep.subr.bf16.mxu0 0
      %436 = vmatpush1.bf16.msra.mxu0 0
      %437 = vmatprep.subr.bf16.mxu0 0
      %438 = vmatpush1.bf16.msra.mxu0 0
      %439 = vmatprep.subr.bf16.mxu0 0
      %440 = vmatpush1.bf16.msra.mxu0 0
      %441 = vmatprep.subr.bf16.mxu0 0
      %442 = vmatpush1.bf16.msra.mxu0 0
      %443 = vmatprep.subr.bf16.mxu0 0
      %444 = vmatpush1.bf16.msra.mxu0 0
      %445 = vmatprep.mubr.bf16.mxu0 0
      %446 = vmatmul.mubr.bf16.gmra.mrb[0].mxu0 %v349
      %v447 = vpop.f32.mrb[0].mxu0
      %v448 = vadd.f32 %v315, %v447
      %v449 = vpop.f32.mrb[0].mxu0
      %v450 = vpop.f32.mrb[0].mxu0
      %v451 = vadd.f32 %v315, %v450
      %v452 = vpop.f32.mrb[0].mxu0
      %453 = vmatprep.mubr.bf16.mxu0 0
      %454 = vmatmul.mubr.bf16.gmra.mrb[0].mxu0 %v350
      %v455 = vpop.f32.mrb[0].mxu0
      %v456 = vadd.f32 %v315, %v455
      %v457 = vpop.f32.mrb[0].mxu0
      %v458 = vpop.f32.mrb[0].mxu0
      %v459 = vadd.f32 %v315, %v458
      %v460 = vpop.f32.mrb[0].mxu0
      %461 = vmatprep.mubr.bf16.mxu0 0
      %462 = vmatmul.mubr.bf16.gmra.mrb[0].mxu0 %v351
      %v463 = vpop.f32.mrb[0].mxu0
      %v464 = vadd.f32 %v315, %v463
      %v465 = vpop.f32.mrb[0].mxu0
      %v466 = vpop.f32.mrb[0].mxu0
      %v467 = vadd.f32 %v315, %v466
      %v468 = vpop.f32.mrb[0].mxu0
      %469 = vmatprep.mubr.bf16.mxu0 0
      %470 = vmatmul.mubr.bf16.gmra.mrb[0].mxu0 %v352
      %v471 = vpop.f32.mrb[0].mxu0
      %v472 = vadd.f32 %v315, %v471
      %v473 = vpop.f32.mrb[0].mxu0
      %v474 = vpop.f32.mrb[0].mxu0
      %v475 = vadd.f32 %v315, %v474
      %v476 = vpop.f32.mrb[0].mxu0
      %477 = vmatprep.mubr.bf16.mxu0 0
      %478 = vmatmul.mubr.bf16.gmra.mrb[0].mxu0 %v353
      %v479 = vpop.f32.mrb[0].mxu0
      %v480 = vadd.f32 %v315, %v479
      %v481 = vpop.f32.mrb[0].mxu0
      %v482 = vpop.f32.mrb[0].mxu0
      %v483 = vadd.f32 %v315, %v482
      %v484 = vpop.f32.mrb[0].mxu0
      %485 = vmatprep.mubr.bf16.mxu0 0
      %486 = vmatmul.mubr.bf16.gmra.mrb[0].mxu0 %v354
      %v487 = vpop.f32.mrb[0].mxu0
      %v488 = vadd.f32 %v315, %v487
      %v489 = vpop.f32.mrb[0].mxu0
      %v490 = vpop.f32.mrb[0].mxu0
      %v491 = vadd.f32 %v315, %v490
      %v492 = vpop.f32.mrb[0].mxu0
      %493 = vmatprep.mubr.bf16.mxu0 0
      %494 = vmatmul.mubr.bf16.gmra.mrb[0].mxu0 %v355
      %v495 = vpop.f32.mrb[0].mxu0
      %v496 = vadd.f32 %v315, %v495
      %v497 = vpop.f32.mrb[0].mxu0
      %v498 = vpop.f32.mrb[0].mxu0
      %v499 = vadd.f32 %v315, %v498
      %v500 = vpop.f32.mrb[0].mxu0
      %501 = vmatprep.mubr.bf16.mxu0 0
      %502 = vmatmul.mubr.bf16.gmra.mrb[0].mxu0 %v356
      %v503 = vpop.f32.mrb[0].mxu0
      %v504 = vadd.f32 %v315, %v503
      %v505 = vpop.f32.mrb[0].mxu0
      %v506 = vpop.f32.mrb[0].mxu0
      %v507 = vadd.f32 %v315, %v506
      %v508 = vpop.f32.mrb[0].mxu0
      %509 = vdwg.mxu0
      %v510 = vld [vmem:[%s269] sm:$0xff]
      %v511 = vld [vmem:[%s269 + $0x8] sm:$0xff]
      %v512 = vld [vmem:[%s269 + $0x10] sm:$0xff]
      %v513 = vld [vmem:[%s269 + $0x18] sm:$0xff]
      %v514 = vld [vmem:[%s269 + $0x20] sm:$0xff]
      %v515 = vld [vmem:[%s269 + $0x28] sm:$0xff]
      %v516 = vld [vmem:[%s269 + $0x30] sm:$0xff]
      %v517 = vld [vmem:[%s269 + $0x38] sm:$0xff]
      %v518 = vld [vmem:[%s269 + $0x40] sm:$0xff]
      %v519 = vld [vmem:[%s269 + $0x48] sm:$0xff]
      %v520 = vld [vmem:[%s269 + $0x50] sm:$0xff]
      %v521 = vld [vmem:[%s269 + $0x58] sm:$0xff]
      %v522 = vld [vmem:[%s269 + $0x60] sm:$0xff]
      %v523 = vld [vmem:[%s269 + $0x68] sm:$0xff]
      %v524 = vld [vmem:[%s269 + $0x70] sm:$0xff]
      %v525 = vld [vmem:[%s269 + $0x78] sm:$0xff]
      %v526 = vadd.f32 %v448, %v510
      %v527 = vadd.f32 %v451, %v511
      %v528 = vadd.f32 %v456, %v512
      %v529 = vadd.f32 %v459, %v513
      %v530 = vadd.f32 %v464, %v514
      %v531 = vadd.f32 %v467, %v515
      %v532 = vadd.f32 %v472, %v516
      %v533 = vadd.f32 %v475, %v517
      %v534 = vadd.f32 %v480, %v518
      %v535 = vadd.f32 %v483, %v519
      %v536 = vadd.f32 %v488, %v520
      %v537 = vadd.f32 %v491, %v521
      %v538 = vadd.f32 %v496, %v522
      %v539 = vadd.f32 %v499, %v523
      %v540 = vadd.f32 %v504, %v524
      %v541 = vadd.f32 %v507, %v525
      %v542 = vld [vmem:[%s4] sm:$0x1]
      %v543 = vld [vmem:[%s5] sm:$0x1]
      %544 = vadd.xlane.f32.xlu0 %v526
      %v545 = vpop.xlane.xlu0 %544
      %546 = vadd.xlane.f32.xlu0 %v527
      %v547 = vpop.xlane.xlu0 %546
      %548 = vadd.xlane.f32.xlu0 %v528
      %v549 = vpop.xlane.xlu0 %548
      %550 = vadd.xlane.f32.xlu0 %v529
      %v551 = vpop.xlane.xlu0 %550
      %552 = vadd.xlane.f32.xlu0 %v530
      %v553 = vpop.xlane.xlu0 %552
      %554 = vadd.xlane.f32.xlu0 %v531
      %v555 = vpop.xlane.xlu0 %554
      %556 = vadd.xlane.f32.xlu0 %v532
      %v557 = vpop.xlane.xlu0 %556
      %558 = vadd.xlane.f32.xlu0 %v533
      %v559 = vpop.xlane.xlu0 %558
      %560 = vadd.xlane.f32.xlu0 %v534
      %v561 = vpop.xlane.xlu0 %560
      %562 = vadd.xlane.f32.xlu0 %v535
      %v563 = vpop.xlane.xlu0 %562
      %564 = vadd.xlane.f32.xlu0 %v536
      %v565 = vpop.xlane.xlu0 %564
      %566 = vadd.xlane.f32.xlu0 %v537
      %v567 = vpop.xlane.xlu0 %566
      %568 = vadd.xlane.f32.xlu0 %v538
      %v569 = vpop.xlane.xlu0 %568
      %570 = vadd.xlane.f32.xlu0 %v539
      %v571 = vpop.xlane.xlu0 %570
      %572 = vadd.xlane.f32.xlu0 %v540
      %v573 = vpop.xlane.xlu0 %572
      %574 = vadd.xlane.f32.xlu0 %v541
      %v575 = vpop.xlane.xlu0 %574
      %v576 = vrcp.pop 128.0
      %v577 = vmul.f32 %v545, %v576
      %v578 = vmul.f32 %v547, %v576
      %v579 = vmul.f32 %v549, %v576
      %v580 = vmul.f32 %v551, %v576
      %v581 = vmul.f32 %v553, %v576
      %v582 = vmul.f32 %v555, %v576
      %v583 = vmul.f32 %v557, %v576
      %v584 = vmul.f32 %v559, %v576
      %v585 = vmul.f32 %v561, %v576
      %v586 = vmul.f32 %v563, %v576
      %v587 = vmul.f32 %v565, %v576
      %v588 = vmul.f32 %v567, %v576
      %v589 = vmul.f32 %v569, %v576
      %v590 = vmul.f32 %v571, %v576
      %v591 = vmul.f32 %v573, %v576
      %v592 = vmul.f32 %v575, %v576
      %v593 = vsub.f32 %v526, %v577
      %v594 = vsub.f32 %v527, %v578
      %v595 = vsub.f32 %v528, %v579
      %v596 = vsub.f32 %v529, %v580
      %v597 = vsub.f32 %v530, %v581
      %v598 = vsub.f32 %v531, %v582
      %v599 = vsub.f32 %v532, %v583
      %v600 = vsub.f32 %v533, %v584
      %v601 = vsub.f32 %v534, %v585
      %v602 = vsub.f32 %v535, %v586
      %v603 = vsub.f32 %v536, %v587
      %v604 = vsub.f32 %v537, %v588
      %v605 = vsub.f32 %v538, %v589
      %v606 = vsub.f32 %v539, %v590
      %v607 = vsub.f32 %v540, %v591
      %v608 = vsub.f32 %v541, %v592
      %v609 = vmul.f32 %v593, %v593
      %v610 = vmul.f32 %v594, %v594
      %v611 = vmul.f32 %v595, %v595
      %v612 = vmul.f32 %v596, %v596
      %v613 = vmul.f32 %v597, %v597
      %v614 = vmul.f32 %v598, %v598
      %v615 = vmul.f32 %v599, %v599
      %v616 = vmul.f32 %v600, %v600
      %v617 = vmul.f32 %v601, %v601
      %v618 = vmul.f32 %v602, %v602
      %v619 = vmul.f32 %v603, %v603
      %v620 = vmul.f32 %v604, %v604
      %v621 = vmul.f32 %v605, %v605
      %v622 = vmul.f32 %v606, %v606
      %v623 = vmul.f32 %v607, %v607
      %v624 = vmul.f32 %v608, %v608
      %625 = vadd.xlane.f32.xlu0 %v609
      %v626 = vpop.xlane.xlu0 %625
      %627 = vadd.xlane.f32.xlu0 %v610
      %v628 = vpop.xlane.xlu0 %627
      %629 = vadd.xlane.f32.xlu0 %v611
      %v630 = vpop.xlane.xlu0 %629
      %631 = vadd.xlane.f32.xlu0 %v612
      %v632 = vpop.xlane.xlu0 %631
      %633 = vadd.xlane.f32.xlu0 %v613
      %v634 = vpop.xlane.xlu0 %633
      %635 = vadd.xlane.f32.xlu0 %v614
      %v636 = vpop.xlane.xlu0 %635
      %637 = vadd.xlane.f32.xlu0 %v615
      %v638 = vpop.xlane.xlu0 %637
      %639 = vadd.xlane.f32.xlu0 %v616
      %v640 = vpop.xlane.xlu0 %639
      %641 = vadd.xlane.f32.xlu0 %v617
      %v642 = vpop.xlane.xlu0 %641
      %643 = vadd.xlane.f32.xlu0 %v618
      %v644 = vpop.xlane.xlu0 %643
      %645 = vadd.xlane.f32.xlu0 %v619
      %v646 = vpop.xlane.xlu0 %645
      %647 = vadd.xlane.f32.xlu0 %v620
      %v648 = vpop.xlane.xlu0 %647
      %649 = vadd.xlane.f32.xlu0 %v621
      %v650 = vpop.xlane.xlu0 %649
      %651 = vadd.xlane.f32.xlu0 %v622
      %v652 = vpop.xlane.xlu0 %651
      %653 = vadd.xlane.f32.xlu0 %v623
      %v654 = vpop.xlane.xlu0 %653
      %655 = vadd.xlane.f32.xlu0 %v624
      %v656 = vpop.xlane.xlu0 %655
      %v657 = vmul.f32 %v626, %v576
      %v658 = vmul.f32 %v628, %v576
      %v659 = vmul.f32 %v630, %v576
      %v660 = vmul.f32 %v632, %v576
      %v661 = vmul.f32 %v634, %v576
      %v662 = vmul.f32 %v636, %v576
      %v663 = vmul.f32 %v638, %v576
      %v664 = vmul.f32 %v640, %v576
      %v665 = vmul.f32 %v642, %v576
      %v666 = vmul.f32 %v644, %v576
      %v667 = vmul.f32 %v646, %v576
      %v668 = vmul.f32 %v648, %v576
      %v669 = vmul.f32 %v650, %v576
      %v670 = vmul.f32 %v652, %v576
      %v671 = vmul.f32 %v654, %v576
      %v672 = vmul.f32 %v656, %v576
      %v673 = vadd.f32 %v657, 1e-12
      %v674 = vadd.f32 %v658, 1e-12
      %v675 = vadd.f32 %v659, 1e-12
      %v676 = vadd.f32 %v660, 1e-12
      %v677 = vadd.f32 %v661, 1e-12
      %v678 = vadd.f32 %v662, 1e-12
      %v679 = vadd.f32 %v663, 1e-12
      %v680 = vadd.f32 %v664, 1e-12
      %v681 = vadd.f32 %v665, 1e-12
      %v682 = vadd.f32 %v666, 1e-12
      %v683 = vadd.f32 %v667, 1e-12
      %v684 = vadd.f32 %v668, 1e-12
      %v685 = vadd.f32 %v669, 1e-12
      %v686 = vadd.f32 %v670, 1e-12
      %v687 = vadd.f32 %v671, 1e-12
      %v688 = vadd.f32 %v672, 1e-12
      %v689 = vrsqrt.pop %v673
      %v690 = vrsqrt.pop %v674
      %v691 = vrsqrt.pop %v675
      %v692 = vrsqrt.pop %v676
      %v693 = vrsqrt.pop %v677
      %v694 = vrsqrt.pop %v678
      %v695 = vrsqrt.pop %v679
      %v696 = vrsqrt.pop %v680
      %v697 = vrsqrt.pop %v681
      %v698 = vrsqrt.pop %v682
      %v699 = vrsqrt.pop %v683
      %v700 = vrsqrt.pop %v684
      %v701 = vrsqrt.pop %v685
      %v702 = vrsqrt.pop %v686
      %v703 = vrsqrt.pop %v687
      %v704 = vrsqrt.pop %v688
      %v705 = vmul.f32 %v593, %v689
      %v706 = vmul.f32 %v594, %v690
      %v707 = vmul.f32 %v595, %v691
      %v708 = vmul.f32 %v596, %v692
      %v709 = vmul.f32 %v597, %v693
      %v710 = vmul.f32 %v598, %v694
      %v711 = vmul.f32 %v599, %v695
      %v712 = vmul.f32 %v600, %v696
      %v713 = vmul.f32 %v601, %v697
      %v714 = vmul.f32 %v602, %v698
      %v715 = vmul.f32 %v603, %v699
      %v716 = vmul.f32 %v604, %v700
      %v717 = vmul.f32 %v605, %v701
      %v718 = vmul.f32 %v606, %v702
      %v719 = vmul.f32 %v607, %v703
      %v720 = vmul.f32 %v608, %v704
      %v722 = vlaneseq
      %v723 = vshrl.u32 %v722, 7
      %v724 = vsub.s32 0, %v723
      %v725 = vrot.slane %v542, %v724
      %v727 = vmul.f32 %v705, %v725
      %v728 = vmul.f32 %v706, %v725
      %v729 = vmul.f32 %v707, %v725
      %v730 = vmul.f32 %v708, %v725
      %v731 = vmul.f32 %v709, %v725
      %v732 = vmul.f32 %v710, %v725
      %v733 = vmul.f32 %v711, %v725
      %v734 = vmul.f32 %v712, %v725
      %v735 = vmul.f32 %v713, %v725
      %v736 = vmul.f32 %v714, %v725
      %v737 = vmul.f32 %v715, %v725
      %v738 = vmul.f32 %v716, %v725
      %v739 = vmul.f32 %v717, %v725
      %v740 = vmul.f32 %v718, %v725
      %v741 = vmul.f32 %v719, %v725
      %v742 = vmul.f32 %v720, %v725
      %v744 = vlaneseq
      %v745 = vshrl.u32 %v744, 7
      %v746 = vsub.s32 0, %v745
      %v747 = vrot.slane %v543, %v746
      %v749 = vadd.f32 %v727, %v747
      %v750 = vadd.f32 %v728, %v747
      %v751 = vadd.f32 %v729, %v747
      %v752 = vadd.f32 %v730, %v747
      %v753 = vadd.f32 %v731, %v747
      %v754 = vadd.f32 %v732, %v747
      %v755 = vadd.f32 %v733, %v747
      %v756 = vadd.f32 %v734, %v747
      %v757 = vadd.f32 %v735, %v747
      %v758 = vadd.f32 %v736, %v747
      %v759 = vadd.f32 %v737, %v747
      %v760 = vadd.f32 %v738, %v747
      %v761 = vadd.f32 %v739, %v747
      %v762 = vadd.f32 %v740, %v747
      %v763 = vadd.f32 %v741, %v747
      %v764 = vadd.f32 %v742, %v747
      %765 = vst [vmem:[%s275] sm:$0xff] %v749
      %766 = vst [vmem:[%s275 + $0x8] sm:$0xff] %v750
      %767 = vst [vmem:[%s275 + $0x10] sm:$0xff] %v751
      %768 = vst [vmem:[%s275 + $0x18] sm:$0xff] %v752
      %769 = vst [vmem:[%s275 + $0x20] sm:$0xff] %v753
      %770 = vst [vmem:[%s275 + $0x28] sm:$0xff] %v754
      %771 = vst [vmem:[%s275 + $0x30] sm:$0xff] %v755
      %772 = vst [vmem:[%s275 + $0x38] sm:$0xff] %v756
      %773 = vst [vmem:[%s275 + $0x40] sm:$0xff] %v757
      %774 = vst [vmem:[%s275 + $0x48] sm:$0xff] %v758
      %775 = vst [vmem:[%s275 + $0x50] sm:$0xff] %v759
      %776 = vst [vmem:[%s275 + $0x58] sm:$0xff] %v760
      %777 = vst [vmem:[%s275 + $0x60] sm:$0xff] %v761
      %778 = vst [vmem:[%s275 + $0x68] sm:$0xff] %v762
      %779 = vst [vmem:[%s275 + $0x70] sm:$0xff] %v763
      %780 = vst [vmem:[%s275 + $0x78] sm:$0xff] %v764
      %s781 = smul.u32 16, %s17
      %p782 = scmp.lt.s32.totalorder %s781, 31
      %s783 = scalar_select %p782, %s781, 31
      %s784 = smul.addr %s783, 8
      %s785 = scalar_lea.vmem %s6, %s784
      // Predicated region
      $region45: #{encoder_forward.14} parent=43 // pred_check
        %p786 = pneg %p171
      $region46: #{encoder_forward.14} parent=43 // pred_check_branch
        %788 = sbr.rel (%p786) target = $region48
      $region47: #{encoder_forward.14} parent=43 // pred_region
        %s789 = smul.u32 16, %s17
      $region48: #{encoder_forward.14} parent=43 // pred_fallthru
        _
    $region44: #{encoder_forward.14} parent=5 // pred_fallthru
      _
    %p790 = scmp.le.s32.totalorder 2, %s12
    // Predicated region
    $region49: #{encoder_forward.14} parent=5 // pred_check
      %p791 = pneg %p790
    $region50: #{encoder_forward.14} parent=5 // pred_check_branch
      %793 = sbr.rel (%p791) target = $region52
    $region51: #{encoder_forward.14} parent=5 // pred_region
      %s794 = ssub.s32 %s12, 2
      // Predicated region
      $region53: #{encoder_forward.14} parent=51 // pred_check
        %p795 = pneg %p177
      $region54: #{encoder_forward.14} parent=51 // pred_check_branch
        %797 = sbr.rel (%p795) target = $region56
      $region55: #{encoder_forward.14} parent=51 // pred_region
        %s798 = smul.u32 16, %s18
        %p799 = scmp.lt.s32.totalorder %s798, 31
        %s800 = scalar_select %p799, %s798, 31
        %s801 = smul.addr %s800, 8
        %s802 = scalar_lea.vmem %s6, %s801
      $region56: #{encoder_forward.14} parent=51 // pred_fallthru
        _
    $region52: #{encoder_forward.14} parent=5 // pred_fallthru
      _
  $region6: #{encoder_forward.14} parent=0 // loop_footer
    %s16 = sadd.s32 1, %s12
  $region7: #{encoder_forward.14} parent=0 // loop_footer_branch
    %11 = sbr.rel target = $region3
  $region8: #{encoder_forward.14} parent=0 // loop_exit
    _

// kernel: encoder_forward.13
$region0: #{encoder_forward.13}
  #allocation0 [shape = 'u32[]', space=smem, size = 0x4, offset = 0x4, fixed_abs, tag = 'smem constant byte address 0x4 - core index']
  #allocation1 [shape = 'u32[144,128]{1,0:T(1,128)}', space=vmem, size = 0x12000, scoped, tag = 'internal scratch']
  %s0 = inlined_call_operand.vmem [shape: bf16[2,128,384], index: 0, kind: input, shape index: {}]
  %s1 = inlined_call_operand.vmem [shape: f32[2,1,128], index: 1, kind: input, shape index: {}]
  %s2 = inlined_call_operand.vmem [shape: bf16[2,128,128], index: 2, kind: output, shape index: {}]
  %s3 = sld [smem:[#allocation0]]
  $region41: #{encoder_forward.13} parent=0
    _
  %s5 = ssub.s32 1, %s3
  %s6 = scalar_select 0, %s5, %s3
  loop: start=0, step=1, limit=4
  $region2: #{encoder_forward.13} parent=0 // loop_pre_header
    _
  $region3: #{encoder_forward.13} parent=0 // loop_header
    %s8 = sphi 0, %s12
    %p9 = scmp.ge.s32.totalorder %s8, 4
    %s18 = sphi 0, %s20
    %s21 = sphi 0, %s18
    %s22 = sphi 0, %s21
    %s38 = sphi 0, %s22
    %s44 = sphi 0, %s46
    %s47 = sphi 0, %s44
    %s48 = sphi 0, %s47
    %s64 = sphi 0, %s48
    %s70 = sphi 0, %s72
    %s73 = sphi 0, %s70
    %s74 = sphi 0, %s73
    %s90 = sphi 0, %s74
  $region4: #{encoder_forward.13} parent=0 // loop_header_branch
    %11 = sbr.rel (%p9) target = $region8
  $region5: #{encoder_forward.13} parent=0 // loop_body
    %s13 = ssub.s32 %s8, 1
    %s14 = ssub.s32 %s8, 2
    %s15 = sadd.s32 %s8, 1
    %s16 = ssub.s32 %s8, %s15
    %p17 = scmp.eq.s32.totalorder %s16, 0
    %s19 = sadd.s32 %s18, 1
    %s20 = scalar_select %p17, %s18, %s19
    %p23 = pneg %p17
    %p24 = scmp.eq.s32.totalorder %s8, 1
    %p25 = por %p23, %p24
    %p26 = scmp.ne.s32.totalorder %s18, %s21
    %p27 = scmp.eq.s32.totalorder %s8, 0
    %p28 = por %p26, %p27
    %p29 = scmp.ne.s32.totalorder %s18, %s21
    %p30 = scmp.eq.s32.totalorder %s13, 1
    %p31 = por %p29, %p30
    %p32 = scmp.ne.s32.totalorder %s21, %s22
    %p33 = scmp.eq.s32.totalorder %s13, 0
    %p34 = por %p32, %p33
    %p35 = scmp.ne.s32.totalorder %s21, %s22
    %p36 = scmp.eq.s32.totalorder %s14, 1
    %p37 = por %p35, %p36
    %p39 = scmp.ne.s32.totalorder %s22, %s38
    %p40 = scmp.eq.s32.totalorder %s14, 0
    %p41 = por %p39, %p40
    %s42 = ssub.s32 %s8, %s15
    %p43 = scmp.eq.s32.totalorder %s42, 0
    %s45 = sadd.s32 %s44, 1
    %s46 = scalar_select %p43, %s44, %s45
    %p49 = pneg %p43
    %p50 = scmp.eq.s32.totalorder %s8, 1
    %p51 = por %p49, %p50
    %p52 = scmp.ne.s32.totalorder %s44, %s47
    %p53 = scmp.eq.s32.totalorder %s8, 0
    %p54 = por %p52, %p53
    %p55 = scmp.ne.s32.totalorder %s44, %s47
    %p56 = scmp.eq.s32.totalorder %s13, 1
    %p57 = por %p55, %p56
    %p58 = scmp.ne.s32.totalorder %s47, %s48
    %p59 = scmp.eq.s32.totalorder %s13, 0
    %p60 = por %p58, %p59
    %p61 = scmp.ne.s32.totalorder %s47, %s48
    %p62 = scmp.eq.s32.totalorder %s14, 1
    %p63 = por %p61, %p62
    %p65 = scmp.ne.s32.totalorder %s48, %s64
    %p66 = scmp.eq.s32.totalorder %s14, 0
    %p67 = por %p65, %p66
    %s68 = ssub.s32 %s8, %s15
    %p69 = scmp.eq.s32.totalorder %s68, 0
    %s71 = sadd.s32 %s70, 1
    %s72 = scalar_select %p69, %s70, %s71
    %p75 = pneg %p69
    %p76 = scmp.eq.s32.totalorder %s8, 1
    %p77 = por %p75, %p76
    %p78 = scmp.ne.s32.totalorder %s70, %s73
    %p79 = scmp.eq.s32.totalorder %s8, 0
    %p80 = por %p78, %p79
    %p81 = scmp.ne.s32.totalorder %s70, %s73
    %p82 = scmp.eq.s32.totalorder %s13, 1
    %p83 = por %p81, %p82
    %p84 = scmp.ne.s32.totalorder %s73, %s74
    %p85 = scmp.eq.s32.totalorder %s13, 0
    %p86 = por %p84, %p85
    %p87 = scmp.ne.s32.totalorder %s73, %s74
    %p88 = scmp.eq.s32.totalorder %s14, 1
    %p89 = por %p87, %p88
    %p91 = scmp.ne.s32.totalorder %s74, %s90
    %p92 = scmp.eq.s32.totalorder %s14, 0
    %p93 = por %p91, %p92
    %p94 = scmp.le.s32.totalorder 1, %s8
    %p95 = scmp.lt.s32.totalorder %s8, 3
    %p96 = pnand %p94, %p95
    %p97 = pneg %p96
    // Predicated region
    $region9: #{encoder_forward.13} parent=5 // pred_check
      _
    $region10: #{encoder_forward.13} parent=5 // pred_check_branch
      %99 = sbr.rel (%p96) target = $region12
    $region11: #{encoder_forward.13} parent=5 // pred_region
      %s100 = ssub.s32 %s8, 1
    $region12: #{encoder_forward.13} parent=5 // pred_fallthru
      _
    %p101 = scmp.lt.s32.totalorder %s8, 2
    // Predicated region
    $region13: #{encoder_forward.13} parent=5 // pred_check
      %p102 = pneg %p101
    $region14: #{encoder_forward.13} parent=5 // pred_check_branch
      %104 = sbr.rel (%p102) target = $region16
    $region15: #{encoder_forward.13} parent=5 // pred_region
      // Predicated region
      $region17: #{encoder_forward.13} parent=15 // pred_check
        %p105 = pneg %p28
      $region18: #{encoder_forward.13} parent=15 // pred_check_branch
        %107 = sbr.rel (%p105) target = $region20
      $region19: #{encoder_forward.13} parent=15 // pred_region
        %p108 = scmp.lt.s32.totalorder %s8, 1
        %s109 = scalar_select %p108, %s8, 1
        %s110 = smul.addr %s109, 48
        %s111 = smul.addr %s110, 4
        %s112 = scalar_lea.vmem %s0, %s111
      $region20: #{encoder_forward.13} parent=15 // pred_fallthru
        _
      // Predicated region
      $region21: #{encoder_forward.13} parent=15 // pred_check
        %p113 = pneg %p54
      $region22: #{encoder_forward.13} parent=15 // pred_check_branch
        %115 = sbr.rel (%p113) target = $region24
      $region23: #{encoder_forward.13} parent=15 // pred_region
        %p116 = scmp.lt.s32.totalorder %s8, 1
        %s117 = scalar_select %p116, %s8, 1
        %s118 = scalar_lea.vmem %s1, %s117
      $region24: #{encoder_forward.13} parent=15 // pred_fallthru
        _
    $region16: #{encoder_forward.13} parent=5 // pred_fallthru
      _
    %p119 = scmp.le.s32.totalorder 1, %s8
    %p120 = scmp.lt.s32.totalorder %s8, 3
    %p121 = pnand %p119, %p120
    %p122 = pneg %p121
    // Predicated region
    $region25: #{encoder_forward.13} parent=5 // pred_check
      _
    $region26: #{encoder_forward.13} parent=5 // pred_check_branch
      %124 = sbr.rel (%p121) target = $region28
    $region27: #{encoder_forward.13} parent=5 // pred_region
      %s125 = ssub.s32 %s8, 1
      %p126 = scmp.lt.s32.totalorder %s13, 1
      %s127 = scalar_select %p126, %s13, 1
      %s128 = smul.addr %s127, 48
      %s129 = smul.addr %s128, 4
      %s130 = scalar_lea.vmem %s0, %s129
      %p131 = pneg %p34
      %p132 = pneg %p31
      %p133 = scmp.lt.s32.totalorder %s13, 1
      %s134 = scalar_select %p133, %s13, 1
      %s135 = scalar_lea.vmem %s1, %s134
      %p136 = pneg %p60
      %p137 = pneg %p57
      %p138 = pneg %p86
      %p139 = pneg %p83
      %p140 = scmp.lt.s32.totalorder %s13, 1
      %s141 = scalar_select %p140, %s13, 1
      %s142 = smul.addr %s141, 16
      %s143 = smul.addr %s142, 4
      %s144 = scalar_lea.vmem %s2, %s143
      %p145 = scmp.lt.s32.totalorder %s13, 1
      %s146 = scalar_select %p145, %s13, 1
      %s147 = smul.addr %s146, 48
      %s148 = smul.addr %s147, 4
      %s149 = scalar_lea.vmem %s0, %s148
      %p150 = scmp.lt.s32.totalorder %s13, 1
      %s151 = scalar_select %p150, %s13, 1
      %s152 = scalar_lea.vmem %s1, %s151
      %p153 = scmp.lt.s32.totalorder %s13, 1
      %s154 = scalar_select %p153, %s13, 1
      %s155 = smul.addr %s154, 16
      %s156 = smul.addr %s155, 4
      %s157 = scalar_lea.vmem %s2, %s156
      %v159 = vld [vmem:[%s149] sm:$0xff]
      %v160 = vld [vmem:[%s149 + $0x8] sm:$0xf]
      %v161 = vld [vmem:[%s149 + $0xc] sm:$0xff]
      %v162 = vld [vmem:[%s149 + $0x14] sm:$0xf]
      %v163 = vld [vmem:[%s149 + $0x18] sm:$0xff]
      %v164 = vld [vmem:[%s149 + $0x20] sm:$0xf]
      %v165 = vld [vmem:[%s149 + $0x24] sm:$0xff]
      %v166 = vld [vmem:[%s149 + $0x2c] sm:$0xf]
      %v167 = vld [vmem:[%s149 + $0x30] sm:$0xff]
      %v168 = vld [vmem:[%s149 + $0x38] sm:$0xf]
      %v169 = vld [vmem:[%s149 + $0x3c] sm:$0xff]
      %v170 = vld [vmem:[%s149 + $0x44] sm:$0xf]
      %v171 = vld [vmem:[%s149 + $0x48] sm:$0xff]
      %v172 = vld [vmem:[%s149 + $0x50] sm:$0xf]
      %v173 = vld [vmem:[%s149 + $0x54] sm:$0xff]
      %v174 = vld [vmem:[%s149 + $0x5c] sm:$0xf]
      %v175 = vld [vmem:[%s149 + $0x60] sm:$0xff]
      %v176 = vld [vmem:[%s149 + $0x68] sm:$0xf]
      %v177 = vld [vmem:[%s149 + $0x6c] sm:$0xff]
      %v178 = vld [vmem:[%s149 + $0x74] sm:$0xf]
      %v179 = vld [vmem:[%s149 + $0x78] sm:$0xff]
      %v180 = vld [vmem:[%s149 + $0x80] sm:$0xf]
      %v181 = vld [vmem:[%s149 + $0x84] sm:$0xff]
      %v182 = vld [vmem:[%s149 + $0x8c] sm:$0xf]
      %v183 = vld [vmem:[%s149 + $0x90] sm:$0xff]
      %v184 = vld [vmem:[%s149 + $0x98] sm:$0xf]
      %v185 = vld [vmem:[%s149 + $0x9c] sm:$0xff]
      %v186 = vld [vmem:[%s149 + $0xa4] sm:$0xf]
      %v187 = vld [vmem:[%s149 + $0xa8] sm:$0xff]
      %v188 = vld [vmem:[%s149 + $0xb0] sm:$0xf]
      %v189 = vld [vmem:[%s149 + $0xb4] sm:$0xff]
      %v190 = vld [vmem:[%s149 + $0xbc] sm:$0xf]
      %v191 = vld [vmem:[%s152] sm:$0x1]
      %v193 = vlaneseq
      %v194 = vshrl.u32 %v193, 7
      %v195 = vsub.s32 0, %v194
      %v196 = vrot.slane %v191, %v195
      %v214 = vunpack.c.l.b16 %v159
      %v215 = vunpack.c.l.b16 %v161
      %v216 = vunpack.c.l.b16 %v163
      %v217 = vunpack.c.l.b16 %v165
      %v218 = vunpack.c.l.b16 %v167
      %v219 = vunpack.c.l.b16 %v169
      %v220 = vunpack.c.l.b16 %v171
      %v221 = vunpack.c.l.b16 %v173
      %v222 = vunpack.c.l.b16 %v175
      %v223 = vunpack.c.l.b16 %v177
      %v224 = vunpack.c.l.b16 %v179
      %v225 = vunpack.c.l.b16 %v181
      %v226 = vunpack.c.l.b16 %v183
      %v227 = vunpack.c.l.b16 %v185
      %v228 = vunpack.c.l.b16 %v187
      %v229 = vunpack.c.l.b16 %v189
      %v230 = vpack.c.b16 %v215, %v214
      %v231 = vpack.c.b16 %v217, %v216
      %v232 = vpack.c.b16 %v219, %v218
      %v233 = vpack.c.b16 %v221, %v220
      %v234 = vpack.c.b16 %v223, %v222
      %v235 = vpack.c.b16 %v225, %v224
      %v236 = vpack.c.b16 %v227, %v226
      %v237 = vpack.c.b16 %v229, %v228
      %v238 = vunpack.c.h.b16 %v159
      %v239 = vunpack.c.h.b16 %v161
      %v240 = vunpack.c.h.b16 %v163
      %v241 = vunpack.c.h.b16 %v165
      %v242 = vunpack.c.h.b16 %v167
      %v243 = vunpack.c.h.b16 %v169
      %v244 = vunpack.c.h.b16 %v171
      %v245 = vunpack.c.h.b16 %v173
      %v246 = vunpack.c.h.b16 %v175
      %v247 = vunpack.c.h.b16 %v177
      %v248 = vunpack.c.h.b16 %v179
      %v249 = vunpack.c.h.b16 %v181
      %v250 = vunpack.c.h.b16 %v183
      %v251 = vunpack.c.h.b16 %v185
      %v252 = vunpack.c.h.b16 %v187
      %v253 = vunpack.c.h.b16 %v189
      %v254 = vpack.c.b16 %v239, %v238
      %v255 = vpack.c.b16 %v241, %v240
      %v256 = vpack.c.b16 %v243, %v242
      %v257 = vpack.c.b16 %v245, %v244
      %v258 = vpack.c.b16 %v247, %v246
      %v259 = vpack.c.b16 %v249, %v248
      %v260 = vpack.c.b16 %v251, %v250
      %v261 = vpack.c.b16 %v253, %v252
      %vm262 = vcmask 261120
      %v264 = vsel %vm262, %v230, 0
      %v267 = vsel %vm262, %v231, 0
      %v270 = vsel %vm262, %v232, 0
      %v273 = vsel %vm262, %v233, 0
      %v276 = vsel %vm262, %v234, 0
      %v279 = vsel %vm262, %v235, 0
      %v282 = vsel %vm262, %v236, 0
      %v285 = vsel %vm262, %v237, 0
      %v288 = vsel %vm262, %v254, 0
      %v291 = vsel %vm262, %v255, 0
      %v294 = vsel %vm262, %v256, 0
      %v297 = vsel %vm262, %v257, 0
      %v300 = vsel %vm262, %v258, 0
      %v303 = vsel %vm262, %v259, 0
      %v306 = vsel %vm262, %v260, 0
      %v309 = vsel %vm262, %v261, 0
      %311 = vmatprep.subr.bf16.mxu0 0
      %312 = vmatpush1.bf16.xpose.msra.mxu0 %v288
      %313 = vmatprep.subr.bf16.mxu0 0
      %314 = vmatpush1.bf16.xpose.msra.mxu0 %v291
      %315 = vmatprep.subr.bf16.mxu0 0
      %316 = vmatpush1.bf16.xpose.msra.mxu0 %v294
      %317 = vmatprep.subr.bf16.mxu0 0
      %318 = vmatpush1.bf16.xpose.msra.mxu0 %v297
      %319 = vmatprep.subr.bf16.mxu0 0
      %320 = vmatpush1.bf16.xpose.msra.mxu0 %v300
      %321 = vmatprep.subr.bf16.mxu0 0
      %322 = vmatpush1.bf16.xpose.msra.mxu0 %v303
      %323 = vmatprep.subr.bf16.mxu0 0
      %324 = vmatpush1.bf16.xpose.msra.mxu0 %v306
      %325 = vmatprep.subr.bf16.mxu0 0
      %326 = vmatpush1.bf16.xpose.msra.mxu0 %v309
      %327 = vmatprep.subr.bf16.mxu0 0
      %328 = vmatpush1.bf16.xpose.msra.mxu0 0
      %329 = vmatprep.subr.bf16.mxu0 0
      %330 = vmatpush1.bf16.xpose.msra.mxu0 0
      %331 = vmatprep.subr.bf16.mxu0 0
      %332 = vmatpush1.bf16.xpose.msra.mxu0 0
      %333 = vmatprep.subr.bf16.mxu0 0
      %334 = vmatpush1.bf16.xpose.msra.mxu0 0
      %335 = vmatprep.subr.bf16.mxu0 0
      %336 = vmatpush1.bf16.xpose.msra.mxu0 0
      %337 = vmatprep.subr.bf16.mxu0 0
      %338 = vmatpush1.bf16.xpose.msra.mxu0 0
      %339 = vmatprep.subr.bf16.mxu0 0
      %340 = vmatpush1.bf16.xpose.msra.mxu0 0
      %341 = vmatprep.subr.bf16.mxu0 0
      %342 = vmatpush1.bf16.xpose.msra.mxu0 0
      %343 = vmatprep.mubr.bf16.mxu0 0
      %344 = vmatmul.mubr.bf16.gmra.mrb[0].mxu0 %v264
      %v345 = vpop.f32.mrb[0].mxu0
      %v346 = vadd.f32 %v196, %v345
      %v347 = vpop.f32.mrb[0].mxu0
      %v348 = vpop.f32.mrb[0].mxu0
      %v349 = vadd.f32 %v196, %v348
      %v350 = vpop.f32.mrb[0].mxu0
      %351 = vmatprep.mubr.bf16.mxu0 0
      %352 = vmatmul.mubr.bf16.gmra.mrb[0].mxu0 %v267
      %v353 = vpop.f32.mrb[0].mxu0
      %v354 = vadd.f32 %v196, %v353
      %v355 = vpop.f32.mrb[0].mxu0
      %v356 = vpop.f32.mrb[0].mxu0
      %v357 = vadd.f32 %v196, %v356
      %v358 = vpop.f32.mrb[0].mxu0
      %359 = vmatprep.mubr.bf16.mxu0 0
      %360 = vmatmul.mubr.bf16.gmra.mrb[0].mxu0 %v270
      %v361 = vpop.f32.mrb[0].mxu0
      %v362 = vadd.f32 %v196, %v361
      %v363 = vpop.f32.mrb[0].mxu0
      %v364 = vpop.f32.mrb[0].mxu0
      %v365 = vadd.f32 %v196, %v364
      %v366 = vpop.f32.mrb[0].mxu0
      %367 = vmatprep.mubr.bf16.mxu0 0
      %368 = vmatmul.mubr.bf16.gmra.mrb[0].mxu0 %v273
      %v369 = vpop.f32.mrb[0].mxu0
      %v370 = vadd.f32 %v196, %v369
      %v371 = vpop.f32.mrb[0].mxu0
      %v372 = vpop.f32.mrb[0].mxu0
      %v373 = vadd.f32 %v196, %v372
      %v374 = vpop.f32.mrb[0].mxu0
      %375 = vmatprep.mubr.bf16.mxu0 0
      %376 = vmatmul.mubr.bf16.gmra.mrb[0].mxu0 %v276
      %v377 = vpop.f32.mrb[0].mxu0
      %v378 = vadd.f32 %v196, %v377
      %v379 = vpop.f32.mrb[0].mxu0
      %v380 = vpop.f32.mrb[0].mxu0
      %v381 = vadd.f32 %v196, %v380
      %v382 = vpop.f32.mrb[0].mxu0
      %383 = vmatprep.mubr.bf16.mxu0 0
      %384 = vmatmul.mubr.bf16.gmra.mrb[0].mxu0 %v279
      %v385 = vpop.f32.mrb[0].mxu0
      %v386 = vadd.f32 %v196, %v385
      %v387 = vpop.f32.mrb[0].mxu0
      %v388 = vpop.f32.mrb[0].mxu0
      %v389 = vadd.f32 %v196, %v388
      %v390 = vpop.f32.mrb[0].mxu0
      %391 = vmatprep.mubr.bf16.mxu0 0
      %392 = vmatmul.mubr.bf16.gmra.mrb[0].mxu0 %v282
      %v393 = vpop.f32.mrb[0].mxu0
      %v394 = vadd.f32 %v196, %v393
      %v395 = vpop.f32.mrb[0].mxu0
      %v396 = vpop.f32.mrb[0].mxu0
      %v397 = vadd.f32 %v196, %v396
      %v398 = vpop.f32.mrb[0].mxu0
      %399 = vmatprep.mubr.bf16.mxu0 0
      %400 = vmatmul.mubr.bf16.gmra.mrb[0].mxu0 %v285
      %v401 = vpop.f32.mrb[0].mxu0
      %v402 = vadd.f32 %v196, %v401
      %v403 = vpop.f32.mrb[0].mxu0
      %v404 = vpop.f32.mrb[0].mxu0
      %v405 = vadd.f32 %v196, %v404
      %v406 = vpop.f32.mrb[0].mxu0
      %407 = vdwg.mxu0
      %408 = vmax.xlane.f32.xlu0 %v346
      %v409 = vpop.xlane.xlu0 %408
      %410 = vmax.xlane.f32.xlu0 %v349
      %v411 = vpop.xlane.xlu0 %410
      %412 = vmax.xlane.f32.xlu0 %v354
      %v413 = vpop.xlane.xlu0 %412
      %414 = vmax.xlane.f32.xlu0 %v357
      %v415 = vpop.xlane.xlu0 %414
      %416 = vmax.xlane.f32.xlu0 %v362
      %v417 = vpop.xlane.xlu0 %416
      %418 = vmax.xlane.f32.xlu0 %v365
      %v419 = vpop.xlane.xlu0 %418
      %420 = vmax.xlane.f32.xlu0 %v370
      %v421 = vpop.xlane.xlu0 %420
      %422 = vmax.xlane.f32.xlu0 %v373
      %v423 = vpop.xlane.xlu0 %422
      %424 = vmax.xlane.f32.xlu0 %v378
      %v425 = vpop.xlane.xlu0 %424
      %426 = vmax.xlane.f32.xlu0 %v381
      %v427 = vpop.xlane.xlu0 %426
      %428 = vmax.xlane.f32.xlu0 %v386
      %v429 = vpop.xlane.xlu0 %428
      %430 = vmax.xlane.f32.xlu0 %v389
      %v431 = vpop.xlane.xlu0 %430
      %432 = vmax.xlane.f32.xlu0 %v394
      %v433 = vpop.xlane.xlu0 %432
      %434 = vmax.xlane.f32.xlu0 %v397
      %v435 = vpop.xlane.xlu0 %434
      %436 = vmax.xlane.f32.xlu0 %v402
      %v437 = vpop.xlane.xlu0 %436
      %438 = vmax.xlane.f32.xlu0 %v405
      %v439 = vpop.xlane.xlu0 %438
      %v440 = vsub.f32 %v346, %v409
      %v441 = vsub.f32 %v349, %v411
      %v442 = vsub.f32 %v354, %v413
      %v443 = vsub.f32 %v357, %v415
      %v444 = vsub.f32 %v362, %v417
      %v445 = vsub.f32 %v365, %v419
      %v446 = vsub.f32 %v370, %v421
      %v447 = vsub.f32 %v373, %v423
      %v448 = vsub.f32 %v378, %v425
      %v449 = vsub.f32 %v381, %v427
      %v450 = vsub.f32 %v386, %v429
      %v451 = vsub.f32 %v389, %v431
      %v452 = vsub.f32 %v394, %v433
      %v453 = vsub.f32 %v397, %v435
      %v454 = vsub.f32 %v402, %v437
      %v455 = vsub.f32 %v405, %v439
      %v456 = vmul.f32 %v440, 1.442695
      %v457 = vpow.pop %v456
      %v458 = vmul.f32 %v441, 1.442695
      %v459 = vpow.pop %v458
      %v460 = vmul.f32 %v442, 1.442695
      %v461 = vpow.pop %v460
      %v462 = vmul.f32 %v443, 1.442695
      %v463 = vpow.pop %v462
      %v464 = vmul.f32 %v444, 1.442695
      %v465 = vpow.pop %v464
      %v466 = vmul.f32 %v445, 1.442695
      %v467 = vpow.pop %v466
      %v468 = vmul.f32 %v446, 1.442695
      %v469 = vpow.pop %v468
      %v470 = vmul.f32 %v447, 1.442695
      %v471 = vpow.pop %v470
      %v472 = vmul.f32 %v448, 1.442695
      %v473 = vpow.pop %v472
      %v474 = vmul.f32 %v449, 1.442695
      %v475 = vpow.pop %v474
      %v476 = vmul.f32 %v450, 1.442695
      %v477 = vpow.pop %v476
      %v478 = vmul.f32 %v451, 1.442695
      %v479 = vpow.pop %v478
      %v480 = vmul.f32 %v452, 1.442695
      %v481 = vpow.pop %v480
      %v482 = vmul.f32 %v453, 1.442695
      %v483 = vpow.pop %v482
      %v484 = vmul.f32 %v454, 1.442695
      %v485 = vpow.pop %v484
      %v486 = vmul.f32 %v455, 1.442695
      %v487 = vpow.pop %v486
      %488 = vadd.xlane.f32.xlu0 %v457
      %v489 = vpop.xlane.xlu0 %488
      %490 = vadd.xlane.f32.xlu0 %v459
      %v491 = vpop.xlane.xlu0 %490
      %492 = vadd.xlane.f32.xlu0 %v461
      %v493 = vpop.xlane.xlu0 %492
      %494 = vadd.xlane.f32.xlu0 %v463
      %v495 = vpop.xlane.xlu0 %494
      %496 = vadd.xlane.f32.xlu0 %v465
      %v497 = vpop.xlane.xlu0 %496
      %498 = vadd.xlane.f32.xlu0 %v467
      %v499 = vpop.xlane.xlu0 %498
      %500 = vadd.xlane.f32.xlu0 %v469
      %v501 = vpop.xlane.xlu0 %500
      %502 = vadd.xlane.f32.xlu0 %v471
      %v503 = vpop.xlane.xlu0 %502
      %504 = vadd.xlane.f32.xlu0 %v473
      %v505 = vpop.xlane.xlu0 %504
      %506 = vadd.xlane.f32.xlu0 %v475
      %v507 = vpop.xlane.xlu0 %506
      %508 = vadd.xlane.f32.xlu0 %v477
      %v509 = vpop.xlane.xlu0 %508
      %510 = vadd.xlane.f32.xlu0 %v479
      %v511 = vpop.xlane.xlu0 %510
      %512 = vadd.xlane.f32.xlu0 %v481
      %v513 = vpop.xlane.xlu0 %512
      %514 = vadd.xlane.f32.xlu0 %v483
      %v515 = vpop.xlane.xlu0 %514
      %516 = vadd.xlane.f32.xlu0 %v485
      %v517 = vpop.xlane.xlu0 %516
      %518 = vadd.xlane.f32.xlu0 %v487
      %v519 = vpop.xlane.xlu0 %518
      %v520 = vrcp.pop %v489
      %v521 = vrcp.pop %v491
      %v522 = vrcp.pop %v493
      %v523 = vrcp.pop %v495
      %v524 = vrcp.pop %v497
      %v525 = vrcp.pop %v499
      %v526 = vrcp.pop %v501
      %v527 = vrcp.pop %v503
      %v528 = vrcp.pop %v505
      %v529 = vrcp.pop %v507
      %v530 = vrcp.pop %v509
      %v531 = vrcp.pop %v511
      %v532 = vrcp.pop %v513
      %v533 = vrcp.pop %v515
      %v534 = vrcp.pop %v517
      %v535 = vrcp.pop %v519
      %v536 = vmul.f32 %v457, %v520
      %v537 = vmul.f32 %v459, %v521
      %v538 = vmul.f32 %v461, %v522
      %v539 = vmul.f32 %v463, %v523
      %v540 = vmul.f32 %v465, %v524
      %v541 = vmul.f32 %v467, %v525
      %v542 = vmul.f32 %v469, %v526
      %v543 = vmul.f32 %v471, %v527
      %v544 = vmul.f32 %v473, %v528
      %v545 = vmul.f32 %v475, %v529
      %v546 = vmul.f32 %v477, %v530
      %v547 = vmul.f32 %v479, %v531
      %v548 = vmul.f32 %v481, %v532
      %v549 = vmul.f32 %v483, %v533
      %v550 = vmul.f32 %v485, %v534
      %v551 = vmul.f32 %v487, %v535
      %v552 = vpack.c.bf16 %v537, %v536
      %v553 = vpack.c.bf16 %v539, %v538
      %v554 = vpack.c.bf16 %v541, %v540
      %v555 = vpack.c.bf16 %v543, %v542
      %v556 = vpack.c.bf16 %v545, %v544
      %v557 = vpack.c.bf16 %v547, %v546
      %v558 = vpack.c.bf16 %v549, %v548
      %v559 = vpack.c.bf16 %v551, %v550
      %v576 = vunpack.c.l.b16 %v160
      %v577 = vunpack.c.l.b16 %v162
      %v578 = vunpack.c.l.b16 %v164
      %v579 = vunpack.c.l.b16 %v166
      %v580 = vunpack.c.l.b16 %v168
      %v581 = vunpack.c.l.b16 %v170
      %v582 = vunpack.c.l.b16 %v172
      %v583 = vunpack.c.l.b16 %v174
      %v584 = vunpack.c.l.b16 %v176
      %v585 = vunpack.c.l.b16 %v178
      %v586 = vunpack.c.l.b16 %v180
      %v587 = vunpack.c.l.b16 %v182
      %v588 = vunpack.c.l.b16 %v184
      %v589 = vunpack.c.l.b16 %v186
      %v590 = vunpack.c.l.b16 %v188
      %v591 = vunpack.c.l.b16 %v190
      %v592 = vpack.c.b16 %v577, %v576
      %v593 = vpack.c.b16 %v579, %v578
      %v594 = vpack.c.b16 %v581, %v580
      %v595 = vpack.c.b16 %v583, %v582
      %v596 = vpack.c.b16 %v585, %v584
      %v597 = vpack.c.b16 %v587, %v586
      %v598 = vpack.c.b16 %v589, %v588
      %v599 = vpack.c.b16 %v591, %v590
      %608 = vmatprep.subr.bf16.mxu0 0
      %609 = vmatpush1.bf16.msra.mxu0 %v592
      %610 = vmatprep.subr.bf16.mxu0 0
      %611 = vmatpush1.bf16.msra.mxu0 %v593
      %612 = vmatprep.subr.bf16.mxu0 0
      %613 = vmatpush1.bf16.msra.mxu0 %v594
      %614 = vmatprep.subr.bf16.mxu0 0
      %615 = vmatpush1.bf16.msra.mxu0 %v595
      %616 = vmatprep.subr.bf16.mxu0 0
      %617 = vmatpush1.bf16.msra.mxu0 %v596
      %618 = vmatprep.subr.bf16.mxu0 0
      %619 = vmatpush1.bf16.msra.mxu0 %v597
      %620 = vmatprep.subr.bf16.mxu0 0
      %621 = vmatpush1.bf16.msra.mxu0 %v598
      %622 = vmatprep.subr.bf16.mxu0 0
      %623 = vmatpush1.bf16.msra.mxu0 %v599
      %624 = vmatprep.subr.bf16.mxu0 0
      %625 = vmatpush1.bf16.msra.mxu0 0
      %626 = vmatprep.subr.bf16.mxu0 0
      %627 = vmatpush1.bf16.msra.mxu0 0
      %628 = vmatprep.subr.bf16.mxu0 0
      %629 = vmatpush1.bf16.msra.mxu0 0
      %630 = vmatprep.subr.bf16.mxu0 0
      %631 = vmatpush1.bf16.msra.mxu0 0
      %632 = vmatprep.subr.bf16.mxu0 0
      %633 = vmatpush1.bf16.msra.mxu0 0
      %634 = vmatprep.subr.bf16.mxu0 0
      %635 = vmatpush1.bf16.msra.mxu0 0
      %636 = vmatprep.subr.bf16.mxu0 0
      %637 = vmatpush1.bf16.msra.mxu0 0
      %638 = vmatprep.subr.bf16.mxu0 0
      %639 = vmatpush1.bf16.msra.mxu0 0
      %640 = vmatprep.mubr.bf16.mxu0 0
      %641 = vmatmul.mubr.bf16.gmra.mrb[0].mxu0 %v552
      %v642 = vpop.f32.mrb[0].mxu0
      %v643 = vadd.f32 0.0, %v642
      %v644 = vpop.f32.mrb[0].mxu0
      %v645 = vpop.f32.mrb[0].mxu0
      %v646 = vadd.f32 0.0, %v645
      %v647 = vpop.f32.mrb[0].mxu0
      %648 = vmatprep.mubr.bf16.mxu0 0
      %649 = vmatmul.mubr.bf16.gmra.mrb[0].mxu0 %v553
      %v650 = vpop.f32.mrb[0].mxu0
      %v651 = vadd.f32 0.0, %v650
      %v652 = vpop.f32.mrb[0].mxu0
      %v653 = vpop.f32.mrb[0].mxu0
      %v654 = vadd.f32 0.0, %v653
      %v655 = vpop.f32.mrb[0].mxu0
      %656 = vmatprep.mubr.bf16.mxu0 0
      %657 = vmatmul.mubr.bf16.gmra.mrb[0].mxu0 %v554
      %v658 = vpop.f32.mrb[0].mxu0
      %v659 = vadd.f32 0.0, %v658
      %v660 = vpop.f32.mrb[0].mxu0
      %v661 = vpop.f32.mrb[0].mxu0
      %v662 = vadd.f32 0.0, %v661
      %v663 = vpop.f32.mrb[0].mxu0
      %664 = vmatprep.mubr.bf16.mxu0 0
      %665 = vmatmul.mubr.bf16.gmra.mrb[0].mxu0 %v555
      %v666 = vpop.f32.mrb[0].mxu0
      %v667 = vadd.f32 0.0, %v666
      %v668 = vpop.f32.mrb[0].mxu0
      %v669 = vpop.f32.mrb[0].mxu0
      %v670 = vadd.f32 0.0, %v669
      %v671 = vpop.f32.mrb[0].mxu0
      %672 = vmatprep.mubr.bf16.mxu0 0
      %673 = vmatmul.mubr.bf16.gmra.mrb[0].mxu0 %v556
      %v674 = vpop.f32.mrb[0].mxu0
      %v675 = vadd.f32 0.0, %v674
      %v676 = vpop.f32.mrb[0].mxu0
      %v677 = vpop.f32.mrb[0].mxu0
      %v678 = vadd.f32 0.0, %v677
      %v679 = vpop.f32.mrb[0].mxu0
      %680 = vmatprep.mubr.bf16.mxu0 0
      %681 = vmatmul.mubr.bf16.gmra.mrb[0].mxu0 %v557
      %v682 = vpop.f32.mrb[0].mxu0
      %v683 = vadd.f32 0.0, %v682
      %v684 = vpop.f32.mrb[0].mxu0
      %v685 = vpop.f32.mrb[0].mxu0
      %v686 = vadd.f32 0.0, %v685
      %v687 = vpop.f32.mrb[0].mxu0
      %688 = vmatprep.mubr.bf16.mxu0 0
      %689 = vmatmul.mubr.bf16.gmra.mrb[0].mxu0 %v558
      %v690 = vpop.f32.mrb[0].mxu0
      %v691 = vadd.f32 0.0, %v690
      %v692 = vpop.f32.mrb[0].mxu0
      %v693 = vpop.f32.mrb[0].mxu0
      %v694 = vadd.f32 0.0, %v693
      %v695 = vpop.f32.mrb[0].mxu0
      %696 = vmatprep.mubr.bf16.mxu0 0
      %697 = vmatmul.mubr.bf16.gmra.mrb[0].mxu0 %v559
      %v698 = vpop.f32.mrb[0].mxu0
      %v699 = vadd.f32 0.0, %v698
      %v700 = vpop.f32.mrb[0].mxu0
      %v701 = vpop.f32.mrb[0].mxu0
      %v702 = vadd.f32 0.0, %v701
      %v703 = vpop.f32.mrb[0].mxu0
      %704 = vdwg.mxu0
      %705 = vrot.lane.b32.xlu0 %v230, 96
      %v706 = vpop.permute.xlu0 %705
      %707 = vrot.lane.b32.xlu0 %v231, 96
      %v708 = vpop.permute.xlu0 %707
      %709 = vrot.lane.b32.xlu0 %v232, 96
      %v710 = vpop.permute.xlu0 %709
      %711 = vrot.lane.b32.xlu0 %v233, 96
      %v712 = vpop.permute.xlu0 %711
      %713 = vrot.lane.b32.xlu0 %v234, 96
      %v714 = vpop.permute.xlu0 %713
      %715 = vrot.lane.b32.xlu0 %v235, 96
      %v716 = vpop.permute.xlu0 %715
      %717 = vrot.lane.b32.xlu0 %v236, 96
      %v718 = vpop.permute.xlu0 %717
      %719 = vrot.lane.b32.xlu0 %v237, 96
      %v720 = vpop.permute.xlu0 %719
      %721 = vrot.lane.b32.xlu0 %v254, 96
      %v722 = vpop.permute.xlu0 %721
      %723 = vrot.lane.b32.xlu0 %v255, 96
      %v724 = vpop.permute.xlu0 %723
      %725 = vrot.lane.b32.xlu0 %v256, 96
      %v726 = vpop.permute.xlu0 %725
      %727 = vrot.lane.b32.xlu0 %v257, 96
      %v728 = vpop.permute.xlu0 %727
      %729 = vrot.lane.b32.xlu0 %v258, 96
      %v730 = vpop.permute.xlu0 %729
      %731 = vrot.lane.b32.xlu0 %v259, 96
      %v732 = vpop.permute.xlu0 %731
      %733 = vrot.lane.b32.xlu0 %v260, 96
      %v734 = vpop.permute.xlu0 %733
      %735 = vrot.lane.b32.xlu0 %v261, 96
      %v736 = vpop.permute.xlu0 %735
      %v738 = vsel %vm262, %v706, 0
      %v741 = vsel %vm262, %v708, 0
      %v744 = vsel %vm262, %v710, 0
      %v747 = vsel %vm262, %v712, 0
      %v750 = vsel %vm262, %v714, 0
      %v753 = vsel %vm262, %v716, 0
      %v756 = vsel %vm262, %v718, 0
      %v759 = vsel %vm262, %v720, 0
      %v762 = vsel %vm262, %v722, 0
      %v765 = vsel %vm262, %v724, 0
      %v768 = vsel %vm262, %v726, 0
      %v771 = vsel %vm262, %v728, 0
      %v774 = vsel %vm262, %v730, 0
      %v777 = vsel %vm262, %v732, 0
      %v780 = vsel %vm262, %v734, 0
      %v783 = vsel %vm262, %v736, 0
      %785 = vmatprep.subr.bf16.mxu0 0
      %786 = vmatpush1.bf16.xpose.msra.mxu0 %v762
      %787 = vmatprep.subr.bf16.mxu0 0
      %788 = vmatpush1.bf16.xpose.msra.mxu0 %v765
      %789 = vmatprep.subr.bf16.mxu0 0
      %790 = vmatpush1.bf16.xpose.msra.mxu0 %v768
      %791 = vmatprep.subr.bf16.mxu0 0
      %792 = vmatpush1.bf16.xpose.msra.mxu0 %v771
      %793 = vmatprep.subr.bf16.mxu0 0
      %794 = vmatpush1.bf16.xpose.msra.mxu0 %v774
      %795 = vmatprep.subr.bf16.mxu0 0
      %796 = vmatpush1.bf16.xpose.msra.mxu0 %v777
      %797 = vmatprep.subr.bf16.mxu0 0
      %798 = vmatpush1.bf16.xpose.msra.mxu0 %v780
      %799 = vmatprep.subr.bf16.mxu0 0
      %800 = vmatpush1.bf16.xpose.msra.mxu0 %v783
      %801 = vmatprep.subr.bf16.mxu0 0
      %802 = vmatpush1.bf16.xpose.msra.mxu0 0
      %803 = vmatprep.subr.bf16.mxu0 0
      %804 = vmatpush1.bf16.xpose.msra.mxu0 0
      %805 = vmatprep.subr.bf16.mxu0 0
      %806 = vmatpush1.bf16.xpose.msra.mxu0 0
      %807 = vmatprep.subr.bf16.mxu0 0
      %808 = vmatpush1.bf16.xpose.msra.mxu0 0
      %809 = vmatprep.subr.bf16.mxu0 0
      %810 = vmatpush1.bf16.xpose.msra.mxu0 0
      %811 = vmatprep.subr.bf16.mxu0 0
      %812 = vmatpush1.bf16.xpose.msra.mxu0 0
      %813 = vmatprep.subr.bf16.mxu0 0
      %814 = vmatpush1.bf16.xpose.msra.mxu0 0
      %815 = vmatprep.subr.bf16.mxu0 0
      %816 = vmatpush1.bf16.xpose.msra.mxu0 0
      %817 = vmatprep.mubr.bf16.mxu0 0
      %818 = vmatmul.mubr.bf16.gmra.mrb[0].mxu0 %v738
      %v819 = vpop.f32.mrb[0].mxu0
      %v820 = vadd.f32 %v196, %v819
      %v821 = vpop.f32.mrb[0].mxu0
      %v822 = vpop.f32.mrb[0].mxu0
      %v823 = vadd.f32 %v196, %v822
      %v824 = vpop.f32.mrb[0].mxu0
      %825 = vmatprep.mubr.bf16.mxu0 0
      %826 = vmatmul.mubr.bf16.gmra.mrb[0].mxu0 %v741
      %v827 = vpop.f32.mrb[0].mxu0
      %v828 = vadd.f32 %v196, %v827
      %v829 = vpop.f32.mrb[0].mxu0
      %v830 = vpop.f32.mrb[0].mxu0
      %v831 = vadd.f32 %v196, %v830
      %v832 = vpop.f32.mrb[0].mxu0
      %833 = vmatprep.mubr.bf16.mxu0 0
      %834 = vmatmul.mubr.bf16.gmra.mrb[0].mxu0 %v744
      %v835 = vpop.f32.mrb[0].mxu0
      %v836 = vadd.f32 %v196, %v835
      %v837 = vpop.f32.mrb[0].mxu0
      %v838 = vpop.f32.mrb[0].mxu0
      %v839 = vadd.f32 %v196, %v838
      %v840 = vpop.f32.mrb[0].mxu0
      %841 = vmatprep.mubr.bf16.mxu0 0
      %842 = vmatmul.mubr.bf16.gmra.mrb[0].mxu0 %v747
      %v843 = vpop.f32.mrb[0].mxu0
      %v844 = vadd.f32 %v196, %v843
      %v845 = vpop.f32.mrb[0].mxu0
      %v846 = vpop.f32.mrb[0].mxu0
      %v847 = vadd.f32 %v196, %v846
      %v848 = vpop.f32.mrb[0].mxu0
      %849 = vmatprep.mubr.bf16.mxu0 0
      %850 = vmatmul.mubr.bf16.gmra.mrb[0].mxu0 %v750
      %v851 = vpop.f32.mrb[0].mxu0
      %v852 = vadd.f32 %v196, %v851
      %v853 = vpop.f32.mrb[0].mxu0
      %v854 = vpop.f32.mrb[0].mxu0
      %v855 = vadd.f32 %v196, %v854
      %v856 = vpop.f32.mrb[0].mxu0
      %857 = vmatprep.mubr.bf16.mxu0 0
      %858 = vmatmul.mubr.bf16.gmra.mrb[0].mxu0 %v753
      %v859 = vpop.f32.mrb[0].mxu0
      %v860 = vadd.f32 %v196, %v859
      %v861 = vpop.f32.mrb[0].mxu0
      %v862 = vpop.f32.mrb[0].mxu0
      %v863 = vadd.f32 %v196, %v862
      %v864 = vpop.f32.mrb[0].mxu0
      %865 = vmatprep.mubr.bf16.mxu0 0
      %866 = vmatmul.mubr.bf16.gmra.mrb[0].mxu0 %v756
      %v867 = vpop.f32.mrb[0].mxu0
      %v868 = vadd.f32 %v196, %v867
      %v869 = vpop.f32.mrb[0].mxu0
      %v870 = vpop.f32.mrb[0].mxu0
      %v871 = vadd.f32 %v196, %v870
      %v872 = vpop.f32.mrb[0].mxu0
      %873 = vmatprep.mubr.bf16.mxu0 0
      %874 = vmatmul.mubr.bf16.gmra.mrb[0].mxu0 %v759
      %v875 = vpop.f32.mrb[0].mxu0
      %v876 = vadd.f32 %v196, %v875
      %v877 = vpop.f32.mrb[0].mxu0
      %v878 = vpop.f32.mrb[0].mxu0
      %v879 = vadd.f32 %v196, %v878
      %v880 = vpop.f32.mrb[0].mxu0
      %881 = vdwg.mxu0
      %882 = vmax.xlane.f32.xlu0 %v820
      %v883 = vpop.xlane.xlu0 %882
      %884 = vmax.xlane.f32.xlu0 %v823
      %v885 = vpop.xlane.xlu0 %884
      %886 = vmax.xlane.f32.xlu0 %v828
      %v887 = vpop.xlane.xlu0 %886
      %888 = vmax.xlane.f32.xlu0 %v831
      %v889 = vpop.xlane.xlu0 %888
      %890 = vmax.xlane.f32.xlu0 %v836
      %v891 = vpop.xlane.xlu0 %890
      %892 = vmax.xlane.f32.xlu0 %v839
      %v893 = vpop.xlane.xlu0 %892
      %894 = vmax.xlane.f32.xlu0 %v844
      %v895 = vpop.xlane.xlu0 %894
      %896 = vmax.xlane.f32.xlu0 %v847
      %v897 = vpop.xlane.xlu0 %896
      %898 = vmax.xlane.f32.xlu0 %v852
      %v899 = vpop.xlane.xlu0 %898
      %900 = vmax.xlane.f32.xlu0 %v855
      %v901 = vpop.xlane.xlu0 %900
      %902 = vmax.xlane.f32.xlu0 %v860
      %v903 = vpop.xlane.xlu0 %902
      %904 = vmax.xlane.f32.xlu0 %v863
      %v905 = vpop.xlane.xlu0 %904
      %906 = vmax.xlane.f32.xlu0 %v868
      %v907 = vpop.xlane.xlu0 %906
      %908 = vmax.xlane.f32.xlu0 %v871
      %v909 = vpop.xlane.xlu0 %908
      %910 = vmax.xlane.f32.xlu0 %v876
      %v911 = vpop.xlane.xlu0 %910
      %912 = vmax.xlane.f32.xlu0 %v879
      %v913 = vpop.xlane.xlu0 %912
      %v914 = vsub.f32 %v820, %v883
      %v915 = vsub.f32 %v823, %v885
      %v916 = vsub.f32 %v828, %v887
      %v917 = vsub.f32 %v831, %v889
      %v918 = vsub.f32 %v836, %v891
      %v919 = vsub.f32 %v839, %v893
      %v920 = vsub.f32 %v844, %v895
      %v921 = vsub.f32 %v847, %v897
      %v922 = vsub.f32 %v852, %v899
      %v923 = vsub.f32 %v855, %v901
      %v924 = vsub.f32 %v860, %v903
      %v925 = vsub.f32 %v863, %v905
      %v926 = vsub.f32 %v868, %v907
      %v927 = vsub.f32 %v871, %v909
      %v928 = vsub.f32 %v876, %v911
      %v929 = vsub.f32 %v879, %v913
      %v930 = vmul.f32 %v914, 1.442695
      %v931 = vpow.pop %v930
      %v932 = vmul.f32 %v915, 1.442695
      %v933 = vpow.pop %v932
      %v934 = vmul.f32 %v916, 1.442695
      %v935 = vpow.pop %v934
      %v936 = vmul.f32 %v917, 1.442695
      %v937 = vpow.pop %v936
      %v938 = vmul.f32 %v918, 1.442695
      %v939 = vpow.pop %v938
      %v940 = vmul.f32 %v919, 1.442695
      %v941 = vpow.pop %v940
      %v942 = vmul.f32 %v920, 1.442695
      %v943 = vpow.pop %v942
      %v944 = vmul.f32 %v921, 1.442695
      %v945 = vpow.pop %v944
      %v946 = vmul.f32 %v922, 1.442695
      %v947 = vpow.pop %v946
      %v948 = vmul.f32 %v923, 1.442695
      %v949 = vpow.pop %v948
      %v950 = vmul.f32 %v924, 1.442695
      %v951 = vpow.pop %v950
      %v952 = vmul.f32 %v925, 1.442695
      %v953 = vpow.pop %v952
      %v954 = vmul.f32 %v926, 1.442695
      %v955 = vpow.pop %v954
      %v956 = vmul.f32 %v927, 1.442695
      %v957 = vpow.pop %v956
      %v958 = vmul.f32 %v928, 1.442695
      %v959 = vpow.pop %v958
      %v960 = vmul.f32 %v929, 1.442695
      %v961 = vpow.pop %v960
      %962 = vadd.xlane.f32.xlu0 %v931
      %v963 = vpop.xlane.xlu0 %962
      %964 = vadd.xlane.f32.xlu0 %v933
      %v965 = vpop.xlane.xlu0 %964
      %966 = vadd.xlane.f32.xlu0 %v935
      %v967 = vpop.xlane.xlu0 %966
      %968 = vadd.xlane.f32.xlu0 %v937
      %v969 = vpop.xlane.xlu0 %968
      %970 = vadd.xlane.f32.xlu0 %v939
      %v971 = vpop.xlane.xlu0 %970
      %972 = vadd.xlane.f32.xlu0 %v941
      %v973 = vpop.xlane.xlu0 %972
      %974 = vadd.xlane.f32.xlu0 %v943
      %v975 = vpop.xlane.xlu0 %974
      %976 = vadd.xlane.f32.xlu0 %v945
      %v977 = vpop.xlane.xlu0 %976
      %978 = vadd.xlane.f32.xlu0 %v947
      %v979 = vpop.xlane.xlu0 %978
      %980 = vadd.xlane.f32.xlu0 %v949
      %v981 = vpop.xlane.xlu0 %980
      %982 = vadd.xlane.f32.xlu0 %v951
      %v983 = vpop.xlane.xlu0 %982
      %984 = vadd.xlane.f32.xlu0 %v953
      %v985 = vpop.xlane.xlu0 %984
      %986 = vadd.xlane.f32.xlu0 %v955
      %v987 = vpop.xlane.xlu0 %986
      %988 = vadd.xlane.f32.xlu0 %v957
      %v989 = vpop.xlane.xlu0 %988
      %990 = vadd.xlane.f32.xlu0 %v959
      %v991 = vpop.xlane.xlu0 %990
      %992 = vadd.xlane.f32.xlu0 %v961
      %v993 = vpop.xlane.xlu0 %992
      %v994 = vrcp.pop %v963
      %v995 = vrcp.pop %v965
      %v996 = vrcp.pop %v967
      %v997 = vrcp.pop %v969
      %v998 = vrcp.pop %v971
      %v999 = vrcp.pop %v973
      %v1000 = vrcp.pop %v975
      %v1001 = vrcp.pop %v977
      %v1002 = vrcp.pop %v979
      %v1003 = vrcp.pop %v981
      %v1004 = vrcp.pop %v983
      %v1005 = vrcp.pop %v985
      %v1006 = vrcp.pop %v987
      %v1007 = vrcp.pop %v989
      %v1008 = vrcp.pop %v991
      %v1009 = vrcp.pop %v993
      %v1010 = vmul.f32 %v931, %v994
      %v1011 = vmul.f32 %v933, %v995
      %v1012 = vmul.f32 %v935, %v996
      %v1013 = vmul.f32 %v937, %v997
      %v1014 = vmul.f32 %v939, %v998
      %v1015 = vmul.f32 %v941, %v999
      %v1016 = vmul.f32 %v943, %v1000
      %v1017 = vmul.f32 %v945, %v1001
      %v1018 = vmul.f32 %v947, %v1002
      %v1019 = vmul.f32 %v949, %v1003
      %v1020 = vmul.f32 %v951, %v1004
      %v1021 = vmul.f32 %v953, %v1005
      %v1022 = vmul.f32 %v955, %v1006
      %v1023 = vmul.f32 %v957, %v1007
      %v1024 = vmul.f32 %v959, %v1008
      %v1025 = vmul.f32 %v961, %v1009
      %v1026 = vpack.c.bf16 %v1011, %v1010
      %v1027 = vpack.c.bf16 %v1013, %v1012
      %v1028 = vpack.c.bf16 %v1015, %v1014
      %v1029 = vpack.c.bf16 %v1017, %v1016
      %v1030 = vpack.c.bf16 %v1019, %v1018
      %v1031 = vpack.c.bf16 %v1021, %v1020
      %v1032 = vpack.c.bf16 %v1023, %v1022
      %v1033 = vpack.c.bf16 %v1025, %v1024
      %1034 = vrot.lane.b32.xlu0 %v592, 96
      %v1035 = vpop.permute.xlu0 %1034
      %1036 = vrot.lane.b32.xlu0 %v593, 96
      %v1037 = vpop.permute.xlu0 %1036
      %1038 = vrot.lane.b32.xlu0 %v594, 96
      %v1039 = vpop.permute.xlu0 %1038
      %1040 = vrot.lane.b32.xlu0 %v595, 96
      %v1041 = vpop.permute.xlu0 %1040
      %1042 = vrot.lane.b32.xlu0 %v596, 96
      %v1043 = vpop.permute.xlu0 %1042
      %1044 = vrot.lane.b32.xlu0 %v597, 96
      %v1045 = vpop.permute.xlu0 %1044
      %1046 = vrot.lane.b32.xlu0 %v598, 96
      %v1047 = vpop.permute.xlu0 %1046
      %1048 = vrot.lane.b32.xlu0 %v599, 96
      %v1049 = vpop.permute.xlu0 %1048
      %1058 = vmatprep.subr.bf16.mxu0 0
      %1059 = vmatpush1.bf16.msra.mxu0 %v1035
      %1060 = vmatprep.subr.bf16.mxu0 0
      %1061 = vmatpush1.bf16.msra.mxu0 %v1037
      %1062 = vmatprep.subr.bf16.mxu0 0
      %1063 = vmatpush1.bf16.msra.mxu0 %v1039
      %1064 = vmatprep.subr.bf16.mxu0 0
      %1065 = vmatpush1.bf16.msra.mxu0 %v1041
      %1066 = vmatprep.subr.bf16.mxu0 0
      %1067 = vmatpush1.bf16.msra.mxu0 %v1043
      %1068 = vmatprep.subr.bf16.mxu0 0
      %1069 = vmatpush1.bf16.msra.mxu0 %v1045
      %1070 = vmatprep.subr.bf16.mxu0 0
      %1071 = vmatpush1.bf16.msra.mxu0 %v1047
      %1072 = vmatprep.subr.bf16.mxu0 0
      %1073 = vmatpush1.bf16.msra.mxu0 %v1049
      %1074 = vmatprep.subr.bf16.mxu0 0
      %1075 = vmatpush1.bf16.msra.mxu0 0
      %1076 = vmatprep.subr.bf16.mxu0 0
      %1077 = vmatpush1.bf16.msra.mxu0 0
      %1078 = vmatprep.subr.bf16.mxu0 0
      %1079 = vmatpush1.bf16.msra.mxu0 0
      %1080 = vmatprep.subr.bf16.mxu0 0
      %1081 = vmatpush1.bf16.msra.mxu0 0
      %1082 = vmatprep.subr.bf16.mxu0 0
      %1083 = vmatpush1.bf16.msra.mxu0 0
      %1084 = vmatprep.subr.bf16.mxu0 0
      %1085 = vmatpush1.bf16.msra.mxu0 0
      %1086 = vmatprep.subr.bf16.mxu0 0
      %1087 = vmatpush1.bf16.msra.mxu0 0
      %1088 = vmatprep.subr.bf16.mxu0 0
      %1089 = vmatpush1.bf16.msra.mxu0 0
      %1090 = vmatprep.mubr.bf16.mxu0 0
      %1091 = vmatmul.mubr.bf16.gmra.mrb[0].mxu0 %v1026
      %v1092 = vpop.f32.mrb[0].mxu0
      %v1093 = vadd.f32 0.0, %v1092
      %v1094 = vpop.f32.mrb[0].mxu0
      %v1095 = vpop.f32.mrb[0].mxu0
      %v1096 = vadd.f32 0.0, %v1095
      %v1097 = vpop.f32.mrb[0].mxu0
      %1098 = vmatprep.mubr.bf16.mxu0 0
      %1099 = vmatmul.mubr.bf16.gmra.mrb[0].mxu0 %v1027
      %v1100 = vpop.f32.mrb[0].mxu0
      %v1101 = vadd.f32 0.0, %v1100
      %v1102 = vpop.f32.mrb[0].mxu0
      %v1103 = vpop.f32.mrb[0].mxu0
      %v1104 = vadd.f32 0.0, %v1103
      %v1105 = vpop.f32.mrb[0].mxu0
      %1106 = vmatprep.mubr.bf16.mxu0 0
      %1107 = vmatmul.mubr.bf16.gmra.mrb[0].mxu0 %v1028
      %v1108 = vpop.f32.mrb[0].mxu0
      %v1109 = vadd.f32 0.0, %v1108
      %v1110 = vpop.f32.mrb[0].mxu0
      %v1111 = vpop.f32.mrb[0].mxu0
      %v1112 = vadd.f32 0.0, %v1111
      %v1113 = vpop.f32.mrb[0].mxu0
      %1114 = vmatprep.mubr.bf16.mxu0 0
      %1115 = vmatmul.mubr.bf16.gmra.mrb[0].mxu0 %v1029
      %v1116 = vpop.f32.mrb[0].mxu0
      %v1117 = vadd.f32 0.0, %v1116
      %v1118 = vpop.f32.mrb[0].mxu0
      %v1119 = vpop.f32.mrb[0].mxu0
      %v1120 = vadd.f32 0.0, %v1119
      %v1121 = vpop.f32.mrb[0].mxu0
      %1122 = vmatprep.mubr.bf16.mxu0 0
      %1123 = vmatmul.mubr.bf16.gmra.mrb[0].mxu0 %v1030
      %v1124 = vpop.f32.mrb[0].mxu0
      %v1125 = vadd.f32 0.0, %v1124
      %v1126 = vpop.f32.mrb[0].mxu0
      %v1127 = vpop.f32.mrb[0].mxu0
      %v1128 = vadd.f32 0.0, %v1127
      %v1129 = vpop.f32.mrb[0].mxu0
      %1130 = vmatprep.mubr.bf16.mxu0 0
      %1131 = vmatmul.mubr.bf16.gmra.mrb[0].mxu0 %v1031
      %v1132 = vpop.f32.mrb[0].mxu0
      %v1133 = vadd.f32 0.0, %v1132
      %v1134 = vpop.f32.mrb[0].mxu0
      %v1135 = vpop.f32.mrb[0].mxu0
      %v1136 = vadd.f32 0.0, %v1135
      %v1137 = vpop.f32.mrb[0].mxu0
      %1138 = vmatprep.mubr.bf16.mxu0 0
      %1139 = vmatmul.mubr.bf16.gmra.mrb[0].mxu0 %v1032
      %v1140 = vpop.f32.mrb[0].mxu0
      %v1141 = vadd.f32 0.0, %v1140
      %v1142 = vpop.f32.mrb[0].mxu0
      %v1143 = vpop.f32.mrb[0].mxu0
      %v1144 = vadd.f32 0.0, %v1143
      %v1145 = vpop.f32.mrb[0].mxu0
      %1146 = vmatprep.mubr.bf16.mxu0 0
      %1147 = vmatmul.mubr.bf16.gmra.mrb[0].mxu0 %v1033
      %v1148 = vpop.f32.mrb[0].mxu0
      %v1149 = vadd.f32 0.0, %v1148
      %v1150 = vpop.f32.mrb[0].mxu0
      %v1151 = vpop.f32.mrb[0].mxu0
      %v1152 = vadd.f32 0.0, %v1151
      %v1153 = vpop.f32.mrb[0].mxu0
      %1154 = vdwg.mxu0
      %1155 = vrot.lane.b32.xlu0 %v230, 64
      %v1156 = vpop.permute.xlu0 %1155
      %1157 = vrot.lane.b32.xlu0 %v231, 64
      %v1158 = vpop.permute.xlu0 %1157
      %1159 = vrot.lane.b32.xlu0 %v232, 64
      %v1160 = vpop.permute.xlu0 %1159
      %1161 = vrot.lane.b32.xlu0 %v233, 64
      %v1162 = vpop.permute.xlu0 %1161
      %1163 = vrot.lane.b32.xlu0 %v234, 64
      %v1164 = vpop.permute.xlu0 %1163
      %1165 = vrot.lane.b32.xlu0 %v235, 64
      %v1166 = vpop.permute.xlu0 %1165
      %1167 = vrot.lane.b32.xlu0 %v236, 64
      %v1168 = vpop.permute.xlu0 %1167
      %1169 = vrot.lane.b32.xlu0 %v237, 64
      %v1170 = vpop.permute.xlu0 %1169
      %1171 = vrot.lane.b32.xlu0 %v254, 64
      %v1172 = vpop.permute.xlu0 %1171
      %1173 = vrot.lane.b32.xlu0 %v255, 64
      %v1174 = vpop.permute.xlu0 %1173
      %1175 = vrot.lane.b32.xlu0 %v256, 64
      %v1176 = vpop.permute.xlu0 %1175
      %1177 = vrot.lane.b32.xlu0 %v257, 64
      %v1178 = vpop.permute.xlu0 %1177
      %1179 = vrot.lane.b32.xlu0 %v258, 64
      %v1180 = vpop.permute.xlu0 %1179
      %1181 = vrot.lane.b32.xlu0 %v259, 64
      %v1182 = vpop.permute.xlu0 %1181
      %1183 = vrot.lane.b32.xlu0 %v260, 64
      %v1184 = vpop.permute.xlu0 %1183
      %1185 = vrot.lane.b32.xlu0 %v261, 64
      %v1186 = vpop.permute.xlu0 %1185
      %v1188 = vsel %vm262, %v1156, 0
      %v1191 = vsel %vm262, %v1158, 0
      %v1194 = vsel %vm262, %v1160, 0
      %v1197 = vsel %vm262, %v1162, 0
      %v1200 = vsel %vm262, %v1164, 0
      %v1203 = vsel %vm262, %v1166, 0
      %v1206 = vsel %vm262, %v1168, 0
      %v1209 = vsel %vm262, %v1170, 0
      %v1212 = vsel %vm262, %v1172, 0
      %v1215 = vsel %vm262, %v1174, 0
      %v1218 = vsel %vm262, %v1176, 0
      %v1221 = vsel %vm262, %v1178, 0
      %v1224 = vsel %vm262, %v1180, 0
      %v1227 = vsel %vm262, %v1182, 0
      %v1230 = vsel %vm262, %v1184, 0
      %v1233 = vsel %vm262, %v1186, 0
      %1235 = vmatprep.subr.bf16.mxu0 0
      %1236 = vmatpush1.bf16.xpose.msra.mxu0 %v1212
      %1237 = vmatprep.subr.bf16.mxu0 0
      %1238 = vmatpush1.bf16.xpose.msra.mxu0 %v1215
      %1239 = vmatprep.subr.bf16.mxu0 0
      %1240 = vmatpush1.bf16.xpose.msra.mxu0 %v1218
      %1241 = vmatprep.subr.bf16.mxu0 0
      %1242 = vmatpush1.bf16.xpose.msra.mxu0 %v1221
      %1243 = vmatprep.subr.bf16.mxu0 0
      %1244 = vmatpush1.bf16.xpose.msra.mxu0 %v1224
      %1245 = vmatprep.subr.bf16.mxu0 0
      %1246 = vmatpush1.bf16.xpose.msra.mxu0 %v1227
      %1247 = vmatprep.subr.bf16.mxu0 0
      %1248 = vmatpush1.bf16.xpose.msra.mxu0 %v1230
      %1249 = vmatprep.subr.bf16.mxu0 0
      %1250 = vmatpush1.bf16.xpose.msra.mxu0 %v1233
      %1251 = vmatprep.subr.bf16.mxu0 0
      %1252 = vmatpush1.bf16.xpose.msra.mxu0 0
      %1253 = vmatprep.subr.bf16.mxu0 0
      %1254 = vmatpush1.bf16.xpose.msra.mxu0 0
      %1255 = vmatprep.subr.bf16.mxu0 0
      %1256 = vmatpush1.bf16.xpose.msra.mxu0 0
      %1257 = vmatprep.subr.bf16.mxu0 0
      %1258 = vmatpush1.bf16.xpose.msra.mxu0 0
      %1259 = vmatprep.subr.bf16.mxu0 0
      %1260 = vmatpush1.bf16.xpose.msra.mxu0 0
      %1261 = vmatprep.subr.bf16.mxu0 0
      %1262 = vmatpush1.bf16.xpose.msra.mxu0 0
      %1263 = vmatprep.subr.bf16.mxu0 0
      %1264 = vmatpush1.bf16.xpose.msra.mxu0 0
      %1265 = vmatprep.subr.bf16.mxu0 0
      %1266 = vmatpush1.bf16.xpose.msra.mxu0 0
      %1267 = vmatprep.mubr.bf16.mxu0 0
      %1268 = vmatmul.mubr.bf16.gmra.mrb[0].mxu0 %v1188
      %v1269 = vpop.f32.mrb[0].mxu0
      %v1270 = vadd.f32 %v196, %v1269
      %v1271 = vpop.f32.mrb[0].mxu0
      %v1272 = vpop.f32.mrb[0].mxu0
      %v1273 = vadd.f32 %v196, %v1272
      %v1274 = vpop.f32.mrb[0].mxu0
      %1275 = vmatprep.mubr.bf16.mxu0 0
      %1276 = vmatmul.mubr.bf16.gmra.mrb[0].mxu0 %v1191
      %v1277 = vpop.f32.mrb[0].mxu0
      %v1278 = vadd.f32 %v196, %v1277
      %v1279 = vpop.f32.mrb[0].mxu0
      %v1280 = vpop.f32.mrb[0].mxu0
      %v1281 = vadd.f32 %v196, %v1280
      %v1282 = vpop.f32.mrb[0].mxu0
      %1283 = vmatprep.mubr.bf16.mxu0 0
      %1284 = vmatmul.mubr.bf16.gmra.mrb[0].mxu0 %v1194
      %v1285 = vpop.f32.mrb[0].mxu0
      %v1286 = vadd.f32 %v196, %v1285
      %v1287 = vpop.f32.mrb[0].mxu0
      %v1288 = vpop.f32.mrb[0].mxu0
      %v1289 = vadd.f32 %v196, %v1288
      %v1290 = vpop.f32.mrb[0].mxu0
      %1291 = vmatprep.mubr.bf16.mxu0 0
      %1292 = vmatmul.mubr.bf16.gmra.mrb[0].mxu0 %v1197
      %v1293 = vpop.f32.mrb[0].mxu0
      %v1294 = vadd.f32 %v196, %v1293
      %v1295 = vpop.f32.mrb[0].mxu0
      %v1296 = vpop.f32.mrb[0].mxu0
      %v1297 = vadd.f32 %v196, %v1296
      %v1298 = vpop.f32.mrb[0].mxu0
      %1299 = vmatprep.mubr.bf16.mxu0 0
      %1300 = vmatmul.mubr.bf16.gmra.mrb[0].mxu0 %v1200
      %v1301 = vpop.f32.mrb[0].mxu0
      %v1302 = vadd.f32 %v196, %v1301
      %v1303 = vpop.f32.mrb[0].mxu0
      %v1304 = vpop.f32.mrb[0].mxu0
      %v1305 = vadd.f32 %v196, %v1304
      %v1306 = vpop.f32.mrb[0].mxu0
      %1307 = vmatprep.mubr.bf16.mxu0 0
      %1308 = vmatmul.mubr.bf16.gmra.mrb[0].mxu0 %v1203
      %v1309 = vpop.f32.mrb[0].mxu0
      %v1310 = vadd.f32 %v196, %v1309
      %v1311 = vpop.f32.mrb[0].mxu0
      %v1312 = vpop.f32.mrb[0].mxu0
      %v1313 = vadd.f32 %v196, %v1312
      %v1314 = vpop.f32.mrb[0].mxu0
      %1315 = vmatprep.mubr.bf16.mxu0 0
      %1316 = vmatmul.mubr.bf16.gmra.mrb[0].mxu0 %v1206
      %v1317 = vpop.f32.mrb[0].mxu0
      %v1318 = vadd.f32 %v196, %v1317
      %v1319 = vpop.f32.mrb[0].mxu0
      %v1320 = vpop.f32.mrb[0].mxu0
      %v1321 = vadd.f32 %v196, %v1320
      %v1322 = vpop.f32.mrb[0].mxu0
      %1323 = vmatprep.mubr.bf16.mxu0 0
      %1324 = vmatmul.mubr.bf16.gmra.mrb[0].mxu0 %v1209
      %v1325 = vpop.f32.mrb[0].mxu0
      %v1326 = vadd.f32 %v196, %v1325
      %v1327 = vpop.f32.mrb[0].mxu0
      %v1328 = vpop.f32.mrb[0].mxu0
      %v1329 = vadd.f32 %v196, %v1328
      %v1330 = vpop.f32.mrb[0].mxu0
      %1331 = vdwg.mxu0
      %1332 = vmax.xlane.f32.xlu0 %v1270
      %v1333 = vpop.xlane.xlu0 %1332
      %1334 = vmax.xlane.f32.xlu0 %v1273
      %v1335 = vpop.xlane.xlu0 %1334
      %1336 = vmax.xlane.f32.xlu0 %v1278
      %v1337 = vpop.xlane.xlu0 %1336
      %1338 = vmax.xlane.f32.xlu0 %v1281
      %v1339 = vpop.xlane.xlu0 %1338
      %1340 = vmax.xlane.f32.xlu0 %v1286
      %v1341 = vpop.xlane.xlu0 %1340
      %1342 = vmax.xlane.f32.xlu0 %v1289
      %v1343 = vpop.xlane.xlu0 %1342
      %1344 = vmax.xlane.f32.xlu0 %v1294
      %v1345 = vpop.xlane.xlu0 %1344
      %1346 = vmax.xlane.f32.xlu0 %v1297
      %v1347 = vpop.xlane.xlu0 %1346
      %1348 = vmax.xlane.f32.xlu0 %v1302
      %v1349 = vpop.xlane.xlu0 %1348
      %1350 = vmax.xlane.f32.xlu0 %v1305
      %v1351 = vpop.xlane.xlu0 %1350
      %1352 = vmax.xlane.f32.xlu0 %v1310
      %v1353 = vpop.xlane.xlu0 %1352
      %1354 = vmax.xlane.f32.xlu0 %v1313
      %v1355 = vpop.xlane.xlu0 %1354
      %1356 = vmax.xlane.f32.xlu0 %v1318
      %v1357 = vpop.xlane.xlu0 %1356
      %1358 = vmax.xlane.f32.xlu0 %v1321
      %v1359 = vpop.xlane.xlu0 %1358
      %1360 = vmax.xlane.f32.xlu0 %v1326
      %v1361 = vpop.xlane.xlu0 %1360
      %1362 = vmax.xlane.f32.xlu0 %v1329
      %v1363 = vpop.xlane.xlu0 %1362
      %v1364 = vsub.f32 %v1270, %v1333
      %v1365 = vsub.f32 %v1273, %v1335
      %v1366 = vsub.f32 %v1278, %v1337
      %v1367 = vsub.f32 %v1281, %v1339
      %v1368 = vsub.f32 %v1286, %v1341
      %v1369 = vsub.f32 %v1289, %v1343
      %v1370 = vsub.f32 %v1294, %v1345
      %v1371 = vsub.f32 %v1297, %v1347
      %v1372 = vsub.f32 %v1302, %v1349
      %v1373 = vsub.f32 %v1305, %v1351
      %v1374 = vsub.f32 %v1310, %v1353
      %v1375 = vsub.f32 %v1313, %v1355
      %v1376 = vsub.f32 %v1318, %v1357
      %v1377 = vsub.f32 %v1321, %v1359
      %v1378 = vsub.f32 %v1326, %v1361
      %v1379 = vsub.f32 %v1329, %v1363
      %v1380 = vmul.f32 %v1364, 1.442695
      %v1381 = vpow.pop %v1380
      %v1382 = vmul.f32 %v1365, 1.442695
      %v1383 = vpow.pop %v1382
      %v1384 = vmul.f32 %v1366, 1.442695
      %v1385 = vpow.pop %v1384
      %v1386 = vmul.f32 %v1367, 1.442695
      %v1387 = vpow.pop %v1386
      %v1388 = vmul.f32 %v1368, 1.442695
      %v1389 = vpow.pop %v1388
      %v1390 = vmul.f32 %v1369, 1.442695
      %v1391 = vpow.pop %v1390
      %v1392 = vmul.f32 %v1370, 1.442695
      %v1393 = vpow.pop %v1392
      %v1394 = vmul.f32 %v1371, 1.442695
      %v1395 = vpow.pop %v1394
      %v1396 = vmul.f32 %v1372, 1.442695
      %v1397 = vpow.pop %v1396
      %v1398 = vmul.f32 %v1373, 1.442695
      %v1399 = vpow.pop %v1398
      %v1400 = vmul.f32 %v1374, 1.442695
      %v1401 = vpow.pop %v1400
      %v1402 = vmul.f32 %v1375, 1.442695
      %v1403 = vpow.pop %v1402
      %v1404 = vmul.f32 %v1376, 1.442695
      %v1405 = vpow.pop %v1404
      %v1406 = vmul.f32 %v1377, 1.442695
      %v1407 = vpow.pop %v1406
      %v1408 = vmul.f32 %v1378, 1.442695
      %v1409 = vpow.pop %v1408
      %v1410 = vmul.f32 %v1379, 1.442695
      %v1411 = vpow.pop %v1410
      %1412 = vadd.xlane.f32.xlu0 %v1381
      %v1413 = vpop.xlane.xlu0 %1412
      %1414 = vadd.xlane.f32.xlu0 %v1383
      %v1415 = vpop.xlane.xlu0 %1414
      %1416 = vadd.xlane.f32.xlu0 %v1385
      %v1417 = vpop.xlane.xlu0 %1416
      %1418 = vadd.xlane.f32.xlu0 %v1387
      %v1419 = vpop.xlane.xlu0 %1418
      %1420 = vadd.xlane.f32.xlu0 %v1389
      %v1421 = vpop.xlane.xlu0 %1420
      %1422 = vadd.xlane.f32.xlu0 %v1391
      %v1423 = vpop.xlane.xlu0 %1422
      %1424 = vadd.xlane.f32.xlu0 %v1393
      %v1425 = vpop.xlane.xlu0 %1424
      %1426 = vadd.xlane.f32.xlu0 %v1395
      %v1427 = vpop.xlane.xlu0 %1426
      %1428 = vadd.xlane.f32.xlu0 %v1397
      %v1429 = vpop.xlane.xlu0 %1428
      %1430 = vadd.xlane.f32.xlu0 %v1399
      %v1431 = vpop.xlane.xlu0 %1430
      %1432 = vadd.xlane.f32.xlu0 %v1401
      %v1433 = vpop.xlane.xlu0 %1432
      %1434 = vadd.xlane.f32.xlu0 %v1403
      %v1435 = vpop.xlane.xlu0 %1434
      %1436 = vadd.xlane.f32.xlu0 %v1405
      %v1437 = vpop.xlane.xlu0 %1436
      %1438 = vadd.xlane.f32.xlu0 %v1407
      %v1439 = vpop.xlane.xlu0 %1438
      %1440 = vadd.xlane.f32.xlu0 %v1409
      %v1441 = vpop.xlane.xlu0 %1440
      %1442 = vadd.xlane.f32.xlu0 %v1411
      %v1443 = vpop.xlane.xlu0 %1442
      %v1444 = vrcp.pop %v1413
      %v1445 = vrcp.pop %v1415
      %v1446 = vrcp.pop %v1417
      %v1447 = vrcp.pop %v1419
      %v1448 = vrcp.pop %v1421
      %v1449 = vrcp.pop %v1423
      %v1450 = vrcp.pop %v1425
      %v1451 = vrcp.pop %v1427
      %v1452 = vrcp.pop %v1429
      %v1453 = vrcp.pop %v1431
      %v1454 = vrcp.pop %v1433
      %v1455 = vrcp.pop %v1435
      %v1456 = vrcp.pop %v1437
      %v1457 = vrcp.pop %v1439
      %v1458 = vrcp.pop %v1441
      %v1459 = vrcp.pop %v1443
      %v1460 = vmul.f32 %v1381, %v1444
      %v1461 = vmul.f32 %v1383, %v1445
      %v1462 = vmul.f32 %v1385, %v1446
      %v1463 = vmul.f32 %v1387, %v1447
      %v1464 = vmul.f32 %v1389, %v1448
      %v1465 = vmul.f32 %v1391, %v1449
      %v1466 = vmul.f32 %v1393, %v1450
      %v1467 = vmul.f32 %v1395, %v1451
      %v1468 = vmul.f32 %v1397, %v1452
      %v1469 = vmul.f32 %v1399, %v1453
      %v1470 = vmul.f32 %v1401, %v1454
      %v1471 = vmul.f32 %v1403, %v1455
      %v1472 = vmul.f32 %v1405, %v1456
      %v1473 = vmul.f32 %v1407, %v1457
      %v1474 = vmul.f32 %v1409, %v1458
      %v1475 = vmul.f32 %v1411, %v1459
      %v1476 = vpack.c.bf16 %v1461, %v1460
      %v1477 = vpack.c.bf16 %v1463, %v1462
      %v1478 = vpack.c.bf16 %v1465, %v1464
      %v1479 = vpack.c.bf16 %v1467, %v1466
      %v1480 = vpack.c.bf16 %v1469, %v1468
      %v1481 = vpack.c.bf16 %v1471, %v1470
      %v1482 = vpack.c.bf16 %v1473, %v1472
      %v1483 = vpack.c.bf16 %v1475, %v1474
      %1484 = vrot.lane.b32.xlu0 %v592, 64
      %v1485 = vpop.permute.xlu0 %1484
      %1486 = vrot.lane.b32.xlu0 %v593, 64
      %v1487 = vpop.permute.xlu0 %1486
      %1488 = vrot.lane.b32.xlu0 %v594, 64
      %v1489 = vpop.permute.xlu0 %1488
      %1490 = vrot.lane.b32.xlu0 %v595, 64
      %v1491 = vpop.permute.xlu0 %1490
      %1492 = vrot.lane.b32.xlu0 %v596, 64
      %v1493 = vpop.permute.xlu0 %1492
      %1494 = vrot.lane.b32.xlu0 %v597, 64
      %v1495 = vpop.permute.xlu0 %1494
      %1496 = vrot.lane.b32.xlu0 %v598, 64
      %v1497 = vpop.permute.xlu0 %1496
      %1498 = vrot.lane.b32.xlu0 %v599, 64
      %v1499 = vpop.permute.xlu0 %1498
      %1508 = vmatprep.subr.bf16.mxu0 0
      %1509 = vmatpush1.bf16.msra.mxu0 %v1485
      %1510 = vmatprep.subr.bf16.mxu0 0
      %1511 = vmatpush1.bf16.msra.mxu0 %v1487
      %1512 = vmatprep.subr.bf16.mxu0 0
      %1513 = vmatpush1.bf16.msra.mxu0 %v1489
      %1514 = vmatprep.subr.bf16.mxu0 0
      %1515 = vmatpush1.bf16.msra.mxu0 %v1491
      %1516 = vmatprep.subr.bf16.mxu0 0
      %1517 = vmatpush1.bf16.msra.mxu0 %v1493
      %1518 = vmatprep.subr.bf16.mxu0 0
      %1519 = vmatpush1.bf16.msra.mxu0 %v1495
      %1520 = vmatprep.subr.bf16.mxu0 0
      %1521 = vmatpush1.bf16.msra.mxu0 %v1497
      %1522 = vmatprep.subr.bf16.mxu0 0
      %1523 = vmatpush1.bf16.msra.mxu0 %v1499
      %1524 = vmatprep.subr.bf16.mxu0 0
      %1525 = vmatpush1.bf16.msra.mxu0 0
      %1526 = vmatprep.subr.bf16.mxu0 0
      %1527 = vmatpush1.bf16.msra.mxu0 0
      %1528 = vmatprep.subr.bf16.mxu0 0
      %1529 = vmatpush1.bf16.msra.mxu0 0
      %1530 = vmatprep.subr.bf16.mxu0 0
      %1531 = vmatpush1.bf16.msra.mxu0 0
      %1532 = vmatprep.subr.bf16.mxu0 0
      %1533 = vmatpush1.bf16.msra.mxu0 0
      %1534 = vmatprep.subr.bf16.mxu0 0
      %1535 = vmatpush1.bf16.msra.mxu0 0
      %1536 = vmatprep.subr.bf16.mxu0 0
      %1537 = vmatpush1.bf16.msra.mxu0 0
      %1538 = vmatprep.subr.bf16.mxu0 0
      %1539 = vmatpush1.bf16.msra.mxu0 0
      %1540 = vmatprep.mubr.bf16.mxu0 0
      %1541 = vmatmul.mubr.bf16.gmra.mrb[0].mxu0 %v1476
      %v1542 = vpop.f32.mrb[0].mxu0
      %v1543 = vadd.f32 0.0, %v1542
      %v1544 = vpop.f32.mrb[0].mxu0
      %v1545 = vpop.f32.mrb[0].mxu0
      %v1546 = vadd.f32 0.0, %v1545
      %v1547 = vpop.f32.mrb[0].mxu0
      %1548 = vmatprep.mubr.bf16.mxu0 0
      %1549 = vmatmul.mubr.bf16.gmra.mrb[0].mxu0 %v1477
      %v1550 = vpop.f32.mrb[0].mxu0
      %v1551 = vadd.f32 0.0, %v1550
      %v1552 = vpop.f32.mrb[0].mxu0
      %v1553 = vpop.f32.mrb[0].mxu0
      %v1554 = vadd.f32 0.0, %v1553
      %v1555 = vpop.f32.mrb[0].mxu0
      %1556 = vmatprep.mubr.bf16.mxu0 0
      %1557 = vmatmul.mubr.bf16.gmra.mrb[0].mxu0 %v1478
      %v1558 = vpop.f32.mrb[0].mxu0
      %v1559 = vadd.f32 0.0, %v1558
      %v1560 = vpop.f32.mrb[0].mxu0
      %v1561 = vpop.f32.mrb[0].mxu0
      %v1562 = vadd.f32 0.0, %v1561
      %v1563 = vpop.f32.mrb[0].mxu0
      %1564 = vmatprep.mubr.bf16.mxu0 0
      %1565 = vmatmul.mubr.bf16.gmra.mrb[0].mxu0 %v1479
      %v1566 = vpop.f32.mrb[0].mxu0
      %v1567 = vadd.f32 0.0, %v1566
      %v1568 = vpop.f32.mrb[0].mxu0
      %v1569 = vpop.f32.mrb[0].mxu0
      %v1570 = vadd.f32 0.0, %v1569
      %v1571 = vpop.f32.mrb[0].mxu0
      %1572 = vmatprep.mubr.bf16.mxu0 0
      %1573 = vmatmul.mubr.bf16.gmra.mrb[0].mxu0 %v1480
      %v1574 = vpop.f32.mrb[0].mxu0
      %v1575 = vadd.f32 0.0, %v1574
      %v1576 = vpop.f32.mrb[0].mxu0
      %v1577 = vpop.f32.mrb[0].mxu0
      %v1578 = vadd.f32 0.0, %v1577
      %v1579 = vpop.f32.mrb[0].mxu0
      %1580 = vmatprep.mubr.bf16.mxu0 0
      %1581 = vmatmul.mubr.bf16.gmra.mrb[0].mxu0 %v1481
      %v1582 = vpop.f32.mrb[0].mxu0
      %v1583 = vadd.f32 0.0, %v1582
      %v1584 = vpop.f32.mrb[0].mxu0
      %v1585 = vpop.f32.mrb[0].mxu0
      %v1586 = vadd.f32 0.0, %v1585
      %v1587 = vpop.f32.mrb[0].mxu0
      %1588 = vmatprep.mubr.bf16.mxu0 0
      %1589 = vmatmul.mubr.bf16.gmra.mrb[0].mxu0 %v1482
      %v1590 = vpop.f32.mrb[0].mxu0
      %v1591 = vadd.f32 0.0, %v1590
      %v1592 = vpop.f32.mrb[0].mxu0
      %v1593 = vpop.f32.mrb[0].mxu0
      %v1594 = vadd.f32 0.0, %v1593
      %v1595 = vpop.f32.mrb[0].mxu0
      %1596 = vmatprep.mubr.bf16.mxu0 0
      %1597 = vmatmul.mubr.bf16.gmra.mrb[0].mxu0 %v1483
      %v1598 = vpop.f32.mrb[0].mxu0
      %v1599 = vadd.f32 0.0, %v1598
      %v1600 = vpop.f32.mrb[0].mxu0
      %v1601 = vpop.f32.mrb[0].mxu0
      %v1602 = vadd.f32 0.0, %v1601
      %v1603 = vpop.f32.mrb[0].mxu0
      %1604 = vdwg.mxu0
      %1605 = vrot.lane.b32.xlu0 %v230, 32
      %v1606 = vpop.permute.xlu0 %1605
      %1607 = vrot.lane.b32.xlu0 %v231, 32
      %v1608 = vpop.permute.xlu0 %1607
      %1609 = vrot.lane.b32.xlu0 %v232, 32
      %v1610 = vpop.permute.xlu0 %1609
      %1611 = vrot.lane.b32.xlu0 %v233, 32
      %v1612 = vpop.permute.xlu0 %1611
      %1613 = vrot.lane.b32.xlu0 %v234, 32
      %v1614 = vpop.permute.xlu0 %1613
      %1615 = vrot.lane.b32.xlu0 %v235, 32
      %v1616 = vpop.permute.xlu0 %1615
      %1617 = vrot.lane.b32.xlu0 %v236, 32
      %v1618 = vpop.permute.xlu0 %1617
      %1619 = vrot.lane.b32.xlu0 %v237, 32
      %v1620 = vpop.permute.xlu0 %1619
      %1621 = vrot.lane.b32.xlu0 %v254, 32
      %v1622 = vpop.permute.xlu0 %1621
      %1623 = vrot.lane.b32.xlu0 %v255, 32
      %v1624 = vpop.permute.xlu0 %1623
      %1625 = vrot.lane.b32.xlu0 %v256, 32
      %v1626 = vpop.permute.xlu0 %1625
      %1627 = vrot.lane.b32.xlu0 %v257, 32
      %v1628 = vpop.permute.xlu0 %1627
      %1629 = vrot.lane.b32.xlu0 %v258, 32
      %v1630 = vpop.permute.xlu0 %1629
      %1631 = vrot.lane.b32.xlu0 %v259, 32
      %v1632 = vpop.permute.xlu0 %1631
      %1633 = vrot.lane.b32.xlu0 %v260, 32
      %v1634 = vpop.permute.xlu0 %1633
      %1635 = vrot.lane.b32.xlu0 %v261, 32
      %v1636 = vpop.permute.xlu0 %1635
      %v1638 = vsel %vm262, %v1606, 0
      %v1641 = vsel %vm262, %v1608, 0
      %v1644 = vsel %vm262, %v1610, 0
      %v1647 = vsel %vm262, %v1612, 0
      %v1650 = vsel %vm262, %v1614, 0
      %v1653 = vsel %vm262, %v1616, 0
      %v1656 = vsel %vm262, %v1618, 0
      %v1659 = vsel %vm262, %v1620, 0
      %v1662 = vsel %vm262, %v1622, 0
      %v1665 = vsel %vm262, %v1624, 0
      %v1668 = vsel %vm262, %v1626, 0
      %v1671 = vsel %vm262, %v1628, 0
      %v1674 = vsel %vm262, %v1630, 0
      %v1677 = vsel %vm262, %v1632, 0
      %v1680 = vsel %vm262, %v1634, 0
      %v1683 = vsel %vm262, %v1636, 0
      %1685 = vmatprep.subr.bf16.mxu0 0
      %1686 = vmatpush1.bf16.xpose.msra.mxu0 %v1662
      %1687 = vmatprep.subr.bf16.mxu0 0
      %1688 = vmatpush1.bf16.xpose.msra.mxu0 %v1665
      %1689 = vmatprep.subr.bf16.mxu0 0
      %1690 = vmatpush1.bf16.xpose.msra.mxu0 %v1668
      %1691 = vmatprep.subr.bf16.mxu0 0
      %1692 = vmatpush1.bf16.xpose.msra.mxu0 %v1671
      %1693 = vmatprep.subr.bf16.mxu0 0
      %1694 = vmatpush1.bf16.xpose.msra.mxu0 %v1674
      %1695 = vmatprep.subr.bf16.mxu0 0
      %1696 = vmatpush1.bf16.xpose.msra.mxu0 %v1677
      %1697 = vmatprep.subr.bf16.mxu0 0
      %1698 = vmatpush1.bf16.xpose.msra.mxu0 %v1680
      %1699 = vmatprep.subr.bf16.mxu0 0
      %1700 = vmatpush1.bf16.xpose.msra.mxu0 %v1683
      %1701 = vmatprep.subr.bf16.mxu0 0
      %1702 = vmatpush1.bf16.xpose.msra.mxu0 0
      %1703 = vmatprep.subr.bf16.mxu0 0
      %1704 = vmatpush1.bf16.xpose.msra.mxu0 0
      %1705 = vmatprep.subr.bf16.mxu0 0
      %1706 = vmatpush1.bf16.xpose.msra.mxu0 0
      %1707 = vmatprep.subr.bf16.mxu0 0
      %1708 = vmatpush1.bf16.xpose.msra.mxu0 0
      %1709 = vmatprep.subr.bf16.mxu0 0
      %1710 = vmatpush1.bf16.xpose.msra.mxu0 0
      %1711 = vmatprep.subr.bf16.mxu0 0
      %1712 = vmatpush1.bf16.xpose.msra.mxu0 0
      %1713 = vmatprep.subr.bf16.mxu0 0
      %1714 = vmatpush1.bf16.xpose.msra.mxu0 0
      %1715 = vmatprep.subr.bf16.mxu0 0
      %1716 = vmatpush1.bf16.xpose.msra.mxu0 0
      %1717 = vmatprep.mubr.bf16.mxu0 0
      %1718 = vmatmul.mubr.bf16.gmra.mrb[0].mxu0 %v1638
      %v1719 = vpop.f32.mrb[0].mxu0
      %v1720 = vadd.f32 %v196, %v1719
      %v1721 = vpop.f32.mrb[0].mxu0
      %v1722 = vpop.f32.mrb[0].mxu0
      %v1723 = vadd.f32 %v196, %v1722
      %v1724 = vpop.f32.mrb[0].mxu0
      %1725 = vmatprep.mubr.bf16.mxu0 0
      %1726 = vmatmul.mubr.bf16.gmra.mrb[0].mxu0 %v1641
      %v1727 = vpop.f32.mrb[0].mxu0
      %v1728 = vadd.f32 %v196, %v1727
      %v1729 = vpop.f32.mrb[0].mxu0
      %v1730 = vpop.f32.mrb[0].mxu0
      %v1731 = vadd.f32 %v196, %v1730
      %v1732 = vpop.f32.mrb[0].mxu0
      %1733 = vmatprep.mubr.bf16.mxu0 0
      %1734 = vmatmul.mubr.bf16.gmra.mrb[0].mxu0 %v1644
      %v1735 = vpop.f32.mrb[0].mxu0
      %v1736 = vadd.f32 %v196, %v1735
      %v1737 = vpop.f32.mrb[0].mxu0
      %v1738 = vpop.f32.mrb[0].mxu0
      %v1739 = vadd.f32 %v196, %v1738
      %v1740 = vpop.f32.mrb[0].mxu0
      %1741 = vmatprep.mubr.bf16.mxu0 0
      %1742 = vmatmul.mubr.bf16.gmra.mrb[0].mxu0 %v1647
      %v1743 = vpop.f32.mrb[0].mxu0
      %v1744 = vadd.f32 %v196, %v1743
      %v1745 = vpop.f32.mrb[0].mxu0
      %v1746 = vpop.f32.mrb[0].mxu0
      %v1747 = vadd.f32 %v196, %v1746
      %v1748 = vpop.f32.mrb[0].mxu0
      %1749 = vmatprep.mubr.bf16.mxu0 0
      %1750 = vmatmul.mubr.bf16.gmra.mrb[0].mxu0 %v1650
      %v1751 = vpop.f32.mrb[0].mxu0
      %v1752 = vadd.f32 %v196, %v1751
      %v1753 = vpop.f32.mrb[0].mxu0
      %v1754 = vpop.f32.mrb[0].mxu0
      %v1755 = vadd.f32 %v196, %v1754
      %v1756 = vpop.f32.mrb[0].mxu0
      %1757 = vmatprep.mubr.bf16.mxu0 0
      %1758 = vmatmul.mubr.bf16.gmra.mrb[0].mxu0 %v1653
      %v1759 = vpop.f32.mrb[0].mxu0
      %v1760 = vadd.f32 %v196, %v1759
      %v1761 = vpop.f32.mrb[0].mxu0
      %v1762 = vpop.f32.mrb[0].mxu0
      %v1763 = vadd.f32 %v196, %v1762
      %v1764 = vpop.f32.mrb[0].mxu0
      %1765 = vmatprep.mubr.bf16.mxu0 0
      %1766 = vmatmul.mubr.bf16.gmra.mrb[0].mxu0 %v1656
      %v1767 = vpop.f32.mrb[0].mxu0
      %v1768 = vadd.f32 %v196, %v1767
      %v1769 = vpop.f32.mrb[0].mxu0
      %v1770 = vpop.f32.mrb[0].mxu0
      %v1771 = vadd.f32 %v196, %v1770
      %v1772 = vpop.f32.mrb[0].mxu0
      %1773 = vmatprep.mubr.bf16.mxu0 0
      %1774 = vmatmul.mubr.bf16.gmra.mrb[0].mxu0 %v1659
      %v1775 = vpop.f32.mrb[0].mxu0
      %v1776 = vadd.f32 %v196, %v1775
      %v1777 = vpop.f32.mrb[0].mxu0
      %v1778 = vpop.f32.mrb[0].mxu0
      %v1779 = vadd.f32 %v196, %v1778
      %v1780 = vpop.f32.mrb[0].mxu0
      %1781 = vdwg.mxu0
      %1782 = vmax.xlane.f32.xlu0 %v1720
      %v1783 = vpop.xlane.xlu0 %1782
      %1784 = vmax.xlane.f32.xlu0 %v1723
      %v1785 = vpop.xlane.xlu0 %1784
      %1786 = vmax.xlane.f32.xlu0 %v1728
      %v1787 = vpop.xlane.xlu0 %1786
      %1788 = vmax.xlane.f32.xlu0 %v1731
      %v1789 = vpop.xlane.xlu0 %1788
      %1790 = vmax.xlane.f32.xlu0 %v1736
      %v1791 = vpop.xlane.xlu0 %1790
      %1792 = vmax.xlane.f32.xlu0 %v1739
      %v1793 = vpop.xlane.xlu0 %1792
      %1794 = vmax.xlane.f32.xlu0 %v1744
      %v1795 = vpop.xlane.xlu0 %1794
      %1796 = vmax.xlane.f32.xlu0 %v1747
      %v1797 = vpop.xlane.xlu0 %1796
      %1798 = vmax.xlane.f32.xlu0 %v1752
      %v1799 = vpop.xlane.xlu0 %1798
      %1800 = vmax.xlane.f32.xlu0 %v1755
      %v1801 = vpop.xlane.xlu0 %1800
      %1802 = vmax.xlane.f32.xlu0 %v1760
      %v1803 = vpop.xlane.xlu0 %1802
      %1804 = vmax.xlane.f32.xlu0 %v1763
      %v1805 = vpop.xlane.xlu0 %1804
      %1806 = vmax.xlane.f32.xlu0 %v1768
      %v1807 = vpop.xlane.xlu0 %1806
      %1808 = vmax.xlane.f32.xlu0 %v1771
      %v1809 = vpop.xlane.xlu0 %1808
      %1810 = vmax.xlane.f32.xlu0 %v1776
      %v1811 = vpop.xlane.xlu0 %1810
      %1812 = vmax.xlane.f32.xlu0 %v1779
      %v1813 = vpop.xlane.xlu0 %1812
      %v1814 = vsub.f32 %v1720, %v1783
      %v1815 = vsub.f32 %v1723, %v1785
      %v1816 = vsub.f32 %v1728, %v1787
      %v1817 = vsub.f32 %v1731, %v1789
      %v1818 = vsub.f32 %v1736, %v1791
      %v1819 = vsub.f32 %v1739, %v1793
      %v1820 = vsub.f32 %v1744, %v1795
      %v1821 = vsub.f32 %v1747, %v1797
      %v1822 = vsub.f32 %v1752, %v1799
      %v1823 = vsub.f32 %v1755, %v1801
      %v1824 = vsub.f32 %v1760, %v1803
      %v1825 = vsub.f32 %v1763, %v1805
      %v1826 = vsub.f32 %v1768, %v1807
      %v1827 = vsub.f32 %v1771, %v1809
      %v1828 = vsub.f32 %v1776, %v1811
      %v1829 = vsub.f32 %v1779, %v1813
      %v1830 = vmul.f32 %v1814, 1.442695
      %v1831 = vpow.pop %v1830
      %v1832 = vmul.f32 %v1815, 1.442695
      %v1833 = vpow.pop %v1832
      %v1834 = vmul.f32 %v1816, 1.442695
      %v1835 = vpow.pop %v1834
      %v1836 = vmul.f32 %v1817, 1.442695
      %v1837 = vpow.pop %v1836
      %v1838 = vmul.f32 %v1818, 1.442695
      %v1839 = vpow.pop %v1838
      %v1840 = vmul.f32 %v1819, 1.442695
      %v1841 = vpow.pop %v1840
      %v1842 = vmul.f32 %v1820, 1.442695
      %v1843 = vpow.pop %v1842
      %v1844 = vmul.f32 %v1821, 1.442695
      %v1845 = vpow.pop %v1844
      %v1846 = vmul.f32 %v1822, 1.442695
      %v1847 = vpow.pop %v1846
      %v1848 = vmul.f32 %v1823, 1.442695
      %v1849 = vpow.pop %v1848
      %v1850 = vmul.f32 %v1824, 1.442695
      %v1851 = vpow.pop %v1850
      %v1852 = vmul.f32 %v1825, 1.442695
      %v1853 = vpow.pop %v1852
      %v1854 = vmul.f32 %v1826, 1.442695
      %v1855 = vpow.pop %v1854
      %v1856 = vmul.f32 %v1827, 1.442695
      %v1857 = vpow.pop %v1856
      %v1858 = vmul.f32 %v1828, 1.442695
      %v1859 = vpow.pop %v1858
      %v1860 = vmul.f32 %v1829, 1.442695
      %v1861 = vpow.pop %v1860
      %1862 = vadd.xlane.f32.xlu0 %v1831
      %v1863 = vpop.xlane.xlu0 %1862
      %1864 = vadd.xlane.f32.xlu0 %v1833
      %v1865 = vpop.xlane.xlu0 %1864
      %1866 = vadd.xlane.f32.xlu0 %v1835
      %v1867 = vpop.xlane.xlu0 %1866
      %1868 = vadd.xlane.f32.xlu0 %v1837
      %v1869 = vpop.xlane.xlu0 %1868
      %1870 = vadd.xlane.f32.xlu0 %v1839
      %v1871 = vpop.xlane.xlu0 %1870
      %1872 = vadd.xlane.f32.xlu0 %v1841
      %v1873 = vpop.xlane.xlu0 %1872
      %1874 = vadd.xlane.f32.xlu0 %v1843
      %v1875 = vpop.xlane.xlu0 %1874
      %1876 = vadd.xlane.f32.xlu0 %v1845
      %v1877 = vpop.xlane.xlu0 %1876
      %1878 = vadd.xlane.f32.xlu0 %v1847
      %v1879 = vpop.xlane.xlu0 %1878
      %1880 = vadd.xlane.f32.xlu0 %v1849
      %v1881 = vpop.xlane.xlu0 %1880
      %1882 = vadd.xlane.f32.xlu0 %v1851
      %v1883 = vpop.xlane.xlu0 %1882
      %1884 = vadd.xlane.f32.xlu0 %v1853
      %v1885 = vpop.xlane.xlu0 %1884
      %1886 = vadd.xlane.f32.xlu0 %v1855
      %v1887 = vpop.xlane.xlu0 %1886
      %1888 = vadd.xlane.f32.xlu0 %v1857
      %v1889 = vpop.xlane.xlu0 %1888
      %1890 = vadd.xlane.f32.xlu0 %v1859
      %v1891 = vpop.xlane.xlu0 %1890
      %1892 = vadd.xlane.f32.xlu0 %v1861
      %v1893 = vpop.xlane.xlu0 %1892
      %v1894 = vrcp.pop %v1863
      %v1895 = vrcp.pop %v1865
      %v1896 = vrcp.pop %v1867
      %v1897 = vrcp.pop %v1869
      %v1898 = vrcp.pop %v1871
      %v1899 = vrcp.pop %v1873
      %v1900 = vrcp.pop %v1875
      %v1901 = vrcp.pop %v1877
      %v1902 = vrcp.pop %v1879
      %v1903 = vrcp.pop %v1881
      %v1904 = vrcp.pop %v1883
      %v1905 = vrcp.pop %v1885
      %v1906 = vrcp.pop %v1887
      %v1907 = vrcp.pop %v1889
      %v1908 = vrcp.pop %v1891
      %v1909 = vrcp.pop %v1893
      %v1910 = vmul.f32 %v1831, %v1894
      %v1911 = vmul.f32 %v1833, %v1895
      %v1912 = vmul.f32 %v1835, %v1896
      %v1913 = vmul.f32 %v1837, %v1897
      %v1914 = vmul.f32 %v1839, %v1898
      %v1915 = vmul.f32 %v1841, %v1899
      %v1916 = vmul.f32 %v1843, %v1900
      %v1917 = vmul.f32 %v1845, %v1901
      %v1918 = vmul.f32 %v1847, %v1902
      %v1919 = vmul.f32 %v1849, %v1903
      %v1920 = vmul.f32 %v1851, %v1904
      %v1921 = vmul.f32 %v1853, %v1905
      %v1922 = vmul.f32 %v1855, %v1906
      %v1923 = vmul.f32 %v1857, %v1907
      %v1924 = vmul.f32 %v1859, %v1908
      %v1925 = vmul.f32 %v1861, %v1909
      %v1926 = vpack.c.bf16 %v1911, %v1910
      %v1927 = vpack.c.bf16 %v1913, %v1912
      %v1928 = vpack.c.bf16 %v1915, %v1914
      %v1929 = vpack.c.bf16 %v1917, %v1916
      %v1930 = vpack.c.bf16 %v1919, %v1918
      %v1931 = vpack.c.bf16 %v1921, %v1920
      %v1932 = vpack.c.bf16 %v1923, %v1922
      %v1933 = vpack.c.bf16 %v1925, %v1924
      %1934 = vrot.lane.b32.xlu0 %v592, 32
      %v1935 = vpop.permute.xlu0 %1934
      %1936 = vrot.lane.b32.xlu0 %v593, 32
      %v1937 = vpop.permute.xlu0 %1936
      %1938 = vrot.lane.b32.xlu0 %v594, 32
      %v1939 = vpop.permute.xlu0 %1938
      %1940 = vrot.lane.b32.xlu0 %v595, 32
      %v1941 = vpop.permute.xlu0 %1940
      %1942 = vrot.lane.b32.xlu0 %v596, 32
      %v1943 = vpop.permute.xlu0 %1942
      %1944 = vrot.lane.b32.xlu0 %v597, 32
      %v1945 = vpop.permute.xlu0 %1944
      %1946 = vrot.lane.b32.xlu0 %v598, 32
      %v1947 = vpop.permute.xlu0 %1946
      %1948 = vrot.lane.b32.xlu0 %v599, 32
      %v1949 = vpop.permute.xlu0 %1948
      %1958 = vmatprep.subr.bf16.mxu0 0
      %1959 = vmatpush1.bf16.msra.mxu0 %v1935
      %1960 = vmatprep.subr.bf16.mxu0 0
      %1961 = vmatpush1.bf16.msra.mxu0 %v1937
      %1962 = vmatprep.subr.bf16.mxu0 0
      %1963 = vmatpush1.bf16.msra.mxu0 %v1939
      %1964 = vmatprep.subr.bf16.mxu0 0
      %1965 = vmatpush1.bf16.msra.mxu0 %v1941
      %1966 = vmatprep.subr.bf16.mxu0 0
      %1967 = vmatpush1.bf16.msra.mxu0 %v1943
      %1968 = vmatprep.subr.bf16.mxu0 0
      %1969 = vmatpush1.bf16.msra.mxu0 %v1945
      %1970 = vmatprep.subr.bf16.mxu0 0
      %1971 = vmatpush1.bf16.msra.mxu0 %v1947
      %1972 = vmatprep.subr.bf16.mxu0 0
      %1973 = vmatpush1.bf16.msra.mxu0 %v1949
      %1974 = vmatprep.subr.bf16.mxu0 0
      %1975 = vmatpush1.bf16.msra.mxu0 0
      %1976 = vmatprep.subr.bf16.mxu0 0
      %1977 = vmatpush1.bf16.msra.mxu0 0
      %1978 = vmatprep.subr.bf16.mxu0 0
      %1979 = vmatpush1.bf16.msra.mxu0 0
      %1980 = vmatprep.subr.bf16.mxu0 0
      %1981 = vmatpush1.bf16.msra.mxu0 0
      %1982 = vmatprep.subr.bf16.mxu0 0
      %1983 = vmatpush1.bf16.msra.mxu0 0
      %1984 = vmatprep.subr.bf16.mxu0 0
      %1985 = vmatpush1.bf16.msra.mxu0 0
      %1986 = vmatprep.subr.bf16.mxu0 0
      %1987 = vmatpush1.bf16.msra.mxu0 0
      %1988 = vmatprep.subr.bf16.mxu0 0
      %1989 = vmatpush1.bf16.msra.mxu0 0
      %1990 = vmatprep.mubr.bf16.mxu0 0
      %1991 = vmatmul.mubr.bf16.gmra.mrb[0].mxu0 %v1926
      %v1992 = vpop.f32.mrb[0].mxu0
      %v1993 = vadd.f32 0.0, %v1992
      %v1994 = vpop.f32.mrb[0].mxu0
      %v1995 = vpop.f32.mrb[0].mxu0
      %v1996 = vadd.f32 0.0, %v1995
      %v1997 = vpop.f32.mrb[0].mxu0
      %1998 = vmatprep.mubr.bf16.mxu0 0
      %1999 = vmatmul.mubr.bf16.gmra.mrb[0].mxu0 %v1927
      %v2000 = vpop.f32.mrb[0].mxu0
      %v2001 = vadd.f32 0.0, %v2000
      %v2002 = vpop.f32.mrb[0].mxu0
      %v2003 = vpop.f32.mrb[0].mxu0
      %v2004 = vadd.f32 0.0, %v2003
      %v2005 = vpop.f32.mrb[0].mxu0
      %2006 = vmatprep.mubr.bf16.mxu0 0
      %2007 = vmatmul.mubr.bf16.gmra.mrb[0].mxu0 %v1928
      %v2008 = vpop.f32.mrb[0].mxu0
      %v2009 = vadd.f32 0.0, %v2008
      %v2010 = vpop.f32.mrb[0].mxu0
      %v2011 = vpop.f32.mrb[0].mxu0
      %v2012 = vadd.f32 0.0, %v2011
      %v2013 = vpop.f32.mrb[0].mxu0
      %2014 = vmatprep.mubr.bf16.mxu0 0
      %2015 = vmatmul.mubr.bf16.gmra.mrb[0].mxu0 %v1929
      %v2016 = vpop.f32.mrb[0].mxu0
      %v2017 = vadd.f32 0.0, %v2016
      %v2018 = vpop.f32.mrb[0].mxu0
      %v2019 = vpop.f32.mrb[0].mxu0
      %v2020 = vadd.f32 0.0, %v2019
      %v2021 = vpop.f32.mrb[0].mxu0
      %2022 = vmatprep.mubr.bf16.mxu0 0
      %2023 = vmatmul.mubr.bf16.gmra.mrb[0].mxu0 %v1930
      %v2024 = vpop.f32.mrb[0].mxu0
      %v2025 = vadd.f32 0.0, %v2024
      %v2026 = vpop.f32.mrb[0].mxu0
      %v2027 = vpop.f32.mrb[0].mxu0
      %v2028 = vadd.f32 0.0, %v2027
      %v2029 = vpop.f32.mrb[0].mxu0
      %2030 = vmatprep.mubr.bf16.mxu0 0
      %2031 = vmatmul.mubr.bf16.gmra.mrb[0].mxu0 %v1931
      %v2032 = vpop.f32.mrb[0].mxu0
      %v2033 = vadd.f32 0.0, %v2032
      %v2034 = vpop.f32.mrb[0].mxu0
      %v2035 = vpop.f32.mrb[0].mxu0
      %v2036 = vadd.f32 0.0, %v2035
      %v2037 = vpop.f32.mrb[0].mxu0
      %2038 = vmatprep.mubr.bf16.mxu0 0
      %2039 = vmatmul.mubr.bf16.gmra.mrb[0].mxu0 %v1932
      %v2040 = vpop.f32.mrb[0].mxu0
      %v2041 = vadd.f32 0.0, %v2040
      %v2042 = vpop.f32.mrb[0].mxu0
      %v2043 = vpop.f32.mrb[0].mxu0
      %v2044 = vadd.f32 0.0, %v2043
      %v2045 = vpop.f32.mrb[0].mxu0
      %2046 = vmatprep.mubr.bf16.mxu0 0
      %2047 = vmatmul.mubr.bf16.gmra.mrb[0].mxu0 %v1933
      %v2048 = vpop.f32.mrb[0].mxu0
      %v2049 = vadd.f32 0.0, %v2048
      %v2050 = vpop.f32.mrb[0].mxu0
      %v2051 = vpop.f32.mrb[0].mxu0
      %v2052 = vadd.f32 0.0, %v2051
      %v2053 = vpop.f32.mrb[0].mxu0
      %2054 = vdwg.mxu0
      %2071 = vrot.lane.b32.xlu0 %v1093, 32
      %v2072 = vpop.permute.xlu0 %2071
      %2073 = vrot.lane.b32.xlu0 %v1096, 32
      %v2074 = vpop.permute.xlu0 %2073
      %2075 = vrot.lane.b32.xlu0 %v1101, 32
      %v2076 = vpop.permute.xlu0 %2075
      %2077 = vrot.lane.b32.xlu0 %v1104, 32
      %v2078 = vpop.permute.xlu0 %2077
      %2079 = vrot.lane.b32.xlu0 %v1109, 32
      %v2080 = vpop.permute.xlu0 %2079
      %2081 = vrot.lane.b32.xlu0 %v1112, 32
      %v2082 = vpop.permute.xlu0 %2081
      %2083 = vrot.lane.b32.xlu0 %v1117, 32
      %v2084 = vpop.permute.xlu0 %2083
      %2085 = vrot.lane.b32.xlu0 %v1120, 32
      %v2086 = vpop.permute.xlu0 %2085
      %2087 = vrot.lane.b32.xlu0 %v1125, 32
      %v2088 = vpop.permute.xlu0 %2087
      %2089 = vrot.lane.b32.xlu0 %v1128, 32
      %v2090 = vpop.permute.xlu0 %2089
      %2091 = vrot.lane.b32.xlu0 %v1133, 32
      %v2092 = vpop.permute.xlu0 %2091
      %2093 = vrot.lane.b32.xlu0 %v1136, 32
      %v2094 = vpop.permute.xlu0 %2093
      %2095 = vrot.lane.b32.xlu0 %v1141, 32
      %v2096 = vpop.permute.xlu0 %2095
      %2097 = vrot.lane.b32.xlu0 %v1144, 32
      %v2098 = vpop.permute.xlu0 %2097
      %2099 = vrot.lane.b32.xlu0 %v1149, 32
      %v2100 = vpop.permute.xlu0 %2099
      %2101 = vrot.lane.b32.xlu0 %v1152, 32
      %v2102 = vpop.permute.xlu0 %2101
      %2135 = vrot.lane.b32.xlu0 %v1543, 64
      %v2136 = vpop.permute.xlu0 %2135
      %2137 = vrot.lane.b32.xlu0 %v1546, 64
      %v2138 = vpop.permute.xlu0 %2137
      %2139 = vrot.lane.b32.xlu0 %v1551, 64
      %v2140 = vpop.permute.xlu0 %2139
      %2141 = vrot.lane.b32.xlu0 %v1554, 64
      %v2142 = vpop.permute.xlu0 %2141
      %2143 = vrot.lane.b32.xlu0 %v1559, 64
      %v2144 = vpop.permute.xlu0 %2143
      %2145 = vrot.lane.b32.xlu0 %v1562, 64
      %v2146 = vpop.permute.xlu0 %2145
      %2147 = vrot.lane.b32.xlu0 %v1567, 64
      %v2148 = vpop.permute.xlu0 %2147
      %2149 = vrot.lane.b32.xlu0 %v1570, 64
      %v2150 = vpop.permute.xlu0 %2149
      %2151 = vrot.lane.b32.xlu0 %v1575, 64
      %v2152 = vpop.permute.xlu0 %2151
      %2153 = vrot.lane.b32.xlu0 %v1578, 64
      %v2154 = vpop.permute.xlu0 %2153
      %2155 = vrot.lane.b32.xlu0 %v1583, 64
      %v2156 = vpop.permute.xlu0 %2155
      %2157 = vrot.lane.b32.xlu0 %v1586, 64
      %v2158 = vpop.permute.xlu0 %2157
      %2159 = vrot.lane.b32.xlu0 %v1591, 64
      %v2160 = vpop.permute.xlu0 %2159
      %2161 = vrot.lane.b32.xlu0 %v1594, 64
      %v2162 = vpop.permute.xlu0 %2161
      %2163 = vrot.lane.b32.xlu0 %v1599, 64
      %v2164 = vpop.permute.xlu0 %2163
      %2165 = vrot.lane.b32.xlu0 %v1602, 64
      %v2166 = vpop.permute.xlu0 %2165
      %2199 = vrot.lane.b32.xlu0 %v1993, 96
      %v2200 = vpop.permute.xlu0 %2199
      %2201 = vrot.lane.b32.xlu0 %v1996, 96
      %v2202 = vpop.permute.xlu0 %2201
      %2203 = vrot.lane.b32.xlu0 %v2001, 96
      %v2204 = vpop.permute.xlu0 %2203
      %2205 = vrot.lane.b32.xlu0 %v2004, 96
      %v2206 = vpop.permute.xlu0 %2205
      %2207 = vrot.lane.b32.xlu0 %v2009, 96
      %v2208 = vpop.permute.xlu0 %2207
      %2209 = vrot.lane.b32.xlu0 %v2012, 96
      %v2210 = vpop.permute.xlu0 %2209
      %2211 = vrot.lane.b32.xlu0 %v2017, 96
      %v2212 = vpop.permute.xlu0 %2211
      %2213 = vrot.lane.b32.xlu0 %v2020, 96
      %v2214 = vpop.permute.xlu0 %2213
      %2215 = vrot.lane.b32.xlu0 %v2025, 96
      %v2216 = vpop.permute.xlu0 %2215
      %2217 = vrot.lane.b32.xlu0 %v2028, 96
      %v2218 = vpop.permute.xlu0 %2217
      %2219 = vrot.lane.b32.xlu0 %v2033, 96
      %v2220 = vpop.permute.xlu0 %2219
      %2221 = vrot.lane.b32.xlu0 %v2036, 96
      %v2222 = vpop.permute.xlu0 %2221
      %2223 = vrot.lane.b32.xlu0 %v2041, 96
      %v2224 = vpop.permute.xlu0 %2223
      %2225 = vrot.lane.b32.xlu0 %v2044, 96
      %v2226 = vpop.permute.xlu0 %2225
      %2227 = vrot.lane.b32.xlu0 %v2049, 96
      %v2228 = vpop.permute.xlu0 %2227
      %2229 = vrot.lane.b32.xlu0 %v2052, 96
      %v2230 = vpop.permute.xlu0 %2229
      %v2247 = vsel %vm262, %v643, %v2072
      %v2248 = vsel %vm262, %v646, %v2074
      %v2249 = vsel %vm262, %v651, %v2076
      %v2250 = vsel %vm262, %v654, %v2078
      %v2251 = vsel %vm262, %v659, %v2080
      %v2252 = vsel %vm262, %v662, %v2082
      %v2253 = vsel %vm262, %v667, %v2084
      %v2254 = vsel %vm262, %v670, %v2086
      %v2255 = vsel %vm262, %v675, %v2088
      %v2256 = vsel %vm262, %v678, %v2090
      %v2257 = vsel %vm262, %v683, %v2092
      %v2258 = vsel %vm262, %v686, %v2094
      %v2259 = vsel %vm262, %v691, %v2096
      %v2260 = vsel %vm262, %v694, %v2098
      %v2261 = vsel %vm262, %v699, %v2100
      %v2262 = vsel %vm262, %v702, %v2102
      %vm2263 = vcmask 523264
      %v2264 = vsel %vm2263, %v2247, %v2136
      %v2265 = vsel %vm2263, %v2248, %v2138
      %v2266 = vsel %vm2263, %v2249, %v2140
      %v2267 = vsel %vm2263, %v2250, %v2142
      %v2268 = vsel %vm2263, %v2251, %v2144
      %v2269 = vsel %vm2263, %v2252, %v2146
      %v2270 = vsel %vm2263, %v2253, %v2148
      %v2271 = vsel %vm2263, %v2254, %v2150
      %v2272 = vsel %vm2263, %v2255, %v2152
      %v2273 = vsel %vm2263, %v2256, %v2154
      %v2274 = vsel %vm2263, %v2257, %v2156
      %v2275 = vsel %vm2263, %v2258, %v2158
      %v2276 = vsel %vm2263, %v2259, %v2160
      %v2277 = vsel %vm2263, %v2260, %v2162
      %v2278 = vsel %vm2263, %v2261, %v2164
      %v2279 = vsel %vm2263, %v2262, %v2166
      %vm2280 = vcmask 785408
      %v2281 = vsel %vm2280, %v2264, %v2200
      %v2282 = vsel %vm2280, %v2265, %v2202
      %v2283 = vsel %vm2280, %v2266, %v2204
      %v2284 = vsel %vm2280, %v2267, %v2206
      %v2285 = vsel %vm2280, %v2268, %v2208
      %v2286 = vsel %vm2280, %v2269, %v2210
      %v2287 = vsel %vm2280, %v2270, %v2212
      %v2288 = vsel %vm2280, %v2271, %v2214
      %v2289 = vsel %vm2280, %v2272, %v2216
      %v2290 = vsel %vm2280, %v2273, %v2218
      %v2291 = vsel %vm2280, %v2274, %v2220
      %v2292 = vsel %vm2280, %v2275, %v2222
      %v2293 = vsel %vm2280, %v2276, %v2224
      %v2294 = vsel %vm2280, %v2277, %v2226
      %v2295 = vsel %vm2280, %v2278, %v2228
      %v2296 = vsel %vm2280, %v2279, %v2230
      %v2297 = vpack.c.bf16 %v2282, %v2281
      %v2298 = vpack.c.bf16 %v2284, %v2283
      %v2299 = vpack.c.bf16 %v2286, %v2285
      %v2300 = vpack.c.bf16 %v2288, %v2287
      %v2301 = vpack.c.bf16 %v2290, %v2289
      %v2302 = vpack.c.bf16 %v2292, %v2291
      %v2303 = vpack.c.bf16 %v2294, %v2293
      %v2304 = vpack.c.bf16 %v2296, %v2295
      %v2313 = vunpack.c.l.b16 %v2297
      %v2314 = vunpack.c.h.b16 %v2297
      %v2315 = vunpack.c.l.b16 %v2298
      %v2316 = vunpack.c.h.b16 %v2298
      %v2317 = vunpack.c.l.b16 %v2299
      %v2318 = vunpack.c.h.b16 %v2299
      %v2319 = vunpack.c.l.b16 %v2300
      %v2320 = vunpack.c.h.b16 %v2300
      %v2321 = vunpack.c.l.b16 %v2301
      %v2322 = vunpack.c.h.b16 %v2301
      %v2323 = vunpack.c.l.b16 %v2302
      %v2324 = vunpack.c.h.b16 %v2302
      %v2325 = vunpack.c.l.b16 %v2303
      %v2326 = vunpack.c.h.b16 %v2303
      %v2327 = vunpack.c.l.b16 %v2304
      %v2328 = vunpack.c.h.b16 %v2304
      %v2329 = vpack.c.b16 %v2313, %v2313
      %v2330 = vpack.c.b16 %v2314, %v2314
      %v2331 = vpack.c.b16 %v2315, %v2315
      %v2332 = vpack.c.b16 %v2316, %v2316
      %v2333 = vpack.c.b16 %v2317, %v2317
      %v2334 = vpack.c.b16 %v2318, %v2318
      %v2335 = vpack.c.b16 %v2319, %v2319
      %v2336 = vpack.c.b16 %v2320, %v2320
      %v2337 = vpack.c.b16 %v2321, %v2321
      %v2338 = vpack.c.b16 %v2322, %v2322
      %v2339 = vpack.c.b16 %v2323, %v2323
      %v2340 = vpack.c.b16 %v2324, %v2324
      %v2341 = vpack.c.b16 %v2325, %v2325
      %v2342 = vpack.c.b16 %v2326, %v2326
      %v2343 = vpack.c.b16 %v2327, %v2327
      %v2344 = vpack.c.b16 %v2328, %v2328
      %2361 = vst [vmem:[%s157] sm:$0xf] %v2329
      %2362 = vst [vmem:[%s157 + $0x4] sm:$0xf] %v2330
      %2363 = vst [vmem:[%s157 + $0x8] sm:$0xf] %v2331
      %2364 = vst [vmem:[%s157 + $0xc] sm:$0xf] %v2332
      %2365 = vst [vmem:[%s157 + $0x10] sm:$0xf] %v2333
      %2366 = vst [vmem:[%s157 + $0x14] sm:$0xf] %v2334
      %2367 = vst [vmem:[%s157 + $0x18] sm:$0xf] %v2335
      %2368 = vst [vmem:[%s157 + $0x1c] sm:$0xf] %v2336
      %2369 = vst [vmem:[%s157 + $0x20] sm:$0xf] %v2337
      %2370 = vst [vmem:[%s157 + $0x24] sm:$0xf] %v2338
      %2371 = vst [vmem:[%s157 + $0x28] sm:$0xf] %v2339
      %2372 = vst [vmem:[%s157 + $0x2c] sm:$0xf] %v2340
      %2373 = vst [vmem:[%s157 + $0x30] sm:$0xf] %v2341
      %2374 = vst [vmem:[%s157 + $0x34] sm:$0xf] %v2342
      %2375 = vst [vmem:[%s157 + $0x38] sm:$0xf] %v2343
      %2376 = vst [vmem:[%s157 + $0x3c] sm:$0xf] %v2344
      %p2377 = scmp.lt.s32.totalorder %s13, 1
      %s2378 = scalar_select %p2377, %s13, 1
      %s2379 = smul.addr %s2378, 16
      %s2380 = smul.addr %s2379, 4
      %s2381 = scalar_lea.vmem %s2, %s2380
      // Predicated region
      $region29: #{encoder_forward.13} parent=27 // pred_check
        %p2382 = pneg %p83
      $region30: #{encoder_forward.13} parent=27 // pred_check_branch
        %2384 = sbr.rel (%p2382) target = $region32
      $region31: #{encoder_forward.13} parent=27 // pred_region
        _
      $region32: #{encoder_forward.13} parent=27 // pred_fallthru
        _
    $region28: #{encoder_forward.13} parent=5 // pred_fallthru
      _
    %p2385 = scmp.le.s32.totalorder 2, %s8
    // Predicated region
    $region33: #{encoder_forward.13} parent=5 // pred_check
      %p2386 = pneg %p2385
    $region34: #{encoder_forward.13} parent=5 // pred_check_branch
      %2388 = sbr.rel (%p2386) target = $region36
    $region35: #{encoder_forward.13} parent=5 // pred_region
      %s2389 = ssub.s32 %s8, 2
      // Predicated region
      $region37: #{encoder_forward.13} parent=35 // pred_check
        %p2390 = pneg %p89
      $region38: #{encoder_forward.13} parent=35 // pred_check_branch
        %2392 = sbr.rel (%p2390) target = $region40
      $region39: #{encoder_forward.13} parent=35 // pred_region
        %p2393 = scmp.lt.s32.totalorder %s14, 1
        %s2394 = scalar_select %p2393, %s14, 1
        %s2395 = smul.addr %s2394, 16
        %s2396 = smul.addr %s2395, 4
        %s2397 = scalar_lea.vmem %s2, %s2396
      $region40: #{encoder_forward.13} parent=35 // pred_fallthru
        _
    $region36: #{encoder_forward.13} parent=5 // pred_fallthru
      _
  $region6: #{encoder_forward.13} parent=0 // loop_footer
    %s12 = sadd.s32 1, %s8
  $region7: #{encoder_forward.13} parent=0 // loop_footer_branch
    %7 = sbr.rel target = $region3
  $region8: #{encoder_forward.13} parent=0 // loop_exit
    _

// kernel: encoder_forward.15
$region0: #{encoder_forward.15}
  #allocation0 [shape = 'u32[]', space=smem, size = 0x4, offset = 0x4, fixed_abs, tag = 'smem constant byte address 0x4 - core index']
  #allocation1 [shape = 'u32[144,128]{1,0:T(1,128)}', space=vmem, size = 0x12000, scoped, tag = 'internal scratch']
  %s0 = inlined_call_operand.vmem [shape: f32[256,128], index: 0, kind: input, shape index: {}]
  %s1 = inlined_call_operand.vmem [shape: bf16[128,512], index: 1, kind: input, shape index: {}]
  %s2 = inlined_call_operand.vmem [shape: f32[1,512], index: 2, kind: input, shape index: {}]
  %s3 = inlined_call_operand.vmem [shape: bf16[256,512], index: 3, kind: output, shape index: {}]
  %s4 = sld [smem:[#allocation0]]
  $region45: #{encoder_forward.15} parent=0
    _
  %s6 = ssub.s32 1, %s4
  %s7 = scalar_select 0, %s6, %s4
  loop: start=0, step=1, limit=4
  $region2: #{encoder_forward.15} parent=0 // loop_pre_header
    _
  $region3: #{encoder_forward.15} parent=0 // loop_header
    %s9 = sphi 0, %s13
    %p10 = scmp.ge.s32.totalorder %s9, 4
    %s19 = sphi 0, %s21
    %s22 = sphi 0, %s19
    %s23 = sphi 0, %s22
    %s39 = sphi 0, %s23
    %s43 = sphi 0, %s43
    %s45 = sphi 0, %s43
    %s46 = sphi 0, %s45
    %s60 = sphi 0, %s46
    %s64 = sphi 0, %s64
    %s66 = sphi 0, %s64
    %s67 = sphi 0, %s66
    %s81 = sphi 0, %s67
    %s87 = sphi 0, %s89
    %s90 = sphi 0, %s87
    %s91 = sphi 0, %s90
    %s107 = sphi 0, %s91
  $region4: #{encoder_forward.15} parent=0 // loop_header_branch
    %12 = sbr.rel (%p10) target = $region8
  $region5: #{encoder_forward.15} parent=0 // loop_body
    %s14 = ssub.s32 %s9, 1
    %s15 = ssub.s32 %s9, 2
    %s16 = sadd.s32 %s9, 1
    %s17 = ssub.s32 %s9, %s16
    %p18 = scmp.eq.s32.totalorder %s17, 0
    %s20 = sadd.s32 %s19, 1
    %s21 = scalar_select %p18, %s19, %s20
    %p24 = pneg %p18
    %p25 = scmp.eq.s32.totalorder %s9, 1
    %p26 = por %p24, %p25
    %p27 = scmp.ne.s32.totalorder %s19, %s22
    %p28 = scmp.eq.s32.totalorder %s9, 0
    %p29 = por %p27, %p28
    %p30 = scmp.ne.s32.totalorder %s19, %s22
    %p31 = scmp.eq.s32.totalorder %s14, 1
    %p32 = por %p30, %p31
    %p33 = scmp.ne.s32.totalorder %s22, %s23
    %p34 = scmp.eq.s32.totalorder %s14, 0
    %p35 = por %p33, %p34
    %p36 = scmp.ne.s32.totalorder %s22, %s23
    %p37 = scmp.eq.s32.totalorder %s15, 1
    %p38 = por %p36, %p37
    %p40 = scmp.ne.s32.totalorder %s23, %s39
    %p41 = scmp.eq.s32.totalorder %s15, 0
    %p42 = por %p40, %p41
    %s44 = sadd.s32 %s43, 1
    %p47 = scmp.eq.s32.totalorder %s9, 1
    %p48 = scmp.ne.s32.totalorder %s43, %s45
    %p49 = scmp.eq.s32.totalorder %s9, 0
    %p50 = por %p48, %p49
    %p51 = scmp.ne.s32.totalorder %s43, %s45
    %p52 = scmp.eq.s32.totalorder %s14, 1
    %p53 = por %p51, %p52
    %p54 = scmp.ne.s32.totalorder %s45, %s46
    %p55 = scmp.eq.s32.totalorder %s14, 0
    %p56 = por %p54, %p55
    %p57 = scmp.ne.s32.totalorder %s45, %s46
    %p58 = scmp.eq.s32.totalorder %s15, 1
    %p59 = por %p57, %p58
    %p61 = scmp.ne.s32.totalorder %s46, %s60
    %p62 = scmp.eq.s32.totalorder %s15, 0
    %p63 = por %p61, %p62
    %s65 = sadd.s32 %s64, 1
    %p68 = scmp.eq.s32.totalorder %s9, 1
    %p69 = scmp.ne.s32.totalorder %s64, %s66
    %p70 = scmp.eq.s32.totalorder %s9, 0
    %p71 = por %p69, %p70
    %p72 = scmp.ne.s32.totalorder %s64, %s66
    %p73 = scmp.eq.s32.totalorder %s14, 1
    %p74 = por %p72, %p73
    %p75 = scmp.ne.s32.totalorder %s66, %s67
    %p76 = scmp.eq.s32.totalorder %s14, 0
    %p77 = por %p75, %p76
    %p78 = scmp.ne.s32.totalorder %s66, %s67
    %p79 = scmp.eq.s32.totalorder %s15, 1
    %p80 = por %p78, %p79
    %p82 = scmp.ne.s32.totalorder %s67, %s81
    %p83 = scmp.eq.s32.totalorder %s15, 0
    %p84 = por %p82, %p83
    %s85 = ssub.s32 %s9, %s16
    %p86 = scmp.eq.s32.totalorder %s85, 0
    %s88 = sadd.s32 %s87, 1
    %s89 = scalar_select %p86, %s87, %s88
    %p92 = pneg %p86
    %p93 = scmp.eq.s32.totalorder %s9, 1
    %p94 = por %p92, %p93
    %p95 = scmp.ne.s32.totalorder %s87, %s90
    %p96 = scmp.eq.s32.totalorder %s9, 0
    %p97 = por %p95, %p96
    %p98 = scmp.ne.s32.totalorder %s87, %s90
    %p99 = scmp.eq.s32.totalorder %s14, 1
    %p100 = por %p98, %p99
    %p101 = scmp.ne.s32.totalorder %s90, %s91
    %p102 = scmp.eq.s32.totalorder %s14, 0
    %p103 = por %p101, %p102
    %p104 = scmp.ne.s32.totalorder %s90, %s91
    %p105 = scmp.eq.s32.totalorder %s15, 1
    %p106 = por %p104, %p105
    %p108 = scmp.ne.s32.totalorder %s91, %s107
    %p109 = scmp.eq.s32.totalorder %s15, 0
    %p110 = por %p108, %p109
    %p111 = scmp.le.s32.totalorder 1, %s9
    %p112 = scmp.lt.s32.totalorder %s9, 3
    %p113 = pnand %p111, %p112
    %p114 = pneg %p113
    // Predicated region
    $region9: #{encoder_forward.15} parent=5 // pred_check
      _
    $region10: #{encoder_forward.15} parent=5 // pred_check_branch
      %116 = sbr.rel (%p113) target = $region12
    $region11: #{encoder_forward.15} parent=5 // pred_region
      %s117 = ssub.s32 %s9, 1
      // Predicated region
      $region13: #{encoder_forward.15} parent=11 // pred_check
        %p118 = pneg %p56
      $region14: #{encoder_forward.15} parent=11 // pred_check_branch
        %120 = sbr.rel (%p118) target = $region16
      $region15: #{encoder_forward.15} parent=11 // pred_region
        _
      $region16: #{encoder_forward.15} parent=11 // pred_fallthru
        _
      // Predicated region
      $region17: #{encoder_forward.15} parent=11 // pred_check
        %p121 = pneg %p77
      $region18: #{encoder_forward.15} parent=11 // pred_check_branch
        %123 = sbr.rel (%p121) target = $region20
      $region19: #{encoder_forward.15} parent=11 // pred_region
        _
      $region20: #{encoder_forward.15} parent=11 // pred_fallthru
        _
    $region12: #{encoder_forward.15} parent=5 // pred_fallthru
      _
    %p124 = scmp.lt.s32.totalorder %s9, 2
    // Predicated region
    $region21: #{encoder_forward.15} parent=5 // pred_check
      %p125 = pneg %p124
    $region22: #{encoder_forward.15} parent=5 // pred_check_branch
      %127 = sbr.rel (%p125) target = $region24
    $region23: #{encoder_forward.15} parent=5 // pred_region
      // Predicated region
      $region25: #{encoder_forward.15} parent=23 // pred_check
        %p128 = pneg %p29
      $region26: #{encoder_forward.15} parent=23 // pred_check_branch
        %130 = sbr.rel (%p128) target = $region28
      $region27: #{encoder_forward.15} parent=23 // pred_region
        %s131 = smul.u32 16, %s9
        %p132 = scmp.lt.s32.totalorder %s131, 31
        %s133 = scalar_select %p132, %s131, 31
        %s134 = smul.addr %s133, 8
        %s135 = scalar_lea.vmem %s0, %s134
        %s136 = smul.u32 16, %s9
      $region28: #{encoder_forward.15} parent=23 // pred_fallthru
        _
    $region24: #{encoder_forward.15} parent=5 // pred_fallthru
      _
    %p137 = scmp.le.s32.totalorder 1, %s9
    %p138 = scmp.lt.s32.totalorder %s9, 3
    %p139 = pnand %p137, %p138
    %p140 = pneg %p139
    // Predicated region
    $region29: #{encoder_forward.15} parent=5 // pred_check
      _
    $region30: #{encoder_forward.15} parent=5 // pred_check_branch
      %142 = sbr.rel (%p139) target = $region32
    $region31: #{encoder_forward.15} parent=5 // pred_region
      %s143 = ssub.s32 %s9, 1
      %s144 = smul.u32 16, %s14
      %p145 = scmp.lt.s32.totalorder %s144, 31
      %s146 = scalar_select %p145, %s144, 31
      %s147 = smul.addr %s146, 8
      %s148 = scalar_lea.vmem %s0, %s147
      %p149 = pneg %p35
      %p150 = pneg %p32
      %p151 = pneg %p56
      %p152 = pneg %p53
      %p153 = pneg %p77
      %p154 = pneg %p74
      %p155 = pneg %p103
      %p156 = pneg %p100
      %s157 = smul.u32 16, %s14
      %p158 = scmp.lt.s32.totalorder %s157, 31
      %s159 = scalar_select %p158, %s157, 31
      %s160 = smul.addr %s159, 4
      %s161 = smul.addr %s160, 4
      %s162 = scalar_lea.vmem %s3, %s161
      %s163 = smul.u32 16, %s14
      %p164 = scmp.lt.s32.totalorder %s163, 31
      %s165 = scalar_select %p164, %s163, 31
      %s166 = smul.addr %s165, 8
      %s167 = scalar_lea.vmem %s0, %s166
      %s168 = smul.u32 16, %s14
      %s169 = smul.u32 16, %s14
      %p170 = scmp.lt.s32.totalorder %s169, 31
      %s171 = scalar_select %p170, %s169, 31
      %s172 = smul.addr %s171, 4
      %s173 = smul.addr %s172, 4
      %s174 = scalar_lea.vmem %s3, %s173
      %s175 = smul.u32 16, %s14
      %v177 = vld [vmem:[%s167] sm:$0xff]
      %v178 = vld [vmem:[%s167 + $0x8] sm:$0xff]
      %v179 = vld [vmem:[%s167 + $0x10] sm:$0xff]
      %v180 = vld [vmem:[%s167 + $0x18] sm:$0xff]
      %v181 = vld [vmem:[%s167 + $0x20] sm:$0xff]
      %v182 = vld [vmem:[%s167 + $0x28] sm:$0xff]
      %v183 = vld [vmem:[%s167 + $0x30] sm:$0xff]
      %v184 = vld [vmem:[%s167 + $0x38] sm:$0xff]
      %v185 = vld [vmem:[%s167 + $0x40] sm:$0xff]
      %v186 = vld [vmem:[%s167 + $0x48] sm:$0xff]
      %v187 = vld [vmem:[%s167 + $0x50] sm:$0xff]
      %v188 = vld [vmem:[%s167 + $0x58] sm:$0xff]
      %v189 = vld [vmem:[%s167 + $0x60] sm:$0xff]
      %v190 = vld [vmem:[%s167 + $0x68] sm:$0xff]
      %v191 = vld [vmem:[%s167 + $0x70] sm:$0xff]
      %v192 = vld [vmem:[%s167 + $0x78] sm:$0xff]
      %v193 = vpack.c.bf16 %v178, %v177
      %v194 = vpack.c.bf16 %v180, %v179
      %v195 = vpack.c.bf16 %v182, %v181
      %v196 = vpack.c.bf16 %v184, %v183
      %v197 = vpack.c.bf16 %v186, %v185
      %v198 = vpack.c.bf16 %v188, %v187
      %v199 = vpack.c.bf16 %v190, %v189
      %v200 = vpack.c.bf16 %v192, %v191
      %v201 = vld [vmem:[%s1] sm:$0xff]
      %v202 = vld [vmem:[%s1 + $0x8] sm:$0xff]
      %v203 = vld [vmem:[%s1 + $0x10] sm:$0xff]
      %v204 = vld [vmem:[%s1 + $0x18] sm:$0xff]
      %v205 = vld [vmem:[%s1 + $0x20] sm:$0xff]
      %v206 = vld [vmem:[%s1 + $0x28] sm:$0xff]
      %v207 = vld [vmem:[%s1 + $0x30] sm:$0xff]
      %v208 = vld [vmem:[%s1 + $0x38] sm:$0xff]
      %v209 = vld [vmem:[%s1 + $0x40] sm:$0xff]
      %v210 = vld [vmem:[%s1 + $0x48] sm:$0xff]
      %v211 = vld [vmem:[%s1 + $0x50] sm:$0xff]
      %v212 = vld [vmem:[%s1 + $0x58] sm:$0xff]
      %v213 = vld [vmem:[%s1 + $0x60] sm:$0xff]
      %v214 = vld [vmem:[%s1 + $0x68] sm:$0xff]
      %v215 = vld [vmem:[%s1 + $0x70] sm:$0xff]
      %v216 = vld [vmem:[%s1 + $0x78] sm:$0xff]
      %v217 = vld [vmem:[%s1 + $0x80] sm:$0xff]
      %v218 = vld [vmem:[%s1 + $0x88] sm:$0xff]
      %v219 = vld [vmem:[%s1 + $0x90] sm:$0xff]
      %v220 = vld [vmem:[%s1 + $0x98] sm:$0xff]
      %v221 = vld [vmem:[%s1 + $0xa0] sm:$0xff]
      %v222 = vld [vmem:[%s1 + $0xa8] sm:$0xff]
      %v223 = vld [vmem:[%s1 + $0xb0] sm:$0xff]
      %v224 = vld [vmem:[%s1 + $0xb8] sm:$0xff]
      %v225 = vld [vmem:[%s1 + $0xc0] sm:$0xff]
      %v226 = vld [vmem:[%s1 + $0xc8] sm:$0xff]
      %v227 = vld [vmem:[%s1 + $0xd0] sm:$0xff]
      %v228 = vld [vmem:[%s1 + $0xd8] sm:$0xff]
      %v229 = vld [vmem:[%s1 + $0xe0] sm:$0xff]
      %v230 = vld [vmem:[%s1 + $0xe8] sm:$0xff]
      %v231 = vld [vmem:[%s1 + $0xf0] sm:$0xff]
      %v232 = vld [vmem:[%s1 + $0xf8] sm:$0xff]
      %v233 = vld [vmem:[%s2] sm:$0xf]
      %v235 = vlaneseq
      %v236 = vshrl.u32 %v235, 7
      %v237 = vsub.s32 0, %v236
      %v238 = vrot.slane %v233, %v237
      %v239 = vlaneseq
      %v240 = vshrl.u32 %v239, 7
      %v241 = vsub.s32 1, %v240
      %v242 = vrot.slane %v233, %v241
      %v243 = vlaneseq
      %v244 = vshrl.u32 %v243, 7
      %v245 = vsub.s32 2, %v244
      %v246 = vrot.slane %v233, %v245
      %v247 = vlaneseq
      %v248 = vshrl.u32 %v247, 7
      %v249 = vsub.s32 3, %v248
      %v250 = vrot.slane %v233, %v249
      %v287 = vunpack.c.l.b16 %v201
      %v288 = vunpack.c.h.b16 %v201
      %v289 = vunpack.c.l.b16 %v202
      %v290 = vunpack.c.h.b16 %v202
      %v291 = vunpack.c.l.b16 %v203
      %v292 = vunpack.c.h.b16 %v203
      %v293 = vunpack.c.l.b16 %v204
      %v294 = vunpack.c.h.b16 %v204
      %v295 = vunpack.c.l.b16 %v205
      %v296 = vunpack.c.h.b16 %v205
      %v297 = vunpack.c.l.b16 %v206
      %v298 = vunpack.c.h.b16 %v206
      %v299 = vunpack.c.l.b16 %v207
      %v300 = vunpack.c.h.b16 %v207
      %v301 = vunpack.c.l.b16 %v208
      %v302 = vunpack.c.h.b16 %v208
      %v303 = vunpack.c.l.b16 %v209
      %v304 = vunpack.c.h.b16 %v209
      %v305 = vunpack.c.l.b16 %v210
      %v306 = vunpack.c.h.b16 %v210
      %v307 = vunpack.c.l.b16 %v211
      %v308 = vunpack.c.h.b16 %v211
      %v309 = vunpack.c.l.b16 %v212
      %v310 = vunpack.c.h.b16 %v212
      %v311 = vunpack.c.l.b16 %v213
      %v312 = vunpack.c.h.b16 %v213
      %v313 = vunpack.c.l.b16 %v214
      %v314 = vunpack.c.h.b16 %v214
      %v315 = vunpack.c.l.b16 %v215
      %v316 = vunpack.c.h.b16 %v215
      %v317 = vunpack.c.l.b16 %v216
      %v318 = vunpack.c.h.b16 %v216
      %v319 = vunpack.c.l.b16 %v217
      %v320 = vunpack.c.h.b16 %v217
      %v321 = vunpack.c.l.b16 %v218
      %v322 = vunpack.c.h.b16 %v218
      %v323 = vunpack.c.l.b16 %v219
      %v324 = vunpack.c.h.b16 %v219
      %v325 = vunpack.c.l.b16 %v220
      %v326 = vunpack.c.h.b16 %v220
      %v327 = vunpack.c.l.b16 %v221
      %v328 = vunpack.c.h.b16 %v221
      %v329 = vunpack.c.l.b16 %v222
      %v330 = vunpack.c.h.b16 %v222
      %v331 = vunpack.c.l.b16 %v223
      %v332 = vunpack.c.h.b16 %v223
      %v333 = vunpack.c.l.b16 %v224
      %v334 = vunpack.c.h.b16 %v224
      %v335 = vunpack.c.l.b16 %v225
      %v336 = vunpack.c.h.b16 %v225
      %v337 = vunpack.c.l.b16 %v226
      %v338 = vunpack.c.h.b16 %v226
      %v339 = vunpack.c.l.b16 %v227
      %v340 = vunpack.c.h.b16 %v227
      %v341 = vunpack.c.l.b16 %v228
      %v342 = vunpack.c.h.b16 %v228
      %v343 = vunpack.c.l.b16 %v229
      %v344 = vunpack.c.h.b16 %v229
      %v345 = vunpack.c.l.b16 %v230
      %v346 = vunpack.c.h.b16 %v230
      %v347 = vunpack.c.l.b16 %v231
      %v348 = vunpack.c.h.b16 %v231
      %v349 = vunpack.c.l.b16 %v232
      %v350 = vunpack.c.h.b16 %v232
      %v351 = vpack.c.b16 %v291, %v287
      %v352 = vpack.c.b16 %v292, %v288
      %v353 = vpack.c.b16 %v293, %v289
      %v354 = vpack.c.b16 %v294, %v290
      %v355 = vpack.c.b16 %v299, %v295
      %v356 = vpack.c.b16 %v300, %v296
      %v357 = vpack.c.b16 %v301, %v297
      %v358 = vpack.c.b16 %v302, %v298
      %v359 = vpack.c.b16 %v307, %v303
      %v360 = vpack.c.b16 %v308, %v304
      %v361 = vpack.c.b16 %v309, %v305
      %v362 = vpack.c.b16 %v310, %v306
      %v363 = vpack.c.b16 %v315, %v311
      %v364 = vpack.c.b16 %v316, %v312
      %v365 = vpack.c.b16 %v317, %v313
      %v366 = vpack.c.b16 %v318, %v314
      %v367 = vpack.c.b16 %v323, %v319
      %v368 = vpack.c.b16 %v324, %v320
      %v369 = vpack.c.b16 %v325, %v321
      %v370 = vpack.c.b16 %v326, %v322
      %v371 = vpack.c.b16 %v331, %v327
      %v372 = vpack.c.b16 %v332, %v328
      %v373 = vpack.c.b16 %v333, %v329
      %v374 = vpack.c.b16 %v334, %v330
      %v375 = vpack.c.b16 %v339, %v335
      %v376 = vpack.c.b16 %v340, %v336
      %v377 = vpack.c.b16 %v341, %v337
      %v378 = vpack.c.b16 %v342, %v338
      %v379 = vpack.c.b16 %v347, %v343
      %v380 = vpack.c.b16 %v348, %v344
      %v381 = vpack.c.b16 %v349, %v345
      %v382 = vpack.c.b16 %v350, %v346
      %415 = vmatprep.subr.bf16.mxu0 %v352
      %416 = vmatpush1.bf16.msra.mxu0 %v351
      %417 = vmatprep.subr.bf16.mxu0 %v356
      %418 = vmatpush1.bf16.msra.mxu0 %v355
      %419 = vmatprep.subr.bf16.mxu0 %v360
      %420 = vmatpush1.bf16.msra.mxu0 %v359
      %421 = vmatprep.subr.bf16.mxu0 %v364
      %422 = vmatpush1.bf16.msra.mxu0 %v363
      %423 = vmatprep.subr.bf16.mxu0 %v368
      %424 = vmatpush1.bf16.msra.mxu0 %v367
      %425 = vmatprep.subr.bf16.mxu0 %v372
      %426 = vmatpush1.bf16.msra.mxu0 %v371
      %427 = vmatprep.subr.bf16.mxu0 %v376
      %428 = vmatpush1.bf16.msra.mxu0 %v375
      %429 = vmatprep.subr.bf16.mxu0 %v380
      %430 = vmatpush1.bf16.msra.mxu0 %v379
      %431 = vmatprep.subr.bf16.mxu0 0
      %432 = vmatpush1.bf16.msra.mxu0 0
      %433 = vmatprep.subr.bf16.mxu0 0
      %434 = vmatpush1.bf16.msra.mxu0 0
      %435 = vmatprep.subr.bf16.mxu0 0
      %436 = vmatpush1.bf16.msra.mxu0 0
      %437 = vmatprep.subr.bf16.mxu0 0
      %438 = vmatpush1.bf16.msra.mxu0 0
      %439 = vmatprep.subr.bf16.mxu0 0
      %440 = vmatpush1.bf16.msra.mxu0 0
      %441 = vmatprep.subr.bf16.mxu0 0
      %442 = vmatpush1.bf16.msra.mxu0 0
      %443 = vmatprep.subr.bf16.mxu0 0
      %444 = vmatpush1.bf16.msra.mxu0 0
      %445 = vmatprep.subr.bf16.mxu0 0
      %446 = vmatpush1.bf16.msra.mxu0 0
      %447 = vmatprep.mubr.bf16.mxu0 0
      %448 = vmatmul.mubr.bf16.gmra.mrb[0].mxu0 %v193
      %v449 = vpop.f32.mrb[0].mxu0
      %v450 = vadd.f32 %v238, %v449
      %v451 = vpop.f32.mrb[0].mxu0
      %v452 = vadd.f32 %v242, %v451
      %v453 = vpop.f32.mrb[0].mxu0
      %v454 = vadd.f32 %v238, %v453
      %v455 = vpop.f32.mrb[0].mxu0
      %v456 = vadd.f32 %v242, %v455
      %457 = vmatprep.mubr.bf16.mxu0 0
      %458 = vmatmul.mubr.bf16.gmra.mrb[0].mxu0 %v194
      %v459 = vpop.f32.mrb[0].mxu0
      %v460 = vadd.f32 %v238, %v459
      %v461 = vpop.f32.mrb[0].mxu0
      %v462 = vadd.f32 %v242, %v461
      %v463 = vpop.f32.mrb[0].mxu0
      %v464 = vadd.f32 %v238, %v463
      %v465 = vpop.f32.mrb[0].mxu0
      %v466 = vadd.f32 %v242, %v465
      %467 = vmatprep.mubr.bf16.mxu0 0
      %468 = vmatmul.mubr.bf16.gmra.mrb[0].mxu0 %v195
      %v469 = vpop.f32.mrb[0].mxu0
      %v470 = vadd.f32 %v238, %v469
      %v471 = vpop.f32.mrb[0].mxu0
      %v472 = vadd.f32 %v242, %v471
      %v473 = vpop.f32.mrb[0].mxu0
      %v474 = vadd.f32 %v238, %v473
      %v475 = vpop.f32.mrb[0].mxu0
      %v476 = vadd.f32 %v242, %v475
      %477 = vmatprep.mubr.bf16.mxu0 0
      %478 = vmatmul.mubr.bf16.gmra.mrb[0].mxu0 %v196
      %v479 = vpop.f32.mrb[0].mxu0
      %v480 = vadd.f32 %v238, %v479
      %v481 = vpop.f32.mrb[0].mxu0
      %v482 = vadd.f32 %v242, %v481
      %v483 = vpop.f32.mrb[0].mxu0
      %v484 = vadd.f32 %v238, %v483
      %v485 = vpop.f32.mrb[0].mxu0
      %v486 = vadd.f32 %v242, %v485
      %487 = vmatprep.mubr.bf16.mxu0 0
      %488 = vmatmul.mubr.bf16.gmra.mrb[0].mxu0 %v197
      %v489 = vpop.f32.mrb[0].mxu0
      %v490 = vadd.f32 %v238, %v489
      %v491 = vpop.f32.mrb[0].mxu0
      %v492 = vadd.f32 %v242, %v491
      %v493 = vpop.f32.mrb[0].mxu0
      %v494 = vadd.f32 %v238, %v493
      %v495 = vpop.f32.mrb[0].mxu0
      %v496 = vadd.f32 %v242, %v495
      %497 = vmatprep.mubr.bf16.mxu0 0
      %498 = vmatmul.mubr.bf16.gmra.mrb[0].mxu0 %v198
      %v499 = vpop.f32.mrb[0].mxu0
      %v500 = vadd.f32 %v238, %v499
      %v501 = vpop.f32.mrb[0].mxu0
      %v502 = vadd.f32 %v242, %v501
      %v503 = vpop.f32.mrb[0].mxu0
      %v504 = vadd.f32 %v238, %v503
      %v505 = vpop.f32.mrb[0].mxu0
      %v506 = vadd.f32 %v242, %v505
      %507 = vmatprep.mubr.bf16.mxu0 0
      %508 = vmatmul.mubr.bf16.gmra.mrb[0].mxu0 %v199
      %v509 = vpop.f32.mrb[0].mxu0
      %v510 = vadd.f32 %v238, %v509
      %v511 = vpop.f32.mrb[0].mxu0
      %v512 = vadd.f32 %v242, %v511
      %v513 = vpop.f32.mrb[0].mxu0
      %v514 = vadd.f32 %v238, %v513
      %v515 = vpop.f32.mrb[0].mxu0
      %v516 = vadd.f32 %v242, %v515
      %517 = vmatprep.mubr.bf16.mxu0 0
      %518 = vmatmul.mubr.bf16.gmra.mrb[0].mxu0 %v200
      %v519 = vpop.f32.mrb[0].mxu0
      %v520 = vadd.f32 %v238, %v519
      %v521 = vpop.f32.mrb[0].mxu0
      %v522 = vadd.f32 %v242, %v521
      %v523 = vpop.f32.mrb[0].mxu0
      %v524 = vadd.f32 %v238, %v523
      %v525 = vpop.f32.mrb[0].mxu0
      %v526 = vadd.f32 %v242, %v525
      %527 = vdwg.mxu0
      %528 = vmatprep.subr.bf16.mxu0 %v354
      %529 = vmatpush1.bf16.msra.mxu0 %v353
      %530 = vmatprep.subr.bf16.mxu0 %v358
      %531 = vmatpush1.bf16.msra.mxu0 %v357
      %532 = vmatprep.subr.bf16.mxu0 %v362
      %533 = vmatpush1.bf16.msra.mxu0 %v361
      %534 = vmatprep.subr.bf16.mxu0 %v366
      %535 = vmatpush1.bf16.msra.mxu0 %v365
      %536 = vmatprep.subr.bf16.mxu0 %v370
      %537 = vmatpush1.bf16.msra.mxu0 %v369
      %538 = vmatprep.subr.bf16.mxu0 %v374
      %539 = vmatpush1.bf16.msra.mxu0 %v373
      %540 = vmatprep.subr.bf16.mxu0 %v378
      %541 = vmatpush1.bf16.msra.mxu0 %v377
      %542 = vmatprep.subr.bf16.mxu0 %v382
      %543 = vmatpush1.bf16.msra.mxu0 %v381
      %544 = vmatprep.subr.bf16.mxu0 0
      %545 = vmatpush1.bf16.msra.mxu0 0
      %546 = vmatprep.subr.bf16.mxu0 0
      %547 = vmatpush1.bf16.msra.mxu0 0
      %548 = vmatprep.subr.bf16.mxu0 0
      %549 = vmatpush1.bf16.msra.mxu0 0
      %550 = vmatprep.subr.bf16.mxu0 0
      %551 = vmatpush1.bf16.msra.mxu0 0
      %552 = vmatprep.subr.bf16.mxu0 0
      %553 = vmatpush1.bf16.msra.mxu0 0
      %554 = vmatprep.subr.bf16.mxu0 0
      %555 = vmatpush1.bf16.msra.mxu0 0
      %556 = vmatprep.subr.bf16.mxu0 0
      %557 = vmatpush1.bf16.msra.mxu0 0
      %558 = vmatprep.subr.bf16.mxu0 0
      %559 = vmatpush1.bf16.msra.mxu0 0
      %560 = vmatprep.mubr.bf16.mxu0 0
      %561 = vmatmul.mubr.bf16.gmra.mrb[0].mxu0 %v193
      %v562 = vpop.f32.mrb[0].mxu0
      %v563 = vadd.f32 %v246, %v562
      %v564 = vpop.f32.mrb[0].mxu0
      %v565 = vadd.f32 %v250, %v564
      %v566 = vpop.f32.mrb[0].mxu0
      %v567 = vadd.f32 %v246, %v566
      %v568 = vpop.f32.mrb[0].mxu0
      %v569 = vadd.f32 %v250, %v568
      %570 = vmatprep.mubr.bf16.mxu0 0
      %571 = vmatmul.mubr.bf16.gmra.mrb[0].mxu0 %v194
      %v572 = vpop.f32.mrb[0].mxu0
      %v573 = vadd.f32 %v246, %v572
      %v574 = vpop.f32.mrb[0].mxu0
      %v575 = vadd.f32 %v250, %v574
      %v576 = vpop.f32.mrb[0].mxu0
      %v577 = vadd.f32 %v246, %v576
      %v578 = vpop.f32.mrb[0].mxu0
      %v579 = vadd.f32 %v250, %v578
      %580 = vmatprep.mubr.bf16.mxu0 0
      %581 = vmatmul.mubr.bf16.gmra.mrb[0].mxu0 %v195
      %v582 = vpop.f32.mrb[0].mxu0
      %v583 = vadd.f32 %v246, %v582
      %v584 = vpop.f32.mrb[0].mxu0
      %v585 = vadd.f32 %v250, %v584
      %v586 = vpop.f32.mrb[0].mxu0
      %v587 = vadd.f32 %v246, %v586
      %v588 = vpop.f32.mrb[0].mxu0
      %v589 = vadd.f32 %v250, %v588
      %590 = vmatprep.mubr.bf16.mxu0 0
      %591 = vmatmul.mubr.bf16.gmra.mrb[0].mxu0 %v196
      %v592 = vpop.f32.mrb[0].mxu0
      %v593 = vadd.f32 %v246, %v592
      %v594 = vpop.f32.mrb[0].mxu0
      %v595 = vadd.f32 %v250, %v594
      %v596 = vpop.f32.mrb[0].mxu0
      %v597 = vadd.f32 %v246, %v596
      %v598 = vpop.f32.mrb[0].mxu0
      %v599 = vadd.f32 %v250, %v598
      %600 = vmatprep.mubr.bf16.mxu0 0
      %601 = vmatmul.mubr.bf16.gmra.mrb[0].mxu0 %v197
      %v602 = vpop.f32.mrb[0].mxu0
      %v603 = vadd.f32 %v246, %v602
      %v604 = vpop.f32.mrb[0].mxu0
      %v605 = vadd.f32 %v250, %v604
      %v606 = vpop.f32.mrb[0].mxu0
      %v607 = vadd.f32 %v246, %v606
      %v608 = vpop.f32.mrb[0].mxu0
      %v609 = vadd.f32 %v250, %v608
      %610 = vmatprep.mubr.bf16.mxu0 0
      %611 = vmatmul.mubr.bf16.gmra.mrb[0].mxu0 %v198
      %v612 = vpop.f32.mrb[0].mxu0
      %v613 = vadd.f32 %v246, %v612
      %v614 = vpop.f32.mrb[0].mxu0
      %v615 = vadd.f32 %v250, %v614
      %v616 = vpop.f32.mrb[0].mxu0
      %v617 = vadd.f32 %v246, %v616
      %v618 = vpop.f32.mrb[0].mxu0
      %v619 = vadd.f32 %v250, %v618
      %620 = vmatprep.mubr.bf16.mxu0 0
      %621 = vmatmul.mubr.bf16.gmra.mrb[0].mxu0 %v199
      %v622 = vpop.f32.mrb[0].mxu0
      %v623 = vadd.f32 %v246, %v622
      %v624 = vpop.f32.mrb[0].mxu0
      %v625 = vadd.f32 %v250, %v624
      %v626 = vpop.f32.mrb[0].mxu0
      %v627 = vadd.f32 %v246, %v626
      %v628 = vpop.f32.mrb[0].mxu0
      %v629 = vadd.f32 %v250, %v628
      %630 = vmatprep.mubr.bf16.mxu0 0
      %631 = vmatmul.mubr.bf16.gmra.mrb[0].mxu0 %v200
      %v632 = vpop.f32.mrb[0].mxu0
      %v633 = vadd.f32 %v246, %v632
      %v634 = vpop.f32.mrb[0].mxu0
      %v635 = vadd.f32 %v250, %v634
      %v636 = vpop.f32.mrb[0].mxu0
      %v637 = vadd.f32 %v246, %v636
      %v638 = vpop.f32.mrb[0].mxu0
      %v639 = vadd.f32 %v250, %v638
      %640 = vdwg.mxu0
      %v641 = vmul.f32 %v450, 0.5
      %v642 = vmul.f32 %v452, 0.5
      %v643 = vmul.f32 %v563, 0.5
      %v644 = vmul.f32 %v565, 0.5
      %v645 = vmul.f32 %v454, 0.5
      %v646 = vmul.f32 %v456, 0.5
      %v647 = vmul.f32 %v567, 0.5
      %v648 = vmul.f32 %v569, 0.5
      %v649 = vmul.f32 %v460, 0.5
      %v650 = vmul.f32 %v462, 0.5
      %v651 = vmul.f32 %v573, 0.5
      %v652 = vmul.f32 %v575, 0.5
      %v653 = vmul.f32 %v464, 0.5
      %v654 = vmul.f32 %v466, 0.5
      %v655 = vmul.f32 %v577, 0.5
      %v656 = vmul.f32 %v579, 0.5
      %v657 = vmul.f32 %v470, 0.5
      %v658 = vmul.f32 %v472, 0.5
      %v659 = vmul.f32 %v583, 0.5
      %v660 = vmul.f32 %v585, 0.5
      %v661 = vmul.f32 %v474, 0.5
      %v662 = vmul.f32 %v476, 0.5
      %v663 = vmul.f32 %v587, 0.5
      %v664 = vmul.f32 %v589, 0.5
      %v665 = vmul.f32 %v480, 0.5
      %v666 = vmul.f32 %v482, 0.5
      %v667 = vmul.f32 %v593, 0.5
      %v668 = vmul.f32 %v595, 0.5
      %v669 = vmul.f32 %v484, 0.5
      %v670 = vmul.f32 %v486, 0.5
      %v671 = vmul.f32 %v597, 0.5
      %v672 = vmul.f32 %v599, 0.5
      %v673 = vmul.f32 %v490, 0.5
      %v674 = vmul.f32 %v492, 0.5
      %v675 = vmul.f32 %v603, 0.5
      %v676 = vmul.f32 %v605, 0.5
      %v677 = vmul.f32 %v494, 0.5
      %v678 = vmul.f32 %v496, 0.5
      %v679 = vmul.f32 %v607, 0.5
      %v680 = vmul.f32 %v609, 0.5
      %v681 = vmul.f32 %v500, 0.5
      %v682 = vmul.f32 %v502, 0.5
      %v683 = vmul.f32 %v613, 0.5
      %v684 = vmul.f32 %v615, 0.5
      %v685 = vmul.f32 %v504, 0.5
      %v686 = vmul.f32 %v506, 0.5
      %v687 = vmul.f32 %v617, 0.5
      %v688 = vmul.f32 %v619, 0.5
      %v689 = vmul.f32 %v510, 0.5
      %v690 = vmul.f32 %v512, 0.5
      %v691 = vmul.f32 %v623, 0.5
      %v692 = vmul.f32 %v625, 0.5
      %v693 = vmul.f32 %v514, 0.5
      %v694 = vmul.f32 %v516, 0.5
      %v695 = vmul.f32 %v627, 0.5
      %v696 = vmul.f32 %v629, 0.5
      %v697 = vmul.f32 %v520, 0.5
      %v698 = vmul.f32 %v522, 0.5
      %v699 = vmul.f32 %v633, 0.5
      %v700 = vmul.f32 %v635, 0.5
      %v701 = vmul.f32 %v524, 0.5
      %v702 = vmul.f32 %v526, 0.5
      %v703 = vmul.f32 %v637, 0.5
      %v704 = vmul.f32 %v639, 0.5
      %v705 = vmul.f32 %v450, 0.044715
      %v706 = vmul.f32 %v452, 0.044715
      %v707 = vmul.f32 %v563, 0.044715
      %v708 = vmul.f32 %v565, 0.044715
      %v709 = vmul.f32 %v454, 0.044715
      %v710 = vmul.f32 %v456, 0.044715
      %v711 = vmul.f32 %v567, 0.044715
      %v712 = vmul.f32 %v569, 0.044715
      %v713 = vmul.f32 %v460, 0.044715
      %v714 = vmul.f32 %v462, 0.044715
      %v715 = vmul.f32 %v573, 0.044715
      %v716 = vmul.f32 %v575, 0.044715
      %v717 = vmul.f32 %v464, 0.044715
      %v718 = vmul.f32 %v466, 0.044715
      %v719 = vmul.f32 %v577, 0.044715
      %v720 = vmul.f32 %v579, 0.044715
      %v721 = vmul.f32 %v470, 0.044715
      %v722 = vmul.f32 %v472, 0.044715
      %v723 = vmul.f32 %v583, 0.044715
      %v724 = vmul.f32 %v585, 0.044715
      %v725 = vmul.f32 %v474, 0.044715
      %v726 = vmul.f32 %v476, 0.044715
      %v727 = vmul.f32 %v587, 0.044715
      %v728 = vmul.f32 %v589, 0.044715
      %v729 = vmul.f32 %v480, 0.044715
      %v730 = vmul.f32 %v482, 0.044715
      %v731 = vmul.f32 %v593, 0.044715
      %v732 = vmul.f32 %v595, 0.044715
      %v733 = vmul.f32 %v484, 0.044715
      %v734 = vmul.f32 %v486, 0.044715
      %v735 = vmul.f32 %v597, 0.044715
      %v736 = vmul.f32 %v599, 0.044715
      %v737 = vmul.f32 %v490, 0.044715
      %v738 = vmul.f32 %v492, 0.044715
      %v739 = vmul.f32 %v603, 0.044715
      %v740 = vmul.f32 %v605, 0.044715
      %v741 = vmul.f32 %v494, 0.044715
      %v742 = vmul.f32 %v496, 0.044715
      %v743 = vmul.f32 %v607, 0.044715
      %v744 = vmul.f32 %v609, 0.044715
      %v745 = vmul.f32 %v500, 0.044715
      %v746 = vmul.f32 %v502, 0.044715
      %v747 = vmul.f32 %v613, 0.044715
      %v748 = vmul.f32 %v615, 0.044715
      %v749 = vmul.f32 %v504, 0.044715
      %v750 = vmul.f32 %v506, 0.044715
      %v751 = vmul.f32 %v617, 0.044715
      %v752 = vmul.f32 %v619, 0.044715
      %v753 = vmul.f32 %v510, 0.044715
      %v754 = vmul.f32 %v512, 0.044715
      %v755 = vmul.f32 %v623, 0.044715
      %v756 = vmul.f32 %v625, 0.044715
      %v757 = vmul.f32 %v514, 0.044715
      %v758 = vmul.f32 %v516, 0.044715
      %v759 = vmul.f32 %v627, 0.044715
      %v760 = vmul.f32 %v629, 0.044715
      %v761 = vmul.f32 %v520, 0.044715
      %v762 = vmul.f32 %v522, 0.044715
      %v763 = vmul.f32 %v633, 0.044715
      %v764 = vmul.f32 %v635, 0.044715
      %v765 = vmul.f32 %v524, 0.044715
      %v766 = vmul.f32 %v526, 0.044715
      %v767 = vmul.f32 %v637, 0.044715
      %v768 = vmul.f32 %v639, 0.044715
      %v769 = vmul.f32 %v705, %v450
      %v770 = vmul.f32 %v706, %v452
      %v771 = vmul.f32 %v707, %v563
      %v772 = vmul.f32 %v708, %v565
      %v773 = vmul.f32 %v709, %v454
      %v774 = vmul.f32 %v710, %v456
      %v775 = vmul.f32 %v711, %v567
      %v776 = vmul.f32 %v712, %v569
      %v777 = vmul.f32 %v713, %v460
      %v778 = vmul.f32 %v714, %v462
      %v779 = vmul.f32 %v715, %v573
      %v780 = vmul.f32 %v716, %v575
      %v781 = vmul.f32 %v717, %v464
      %v782 = vmul.f32 %v718, %v466
      %v783 = vmul.f32 %v719, %v577
      %v784 = vmul.f32 %v720, %v579
      %v785 = vmul.f32 %v721, %v470
      %v786 = vmul.f32 %v722, %v472
      %v787 = vmul.f32 %v723, %v583
      %v788 = vmul.f32 %v724, %v585
      %v789 = vmul.f32 %v725, %v474
      %v790 = vmul.f32 %v726, %v476
      %v791 = vmul.f32 %v727, %v587
      %v792 = vmul.f32 %v728, %v589
      %v793 = vmul.f32 %v729, %v480
      %v794 = vmul.f32 %v730, %v482
      %v795 = vmul.f32 %v731, %v593
      %v796 = vmul.f32 %v732, %v595
      %v797 = vmul.f32 %v733, %v484
      %v798 = vmul.f32 %v734, %v486
      %v799 = vmul.f32 %v735, %v597
      %v800 = vmul.f32 %v736, %v599
      %v801 = vmul.f32 %v737, %v490
      %v802 = vmul.f32 %v738, %v492
      %v803 = vmul.f32 %v739, %v603
      %v804 = vmul.f32 %v740, %v605
      %v805 = vmul.f32 %v741, %v494
      %v806 = vmul.f32 %v742, %v496
      %v807 = vmul.f32 %v743, %v607
      %v808 = vmul.f32 %v744, %v609
      %v809 = vmul.f32 %v745, %v500
      %v810 = vmul.f32 %v746, %v502
      %v811 = vmul.f32 %v747, %v613
      %v812 = vmul.f32 %v748, %v615
      %v813 = vmul.f32 %v749, %v504
      %v814 = vmul.f32 %v750, %v506
      %v815 = vmul.f32 %v751, %v617
      %v816 = vmul.f32 %v752, %v619
      %v817 = vmul.f32 %v753, %v510
      %v818 = vmul.f32 %v754, %v512
      %v819 = vmul.f32 %v755, %v623
      %v820 = vmul.f32 %v756, %v625
      %v821 = vmul.f32 %v757, %v514
      %v822 = vmul.f32 %v758, %v516
      %v823 = vmul.f32 %v759, %v627
      %v824 = vmul.f32 %v760, %v629
      %v825 = vmul.f32 %v761, %v520
      %v826 = vmul.f32 %v762, %v522
      %v827 = vmul.f32 %v763, %v633
      %v828 = vmul.f32 %v764, %v635
      %v829 = vmul.f32 %v765, %v524
      %v830 = vmul.f32 %v766, %v526
      %v831 = vmul.f32 %v767, %v637
      %v832 = vmul.f32 %v768, %v639
      %v833 = vmul.f32 %v769, %v450
      %v834 = vmul.f32 %v770, %v452
      %v835 = vmul.f32 %v771, %v563
      %v836 = vmul.f32 %v772, %v565
      %v837 = vmul.f32 %v773, %v454
      %v838 = vmul.f32 %v774, %v456
      %v839 = vmul.f32 %v775, %v567
      %v840 = vmul.f32 %v776, %v569
      %v841 = vmul.f32 %v777, %v460
      %v842 = vmul.f32 %v778, %v462
      %v843 = vmul.f32 %v779, %v573
      %v844 = vmul.f32 %v780, %v575
      %v845 = vmul.f32 %v781, %v464
      %v846 = vmul.f32 %v782, %v466
      %v847 = vmul.f32 %v783, %v577
      %v848 = vmul.f32 %v784, %v579
      %v849 = vmul.f32 %v785, %v470
      %v850 = vmul.f32 %v786, %v472
      %v851 = vmul.f32 %v787, %v583
      %v852 = vmul.f32 %v788, %v585
      %v853 = vmul.f32 %v789, %v474
      %v854 = vmul.f32 %v790, %v476
      %v855 = vmul.f32 %v791, %v587
      %v856 = vmul.f32 %v792, %v589
      %v857 = vmul.f32 %v793, %v480
      %v858 = vmul.f32 %v794, %v482
      %v859 = vmul.f32 %v795, %v593
      %v860 = vmul.f32 %v796, %v595
      %v861 = vmul.f32 %v797, %v484
      %v862 = vmul.f32 %v798, %v486
      %v863 = vmul.f32 %v799, %v597
      %v864 = vmul.f32 %v800, %v599
      %v865 = vmul.f32 %v801, %v490
      %v866 = vmul.f32 %v802, %v492
      %v867 = vmul.f32 %v803, %v603
      %v868 = vmul.f32 %v804, %v605
      %v869 = vmul.f32 %v805, %v494
      %v870 = vmul.f32 %v806, %v496
      %v871 = vmul.f32 %v807, %v607
      %v872 = vmul.f32 %v808, %v609
      %v873 = vmul.f32 %v809, %v500
      %v874 = vmul.f32 %v810, %v502
      %v875 = vmul.f32 %v811, %v613
      %v876 = vmul.f32 %v812, %v615
      %v877 = vmul.f32 %v813, %v504
      %v878 = vmul.f32 %v814, %v506
      %v879 = vmul.f32 %v815, %v617
      %v880 = vmul.f32 %v816, %v619
      %v881 = vmul.f32 %v817, %v510
      %v882 = vmul.f32 %v818, %v512
      %v883 = vmul.f32 %v819, %v623
      %v884 = vmul.f32 %v820, %v625
      %v885 = vmul.f32 %v821, %v514
      %v886 = vmul.f32 %v822, %v516
      %v887 = vmul.f32 %v823, %v627
      %v888 = vmul.f32 %v824, %v629
      %v889 = vmul.f32 %v825, %v520
      %v890 = vmul.f32 %v826, %v522
      %v891 = vmul.f32 %v827, %v633
      %v892 = vmul.f32 %v828, %v635
      %v893 = vmul.f32 %v829, %v524
      %v894 = vmul.f32 %v830, %v526
      %v895 = vmul.f32 %v831, %v637
      %v896 = vmul.f32 %v832, %v639
      %v897 = vadd.f32 %v450, %v833
      %v898 = vadd.f32 %v452, %v834
      %v899 = vadd.f32 %v563, %v835
      %v900 = vadd.f32 %v565, %v836
      %v901 = vadd.f32 %v454, %v837
      %v902 = vadd.f32 %v456, %v838
      %v903 = vadd.f32 %v567, %v839
      %v904 = vadd.f32 %v569, %v840
      %v905 = vadd.f32 %v460, %v841
      %v906 = vadd.f32 %v462, %v842
      %v907 = vadd.f32 %v573, %v843
      %v908 = vadd.f32 %v575, %v844
      %v909 = vadd.f32 %v464, %v845
      %v910 = vadd.f32 %v466, %v846
      %v911 = vadd.f32 %v577, %v847
      %v912 = vadd.f32 %v579, %v848
      %v913 = vadd.f32 %v470, %v849
      %v914 = vadd.f32 %v472, %v850
      %v915 = vadd.f32 %v583, %v851
      %v916 = vadd.f32 %v585, %v852
      %v917 = vadd.f32 %v474, %v853
      %v918 = vadd.f32 %v476, %v854
      %v919 = vadd.f32 %v587, %v855
      %v920 = vadd.f32 %v589, %v856
      %v921 = vadd.f32 %v480, %v857
      %v922 = vadd.f32 %v482, %v858
      %v923 = vadd.f32 %v593, %v859
      %v924 = vadd.f32 %v595, %v860
      %v925 = vadd.f32 %v484, %v861
      %v926 = vadd.f32 %v486, %v862
      %v927 = vadd.f32 %v597, %v863
      %v928 = vadd.f32 %v599, %v864
      %v929 = vadd.f32 %v490, %v865
      %v930 = vadd.f32 %v492, %v866
      %v931 = vadd.f32 %v603, %v867
      %v932 = vadd.f32 %v605, %v868
      %v933 = vadd.f32 %v494, %v869
      %v934 = vadd.f32 %v496, %v870
      %v935 = vadd.f32 %v607, %v871
      %v936 = vadd.f32 %v609, %v872
      %v937 = vadd.f32 %v500, %v873
      %v938 = vadd.f32 %v502, %v874
      %v939 = vadd.f32 %v613, %v875
      %v940 = vadd.f32 %v615, %v876
      %v941 = vadd.f32 %v504, %v877
      %v942 = vadd.f32 %v506, %v878
      %v943 = vadd.f32 %v617, %v879
      %v944 = vadd.f32 %v619, %v880
      %v945 = vadd.f32 %v510, %v881
      %v946 = vadd.f32 %v512, %v882
      %v947 = vadd.f32 %v623, %v883
      %v948 = vadd.f32 %v625, %v884
      %v949 = vadd.f32 %v514, %v885
      %v950 = vadd.f32 %v516, %v886
      %v951 = vadd.f32 %v627, %v887
      %v952 = vadd.f32 %v629, %v888
      %v953 = vadd.f32 %v520, %v889
      %v954 = vadd.f32 %v522, %v890
      %v955 = vadd.f32 %v633, %v891
      %v956 = vadd.f32 %v635, %v892
      %v957 = vadd.f32 %v524, %v893
      %v958 = vadd.f32 %v526, %v894
      %v959 = vadd.f32 %v637, %v895
      %v960 = vadd.f32 %v639, %v896
      %v961 = vmul.f32 %v897, 0.7978846
      %v962 = vmul.f32 %v898, 0.7978846
      %v963 = vmul.f32 %v899, 0.7978846
      %v964 = vmul.f32 %v900, 0.7978846
      %v965 = vmul.f32 %v901, 0.7978846
      %v966 = vmul.f32 %v902, 0.7978846
      %v967 = vmul.f32 %v903, 0.7978846
      %v968 = vmul.f32 %v904, 0.7978846
      %v969 = vmul.f32 %v905, 0.7978846
      %v970 = vmul.f32 %v906, 0.7978846
      %v971 = vmul.f32 %v907, 0.7978846
      %v972 = vmul.f32 %v908, 0.7978846
      %v973 = vmul.f32 %v909, 0.7978846
      %v974 = vmul.f32 %v910, 0.7978846
      %v975 = vmul.f32 %v911, 0.7978846
      %v976 = vmul.f32 %v912, 0.7978846
      %v977 = vmul.f32 %v913, 0.7978846
      %v978 = vmul.f32 %v914, 0.7978846
      %v979 = vmul.f32 %v915, 0.7978846
      %v980 = vmul.f32 %v916, 0.7978846
      %v981 = vmul.f32 %v917, 0.7978846
      %v982 = vmul.f32 %v918, 0.7978846
      %v983 = vmul.f32 %v919, 0.7978846
      %v984 = vmul.f32 %v920, 0.7978846
      %v985 = vmul.f32 %v921, 0.7978846
      %v986 = vmul.f32 %v922, 0.7978846
      %v987 = vmul.f32 %v923, 0.7978846
      %v988 = vmul.f32 %v924, 0.7978846
      %v989 = vmul.f32 %v925, 0.7978846
      %v990 = vmul.f32 %v926, 0.7978846
      %v991 = vmul.f32 %v927, 0.7978846
      %v992 = vmul.f32 %v928, 0.7978846
      %v993 = vmul.f32 %v929, 0.7978846
      %v994 = vmul.f32 %v930, 0.7978846
      %v995 = vmul.f32 %v931, 0.7978846
      %v996 = vmul.f32 %v932, 0.7978846
      %v997 = vmul.f32 %v933, 0.7978846
      %v998 = vmul.f32 %v934, 0.7978846
      %v999 = vmul.f32 %v935, 0.7978846
      %v1000 = vmul.f32 %v936, 0.7978846
      %v1001 = vmul.f32 %v937, 0.7978846
      %v1002 = vmul.f32 %v938, 0.7978846
      %v1003 = vmul.f32 %v939, 0.7978846
      %v1004 = vmul.f32 %v940, 0.7978846
      %v1005 = vmul.f32 %v941, 0.7978846
      %v1006 = vmul.f32 %v942, 0.7978846
      %v1007 = vmul.f32 %v943, 0.7978846
      %v1008 = vmul.f32 %v944, 0.7978846
      %v1009 = vmul.f32 %v945, 0.7978846
      %v1010 = vmul.f32 %v946, 0.7978846
      %v1011 = vmul.f32 %v947, 0.7978846
      %v1012 = vmul.f32 %v948, 0.7978846
      %v1013 = vmul.f32 %v949, 0.7978846
      %v1014 = vmul.f32 %v950, 0.7978846
      %v1015 = vmul.f32 %v951, 0.7978846
      %v1016 = vmul.f32 %v952, 0.7978846
      %v1017 = vmul.f32 %v953, 0.7978846
      %v1018 = vmul.f32 %v954, 0.7978846
      %v1019 = vmul.f32 %v955, 0.7978846
      %v1020 = vmul.f32 %v956, 0.7978846
      %v1021 = vmul.f32 %v957, 0.7978846
      %v1022 = vmul.f32 %v958, 0.7978846
      %v1023 = vmul.f32 %v959, 0.7978846
      %v1024 = vmul.f32 %v960, 0.7978846
      %v1025 = vtanh.pop %v961
      %v1026 = vtanh.pop %v962
      %v1027 = vtanh.pop %v963
      %v1028 = vtanh.pop %v964
      %v1029 = vtanh.pop %v965
      %v1030 = vtanh.pop %v966
      %v1031 = vtanh.pop %v967
      %v1032 = vtanh.pop %v968
      %v1033 = vtanh.pop %v969
      %v1034 = vtanh.pop %v970
      %v1035 = vtanh.pop %v971
      %v1036 = vtanh.pop %v972
      %v1037 = vtanh.pop %v973
      %v1038 = vtanh.pop %v974
      %v1039 = vtanh.pop %v975
      %v1040 = vtanh.pop %v976
      %v1041 = vtanh.pop %v977
      %v1042 = vtanh.pop %v978
      %v1043 = vtanh.pop %v979
      %v1044 = vtanh.pop %v980
      %v1045 = vtanh.pop %v981
      %v1046 = vtanh.pop %v982
      %v1047 = vtanh.pop %v983
      %v1048 = vtanh.pop %v984
      %v1049 = vtanh.pop %v985
      %v1050 = vtanh.pop %v986
      %v1051 = vtanh.pop %v987
      %v1052 = vtanh.pop %v988
      %v1053 = vtanh.pop %v989
      %v1054 = vtanh.pop %v990
      %v1055 = vtanh.pop %v991
      %v1056 = vtanh.pop %v992
      %v1057 = vtanh.pop %v993
      %v1058 = vtanh.pop %v994
      %v1059 = vtanh.pop %v995
      %v1060 = vtanh.pop %v996
      %v1061 = vtanh.pop %v997
      %v1062 = vtanh.pop %v998
      %v1063 = vtanh.pop %v999
      %v1064 = vtanh.pop %v1000
      %v1065 = vtanh.pop %v1001
      %v1066 = vtanh.pop %v1002
      %v1067 = vtanh.pop %v1003
      %v1068 = vtanh.pop %v1004
      %v1069 = vtanh.pop %v1005
      %v1070 = vtanh.pop %v1006
      %v1071 = vtanh.pop %v1007
      %v1072 = vtanh.pop %v1008
      %v1073 = vtanh.pop %v1009
      %v1074 = vtanh.pop %v1010
      %v1075 = vtanh.pop %v1011
      %v1076 = vtanh.pop %v1012
      %v1077 = vtanh.pop %v1013
      %v1078 = vtanh.pop %v1014
      %v1079 = vtanh.pop %v1015
      %v1080 = vtanh.pop %v1016
      %v1081 = vtanh.pop %v1017
      %v1082 = vtanh.pop %v1018
      %v1083 = vtanh.pop %v1019
      %v1084 = vtanh.pop %v1020
      %v1085 = vtanh.pop %v1021
      %v1086 = vtanh.pop %v1022
      %v1087 = vtanh.pop %v1023
      %v1088 = vtanh.pop %v1024
      %v1089 = vadd.f32 %v1025, 1.0
      %v1090 = vadd.f32 %v1026, 1.0
      %v1091 = vadd.f32 %v1027, 1.0
      %v1092 = vadd.f32 %v1028, 1.0
      %v1093 = vadd.f32 %v1029, 1.0
      %v1094 = vadd.f32 %v1030, 1.0
      %v1095 = vadd.f32 %v1031, 1.0
      %v1096 = vadd.f32 %v1032, 1.0
      %v1097 = vadd.f32 %v1033, 1.0
      %v1098 = vadd.f32 %v1034, 1.0
      %v1099 = vadd.f32 %v1035, 1.0
      %v1100 = vadd.f32 %v1036, 1.0
      %v1101 = vadd.f32 %v1037, 1.0
      %v1102 = vadd.f32 %v1038, 1.0
      %v1103 = vadd.f32 %v1039, 1.0
      %v1104 = vadd.f32 %v1040, 1.0
      %v1105 = vadd.f32 %v1041, 1.0
      %v1106 = vadd.f32 %v1042, 1.0
      %v1107 = vadd.f32 %v1043, 1.0
      %v1108 = vadd.f32 %v1044, 1.0
      %v1109 = vadd.f32 %v1045, 1.0
      %v1110 = vadd.f32 %v1046, 1.0
      %v1111 = vadd.f32 %v1047, 1.0
      %v1112 = vadd.f32 %v1048, 1.0
      %v1113 = vadd.f32 %v1049, 1.0
      %v1114 = vadd.f32 %v1050, 1.0
      %v1115 = vadd.f32 %v1051, 1.0
      %v1116 = vadd.f32 %v1052, 1.0
      %v1117 = vadd.f32 %v1053, 1.0
      %v1118 = vadd.f32 %v1054, 1.0
      %v1119 = vadd.f32 %v1055, 1.0
      %v1120 = vadd.f32 %v1056, 1.0
      %v1121 = vadd.f32 %v1057, 1.0
      %v1122 = vadd.f32 %v1058, 1.0
      %v1123 = vadd.f32 %v1059, 1.0
      %v1124 = vadd.f32 %v1060, 1.0
      %v1125 = vadd.f32 %v1061, 1.0
      %v1126 = vadd.f32 %v1062, 1.0
      %v1127 = vadd.f32 %v1063, 1.0
      %v1128 = vadd.f32 %v1064, 1.0
      %v1129 = vadd.f32 %v1065, 1.0
      %v1130 = vadd.f32 %v1066, 1.0
      %v1131 = vadd.f32 %v1067, 1.0
      %v1132 = vadd.f32 %v1068, 1.0
      %v1133 = vadd.f32 %v1069, 1.0
      %v1134 = vadd.f32 %v1070, 1.0
      %v1135 = vadd.f32 %v1071, 1.0
      %v1136 = vadd.f32 %v1072, 1.0
      %v1137 = vadd.f32 %v1073, 1.0
      %v1138 = vadd.f32 %v1074, 1.0
      %v1139 = vadd.f32 %v1075, 1.0
      %v1140 = vadd.f32 %v1076, 1.0
      %v1141 = vadd.f32 %v1077, 1.0
      %v1142 = vadd.f32 %v1078, 1.0
      %v1143 = vadd.f32 %v1079, 1.0
      %v1144 = vadd.f32 %v1080, 1.0
      %v1145 = vadd.f32 %v1081, 1.0
      %v1146 = vadd.f32 %v1082, 1.0
      %v1147 = vadd.f32 %v1083, 1.0
      %v1148 = vadd.f32 %v1084, 1.0
      %v1149 = vadd.f32 %v1085, 1.0
      %v1150 = vadd.f32 %v1086, 1.0
      %v1151 = vadd.f32 %v1087, 1.0
      %v1152 = vadd.f32 %v1088, 1.0
      %v1153 = vmul.f32 %v641, %v1089
      %v1154 = vmul.f32 %v642, %v1090
      %v1155 = vmul.f32 %v643, %v1091
      %v1156 = vmul.f32 %v644, %v1092
      %v1157 = vmul.f32 %v645, %v1093
      %v1158 = vmul.f32 %v646, %v1094
      %v1159 = vmul.f32 %v647, %v1095
      %v1160 = vmul.f32 %v648, %v1096
      %v1161 = vmul.f32 %v649, %v1097
      %v1162 = vmul.f32 %v650, %v1098
      %v1163 = vmul.f32 %v651, %v1099
      %v1164 = vmul.f32 %v652, %v1100
      %v1165 = vmul.f32 %v653, %v1101
      %v1166 = vmul.f32 %v654, %v1102
      %v1167 = vmul.f32 %v655, %v1103
      %v1168 = vmul.f32 %v656, %v1104
      %v1169 = vmul.f32 %v657, %v1105
      %v1170 = vmul.f32 %v658, %v1106
      %v1171 = vmul.f32 %v659, %v1107
      %v1172 = vmul.f32 %v660, %v1108
      %v1173 = vmul.f32 %v661, %v1109
      %v1174 = vmul.f32 %v662, %v1110
      %v1175 = vmul.f32 %v663, %v1111
      %v1176 = vmul.f32 %v664, %v1112
      %v1177 = vmul.f32 %v665, %v1113
      %v1178 = vmul.f32 %v666, %v1114
      %v1179 = vmul.f32 %v667, %v1115
      %v1180 = vmul.f32 %v668, %v1116
      %v1181 = vmul.f32 %v669, %v1117
      %v1182 = vmul.f32 %v670, %v1118
      %v1183 = vmul.f32 %v671, %v1119
      %v1184 = vmul.f32 %v672, %v1120
      %v1185 = vmul.f32 %v673, %v1121
      %v1186 = vmul.f32 %v674, %v1122
      %v1187 = vmul.f32 %v675, %v1123
      %v1188 = vmul.f32 %v676, %v1124
      %v1189 = vmul.f32 %v677, %v1125
      %v1190 = vmul.f32 %v678, %v1126
      %v1191 = vmul.f32 %v679, %v1127
      %v1192 = vmul.f32 %v680, %v1128
      %v1193 = vmul.f32 %v681, %v1129
      %v1194 = vmul.f32 %v682, %v1130
      %v1195 = vmul.f32 %v683, %v1131
      %v1196 = vmul.f32 %v684, %v1132
      %v1197 = vmul.f32 %v685, %v1133
      %v1198 = vmul.f32 %v686, %v1134
      %v1199 = vmul.f32 %v687, %v1135
      %v1200 = vmul.f32 %v688, %v1136
      %v1201 = vmul.f32 %v689, %v1137
      %v1202 = vmul.f32 %v690, %v1138
      %v1203 = vmul.f32 %v691, %v1139
      %v1204 = vmul.f32 %v692, %v1140
      %v1205 = vmul.f32 %v693, %v1141
      %v1206 = vmul.f32 %v694, %v1142
      %v1207 = vmul.f32 %v695, %v1143
      %v1208 = vmul.f32 %v696, %v1144
      %v1209 = vmul.f32 %v697, %v1145
      %v1210 = vmul.f32 %v698, %v1146
      %v1211 = vmul.f32 %v699, %v1147
      %v1212 = vmul.f32 %v700, %v1148
      %v1213 = vmul.f32 %v701, %v1149
      %v1214 = vmul.f32 %v702, %v1150
      %v1215 = vmul.f32 %v703, %v1151
      %v1216 = vmul.f32 %v704, %v1152
      %v1217 = vpack.c.bf16 %v1157, %v1153
      %v1218 = vpack.c.bf16 %v1158, %v1154
      %v1219 = vpack.c.bf16 %v1159, %v1155
      %v1220 = vpack.c.bf16 %v1160, %v1156
      %v1221 = vpack.c.bf16 %v1165, %v1161
      %v1222 = vpack.c.bf16 %v1166, %v1162
      %v1223 = vpack.c.bf16 %v1167, %v1163
      %v1224 = vpack.c.bf16 %v1168, %v1164
      %v1225 = vpack.c.bf16 %v1173, %v1169
      %v1226 = vpack.c.bf16 %v1174, %v1170
      %v1227 = vpack.c.bf16 %v1175, %v1171
      %v1228 = vpack.c.bf16 %v1176, %v1172
      %v1229 = vpack.c.bf16 %v1181, %v1177
      %v1230 = vpack.c.bf16 %v1182, %v1178
      %v1231 = vpack.c.bf16 %v1183, %v1179
      %v1232 = vpack.c.bf16 %v1184, %v1180
      %v1233 = vpack.c.bf16 %v1189, %v1185
      %v1234 = vpack.c.bf16 %v1190, %v1186
      %v1235 = vpack.c.bf16 %v1191, %v1187
      %v1236 = vpack.c.bf16 %v1192, %v1188
      %v1237 = vpack.c.bf16 %v1197, %v1193
      %v1238 = vpack.c.bf16 %v1198, %v1194
      %v1239 = vpack.c.bf16 %v1199, %v1195
      %v1240 = vpack.c.bf16 %v1200, %v1196
      %v1241 = vpack.c.bf16 %v1205, %v1201
      %v1242 = vpack.c.bf16 %v1206, %v1202
      %v1243 = vpack.c.bf16 %v1207, %v1203
      %v1244 = vpack.c.bf16 %v1208, %v1204
      %v1245 = vpack.c.bf16 %v1213, %v1209
      %v1246 = vpack.c.bf16 %v1214, %v1210
      %v1247 = vpack.c.bf16 %v1215, %v1211
      %v1248 = vpack.c.bf16 %v1216, %v1212
      %v1281 = vunpack.c.l.b16 %v1217
      %v1282 = vunpack.c.l.b16 %v1218
      %v1283 = vunpack.c.l.b16 %v1219
      %v1284 = vunpack.c.l.b16 %v1220
      %v1285 = vunpack.c.h.b16 %v1217
      %v1286 = vunpack.c.h.b16 %v1218
      %v1287 = vunpack.c.h.b16 %v1219
      %v1288 = vunpack.c.h.b16 %v1220
      %v1289 = vunpack.c.l.b16 %v1221
      %v1290 = vunpack.c.l.b16 %v1222
      %v1291 = vunpack.c.l.b16 %v1223
      %v1292 = vunpack.c.l.b16 %v1224
      %v1293 = vunpack.c.h.b16 %v1221
      %v1294 = vunpack.c.h.b16 %v1222
      %v1295 = vunpack.c.h.b16 %v1223
      %v1296 = vunpack.c.h.b16 %v1224
      %v1297 = vunpack.c.l.b16 %v1225
      %v1298 = vunpack.c.l.b16 %v1226
      %v1299 = vunpack.c.l.b16 %v1227
      %v1300 = vunpack.c.l.b16 %v1228
      %v1301 = vunpack.c.h.b16 %v1225
      %v1302 = vunpack.c.h.b16 %v1226
      %v1303 = vunpack.c.h.b16 %v1227
      %v1304 = vunpack.c.h.b16 %v1228
      %v1305 = vunpack.c.l.b16 %v1229
      %v1306 = vunpack.c.l.b16 %v1230
      %v1307 = vunpack.c.l.b16 %v1231
      %v1308 = vunpack.c.l.b16 %v1232
      %v1309 = vunpack.c.h.b16 %v1229
      %v1310 = vunpack.c.h.b16 %v1230
      %v1311 = vunpack.c.h.b16 %v1231
      %v1312 = vunpack.c.h.b16 %v1232
      %v1313 = vunpack.c.l.b16 %v1233
      %v1314 = vunpack.c.l.b16 %v1234
      %v1315 = vunpack.c.l.b16 %v1235
      %v1316 = vunpack.c.l.b16 %v1236
      %v1317 = vunpack.c.h.b16 %v1233
      %v1318 = vunpack.c.h.b16 %v1234
      %v1319 = vunpack.c.h.b16 %v1235
      %v1320 = vunpack.c.h.b16 %v1236
      %v1321 = vunpack.c.l.b16 %v1237
      %v1322 = vunpack.c.l.b16 %v1238
      %v1323 = vunpack.c.l.b16 %v1239
      %v1324 = vunpack.c.l.b16 %v1240
      %v1325 = vunpack.c.h.b16 %v1237
      %v1326 = vunpack.c.h.b16 %v1238
      %v1327 = vunpack.c.h.b16 %v1239
      %v1328 = vunpack.c.h.b16 %v1240
      %v1329 = vunpack.c.l.b16 %v1241
      %v1330 = vunpack.c.l.b16 %v1242
      %v1331 = vunpack.c.l.b16 %v1243
      %v1332 = vunpack.c.l.b16 %v1244
      %v1333 = vunpack.c.h.b16 %v1241
      %v1334 = vunpack.c.h.b16 %v1242
      %v1335 = vunpack.c.h.b16 %v1243
      %v1336 = vunpack.c.h.b16 %v1244
      %v1337 = vunpack.c.l.b16 %v1245
      %v1338 = vunpack.c.l.b16 %v1246
      %v1339 = vunpack.c.l.b16 %v1247
      %v1340 = vunpack.c.l.b16 %v1248
      %v1341 = vunpack.c.h.b16 %v1245
      %v1342 = vunpack.c.h.b16 %v1246
      %v1343 = vunpack.c.h.b16 %v1247
      %v1344 = vunpack.c.h.b16 %v1248
      %v1345 = vpack.c.b16 %v1282, %v1281
      %v1346 = vpack.c.b16 %v1284, %v1283
      %v1347 = vpack.c.b16 %v1286, %v1285
      %v1348 = vpack.c.b16 %v1288, %v1287
      %v1349 = vpack.c.b16 %v1290, %v1289
      %v1350 = vpack.c.b16 %v1292, %v1291
      %v1351 = vpack.c.b16 %v1294, %v1293
      %v1352 = vpack.c.b16 %v1296, %v1295
      %v1353 = vpack.c.b16 %v1298, %v1297
      %v1354 = vpack.c.b16 %v1300, %v1299
      %v1355 = vpack.c.b16 %v1302, %v1301
      %v1356 = vpack.c.b16 %v1304, %v1303
      %v1357 = vpack.c.b16 %v1306, %v1305
      %v1358 = vpack.c.b16 %v1308, %v1307
      %v1359 = vpack.c.b16 %v1310, %v1309
      %v1360 = vpack.c.b16 %v1312, %v1311
      %v1361 = vpack.c.b16 %v1314, %v1313
      %v1362 = vpack.c.b16 %v1316, %v1315
      %v1363 = vpack.c.b16 %v1318, %v1317
      %v1364 = vpack.c.b16 %v1320, %v1319
      %v1365 = vpack.c.b16 %v1322, %v1321
      %v1366 = vpack.c.b16 %v1324, %v1323
      %v1367 = vpack.c.b16 %v1326, %v1325
      %v1368 = vpack.c.b16 %v1328, %v1327
      %v1369 = vpack.c.b16 %v1330, %v1329
      %v1370 = vpack.c.b16 %v1332, %v1331
      %v1371 = vpack.c.b16 %v1334, %v1333
      %v1372 = vpack.c.b16 %v1336, %v1335
      %v1373 = vpack.c.b16 %v1338, %v1337
      %v1374 = vpack.c.b16 %v1340, %v1339
      %v1375 = vpack.c.b16 %v1342, %v1341
      %v1376 = vpack.c.b16 %v1344, %v1343
      %1409 = vst [vmem:[%s174] sm:$0xff] %v1345
      %1410 = vst [vmem:[%s174 + $0x8] sm:$0xff] %v1346
      %1411 = vst [vmem:[%s174 + $0x10] sm:$0xff] %v1347
      %1412 = vst [vmem:[%s174 + $0x18] sm:$0xff] %v1348
      %1413 = vst [vmem:[%s174 + $0x20] sm:$0xff] %v1349
      %1414 = vst [vmem:[%s174 + $0x28] sm:$0xff] %v1350
      %1415 = vst [vmem:[%s174 + $0x30] sm:$0xff] %v1351
      %1416 = vst [vmem:[%s174 + $0x38] sm:$0xff] %v1352
      %1417 = vst [vmem:[%s174 + $0x40] sm:$0xff] %v1353
      %1418 = vst [vmem:[%s174 + $0x48] sm:$0xff] %v1354
      %1419 = vst [vmem:[%s174 + $0x50] sm:$0xff] %v1355
      %1420 = vst [vmem:[%s174 + $0x58] sm:$0xff] %v1356
      %1421 = vst [vmem:[%s174 + $0x60] sm:$0xff] %v1357
      %1422 = vst [vmem:[%s174 + $0x68] sm:$0xff] %v1358
      %1423 = vst [vmem:[%s174 + $0x70] sm:$0xff] %v1359
      %1424 = vst [vmem:[%s174 + $0x78] sm:$0xff] %v1360
      %1425 = vst [vmem:[%s174 + $0x80] sm:$0xff] %v1361
      %1426 = vst [vmem:[%s174 + $0x88] sm:$0xff] %v1362
      %1427 = vst [vmem:[%s174 + $0x90] sm:$0xff] %v1363
      %1428 = vst [vmem:[%s174 + $0x98] sm:$0xff] %v1364
      %1429 = vst [vmem:[%s174 + $0xa0] sm:$0xff] %v1365
      %1430 = vst [vmem:[%s174 + $0xa8] sm:$0xff] %v1366
      %1431 = vst [vmem:[%s174 + $0xb0] sm:$0xff] %v1367
      %1432 = vst [vmem:[%s174 + $0xb8] sm:$0xff] %v1368
      %1433 = vst [vmem:[%s174 + $0xc0] sm:$0xff] %v1369
      %1434 = vst [vmem:[%s174 + $0xc8] sm:$0xff] %v1370
      %1435 = vst [vmem:[%s174 + $0xd0] sm:$0xff] %v1371
      %1436 = vst [vmem:[%s174 + $0xd8] sm:$0xff] %v1372
      %1437 = vst [vmem:[%s174 + $0xe0] sm:$0xff] %v1373
      %1438 = vst [vmem:[%s174 + $0xe8] sm:$0xff] %v1374
      %1439 = vst [vmem:[%s174 + $0xf0] sm:$0xff] %v1375
      %1440 = vst [vmem:[%s174 + $0xf8] sm:$0xff] %v1376
      %s1441 = smul.u32 16, %s14
      %p1442 = scmp.lt.s32.totalorder %s1441, 31
      %s1443 = scalar_select %p1442, %s1441, 31
      %s1444 = smul.addr %s1443, 4
      %s1445 = smul.addr %s1444, 4
      %s1446 = scalar_lea.vmem %s3, %s1445
      // Predicated region
      $region33: #{encoder_forward.15} parent=31 // pred_check
        %p1447 = pneg %p100
      $region34: #{encoder_forward.15} parent=31 // pred_check_branch
        %1449 = sbr.rel (%p1447) target = $region36
      $region35: #{encoder_forward.15} parent=31 // pred_region
        %s1450 = smul.u32 16, %s14
      $region36: #{encoder_forward.15} parent=31 // pred_fallthru
        _
    $region32: #{encoder_forward.15} parent=5 // pred_fallthru
      _
    %p1451 = scmp.le.s32.totalorder 2, %s9
    // Predicated region
    $region37: #{encoder_forward.15} parent=5 // pred_check
      %p1452 = pneg %p1451
    $region38: #{encoder_forward.15} parent=5 // pred_check_branch
      %1454 = sbr.rel (%p1452) target = $region40
    $region39: #{encoder_forward.15} parent=5 // pred_region
      %s1455 = ssub.s32 %s9, 2
      // Predicated region
      $region41: #{encoder_forward.15} parent=39 // pred_check
        %p1456 = pneg %p106
      $region42: #{encoder_forward.15} parent=39 // pred_check_branch
        %1458 = sbr.rel (%p1456) target = $region44
      $region43: #{encoder_forward.15} parent=39 // pred_region
        %s1459 = smul.u32 16, %s15
        %p1460 = scmp.lt.s32.totalorder %s1459, 31
        %s1461 = scalar_select %p1460, %s1459, 31
        %s1462 = smul.addr %s1461, 4
        %s1463 = smul.addr %s1462, 4
        %s1464 = scalar_lea.vmem %s3, %s1463
      $region44: #{encoder_forward.15} parent=39 // pred_fallthru
        _
    $region40: #{encoder_forward.15} parent=5 // pred_fallthru
      _
  $region6: #{encoder_forward.15} parent=0 // loop_footer
    %s13 = sadd.s32 1, %s9
  $region7: #{encoder_forward.15} parent=0 // loop_footer_branch
    %8 = sbr.rel target = $region3
  $region8: #{encoder_forward.15} parent=0 // loop_exit
    _

// kernel: encoder_forward.16
$region0: #{encoder_forward.16}
  #allocation0 [shape = 'u32[]', space=smem, size = 0x4, offset = 0x4, fixed_abs, tag = 'smem constant byte address 0x4 - core index']
  #allocation1 [shape = 'u32[144,128]{1,0:T(1,128)}', space=vmem, size = 0x12000, scoped, tag = 'internal scratch']
  %s0 = inlined_call_operand.vmem [shape: bf16[256,512], index: 0, kind: input, shape index: {}]
  %s1 = inlined_call_operand.vmem [shape: bf16[512,128], index: 1, kind: input, shape index: {}]
  %s2 = inlined_call_operand.vmem [shape: f32[1,128], index: 2, kind: input, shape index: {}]
  %s3 = inlined_call_operand.vmem [shape: f32[256,128], index: 3, kind: input, shape index: {}]
  %s4 = inlined_call_operand.vmem [shape: f32[1,128], index: 4, kind: input, shape index: {}]
  %s5 = inlined_call_operand.vmem [shape: f32[1,128], index: 5, kind: input, shape index: {}]
  %s6 = inlined_call_operand.vmem [shape: f32[256,128], index: 6, kind: output, shape index: {}]
  %s7 = sld [smem:[#allocation0]]
  $region57: #{encoder_forward.16} parent=0
    _
  %s9 = ssub.s32 1, %s7
  %s10 = scalar_select 0, %s9, %s7
  loop: start=0, step=1, limit=4
  $region2: #{encoder_forward.16} parent=0 // loop_pre_header
    _
  $region3: #{encoder_forward.16} parent=0 // loop_header
    %s12 = sphi 0, %s16
    %p13 = scmp.ge.s32.totalorder %s12, 4
    %s22 = sphi 0, %s24
    %s25 = sphi 0, %s22
    %s26 = sphi 0, %s25
    %s42 = sphi 0, %s26
    %s46 = sphi 0, %s46
    %s48 = sphi 0, %s46
    %s49 = sphi 0, %s48
    %s63 = sphi 0, %s49
    %s67 = sphi 0, %s67
    %s69 = sphi 0, %s67
    %s70 = sphi 0, %s69
    %s84 = sphi 0, %s70
    %s90 = sphi 0, %s92
    %s93 = sphi 0, %s90
    %s94 = sphi 0, %s93
    %s110 = sphi 0, %s94
    %s114 = sphi 0, %s114
    %s116 = sphi 0, %s114
    %s117 = sphi 0, %s116
    %s131 = sphi 0, %s117
    %s135 = sphi 0, %s135
    %s137 = sphi 0, %s135
    %s138 = sphi 0, %s137
    %s152 = sphi 0, %s138
    %s158 = sphi 0, %s160
    %s161 = sphi 0, %s158
    %s162 = sphi 0, %s161
    %s178 = sphi 0, %s162
  $region4: #{encoder_forward.16} parent=0 // loop_header_branch
    %15 = sbr.rel (%p13) target = $region8
  $region5: #{encoder_forward.16} parent=0 // loop_body
    %s17 = ssub.s32 %s12, 1
    %s18 = ssub.s32 %s12, 2
    %s19 = sadd.s32 %s12, 1
    %s20 = ssub.s32 %s12, %s19
    %p21 = scmp.eq.s32.totalorder %s20, 0
    %s23 = sadd.s32 %s22, 1
    %s24 = scalar_select %p21, %s22, %s23
    %p27 = pneg %p21
    %p28 = scmp.eq.s32.totalorder %s12, 1
    %p29 = por %p27, %p28
    %p30 = scmp.ne.s32.totalorder %s22, %s25
    %p31 = scmp.eq.s32.totalorder %s12, 0
    %p32 = por %p30, %p31
    %p33 = scmp.ne.s32.totalorder %s22, %s25
    %p34 = scmp.eq.s32.totalorder %s17, 1
    %p35 = por %p33, %p34
    %p36 = scmp.ne.s32.totalorder %s25, %s26
    %p37 = scmp.eq.s32.totalorder %s17, 0
    %p38 = por %p36, %p37
    %p39 = scmp.ne.s32.totalorder %s25, %s26
    %p40 = scmp.eq.s32.totalorder %s18, 1
    %p41 = por %p39, %p40
    %p43 = scmp.ne.s32.totalorder %s26, %s42
    %p44 = scmp.eq.s32.totalorder %s18, 0
    %p45 = por %p43, %p44
    %s47 = sadd.s32 %s46, 1
    %p50 = scmp.eq.s32.totalorder %s12, 1
    %p51 = scmp.ne.s32.totalorder %s46, %s48
    %p52 = scmp.eq.s32.totalorder %s12, 0
    %p53 = por %p51, %p52
    %p54 = scmp.ne.s32.totalorder %s46, %s48
    %p55 = scmp.eq.s32.totalorder %s17, 1
    %p56 = por %p54, %p55
    %p57 = scmp.ne.s32.totalorder %s48, %s49
    %p58 = scmp.eq.s32.totalorder %s17, 0
    %p59 = por %p57, %p58
    %p60 = scmp.ne.s32.totalorder %s48, %s49
    %p61 = scmp.eq.s32.totalorder %s18, 1
    %p62 = por %p60, %p61
    %p64 = scmp.ne.s32.totalorder %s49, %s63
    %p65 = scmp.eq.s32.totalorder %s18, 0
    %p66 = por %p64, %p65
    %s68 = sadd.s32 %s67, 1
    %p71 = scmp.eq.s32.totalorder %s12, 1
    %p72 = scmp.ne.s32.totalorder %s67, %s69
    %p73 = scmp.eq.s32.totalorder %s12, 0
    %p74 = por %p72, %p73
    %p75 = scmp.ne.s32.totalorder %s67, %s69
    %p76 = scmp.eq.s32.totalorder %s17, 1
    %p77 = por %p75, %p76
    %p78 = scmp.ne.s32.totalorder %s69, %s70
    %p79 = scmp.eq.s32.totalorder %s17, 0
    %p80 = por %p78, %p79
    %p81 = scmp.ne.s32.totalorder %s69, %s70
    %p82 = scmp.eq.s32.totalorder %s18, 1
    %p83 = por %p81, %p82
    %p85 = scmp.ne.s32.totalorder %s70, %s84
    %p86 = scmp.eq.s32.totalorder %s18, 0
    %p87 = por %p85, %p86
    %s88 = ssub.s32 %s12, %s19
    %p89 = scmp.eq.s32.totalorder %s88, 0
    %s91 = sadd.s32 %s90, 1
    %s92 = scalar_select %p89, %s90, %s91
    %p95 = pneg %p89
    %p96 = scmp.eq.s32.totalorder %s12, 1
    %p97 = por %p95, %p96
    %p98 = scmp.ne.s32.totalorder %s90, %s93
    %p99 = scmp.eq.s32.totalorder %s12, 0
    %p100 = por %p98, %p99
    %p101 = scmp.ne.s32.totalorder %s90, %s93
    %p102 = scmp.eq.s32.totalorder %s17, 1
    %p103 = por %p101, %p102
    %p104 = scmp.ne.s32.totalorder %s93, %s94
    %p105 = scmp.eq.s32.totalorder %s17, 0
    %p106 = por %p104, %p105
    %p107 = scmp.ne.s32.totalorder %s93, %s94
    %p108 = scmp.eq.s32.totalorder %s18, 1
    %p109 = por %p107, %p108
    %p111 = scmp.ne.s32.totalorder %s94, %s110
    %p112 = scmp.eq.s32.totalorder %s18, 0
    %p113 = por %p111, %p112
    %s115 = sadd.s32 %s114, 1
    %p118 = scmp.eq.s32.totalorder %s12, 1
    %p119 = scmp.ne.s32.totalorder %s114, %s116
    %p120 = scmp.eq.s32.totalorder %s12, 0
    %p121 = por %p119, %p120
    %p122 = scmp.ne.s32.totalorder %s114, %s116
    %p123 = scmp.eq.s32.totalorder %s17, 1
    %p124 = por %p122, %p123
    %p125 = scmp.ne.s32.totalorder %s116, %s117
    %p126 = scmp.eq.s32.totalorder %s17, 0
    %p127 = por %p125, %p126
    %p128 = scmp.ne.s32.totalorder %s116, %s117
    %p129 = scmp.eq.s32.totalorder %s18, 1
    %p130 = por %p128, %p129
    %p132 = scmp.ne.s32.totalorder %s117, %s131
    %p133 = scmp.eq.s32.totalorder %s18, 0
    %p134 = por %p132, %p133
    %s136 = sadd.s32 %s135, 1
    %p139 = scmp.eq.s32.totalorder %s12, 1
    %p140 = scmp.ne.s32.totalorder %s135, %s137
    %p141 = scmp.eq.s32.totalorder %s12, 0
    %p142 = por %p140, %p141
    %p143 = scmp.ne.s32.totalorder %s135, %s137
    %p144 = scmp.eq.s32.totalorder %s17, 1
    %p145 = por %p143, %p144
    %p146 = scmp.ne.s32.totalorder %s137, %s138
    %p147 = scmp.eq.s32.totalorder %s17, 0
    %p148 = por %p146, %p147
    %p149 = scmp.ne.s32.totalorder %s137, %s138
    %p150 = scmp.eq.s32.totalorder %s18, 1
    %p151 = por %p149, %p150
    %p153 = scmp.ne.s32.totalorder %s138, %s152
    %p154 = scmp.eq.s32.totalorder %s18, 0
    %p155 = por %p153, %p154
    %s156 = ssub.s32 %s12, %s19
    %p157 = scmp.eq.s32.totalorder %s156, 0
    %s159 = sadd.s32 %s158, 1
    %s160 = scalar_select %p157, %s158, %s159
    %p163 = pneg %p157
    %p164 = scmp.eq.s32.totalorder %s12, 1
    %p165 = por %p163, %p164
    %p166 = scmp.ne.s32.totalorder %s158, %s161
    %p167 = scmp.eq.s32.totalorder %s12, 0
    %p168 = por %p166, %p167
    %p169 = scmp.ne.s32.totalorder %s158, %s161
    %p170 = scmp.eq.s32.totalorder %s17, 1
    %p171 = por %p169, %p170
    %p172 = scmp.ne.s32.totalorder %s161, %s162
    %p173 = scmp.eq.s32.totalorder %s17, 0
    %p174 = por %p172, %p173
    %p175 = scmp.ne.s32.totalorder %s161, %s162
    %p176 = scmp.eq.s32.totalorder %s18, 1
    %p177 = por %p175, %p176
    %p179 = scmp.ne.s32.totalorder %s162, %s178
    %p180 = scmp.eq.s32.totalorder %s18, 0
    %p181 = por %p179, %p180
    %p182 = scmp.le.s32.totalorder 1, %s12
    %p183 = scmp.lt.s32.totalorder %s12, 3
    %p184 = pnand %p182, %p183
    %p185 = pneg %p184
    // Predicated region
    $region9: #{encoder_forward.16} parent=5 // pred_check
      _
    $region10: #{encoder_forward.16} parent=5 // pred_check_branch
      %187 = sbr.rel (%p184) target = $region12
    $region11: #{encoder_forward.16} parent=5 // pred_region
      %s188 = ssub.s32 %s12, 1
      // Predicated region
      $region13: #{encoder_forward.16} parent=11 // pred_check
        %p189 = pneg %p59
      $region14: #{encoder_forward.16} parent=11 // pred_check_branch
        %191 = sbr.rel (%p189) target = $region16
      $region15: #{encoder_forward.16} parent=11 // pred_region
        _
      $region16: #{encoder_forward.16} parent=11 // pred_fallthru
        _
      // Predicated region
      $region17: #{encoder_forward.16} parent=11 // pred_check
        %p192 = pneg %p80
      $region18: #{encoder_forward.16} parent=11 // pred_check_branch
        %194 = sbr.rel (%p192) target = $region20
      $region19: #{encoder_forward.16} parent=11 // pred_region
        _
      $region20: #{encoder_forward.16} parent=11 // pred_fallthru
        _
      // Predicated region
      $region21: #{encoder_forward.16} parent=11 // pred_check
        %p195 = pneg %p127
      $region22: #{encoder_forward.16} parent=11 // pred_check_branch
        %197 = sbr.rel (%p195) target = $region24
      $region23: #{encoder_forward.16} parent=11 // pred_region
        _
      $region24: #{encoder_forward.16} parent=11 // pred_fallthru
        _
      // Predicated region
      $region25: #{encoder_forward.16} parent=11 // pred_check
        %p198 = pneg %p148
      $region26: #{encoder_forward.16} parent=11 // pred_check_branch
        %200 = sbr.rel (%p198) target = $region28
      $region27: #{encoder_forward.16} parent=11 // pred_region
        _
      $region28: #{encoder_forward.16} parent=11 // pred_fallthru
        _
    $region12: #{encoder_forward.16} parent=5 // pred_fallthru
      _
    %p201 = scmp.lt.s32.totalorder %s12, 2
    // Predicated region
    $region29: #{encoder_forward.16} parent=5 // pred_check
      %p202 = pneg %p201
    $region30: #{encoder_forward.16} parent=5 // pred_check_branch
      %204 = sbr.rel (%p202) target = $region32
    $region31: #{encoder_forward.16} parent=5 // pred_region
      // Predicated region
      $region33: #{encoder_forward.16} parent=31 // pred_check
        %p205 = pneg %p32
      $region34: #{encoder_forward.16} parent=31 // pred_check_branch
        %207 = sbr.rel (%p205) target = $region36
      $region35: #{encoder_forward.16} parent=31 // pred_region
        %s208 = smul.u32 16, %s12
        %p209 = scmp.lt.s32.totalorder %s208, 31
        %s210 = scalar_select %p209, %s208, 31
        %s211 = smul.addr %s210, 4
        %s212 = smul.addr %s211, 4
        %s213 = scalar_lea.vmem %s0, %s212
        %s214 = smul.u32 16, %s12
      $region36: #{encoder_forward.16} parent=31 // pred_fallthru
        _
      // Predicated region
      $region37: #{encoder_forward.16} parent=31 // pred_check
        %p215 = pneg %p100
      $region38: #{encoder_forward.16} parent=31 // pred_check_branch
        %217 = sbr.rel (%p215) target = $region40
      $region39: #{encoder_forward.16} parent=31 // pred_region
        %s218 = smul.u32 16, %s12
        %p219 = scmp.lt.s32.totalorder %s218, 31
        %s220 = scalar_select %p219, %s218, 31
        %s221 = smul.addr %s220, 8
        %s222 = scalar_lea.vmem %s3, %s221
        %s223 = smul.u32 16, %s12
      $region40: #{encoder_forward.16} parent=31 // pred_fallthru
        _
    $region32: #{encoder_forward.16} parent=5 // pred_fallthru
      _
    %p224 = scmp.le.s32.totalorder 1, %s12
    %p225 = scmp.lt.s32.totalorder %s12, 3
    %p226 = pnand %p224, %p225
    %p227 = pneg %p226
    // Predicated region
    $region41: #{encoder_forward.16} parent=5 // pred_check
      _
    $region42: #{encoder_forward.16} parent=5 // pred_check_branch
      %229 = sbr.rel (%p226) target = $region44
    $region43: #{encoder_forward.16} parent=5 // pred_region
      %s230 = ssub.s32 %s12, 1
      %s231 = smul.u32 16, %s17
      %p232 = scmp.lt.s32.totalorder %s231, 31
      %s233 = scalar_select %p232, %s231, 31
      %s234 = smul.addr %s233, 4
      %s235 = smul.addr %s234, 4
      %s236 = scalar_lea.vmem %s0, %s235
      %p237 = pneg %p38
      %p238 = pneg %p35
      %p239 = pneg %p59
      %p240 = pneg %p56
      %p241 = pneg %p80
      %p242 = pneg %p77
      %s243 = smul.u32 16, %s17
      %p244 = scmp.lt.s32.totalorder %s243, 31
      %s245 = scalar_select %p244, %s243, 31
      %s246 = smul.addr %s245, 8
      %s247 = scalar_lea.vmem %s3, %s246
      %p248 = pneg %p106
      %p249 = pneg %p103
      %p250 = pneg %p127
      %p251 = pneg %p124
      %p252 = pneg %p148
      %p253 = pneg %p145
      %p254 = pneg %p174
      %p255 = pneg %p171
      %s256 = smul.u32 16, %s17
      %p257 = scmp.lt.s32.totalorder %s256, 31
      %s258 = scalar_select %p257, %s256, 31
      %s259 = smul.addr %s258, 8
      %s260 = scalar_lea.vmem %s6, %s259
      %s261 = smul.u32 16, %s17
      %p262 = scmp.lt.s32.totalorder %s261, 31
      %s263 = scalar_select %p262, %s261, 31
      %s264 = smul.addr %s263, 4
      %s265 = smul.addr %s264, 4
      %s266 = scalar_lea.vmem %s0, %s265
      %s267 = smul.u32 16, %s17
      %s268 = smul.u32 16, %s17
      %p269 = scmp.lt.s32.totalorder %s268, 31
      %s270 = scalar_select %p269, %s268, 31
      %s271 = smul.addr %s270, 8
      %s272 = scalar_lea.vmem %s3, %s271
      %s273 = smul.u32 16, %s17
      %s274 = smul.u32 16, %s17
      %p275 = scmp.lt.s32.totalorder %s274, 31
      %s276 = scalar_select %p275, %s274, 31
      %s277 = smul.addr %s276, 8
      %s278 = scalar_lea.vmem %s6, %s277
      %s279 = smul.u32 16, %s17
      %v281 = vld [vmem:[%s266] sm:$0xff]
      %v282 = vld [vmem:[%s266 + $0x8] sm:$0xff]
      %v283 = vld [vmem:[%s266 + $0x10] sm:$0xff]
      %v284 = vld [vmem:[%s266 + $0x18] sm:$0xff]
      %v285 = vld [vmem:[%s266 + $0x20] sm:$0xff]
      %v286 = vld [vmem:[%s266 + $0x28] sm:$0xff]
      %v287 = vld [vmem:[%s266 + $0x30] sm:$0xff]
      %v288 = vld [vmem:[%s266 + $0x38] sm:$0xff]
      %v289 = vld [vmem:[%s266 + $0x40] sm:$0xff]
      %v290 = vld [vmem:[%s266 + $0x48] sm:$0xff]
      %v291 = vld [vmem:[%s266 + $0x50] sm:$0xff]
      %v292 = vld [vmem:[%s266 + $0x58] sm:$0xff]
      %v293 = vld [vmem:[%s266 + $0x60] sm:$0xff]
      %v294 = vld [vmem:[%s266 + $0x68] sm:$0xff]
      %v295 = vld [vmem:[%s266 + $0x70] sm:$0xff]
      %v296 = vld [vmem:[%s266 + $0x78] sm:$0xff]
      %v297 = vld [vmem:[%s266 + $0x80] sm:$0xff]
      %v298 = vld [vmem:[%s266 + $0x88] sm:$0xff]
      %v299 = vld [vmem:[%s266 + $0x90] sm:$0xff]
      %v300 = vld [vmem:[%s266 + $0x98] sm:$0xff]
      %v301 = vld [vmem:[%s266 + $0xa0] sm:$0xff]
      %v302 = vld [vmem:[%s266 + $0xa8] sm:$0xff]
      %v303 = vld [vmem:[%s266 + $0xb0] sm:$0xff]
      %v304 = vld [vmem:[%s266 + $0xb8] sm:$0xff]
      %v305 = vld [vmem:[%s266 + $0xc0] sm:$0xff]
      %v306 = vld [vmem:[%s266 + $0xc8] sm:$0xff]
      %v307 = vld [vmem:[%s266 + $0xd0] sm:$0xff]
      %v308 = vld [vmem:[%s266 + $0xd8] sm:$0xff]
      %v309 = vld [vmem:[%s266 + $0xe0] sm:$0xff]
      %v310 = vld [vmem:[%s266 + $0xe8] sm:$0xff]
      %v311 = vld [vmem:[%s266 + $0xf0] sm:$0xff]
      %v312 = vld [vmem:[%s266 + $0xf8] sm:$0xff]
      %v313 = vld [vmem:[%s1] sm:$0xf]
      %v314 = vld [vmem:[%s1 + $0x4] sm:$0xf]
      %v315 = vld [vmem:[%s1 + $0x8] sm:$0xf]
      %v316 = vld [vmem:[%s1 + $0xc] sm:$0xf]
      %v317 = vld [vmem:[%s1 + $0x10] sm:$0xf]
      %v318 = vld [vmem:[%s1 + $0x14] sm:$0xf]
      %v319 = vld [vmem:[%s1 + $0x18] sm:$0xf]
      %v320 = vld [vmem:[%s1 + $0x1c] sm:$0xf]
      %v321 = vld [vmem:[%s1 + $0x20] sm:$0xf]
      %v322 = vld [vmem:[%s1 + $0x24] sm:$0xf]
      %v323 = vld [vmem:[%s1 + $0x28] sm:$0xf]
      %v324 = vld [vmem:[%s1 + $0x2c] sm:$0xf]
      %v325 = vld [vmem:[%s1 + $0x30] sm:$0xf]
      %v326 = vld [vmem:[%s1 + $0x34] sm:$0xf]
      %v327 = vld [vmem:[%s1 + $0x38] sm:$0xf]
      %v328 = vld [vmem:[%s1 + $0x3c] sm:$0xf]
      %v329 = vld [vmem:[%s1 + $0x40] sm:$0xf]
      %v330 = vld [vmem:[%s1 + $0x44] sm:$0xf]
      %v331 = vld [vmem:[%s1 + $0x48] sm:$0xf]
      %v332 = vld [vmem:[%s1 + $0x4c] sm:$0xf]
      %v333 = vld [vmem:[%s1 + $0x50] sm:$0xf]
      %v334 = vld [vmem:[%s1 + $0x54] sm:$0xf]
      %v335 = vld [vmem:[%s1 + $0x58] sm:$0xf]
      %v336 = vld [vmem:[%s1 + $0x5c] sm:$0xf]
      %v337 = vld [vmem:[%s1 + $0x60] sm:$0xf]
      %v338 = vld [vmem:[%s1 + $0x64] sm:$0xf]
      %v339 = vld [vmem:[%s1 + $0x68] sm:$0xf]
      %v340 = vld [vmem:[%s1 + $0x6c] sm:$0xf]
      %v341 = vld [vmem:[%s1 + $0x70] sm:$0xf]
      %v342 = vld [vmem:[%s1 + $0x74] sm:$0xf]
      %v343 = vld [vmem:[%s1 + $0x78] sm:$0xf]
      %v344 = vld [vmem:[%s1 + $0x7c] sm:$0xf]
      %v345 = vld [vmem:[%s1 + $0x80] sm:$0xf]
      %v346 = vld [vmem:[%s1 + $0x84] sm:$0xf]
      %v347 = vld [vmem:[%s1 + $0x88] sm:$0xf]
      %v348 = vld [vmem:[%s1 + $0x8c] sm:$0xf]
      %v349 = vld [vmem:[%s1 + $0x90] sm:$0xf]
      %v350 = vld [vmem:[%s1 + $0x94] sm:$0xf]
      %v351 = vld [vmem:[%s1 + $0x98] sm:$0xf]
      %v352 = vld [vmem:[%s1 + $0x9c] sm:$0xf]
      %v353 = vld [vmem:[%s1 + $0xa0] sm:$0xf]
      %v354 = vld [vmem:[%s1 + $0xa4] sm:$0xf]
      %v355 = vld [vmem:[%s1 + $0xa8] sm:$0xf]
      %v356 = vld [vmem:[%s1 + $0xac] sm:$0xf]
      %v357 = vld [vmem:[%s1 + $0xb0] sm:$0xf]
      %v358 = vld [vmem:[%s1 + $0xb4] sm:$0xf]
      %v359 = vld [vmem:[%s1 + $0xb8] sm:$0xf]
      %v360 = vld [vmem:[%s1 + $0xbc] sm:$0xf]
      %v361 = vld [vmem:[%s1 + $0xc0] sm:$0xf]
      %v362 = vld [vmem:[%s1 + $0xc4] sm:$0xf]
      %v363 = vld [vmem:[%s1 + $0xc8] sm:$0xf]
      %v364 = vld [vmem:[%s1 + $0xcc] sm:$0xf]
      %v365 = vld [vmem:[%s1 + $0xd0] sm:$0xf]
      %v366 = vld [vmem:[%s1 + $0xd4] sm:$0xf]
      %v367 = vld [vmem:[%s1 + $0xd8] sm:$0xf]
      %v368 = vld [vmem:[%s1 + $0xdc] sm:$0xf]
      %v369 = vld [vmem:[%s1 + $0xe0] sm:$0xf]
      %v370 = vld [vmem:[%s1 + $0xe4] sm:$0xf]
      %v371 = vld [vmem:[%s1 + $0xe8] sm:$0xf]
      %v372 = vld [vmem:[%s1 + $0xec] sm:$0xf]
      %v373 = vld [vmem:[%s1 + $0xf0] sm:$0xf]
      %v374 = vld [vmem:[%s1 + $0xf4] sm:$0xf]
      %v375 = vld [vmem:[%s1 + $0xf8] sm:$0xf]
      %v376 = vld [vmem:[%s1 + $0xfc] sm:$0xf]
      %v377 = vld [vmem:[%s2] sm:$0x1]
      %v379 = vlaneseq
      %v380 = vshrl.u32 %v379, 7
      %v381 = vsub.s32 0, %v380
      %v382 = vrot.slane %v377, %v381
      %v416 = vunpack.c.l.b16 %v281
      %v417 = vunpack.c.h.b16 %v281
      %v418 = vunpack.c.l.b16 %v282
      %v419 = vunpack.c.h.b16 %v282
      %v420 = vunpack.c.l.b16 %v283
      %v421 = vunpack.c.h.b16 %v283
      %v422 = vunpack.c.l.b16 %v284
      %v423 = vunpack.c.h.b16 %v284
      %v424 = vunpack.c.l.b16 %v285
      %v425 = vunpack.c.h.b16 %v285
      %v426 = vunpack.c.l.b16 %v286
      %v427 = vunpack.c.h.b16 %v286
      %v428 = vunpack.c.l.b16 %v287
      %v429 = vunpack.c.h.b16 %v287
      %v430 = vunpack.c.l.b16 %v288
      %v431 = vunpack.c.h.b16 %v288
      %v432 = vunpack.c.l.b16 %v289
      %v433 = vunpack.c.h.b16 %v289
      %v434 = vunpack.c.l.b16 %v290
      %v435 = vunpack.c.h.b16 %v290
      %v436 = vunpack.c.l.b16 %v291
      %v437 = vunpack.c.h.b16 %v291
      %v438 = vunpack.c.l.b16 %v292
      %v439 = vunpack.c.h.b16 %v292
      %v440 = vunpack.c.l.b16 %v293
      %v441 = vunpack.c.h.b16 %v293
      %v442 = vunpack.c.l.b16 %v294
      %v443 = vunpack.c.h.b16 %v294
      %v444 = vunpack.c.l.b16 %v295
      %v445 = vunpack.c.h.b16 %v295
      %v446 = vunpack.c.l.b16 %v296
      %v447 = vunpack.c.h.b16 %v296
      %v448 = vunpack.c.l.b16 %v297
      %v449 = vunpack.c.h.b16 %v297
      %v450 = vunpack.c.l.b16 %v298
      %v451 = vunpack.c.h.b16 %v298
      %v452 = vunpack.c.l.b16 %v299
      %v453 = vunpack.c.h.b16 %v299
      %v454 = vunpack.c.l.b16 %v300
      %v455 = vunpack.c.h.b16 %v300
      %v456 = vunpack.c.l.b16 %v301
      %v457 = vunpack.c.h.b16 %v301
      %v458 = vunpack.c.l.b16 %v302
      %v459 = vunpack.c.h.b16 %v302
      %v460 = vunpack.c.l.b16 %v303
      %v461 = vunpack.c.h.b16 %v303
      %v462 = vunpack.c.l.b16 %v304
      %v463 = vunpack.c.h.b16 %v304
      %v464 = vunpack.c.l.b16 %v305
      %v465 = vunpack.c.h.b16 %v305
      %v466 = vunpack.c.l.b16 %v306
      %v467 = vunpack.c.h.b16 %v306
      %v468 = vunpack.c.l.b16 %v307
      %v469 = vunpack.c.h.b16 %v307
      %v470 = vunpack.c.l.b16 %v308
      %v471 = vunpack.c.h.b16 %v308
      %v472 = vunpack.c.l.b16 %v309
      %v473 = vunpack.c.h.b16 %v309
      %v474 = vunpack.c.l.b16 %v310
      %v475 = vunpack.c.h.b16 %v310
      %v476 = vunpack.c.l.b16 %v311
      %v477 = vunpack.c.h.b16 %v311
      %v478 = vunpack.c.l.b16 %v312
      %v479 = vunpack.c.h.b16 %v312
      %v480 = vpack.c.b16 %v420, %v416
      %v481 = vpack.c.b16 %v421, %v417
      %v482 = vpack.c.b16 %v422, %v418
      %v483 = vpack.c.b16 %v423, %v419
      %v484 = vpack.c.b16 %v428, %v424
      %v485 = vpack.c.b16 %v429, %v425
      %v486 = vpack.c.b16 %v430, %v426
      %v487 = vpack.c.b16 %v431, %v427
      %v488 = vpack.c.b16 %v436, %v432
      %v489 = vpack.c.b16 %v437, %v433
      %v490 = vpack.c.b16 %v438, %v434
      %v491 = vpack.c.b16 %v439, %v435
      %v492 = vpack.c.b16 %v444, %v440
      %v493 = vpack.c.b16 %v445, %v441
      %v494 = vpack.c.b16 %v446, %v442
      %v495 = vpack.c.b16 %v447, %v443
      %v496 = vpack.c.b16 %v452, %v448
      %v497 = vpack.c.b16 %v453, %v449
      %v498 = vpack.c.b16 %v454, %v450
      %v499 = vpack.c.b16 %v455, %v451
      %v500 = vpack.c.b16 %v460, %v456
      %v501 = vpack.c.b16 %v461, %v457
      %v502 = vpack.c.b16 %v462, %v458
      %v503 = vpack.c.b16 %v463, %v459
      %v504 = vpack.c.b16 %v468, %v464
      %v505 = vpack.c.b16 %v469, %v465
      %v506 = vpack.c.b16 %v470, %v466
      %v507 = vpack.c.b16 %v471, %v467
      %v508 = vpack.c.b16 %v476, %v472
      %v509 = vpack.c.b16 %v477, %v473
      %v510 = vpack.c.b16 %v478, %v474
      %v511 = vpack.c.b16 %v479, %v475
      %v608 = vunpack.c.l.b16 %v313
      %v609 = vunpack.c.l.b16 %v314
      %v610 = vunpack.c.l.b16 %v315
      %v611 = vunpack.c.l.b16 %v316
      %v612 = vunpack.c.l.b16 %v317
      %v613 = vunpack.c.l.b16 %v318
      %v614 = vunpack.c.l.b16 %v319
      %v615 = vunpack.c.l.b16 %v320
      %v616 = vunpack.c.l.b16 %v321
      %v617 = vunpack.c.l.b16 %v322
      %v618 = vunpack.c.l.b16 %v323
      %v619 = vunpack.c.l.b16 %v324
      %v620 = vunpack.c.l.b16 %v325
      %v621 = vunpack.c.l.b16 %v326
      %v622 = vunpack.c.l.b16 %v327
      %v623 = vunpack.c.l.b16 %v328
      %v624 = vunpack.c.l.b16 %v329
      %v625 = vunpack.c.l.b16 %v330
      %v626 = vunpack.c.l.b16 %v331
      %v627 = vunpack.c.l.b16 %v332
      %v628 = vunpack.c.l.b16 %v333
      %v629 = vunpack.c.l.b16 %v334
      %v630 = vunpack.c.l.b16 %v335
      %v631 = vunpack.c.l.b16 %v336
      %v632 = vunpack.c.l.b16 %v337
      %v633 = vunpack.c.l.b16 %v338
      %v634 = vunpack.c.l.b16 %v339
      %v635 = vunpack.c.l.b16 %v340
      %v636 = vunpack.c.l.b16 %v341
      %v637 = vunpack.c.l.b16 %v342
      %v638 = vunpack.c.l.b16 %v343
      %v639 = vunpack.c.l.b16 %v344
      %v640 = vunpack.c.l.b16 %v345
      %v641 = vunpack.c.l.b16 %v346
      %v642 = vunpack.c.l.b16 %v347
      %v643 = vunpack.c.l.b16 %v348
      %v644 = vunpack.c.l.b16 %v349
      %v645 = vunpack.c.l.b16 %v350
      %v646 = vunpack.c.l.b16 %v351
      %v647 = vunpack.c.l.b16 %v352
      %v648 = vunpack.c.l.b16 %v353
      %v649 = vunpack.c.l.b16 %v354
      %v650 = vunpack.c.l.b16 %v355
      %v651 = vunpack.c.l.b16 %v356
      %v652 = vunpack.c.l.b16 %v357
      %v653 = vunpack.c.l.b16 %v358
      %v654 = vunpack.c.l.b16 %v359
      %v655 = vunpack.c.l.b16 %v360
      %v656 = vunpack.c.l.b16 %v361
      %v657 = vunpack.c.l.b16 %v362
      %v658 = vunpack.c.l.b16 %v363
      %v659 = vunpack.c.l.b16 %v364
      %v660 = vunpack.c.l.b16 %v365
      %v661 = vunpack.c.l.b16 %v366
      %v662 = vunpack.c.l.b16 %v367
      %v663 = vunpack.c.l.b16 %v368
      %v664 = vunpack.c.l.b16 %v369
      %v665 = vunpack.c.l.b16 %v370
      %v666 = vunpack.c.l.b16 %v371
      %v667 = vunpack.c.l.b16 %v372
      %v668 = vunpack.c.l.b16 %v373
      %v669 = vunpack.c.l.b16 %v374
      %v670 = vunpack.c.l.b16 %v375
      %v671 = vunpack.c.l.b16 %v376
      %v672 = vpack.c.b16 %v609, %v608
      %v673 = vpack.c.b16 %v611, %v610
      %v674 = vpack.c.b16 %v613, %v612
      %v675 = vpack.c.b16 %v615, %v614
      %v676 = vpack.c.b16 %v617, %v616
      %v677 = vpack.c.b16 %v619, %v618
      %v678 = vpack.c.b16 %v621, %v620
      %v679 = vpack.c.b16 %v623, %v622
      %v680 = vpack.c.b16 %v625, %v624
      %v681 = vpack.c.b16 %v627, %v626
      %v682 = vpack.c.b16 %v629, %v628
      %v683 = vpack.c.b16 %v631, %v630
      %v684 = vpack.c.b16 %v633, %v632
      %v685 = vpack.c.b16 %v635, %v634
      %v686 = vpack.c.b16 %v637, %v636
      %v687 = vpack.c.b16 %v639, %v638
      %v688 = vpack.c.b16 %v641, %v640
      %v689 = vpack.c.b16 %v643, %v642
      %v690 = vpack.c.b16 %v645, %v644
      %v691 = vpack.c.b16 %v647, %v646
      %v692 = vpack.c.b16 %v649, %v648
      %v693 = vpack.c.b16 %v651, %v650
      %v694 = vpack.c.b16 %v653, %v652
      %v695 = vpack.c.b16 %v655, %v654
      %v696 = vpack.c.b16 %v657, %v656
      %v697 = vpack.c.b16 %v659, %v658
      %v698 = vpack.c.b16 %v661, %v660
      %v699 = vpack.c.b16 %v663, %v662
      %v700 = vpack.c.b16 %v665, %v664
      %v701 = vpack.c.b16 %v667, %v666
      %v702 = vpack.c.b16 %v669, %v668
      %v703 = vpack.c.b16 %v671, %v670
      %736 = vmatprep.subr.bf16.mxu0 0
      %737 = vmatpush1.bf16.msra.mxu0 %v672
      %738 = vmatprep.subr.bf16.mxu0 0
      %739 = vmatpush1.bf16.msra.mxu0 %v673
      %740 = vmatprep.subr.bf16.mxu0 0
      %741 = vmatpush1.bf16.msra.mxu0 %v674
      %742 = vmatprep.subr.bf16.mxu0 0
      %743 = vmatpush1.bf16.msra.mxu0 %v675
      %744 = vmatprep.subr.bf16.mxu0 0
      %745 = vmatpush1.bf16.msra.mxu0 %v676
      %746 = vmatprep.subr.bf16.mxu0 0
      %747 = vmatpush1.bf16.msra.mxu0 %v677
      %748 = vmatprep.subr.bf16.mxu0 0
      %749 = vmatpush1.bf16.msra.mxu0 %v678
      %750 = vmatprep.subr.bf16.mxu0 0
      %751 = vmatpush1.bf16.msra.mxu0 %v679
      %752 = vmatprep.subr.bf16.mxu0 0
      %753 = vmatpush1.bf16.msra.mxu0 %v680
      %754 = vmatprep.subr.bf16.mxu0 0
      %755 = vmatpush1.bf16.msra.mxu0 %v681
      %756 = vmatprep.subr.bf16.mxu0 0
      %757 = vmatpush1.bf16.msra.mxu0 %v682
      %758 = vmatprep.subr.bf16.mxu0 0
      %759 = vmatpush1.bf16.msra.mxu0 %v683
      %760 = vmatprep.subr.bf16.mxu0 0
      %761 = vmatpush1.bf16.msra.mxu0 %v684
      %762 = vmatprep.subr.bf16.mxu0 0
      %763 = vmatpush1.bf16.msra.mxu0 %v685
      %764 = vmatprep.subr.bf16.mxu0 0
      %765 = vmatpush1.bf16.msra.mxu0 %v686
      %766 = vmatprep.subr.bf16.mxu0 0
      %767 = vmatpush1.bf16.msra.mxu0 %v687
      %768 = vmatprep.mubr.bf16.mxu0 %v481
      %769 = vmatmul.mubr.bf16.gmra.mrb[0].mxu0 %v480
      %v770 = vpop.f32.mrb[0].mxu0
      %v771 = vadd.f32 %v382, %v770
      %v772 = vpop.f32.mrb[0].mxu0
      %v773 = vpop.f32.mrb[0].mxu0
      %v774 = vadd.f32 %v382, %v773
      %v775 = vpop.f32.mrb[0].mxu0
      %776 = vmatprep.mubr.bf16.mxu0 %v485
      %777 = vmatmul.mubr.bf16.gmra.mrb[0].mxu0 %v484
      %v778 = vpop.f32.mrb[0].mxu0
      %v779 = vadd.f32 %v382, %v778
      %v780 = vpop.f32.mrb[0].mxu0
      %v781 = vpop.f32.mrb[0].mxu0
      %v782 = vadd.f32 %v382, %v781
      %v783 = vpop.f32.mrb[0].mxu0
      %784 = vmatprep.mubr.bf16.mxu0 %v489
      %785 = vmatmul.mubr.bf16.gmra.mrb[0].mxu0 %v488
      %v786 = vpop.f32.mrb[0].mxu0
      %v787 = vadd.f32 %v382, %v786
      %v788 = vpop.f32.mrb[0].mxu0
      %v789 = vpop.f32.mrb[0].mxu0
      %v790 = vadd.f32 %v382, %v789
      %v791 = vpop.f32.mrb[0].mxu0
      %792 = vmatprep.mubr.bf16.mxu0 %v493
      %793 = vmatmul.mubr.bf16.gmra.mrb[0].mxu0 %v492
      %v794 = vpop.f32.mrb[0].mxu0
      %v795 = vadd.f32 %v382, %v794
      %v796 = vpop.f32.mrb[0].mxu0
      %v797 = vpop.f32.mrb[0].mxu0
      %v798 = vadd.f32 %v382, %v797
      %v799 = vpop.f32.mrb[0].mxu0
      %800 = vmatprep.mubr.bf16.mxu0 %v497
      %801 = vmatmul.mubr.bf16.gmra.mrb[0].mxu0 %v496
      %v802 = vpop.f32.mrb[0].mxu0
      %v803 = vadd.f32 %v382, %v802
      %v804 = vpop.f32.mrb[0].mxu0
      %v805 = vpop.f32.mrb[0].mxu0
      %v806 = vadd.f32 %v382, %v805
      %v807 = vpop.f32.mrb[0].mxu0
      %808 = vmatprep.mubr.bf16.mxu0 %v501
      %809 = vmatmul.mubr.bf16.gmra.mrb[0].mxu0 %v500
      %v810 = vpop.f32.mrb[0].mxu0
      %v811 = vadd.f32 %v382, %v810
      %v812 = vpop.f32.mrb[0].mxu0
      %v813 = vpop.f32.mrb[0].mxu0
      %v814 = vadd.f32 %v382, %v813
      %v815 = vpop.f32.mrb[0].mxu0
      %816 = vmatprep.mubr.bf16.mxu0 %v505
      %817 = vmatmul.mubr.bf16.gmra.mrb[0].mxu0 %v504
      %v818 = vpop.f32.mrb[0].mxu0
      %v819 = vadd.f32 %v382, %v818
      %v820 = vpop.f32.mrb[0].mxu0
      %v821 = vpop.f32.mrb[0].mxu0
      %v822 = vadd.f32 %v382, %v821
      %v823 = vpop.f32.mrb[0].mxu0
      %824 = vmatprep.mubr.bf16.mxu0 %v509
      %825 = vmatmul.mubr.bf16.gmra.mrb[0].mxu0 %v508
      %v826 = vpop.f32.mrb[0].mxu0
      %v827 = vadd.f32 %v382, %v826
      %v828 = vpop.f32.mrb[0].mxu0
      %v829 = vpop.f32.mrb[0].mxu0
      %v830 = vadd.f32 %v382, %v829
      %v831 = vpop.f32.mrb[0].mxu0
      %832 = vdwg.mxu0
      %833 = vmatprep.subr.bf16.mxu0 0
      %834 = vmatpush1.bf16.msra.mxu0 %v688
      %835 = vmatprep.subr.bf16.mxu0 0
      %836 = vmatpush1.bf16.msra.mxu0 %v689
      %837 = vmatprep.subr.bf16.mxu0 0
      %838 = vmatpush1.bf16.msra.mxu0 %v690
      %839 = vmatprep.subr.bf16.mxu0 0
      %840 = vmatpush1.bf16.msra.mxu0 %v691
      %841 = vmatprep.subr.bf16.mxu0 0
      %842 = vmatpush1.bf16.msra.mxu0 %v692
      %843 = vmatprep.subr.bf16.mxu0 0
      %844 = vmatpush1.bf16.msra.mxu0 %v693
      %845 = vmatprep.subr.bf16.mxu0 0
      %846 = vmatpush1.bf16.msra.mxu0 %v694
      %847 = vmatprep.subr.bf16.mxu0 0
      %848 = vmatpush1.bf16.msra.mxu0 %v695
      %849 = vmatprep.subr.bf16.mxu0 0
      %850 = vmatpush1.bf16.msra.mxu0 %v696
      %851 = vmatprep.subr.bf16.mxu0 0
      %852 = vmatpush1.bf16.msra.mxu0 %v697
      %853 = vmatprep.subr.bf16.mxu0 0
      %854 = vmatpush1.bf16.msra.mxu0 %v698
      %855 = vmatprep.subr.bf16.mxu0 0
      %856 = vmatpush1.bf16.msra.mxu0 %v699
      %857 = vmatprep.subr.bf16.mxu0 0
      %858 = vmatpush1.bf16.msra.mxu0 %v700
      %859 = vmatprep.subr.bf16.mxu0 0
      %860 = vmatpush1.bf16.msra.mxu0 %v701
      %861 = vmatprep.subr.bf16.mxu0 0
      %862 = vmatpush1.bf16.msra.mxu0 %v702
      %863 = vmatprep.subr.bf16.mxu0 0
      %864 = vmatpush1.bf16.msra.mxu0 %v703
      %865 = vmatprep.mubr.bf16.mxu0 %v483
      %866 = vmatmul.mubr.bf16.gmra.mrb[0].mxu0 %v482
      %v867 = vpop.f32.mrb[0].mxu0
      %v868 = vadd.f32 %v771, %v867
      %v869 = vpop.f32.mrb[0].mxu0
      %v870 = vpop.f32.mrb[0].mxu0
      %v871 = vadd.f32 %v774, %v870
      %v872 = vpop.f32.mrb[0].mxu0
      %873 = vmatprep.mubr.bf16.mxu0 %v487
      %874 = vmatmul.mubr.bf16.gmra.mrb[0].mxu0 %v486
      %v875 = vpop.f32.mrb[0].mxu0
      %v876 = vadd.f32 %v779, %v875
      %v877 = vpop.f32.mrb[0].mxu0
      %v878 = vpop.f32.mrb[0].mxu0
      %v879 = vadd.f32 %v782, %v878
      %v880 = vpop.f32.mrb[0].mxu0
      %881 = vmatprep.mubr.bf16.mxu0 %v491
      %882 = vmatmul.mubr.bf16.gmra.mrb[0].mxu0 %v490
      %v883 = vpop.f32.mrb[0].mxu0
      %v884 = vadd.f32 %v787, %v883
      %v885 = vpop.f32.mrb[0].mxu0
      %v886 = vpop.f32.mrb[0].mxu0
      %v887 = vadd.f32 %v790, %v886
      %v888 = vpop.f32.mrb[0].mxu0
      %889 = vmatprep.mubr.bf16.mxu0 %v495
      %890 = vmatmul.mubr.bf16.gmra.mrb[0].mxu0 %v494
      %v891 = vpop.f32.mrb[0].mxu0
      %v892 = vadd.f32 %v795, %v891
      %v893 = vpop.f32.mrb[0].mxu0
      %v894 = vpop.f32.mrb[0].mxu0
      %v895 = vadd.f32 %v798, %v894
      %v896 = vpop.f32.mrb[0].mxu0
      %897 = vmatprep.mubr.bf16.mxu0 %v499
      %898 = vmatmul.mubr.bf16.gmra.mrb[0].mxu0 %v498
      %v899 = vpop.f32.mrb[0].mxu0
      %v900 = vadd.f32 %v803, %v899
      %v901 = vpop.f32.mrb[0].mxu0
      %v902 = vpop.f32.mrb[0].mxu0
      %v903 = vadd.f32 %v806, %v902
      %v904 = vpop.f32.mrb[0].mxu0
      %905 = vmatprep.mubr.bf16.mxu0 %v503
      %906 = vmatmul.mubr.bf16.gmra.mrb[0].mxu0 %v502
      %v907 = vpop.f32.mrb[0].mxu0
      %v908 = vadd.f32 %v811, %v907
      %v909 = vpop.f32.mrb[0].mxu0
      %v910 = vpop.f32.mrb[0].mxu0
      %v911 = vadd.f32 %v814, %v910
      %v912 = vpop.f32.mrb[0].mxu0
      %913 = vmatprep.mubr.bf16.mxu0 %v507
      %914 = vmatmul.mubr.bf16.gmra.mrb[0].mxu0 %v506
      %v915 = vpop.f32.mrb[0].mxu0
      %v916 = vadd.f32 %v819, %v915
      %v917 = vpop.f32.mrb[0].mxu0
      %v918 = vpop.f32.mrb[0].mxu0
      %v919 = vadd.f32 %v822, %v918
      %v920 = vpop.f32.mrb[0].mxu0
      %921 = vmatprep.mubr.bf16.mxu0 %v511
      %922 = vmatmul.mubr.bf16.gmra.mrb[0].mxu0 %v510
      %v923 = vpop.f32.mrb[0].mxu0
      %v924 = vadd.f32 %v827, %v923
      %v925 = vpop.f32.mrb[0].mxu0
      %v926 = vpop.f32.mrb[0].mxu0
      %v927 = vadd.f32 %v830, %v926
      %v928 = vpop.f32.mrb[0].mxu0
      %929 = vdwg.mxu0
      %v930 = vld [vmem:[%s272] sm:$0xff]
      %v931 = vld [vmem:[%s272 + $0x8] sm:$0xff]
      %v932 = vld [vmem:[%s272 + $0x10] sm:$0xff]
      %v933 = vld [vmem:[%s272 + $0x18] sm:$0xff]
      %v934 = vld [vmem:[%s272 + $0x20] sm:$0xff]
      %v935 = vld [vmem:[%s272 + $0x28] sm:$0xff]
      %v936 = vld [vmem:[%s272 + $0x30] sm:$0xff]
      %v937 = vld [vmem:[%s272 + $0x38] sm:$0xff]
      %v938 = vld [vmem:[%s272 + $0x40] sm:$0xff]
      %v939 = vld [vmem:[%s272 + $0x48] sm:$0xff]
      %v940 = vld [vmem:[%s272 + $0x50] sm:$0xff]
      %v941 = vld [vmem:[%s272 + $0x58] sm:$0xff]
      %v942 = vld [vmem:[%s272 + $0x60] sm:$0xff]
      %v943 = vld [vmem:[%s272 + $0x68] sm:$0xff]
      %v944 = vld [vmem:[%s272 + $0x70] sm:$0xff]
      %v945 = vld [vmem:[%s272 + $0x78] sm:$0xff]
      %v946 = vadd.f32 %v868, %v930
      %v947 = vadd.f32 %v871, %v931
      %v948 = vadd.f32 %v876, %v932
      %v949 = vadd.f32 %v879, %v933
      %v950 = vadd.f32 %v884, %v934
      %v951 = vadd.f32 %v887, %v935
      %v952 = vadd.f32 %v892, %v936
      %v953 = vadd.f32 %v895, %v937
      %v954 = vadd.f32 %v900, %v938
      %v955 = vadd.f32 %v903, %v939
      %v956 = vadd.f32 %v908, %v940
      %v957 = vadd.f32 %v911, %v941
      %v958 = vadd.f32 %v916, %v942
      %v959 = vadd.f32 %v919, %v943
      %v960 = vadd.f32 %v924, %v944
      %v961 = vadd.f32 %v927, %v945
      %v962 = vld [vmem:[%s4] sm:$0x1]
      %v963 = vld [vmem:[%s5] sm:$0x1]
      %964 = vadd.xlane.f32.xlu0 %v946
      %v965 = vpop.xlane.xlu0 %964
      %966 = vadd.xlane.f32.xlu0 %v947
      %v967 = vpop.xlane.xlu0 %966
      %968 = vadd.xlane.f32.xlu0 %v948
      %v969 = vpop.xlane.xlu0 %968
      %970 = vadd.xlane.f32.xlu0 %v949
      %v971 = vpop.xlane.xlu0 %970
      %972 = vadd.xlane.f32.xlu0 %v950
      %v973 = vpop.xlane.xlu0 %972
      %974 = vadd.xlane.f32.xlu0 %v951
      %v975 = vpop.xlane.xlu0 %974
      %976 = vadd.xlane.f32.xlu0 %v952
      %v977 = vpop.xlane.xlu0 %976
      %978 = vadd.xlane.f32.xlu0 %v953
      %v979 = vpop.xlane.xlu0 %978
      %980 = vadd.xlane.f32.xlu0 %v954
      %v981 = vpop.xlane.xlu0 %980
      %982 = vadd.xlane.f32.xlu0 %v955
      %v983 = vpop.xlane.xlu0 %982
      %984 = vadd.xlane.f32.xlu0 %v956
      %v985 = vpop.xlane.xlu0 %984
      %986 = vadd.xlane.f32.xlu0 %v957
      %v987 = vpop.xlane.xlu0 %986
      %988 = vadd.xlane.f32.xlu0 %v958
      %v989 = vpop.xlane.xlu0 %988
      %990 = vadd.xlane.f32.xlu0 %v959
      %v991 = vpop.xlane.xlu0 %990
      %992 = vadd.xlane.f32.xlu0 %v960
      %v993 = vpop.xlane.xlu0 %992
      %994 = vadd.xlane.f32.xlu0 %v961
      %v995 = vpop.xlane.xlu0 %994
      %v996 = vrcp.pop 128.0
      %v997 = vmul.f32 %v965, %v996
      %v998 = vmul.f32 %v967, %v996
      %v999 = vmul.f32 %v969, %v996
      %v1000 = vmul.f32 %v971, %v996
      %v1001 = vmul.f32 %v973, %v996
      %v1002 = vmul.f32 %v975, %v996
      %v1003 = vmul.f32 %v977, %v996
      %v1004 = vmul.f32 %v979, %v996
      %v1005 = vmul.f32 %v981, %v996
      %v1006 = vmul.f32 %v983, %v996
      %v1007 = vmul.f32 %v985, %v996
      %v1008 = vmul.f32 %v987, %v996
      %v1009 = vmul.f32 %v989, %v996
      %v1010 = vmul.f32 %v991, %v996
      %v1011 = vmul.f32 %v993, %v996
      %v1012 = vmul.f32 %v995, %v996
      %v1013 = vsub.f32 %v946, %v997
      %v1014 = vsub.f32 %v947, %v998
      %v1015 = vsub.f32 %v948, %v999
      %v1016 = vsub.f32 %v949, %v1000
      %v1017 = vsub.f32 %v950, %v1001
      %v1018 = vsub.f32 %v951, %v1002
      %v1019 = vsub.f32 %v952, %v1003
      %v1020 = vsub.f32 %v953, %v1004
      %v1021 = vsub.f32 %v954, %v1005
      %v1022 = vsub.f32 %v955, %v1006
      %v1023 = vsub.f32 %v956, %v1007
      %v1024 = vsub.f32 %v957, %v1008
      %v1025 = vsub.f32 %v958, %v1009
      %v1026 = vsub.f32 %v959, %v1010
      %v1027 = vsub.f32 %v960, %v1011
      %v1028 = vsub.f32 %v961, %v1012
      %v1029 = vmul.f32 %v1013, %v1013
      %v1030 = vmul.f32 %v1014, %v1014
      %v1031 = vmul.f32 %v1015, %v1015
      %v1032 = vmul.f32 %v1016, %v1016
      %v1033 = vmul.f32 %v1017, %v1017
      %v1034 = vmul.f32 %v1018, %v1018
      %v1035 = vmul.f32 %v1019, %v1019
      %v1036 = vmul.f32 %v1020, %v1020
      %v1037 = vmul.f32 %v1021, %v1021
      %v1038 = vmul.f32 %v1022, %v1022
      %v1039 = vmul.f32 %v1023, %v1023
      %v1040 = vmul.f32 %v1024, %v1024
      %v1041 = vmul.f32 %v1025, %v1025
      %v1042 = vmul.f32 %v1026, %v1026
      %v1043 = vmul.f32 %v1027, %v1027
      %v1044 = vmul.f32 %v1028, %v1028
      %1045 = vadd.xlane.f32.xlu0 %v1029
      %v1046 = vpop.xlane.xlu0 %1045
      %1047 = vadd.xlane.f32.xlu0 %v1030
      %v1048 = vpop.xlane.xlu0 %1047
      %1049 = vadd.xlane.f32.xlu0 %v1031
      %v1050 = vpop.xlane.xlu0 %1049
      %1051 = vadd.xlane.f32.xlu0 %v1032
      %v1052 = vpop.xlane.xlu0 %1051
      %1053 = vadd.xlane.f32.xlu0 %v1033
      %v1054 = vpop.xlane.xlu0 %1053
      %1055 = vadd.xlane.f32.xlu0 %v1034
      %v1056 = vpop.xlane.xlu0 %1055
      %1057 = vadd.xlane.f32.xlu0 %v1035
      %v1058 = vpop.xlane.xlu0 %1057
      %1059 = vadd.xlane.f32.xlu0 %v1036
      %v1060 = vpop.xlane.xlu0 %1059
      %1061 = vadd.xlane.f32.xlu0 %v1037
      %v1062 = vpop.xlane.xlu0 %1061
      %1063 = vadd.xlane.f32.xlu0 %v1038
      %v1064 = vpop.xlane.xlu0 %1063
      %1065 = vadd.xlane.f32.xlu0 %v1039
      %v1066 = vpop.xlane.xlu0 %1065
      %1067 = vadd.xlane.f32.xlu0 %v1040
      %v1068 = vpop.xlane.xlu0 %1067
      %1069 = vadd.xlane.f32.xlu0 %v1041
      %v1070 = vpop.xlane.xlu0 %1069
      %1071 = vadd.xlane.f32.xlu0 %v1042
      %v1072 = vpop.xlane.xlu0 %1071
      %1073 = vadd.xlane.f32.xlu0 %v1043
      %v1074 = vpop.xlane.xlu0 %1073
      %1075 = vadd.xlane.f32.xlu0 %v1044
      %v1076 = vpop.xlane.xlu0 %1075
      %v1077 = vmul.f32 %v1046, %v996
      %v1078 = vmul.f32 %v1048, %v996
      %v1079 = vmul.f32 %v1050, %v996
      %v1080 = vmul.f32 %v1052, %v996
      %v1081 = vmul.f32 %v1054, %v996
      %v1082 = vmul.f32 %v1056, %v996
      %v1083 = vmul.f32 %v1058, %v996
      %v1084 = vmul.f32 %v1060, %v996
      %v1085 = vmul.f32 %v1062, %v996
      %v1086 = vmul.f32 %v1064, %v996
      %v1087 = vmul.f32 %v1066, %v996
      %v1088 = vmul.f32 %v1068, %v996
      %v1089 = vmul.f32 %v1070, %v996
      %v1090 = vmul.f32 %v1072, %v996
      %v1091 = vmul.f32 %v1074, %v996
      %v1092 = vmul.f32 %v1076, %v996
      %v1093 = vadd.f32 %v1077, 1e-12
      %v1094 = vadd.f32 %v1078, 1e-12
      %v1095 = vadd.f32 %v1079, 1e-12
      %v1096 = vadd.f32 %v1080, 1e-12
      %v1097 = vadd.f32 %v1081, 1e-12
      %v1098 = vadd.f32 %v1082, 1e-12
      %v1099 = vadd.f32 %v1083, 1e-12
      %v1100 = vadd.f32 %v1084, 1e-12
      %v1101 = vadd.f32 %v1085, 1e-12
      %v1102 = vadd.f32 %v1086, 1e-12
      %v1103 = vadd.f32 %v1087, 1e-12
      %v1104 = vadd.f32 %v1088, 1e-12
      %v1105 = vadd.f32 %v1089, 1e-12
      %v1106 = vadd.f32 %v1090, 1e-12
      %v1107 = vadd.f32 %v1091, 1e-12
      %v1108 = vadd.f32 %v1092, 1e-12
      %v1109 = vrsqrt.pop %v1093
      %v1110 = vrsqrt.pop %v1094
      %v1111 = vrsqrt.pop %v1095
      %v1112 = vrsqrt.pop %v1096
      %v1113 = vrsqrt.pop %v1097
      %v1114 = vrsqrt.pop %v1098
      %v1115 = vrsqrt.pop %v1099
      %v1116 = vrsqrt.pop %v1100
      %v1117 = vrsqrt.pop %v1101
      %v1118 = vrsqrt.pop %v1102
      %v1119 = vrsqrt.pop %v1103
      %v1120 = vrsqrt.pop %v1104
      %v1121 = vrsqrt.pop %v1105
      %v1122 = vrsqrt.pop %v1106
      %v1123 = vrsqrt.pop %v1107
      %v1124 = vrsqrt.pop %v1108
      %v1125 = vmul.f32 %v1013, %v1109
      %v1126 = vmul.f32 %v1014, %v1110
      %v1127 = vmul.f32 %v1015, %v1111
      %v1128 = vmul.f32 %v1016, %v1112
      %v1129 = vmul.f32 %v1017, %v1113
      %v1130 = vmul.f32 %v1018, %v1114
      %v1131 = vmul.f32 %v1019, %v1115
      %v1132 = vmul.f32 %v1020, %v1116
      %v1133 = vmul.f32 %v1021, %v1117
      %v1134 = vmul.f32 %v1022, %v1118
      %v1135 = vmul.f32 %v1023, %v1119
      %v1136 = vmul.f32 %v1024, %v1120
      %v1137 = vmul.f32 %v1025, %v1121
      %v1138 = vmul.f32 %v1026, %v1122
      %v1139 = vmul.f32 %v1027, %v1123
      %v1140 = vmul.f32 %v1028, %v1124
      %v1142 = vlaneseq
      %v1143 = vshrl.u32 %v1142, 7
      %v1144 = vsub.s32 0, %v1143
      %v1145 = vrot.slane %v962, %v1144
      %v1147 = vmul.f32 %v1125, %v1145
      %v1148 = vmul.f32 %v1126, %v1145
      %v1149 = vmul.f32 %v1127, %v1145
      %v1150 = vmul.f32 %v1128, %v1145
      %v1151 = vmul.f32 %v1129, %v1145
      %v1152 = vmul.f32 %v1130, %v1145
      %v1153 = vmul.f32 %v1131, %v1145
      %v1154 = vmul.f32 %v1132, %v1145
      %v1155 = vmul.f32 %v1133, %v1145
      %v1156 = vmul.f32 %v1134, %v1145
      %v1157 = vmul.f32 %v1135, %v1145
      %v1158 = vmul.f32 %v1136, %v1145
      %v1159 = vmul.f32 %v1137, %v1145
      %v1160 = vmul.f32 %v1138, %v1145
      %v1161 = vmul.f32 %v1139, %v1145
      %v1162 = vmul.f32 %v1140, %v1145
      %v1164 = vlaneseq
      %v1165 = vshrl.u32 %v1164, 7
      %v1166 = vsub.s32 0, %v1165
      %v1167 = vrot.slane %v963, %v1166
      %v1169 = vadd.f32 %v1147, %v1167
      %v1170 = vadd.f32 %v1148, %v1167
      %v1171 = vadd.f32 %v1149, %v1167
      %v1172 = vadd.f32 %v1150, %v1167
      %v1173 = vadd.f32 %v1151, %v1167
      %v1174 = vadd.f32 %v1152, %v1167
      %v1175 = vadd.f32 %v1153, %v1167
      %v1176 = vadd.f32 %v1154, %v1167
      %v1177 = vadd.f32 %v1155, %v1167
      %v1178 = vadd.f32 %v1156, %v1167
      %v1179 = vadd.f32 %v1157, %v1167
      %v1180 = vadd.f32 %v1158, %v1167
      %v1181 = vadd.f32 %v1159, %v1167
      %v1182 = vadd.f32 %v1160, %v1167
      %v1183 = vadd.f32 %v1161, %v1167
      %v1184 = vadd.f32 %v1162, %v1167
      %1185 = vst [vmem:[%s278] sm:$0xff] %v1169
      %1186 = vst [vmem:[%s278 + $0x8] sm:$0xff] %v1170
      %1187 = vst [vmem:[%s278 + $0x10] sm:$0xff] %v1171
      %1188 = vst [vmem:[%s278 + $0x18] sm:$0xff] %v1172
      %1189 = vst [vmem:[%s278 + $0x20] sm:$0xff] %v1173
      %1190 = vst [vmem:[%s278 + $0x28] sm:$0xff] %v1174
      %1191 = vst [vmem:[%s278 + $0x30] sm:$0xff] %v1175
      %1192 = vst [vmem:[%s278 + $0x38] sm:$0xff] %v1176
      %1193 = vst [vmem:[%s278 + $0x40] sm:$0xff] %v1177
      %1194 = vst [vmem:[%s278 + $0x48] sm:$0xff] %v1178
      %1195 = vst [vmem:[%s278 + $0x50] sm:$0xff] %v1179
      %1196 = vst [vmem:[%s278 + $0x58] sm:$0xff] %v1180
      %1197 = vst [vmem:[%s278 + $0x60] sm:$0xff] %v1181
      %1198 = vst [vmem:[%s278 + $0x68] sm:$0xff] %v1182
      %1199 = vst [vmem:[%s278 + $0x70] sm:$0xff] %v1183
      %1200 = vst [vmem:[%s278 + $0x78] sm:$0xff] %v1184
      %s1201 = smul.u32 16, %s17
      %p1202 = scmp.lt.s32.totalorder %s1201, 31
      %s1203 = scalar_select %p1202, %s1201, 31
      %s1204 = smul.addr %s1203, 8
      %s1205 = scalar_lea.vmem %s6, %s1204
      // Predicated region
      $region45: #{encoder_forward.16} parent=43 // pred_check
        %p1206 = pneg %p171
      $region46: #{encoder_forward.16} parent=43 // pred_check_branch
        %1208 = sbr.rel (%p1206) target = $region48
      $region47: #{encoder_forward.16} parent=43 // pred_region
        %s1209 = smul.u32 16, %s17
      $region48: #{encoder_forward.16} parent=43 // pred_fallthru
        _
    $region44: #{encoder_forward.16} parent=5 // pred_fallthru
      _
    %p1210 = scmp.le.s32.totalorder 2, %s12
    // Predicated region
    $region49: #{encoder_forward.16} parent=5 // pred_check
      %p1211 = pneg %p1210
    $region50: #{encoder_forward.16} parent=5 // pred_check_branch
      %1213 = sbr.rel (%p1211) target = $region52
    $region51: #{encoder_forward.16} parent=5 // pred_region
      %s1214 = ssub.s32 %s12, 2
      // Predicated region
      $region53: #{encoder_forward.16} parent=51 // pred_check
        %p1215 = pneg %p177
      $region54: #{encoder_forward.16} parent=51 // pred_check_branch
        %1217 = sbr.rel (%p1215) target = $region56
      $region55: #{encoder_forward.16} parent=51 // pred_region
        %s1218 = smul.u32 16, %s18
        %p1219 = scmp.lt.s32.totalorder %s1218, 31
        %s1220 = scalar_select %p1219, %s1218, 31
        %s1221 = smul.addr %s1220, 8
        %s1222 = scalar_lea.vmem %s6, %s1221
      $region56: #{encoder_forward.16} parent=51 // pred_fallthru
        _
    $region52: #{encoder_forward.16} parent=5 // pred_fallthru
      _
  $region6: #{encoder_forward.16} parent=0 // loop_footer
    %s16 = sadd.s32 1, %s12
  $region7: #{encoder_forward.16} parent=0 // loop_footer_branch
    %11 = sbr.rel target = $region3
  $region8: #{encoder_forward.16} parent=0 // loop_exit
    _

// kernel: encoder_forward.21
$region0: #{encoder_forward.21}
  #allocation0 [shape = 'u32[]', space=smem, size = 0x4, offset = 0x4, fixed_abs, tag = 'smem constant byte address 0x4 - core index']
  #allocation1 [shape = 'u32[144,128]{1,0:T(1,128)}', space=vmem, size = 0x12000, scoped, tag = 'internal scratch']
  %s0 = inlined_call_operand.vmem [shape: bf16[256,512], index: 0, kind: input, shape index: {}]
  %s1 = inlined_call_operand.vmem [shape: bf16[512,128], index: 1, kind: input, shape index: {}]
  %s2 = inlined_call_operand.vmem [shape: f32[1,128], index: 2, kind: input, shape index: {}]
  %s3 = inlined_call_operand.vmem [shape: f32[256,128], index: 3, kind: input, shape index: {}]
  %s4 = inlined_call_operand.vmem [shape: f32[1,128], index: 4, kind: input, shape index: {}]
  %s5 = inlined_call_operand.vmem [shape: f32[1,128], index: 5, kind: input, shape index: {}]
  %s6 = inlined_call_operand.hbm [shape: f32[256,128], index: 6, kind: output, shape index: {}]
  %s7 = sld [smem:[#allocation0]]
  $region57: #{encoder_forward.21} parent=0
    _
  %s9 = ssub.s32 1, %s7
  %s10 = scalar_select 0, %s9, %s7
  $region1: #{encoder_forward.21} parent=0
    #allocation2 [shape = 'u8[131072]{0}', space=vmem, size = 0x20000, scoped, tag = 'output window, operand 0']
    #allocation3 [shape = 's32[2]{0}', space=sflag, size = 0x8, scoped, tag = 'scoped memory for encoder_forward.21']
    %11 = vsyncpa [#allocation3], 0
    %s12 = scalar_lea.sflag [#allocation3], 1
    %13 = vsyncpa %s12, 0
    loop: start=0, step=1, limit=4
    $region2: #{encoder_forward.21} parent=1 // loop_pre_header
      _
    $region3: #{encoder_forward.21} parent=1 // loop_header
      %s15 = sphi 0, %s19
      %p16 = scmp.ge.s32.totalorder %s15, 4
      %s25 = sphi 0, %s27
      %s28 = sphi 0, %s25
      %s29 = sphi 0, %s28
      %s45 = sphi 0, %s29
      %s49 = sphi 0, %s49
      %s51 = sphi 0, %s49
      %s52 = sphi 0, %s51
      %s66 = sphi 0, %s52
      %s70 = sphi 0, %s70
      %s72 = sphi 0, %s70
      %s73 = sphi 0, %s72
      %s87 = sphi 0, %s73
      %s93 = sphi 0, %s95
      %s96 = sphi 0, %s93
      %s97 = sphi 0, %s96
      %s113 = sphi 0, %s97
      %s117 = sphi 0, %s117
      %s119 = sphi 0, %s117
      %s120 = sphi 0, %s119
      %s134 = sphi 0, %s120
      %s138 = sphi 0, %s138
      %s140 = sphi 0, %s138
      %s141 = sphi 0, %s140
      %s155 = sphi 0, %s141
      %s161 = sphi 0, %s163
      %s164 = sphi 0, %s161
      %s165 = sphi 0, %s164
      %s181 = sphi 0, %s165
    $region4: #{encoder_forward.21} parent=1 // loop_header_branch
      %18 = sbr.rel (%p16) target = $region8
    $region5: #{encoder_forward.21} parent=1 // loop_body
      %s20 = ssub.s32 %s15, 1
      %s21 = ssub.s32 %s15, 2
      %s22 = sadd.s32 %s15, 1
      %s23 = ssub.s32 %s15, %s22
      %p24 = scmp.eq.s32.totalorder %s23, 0
      %s26 = sadd.s32 %s25, 1
      %s27 = scalar_select %p24, %s25, %s26
      %p30 = pneg %p24
      %p31 = scmp.eq.s32.totalorder %s15, 1
      %p32 = por %p30, %p31
      %p33 = scmp.ne.s32.totalorder %s25, %s28
      %p34 = scmp.eq.s32.totalorder %s15, 0
      %p35 = por %p33, %p34
      %p36 = scmp.ne.s32.totalorder %s25, %s28
      %p37 = scmp.eq.s32.totalorder %s20, 1
      %p38 = por %p36, %p37
      %p39 = scmp.ne.s32.totalorder %s28, %s29
      %p40 = scmp.eq.s32.totalorder %s20, 0
      %p41 = por %p39, %p40
      %p42 = scmp.ne.s32.totalorder %s28, %s29
      %p43 = scmp.eq.s32.totalorder %s21, 1
      %p44 = por %p42, %p43
      %p46 = scmp.ne.s32.totalorder %s29, %s45
      %p47 = scmp.eq.s32.totalorder %s21, 0
      %p48 = por %p46, %p47
      %s50 = sadd.s32 %s49, 1
      %p53 = scmp.eq.s32.totalorder %s15, 1
      %p54 = scmp.ne.s32.totalorder %s49, %s51
      %p55 = scmp.eq.s32.totalorder %s15, 0
      %p56 = por %p54, %p55
      %p57 = scmp.ne.s32.totalorder %s49, %s51
      %p58 = scmp.eq.s32.totalorder %s20, 1
      %p59 = por %p57, %p58
      %p60 = scmp.ne.s32.totalorder %s51, %s52
      %p61 = scmp.eq.s32.totalorder %s20, 0
      %p62 = por %p60, %p61
      %p63 = scmp.ne.s32.totalorder %s51, %s52
      %p64 = scmp.eq.s32.totalorder %s21, 1
      %p65 = por %p63, %p64
      %p67 = scmp.ne.s32.totalorder %s52, %s66
      %p68 = scmp.eq.s32.totalorder %s21, 0
      %p69 = por %p67, %p68
      %s71 = sadd.s32 %s70, 1
      %p74 = scmp.eq.s32.totalorder %s15, 1
      %p75 = scmp.ne.s32.totalorder %s70, %s72
      %p76 = scmp.eq.s32.totalorder %s15, 0
      %p77 = por %p75, %p76
      %p78 = scmp.ne.s32.totalorder %s70, %s72
      %p79 = scmp.eq.s32.totalorder %s20, 1
      %p80 = por %p78, %p79
      %p81 = scmp.ne.s32.totalorder %s72, %s73
      %p82 = scmp.eq.s32.totalorder %s20, 0
      %p83 = por %p81, %p82
      %p84 = scmp.ne.s32.totalorder %s72, %s73
      %p85 = scmp.eq.s32.totalorder %s21, 1
      %p86 = por %p84, %p85
      %p88 = scmp.ne.s32.totalorder %s73, %s87
      %p89 = scmp.eq.s32.totalorder %s21, 0
      %p90 = por %p88, %p89
      %s91 = ssub.s32 %s15, %s22
      %p92 = scmp.eq.s32.totalorder %s91, 0
      %s94 = sadd.s32 %s93, 1
      %s95 = scalar_select %p92, %s93, %s94
      %p98 = pneg %p92
      %p99 = scmp.eq.s32.totalorder %s15, 1
      %p100 = por %p98, %p99
      %p101 = scmp.ne.s32.totalorder %s93, %s96
      %p102 = scmp.eq.s32.totalorder %s15, 0
      %p103 = por %p101, %p102
      %p104 = scmp.ne.s32.totalorder %s93, %s96
      %p105 = scmp.eq.s32.totalorder %s20, 1
      %p106 = por %p104, %p105
      %p107 = scmp.ne.s32.totalorder %s96, %s97
      %p108 = scmp.eq.s32.totalorder %s20, 0
      %p109 = por %p107, %p108
      %p110 = scmp.ne.s32.totalorder %s96, %s97
      %p111 = scmp.eq.s32.totalorder %s21, 1
      %p112 = por %p110, %p111
      %p114 = scmp.ne.s32.totalorder %s97, %s113
      %p115 = scmp.eq.s32.totalorder %s21, 0
      %p116 = por %p114, %p115
      %s118 = sadd.s32 %s117, 1
      %p121 = scmp.eq.s32.totalorder %s15, 1
      %p122 = scmp.ne.s32.totalorder %s117, %s119
      %p123 = scmp.eq.s32.totalorder %s15, 0
      %p124 = por %p122, %p123
      %p125 = scmp.ne.s32.totalorder %s117, %s119
      %p126 = scmp.eq.s32.totalorder %s20, 1
      %p127 = por %p125, %p126
      %p128 = scmp.ne.s32.totalorder %s119, %s120
      %p129 = scmp.eq.s32.totalorder %s20, 0
      %p130 = por %p128, %p129
      %p131 = scmp.ne.s32.totalorder %s119, %s120
      %p132 = scmp.eq.s32.totalorder %s21, 1
      %p133 = por %p131, %p132
      %p135 = scmp.ne.s32.totalorder %s120, %s134
      %p136 = scmp.eq.s32.totalorder %s21, 0
      %p137 = por %p135, %p136
      %s139 = sadd.s32 %s138, 1
      %p142 = scmp.eq.s32.totalorder %s15, 1
      %p143 = scmp.ne.s32.totalorder %s138, %s140
      %p144 = scmp.eq.s32.totalorder %s15, 0
      %p145 = por %p143, %p144
      %p146 = scmp.ne.s32.totalorder %s138, %s140
      %p147 = scmp.eq.s32.totalorder %s20, 1
      %p148 = por %p146, %p147
      %p149 = scmp.ne.s32.totalorder %s140, %s141
      %p150 = scmp.eq.s32.totalorder %s20, 0
      %p151 = por %p149, %p150
      %p152 = scmp.ne.s32.totalorder %s140, %s141
      %p153 = scmp.eq.s32.totalorder %s21, 1
      %p154 = por %p152, %p153
      %p156 = scmp.ne.s32.totalorder %s141, %s155
      %p157 = scmp.eq.s32.totalorder %s21, 0
      %p158 = por %p156, %p157
      %s159 = ssub.s32 %s15, %s22
      %p160 = scmp.eq.s32.totalorder %s159, 0
      %s162 = sadd.s32 %s161, 1
      %s163 = scalar_select %p160, %s161, %s162
      %p166 = pneg %p160
      %p167 = scmp.eq.s32.totalorder %s15, 1
      %p168 = por %p166, %p167
      %p169 = scmp.ne.s32.totalorder %s161, %s164
      %p170 = scmp.eq.s32.totalorder %s15, 0
      %p171 = por %p169, %p170
      %p172 = scmp.ne.s32.totalorder %s161, %s164
      %p173 = scmp.eq.s32.totalorder %s20, 1
      %p174 = por %p172, %p173
      %p175 = scmp.ne.s32.totalorder %s164, %s165
      %p176 = scmp.eq.s32.totalorder %s20, 0
      %p177 = por %p175, %p176
      %p178 = scmp.ne.s32.totalorder %s164, %s165
      %p179 = scmp.eq.s32.totalorder %s21, 1
      %p180 = por %p178, %p179
      %p182 = scmp.ne.s32.totalorder %s165, %s181
      %p183 = scmp.eq.s32.totalorder %s21, 0
      %p184 = por %p182, %p183
      %p185 = scmp.le.s32.totalorder 1, %s15
      %p186 = scmp.lt.s32.totalorder %s15, 3
      %p187 = pnand %p185, %p186
      %p188 = pneg %p187
      // Predicated region
      $region9: #{encoder_forward.21} parent=5 // pred_check
        _
      $region10: #{encoder_forward.21} parent=5 // pred_check_branch
        %190 = sbr.rel (%p187) target = $region12
      $region11: #{encoder_forward.21} parent=5 // pred_region
        %s191 = ssub.s32 %s15, 1
        // Predicated region
        $region13: #{encoder_forward.21} parent=11 // pred_check
          %p192 = pneg %p62
        $region14: #{encoder_forward.21} parent=11 // pred_check_branch
          %194 = sbr.rel (%p192) target = $region16
        $region15: #{encoder_forward.21} parent=11 // pred_region
          _
        $region16: #{encoder_forward.21} parent=11 // pred_fallthru
          _
        // Predicated region
        $region17: #{encoder_forward.21} parent=11 // pred_check
          %p195 = pneg %p83
        $region18: #{encoder_forward.21} parent=11 // pred_check_branch
          %197 = sbr.rel (%p195) target = $region20
        $region19: #{encoder_forward.21} parent=11 // pred_region
          _
        $region20: #{encoder_forward.21} parent=11 // pred_fallthru
          _
        // Predicated region
        $region21: #{encoder_forward.21} parent=11 // pred_check
          %p198 = pneg %p130
        $region22: #{encoder_forward.21} parent=11 // pred_check_branch
          %200 = sbr.rel (%p198) target = $region24
        $region23: #{encoder_forward.21} parent=11 // pred_region
          _
        $region24: #{encoder_forward.21} parent=11 // pred_fallthru
          _
        // Predicated region
        $region25: #{encoder_forward.21} parent=11 // pred_check
          %p201 = pneg %p151
        $region26: #{encoder_forward.21} parent=11 // pred_check_branch
          %203 = sbr.rel (%p201) target = $region28
        $region27: #{encoder_forward.21} parent=11 // pred_region
          _
        $region28: #{encoder_forward.21} parent=11 // pred_fallthru
          _
      $region12: #{encoder_forward.21} parent=5 // pred_fallthru
        _
      %p204 = scmp.lt.s32.totalorder %s15, 2
      // Predicated region
      $region29: #{encoder_forward.21} parent=5 // pred_check
        %p205 = pneg %p204
      $region30: #{encoder_forward.21} parent=5 // pred_check_branch
        %207 = sbr.rel (%p205) target = $region32
      $region31: #{encoder_forward.21} parent=5 // pred_region
        // Predicated region
        $region33: #{encoder_forward.21} parent=31 // pred_check
          %p208 = pneg %p35
        $region34: #{encoder_forward.21} parent=31 // pred_check_branch
          %210 = sbr.rel (%p208) target = $region36
        $region35: #{encoder_forward.21} parent=31 // pred_region
          %s211 = smul.u32 16, %s15
          %p212 = scmp.lt.s32.totalorder %s211, 31
          %s213 = scalar_select %p212, %s211, 31
          %s214 = smul.addr %s213, 4
          %s215 = smul.addr %s214, 4
          %s216 = scalar_lea.vmem %s0, %s215
          %s217 = smul.u32 16, %s15
        $region36: #{encoder_forward.21} parent=31 // pred_fallthru
          _
        // Predicated region
        $region37: #{encoder_forward.21} parent=31 // pred_check
          %p218 = pneg %p103
        $region38: #{encoder_forward.21} parent=31 // pred_check_branch
          %220 = sbr.rel (%p218) target = $region40
        $region39: #{encoder_forward.21} parent=31 // pred_region
          %s221 = smul.u32 16, %s15
          %p222 = scmp.lt.s32.totalorder %s221, 31
          %s223 = scalar_select %p222, %s221, 31
          %s224 = smul.addr %s223, 8
          %s225 = scalar_lea.vmem %s3, %s224
          %s226 = smul.u32 16, %s15
        $region40: #{encoder_forward.21} parent=31 // pred_fallthru
          _
      $region32: #{encoder_forward.21} parent=5 // pred_fallthru
        _
      %p227 = scmp.le.s32.totalorder 1, %s15
      %p228 = scmp.lt.s32.totalorder %s15, 3
      %p229 = pnand %p227, %p228
      %p230 = pneg %p229
      // Predicated region
      $region41: #{encoder_forward.21} parent=5 // pred_check
        _
      $region42: #{encoder_forward.21} parent=5 // pred_check_branch
        %232 = sbr.rel (%p229) target = $region44
      $region43: #{encoder_forward.21} parent=5 // pred_region
        %s233 = ssub.s32 %s15, 1
        %s234 = smul.u32 16, %s20
        %p235 = scmp.lt.s32.totalorder %s234, 31
        %s236 = scalar_select %p235, %s234, 31
        %s237 = smul.addr %s236, 4
        %s238 = smul.addr %s237, 4
        %s239 = scalar_lea.vmem %s0, %s238
        %p240 = pneg %p41
        %p241 = pneg %p38
        %p242 = pneg %p62
        %p243 = pneg %p59
        %p244 = pneg %p83
        %p245 = pneg %p80
        %s246 = smul.u32 16, %s20
        %p247 = scmp.lt.s32.totalorder %s246, 31
        %s248 = scalar_select %p247, %s246, 31
        %s249 = smul.addr %s248, 8
        %s250 = scalar_lea.vmem %s3, %s249
        %p251 = pneg %p109
        %p252 = pneg %p106
        %p253 = pneg %p130
        %p254 = pneg %p127
        %p255 = pneg %p151
        %p256 = pneg %p148
        %p257 = pneg %p177
        %p258 = pneg %p174
        %s259 = sand.u32 %s164, 1
        %s260 = scalar_lea.sflag [#allocation3], %s259
        %s261 = sand.u32 %s164, 1
        %s262 = smul.addr %s261, 128
        %s263 = scalar_lea.vmem [#allocation2], %s262
        %s264 = smul.u32 16, %s20
        %p265 = scmp.lt.s32.totalorder %s264, 31
        %s266 = scalar_select %p265, %s264, 31
        %s267 = smul.addr %s266, 4
        %s268 = smul.addr %s267, 4
        %s269 = scalar_lea.vmem %s0, %s268
        %s270 = smul.u32 16, %s20
        %s271 = smul.u32 16, %s20
        %p272 = scmp.lt.s32.totalorder %s271, 31
        %s273 = scalar_select %p272, %s271, 31
        %s274 = smul.addr %s273, 8
        %s275 = scalar_lea.vmem %s3, %s274
        %s276 = smul.u32 16, %s20
        %s277 = smul.u32 16, %s20
        %v279 = vld [vmem:[%s269] sm:$0xff]
        %v280 = vld [vmem:[%s269 + $0x8] sm:$0xff]
        %v281 = vld [vmem:[%s269 + $0x10] sm:$0xff]
        %v282 = vld [vmem:[%s269 + $0x18] sm:$0xff]
        %v283 = vld [vmem:[%s269 + $0x20] sm:$0xff]
        %v284 = vld [vmem:[%s269 + $0x28] sm:$0xff]
        %v285 = vld [vmem:[%s269 + $0x30] sm:$0xff]
        %v286 = vld [vmem:[%s269 + $0x38] sm:$0xff]
        %v287 = vld [vmem:[%s269 + $0x40] sm:$0xff]
        %v288 = vld [vmem:[%s269 + $0x48] sm:$0xff]
        %v289 = vld [vmem:[%s269 + $0x50] sm:$0xff]
        %v290 = vld [vmem:[%s269 + $0x58] sm:$0xff]
        %v291 = vld [vmem:[%s269 + $0x60] sm:$0xff]
        %v292 = vld [vmem:[%s269 + $0x68] sm:$0xff]
        %v293 = vld [vmem:[%s269 + $0x70] sm:$0xff]
        %v294 = vld [vmem:[%s269 + $0x78] sm:$0xff]
        %v295 = vld [vmem:[%s269 + $0x80] sm:$0xff]
        %v296 = vld [vmem:[%s269 + $0x88] sm:$0xff]
        %v297 = vld [vmem:[%s269 + $0x90] sm:$0xff]
        %v298 = vld [vmem:[%s269 + $0x98] sm:$0xff]
        %v299 = vld [vmem:[%s269 + $0xa0] sm:$0xff]
        %v300 = vld [vmem:[%s269 + $0xa8] sm:$0xff]
        %v301 = vld [vmem:[%s269 + $0xb0] sm:$0xff]
        %v302 = vld [vmem:[%s269 + $0xb8] sm:$0xff]
        %v303 = vld [vmem:[%s269 + $0xc0] sm:$0xff]
        %v304 = vld [vmem:[%s269 + $0xc8] sm:$0xff]
        %v305 = vld [vmem:[%s269 + $0xd0] sm:$0xff]
        %v306 = vld [vmem:[%s269 + $0xd8] sm:$0xff]
        %v307 = vld [vmem:[%s269 + $0xe0] sm:$0xff]
        %v308 = vld [vmem:[%s269 + $0xe8] sm:$0xff]
        %v309 = vld [vmem:[%s269 + $0xf0] sm:$0xff]
        %v310 = vld [vmem:[%s269 + $0xf8] sm:$0xff]
        %v311 = vld [vmem:[%s1] sm:$0xf]
        %v312 = vld [vmem:[%s1 + $0x4] sm:$0xf]
        %v313 = vld [vmem:[%s1 + $0x8] sm:$0xf]
        %v314 = vld [vmem:[%s1 + $0xc] sm:$0xf]
        %v315 = vld [vmem:[%s1 + $0x10] sm:$0xf]
        %v316 = vld [vmem:[%s1 + $0x14] sm:$0xf]
        %v317 = vld [vmem:[%s1 + $0x18] sm:$0xf]
        %v318 = vld [vmem:[%s1 + $0x1c] sm:$0xf]
        %v319 = vld [vmem:[%s1 + $0x20] sm:$0xf]
        %v320 = vld [vmem:[%s1 + $0x24] sm:$0xf]
        %v321 = vld [vmem:[%s1 + $0x28] sm:$0xf]
        %v322 = vld [vmem:[%s1 + $0x2c] sm:$0xf]
        %v323 = vld [vmem:[%s1 + $0x30] sm:$0xf]
        %v324 = vld [vmem:[%s1 + $0x34] sm:$0xf]
        %v325 = vld [vmem:[%s1 + $0x38] sm:$0xf]
        %v326 = vld [vmem:[%s1 + $0x3c] sm:$0xf]
        %v327 = vld [vmem:[%s1 + $0x40] sm:$0xf]
        %v328 = vld [vmem:[%s1 + $0x44] sm:$0xf]
        %v329 = vld [vmem:[%s1 + $0x48] sm:$0xf]
        %v330 = vld [vmem:[%s1 + $0x4c] sm:$0xf]
        %v331 = vld [vmem:[%s1 + $0x50] sm:$0xf]
        %v332 = vld [vmem:[%s1 + $0x54] sm:$0xf]
        %v333 = vld [vmem:[%s1 + $0x58] sm:$0xf]
        %v334 = vld [vmem:[%s1 + $0x5c] sm:$0xf]
        %v335 = vld [vmem:[%s1 + $0x60] sm:$0xf]
        %v336 = vld [vmem:[%s1 + $0x64] sm:$0xf]
        %v337 = vld [vmem:[%s1 + $0x68] sm:$0xf]
        %v338 = vld [vmem:[%s1 + $0x6c] sm:$0xf]
        %v339 = vld [vmem:[%s1 + $0x70] sm:$0xf]
        %v340 = vld [vmem:[%s1 + $0x74] sm:$0xf]
        %v341 = vld [vmem:[%s1 + $0x78] sm:$0xf]
        %v342 = vld [vmem:[%s1 + $0x7c] sm:$0xf]
        %v343 = vld [vmem:[%s1 + $0x80] sm:$0xf]
        %v344 = vld [vmem:[%s1 + $0x84] sm:$0xf]
        %v345 = vld [vmem:[%s1 + $0x88] sm:$0xf]
        %v346 = vld [vmem:[%s1 + $0x8c] sm:$0xf]
        %v347 = vld [vmem:[%s1 + $0x90] sm:$0xf]
        %v348 = vld [vmem:[%s1 + $0x94] sm:$0xf]
        %v349 = vld [vmem:[%s1 + $0x98] sm:$0xf]
        %v350 = vld [vmem:[%s1 + $0x9c] sm:$0xf]
        %v351 = vld [vmem:[%s1 + $0xa0] sm:$0xf]
        %v352 = vld [vmem:[%s1 + $0xa4] sm:$0xf]
        %v353 = vld [vmem:[%s1 + $0xa8] sm:$0xf]
        %v354 = vld [vmem:[%s1 + $0xac] sm:$0xf]
        %v355 = vld [vmem:[%s1 + $0xb0] sm:$0xf]
        %v356 = vld [vmem:[%s1 + $0xb4] sm:$0xf]
        %v357 = vld [vmem:[%s1 + $0xb8] sm:$0xf]
        %v358 = vld [vmem:[%s1 + $0xbc] sm:$0xf]
        %v359 = vld [vmem:[%s1 + $0xc0] sm:$0xf]
        %v360 = vld [vmem:[%s1 + $0xc4] sm:$0xf]
        %v361 = vld [vmem:[%s1 + $0xc8] sm:$0xf]
        %v362 = vld [vmem:[%s1 + $0xcc] sm:$0xf]
        %v363 = vld [vmem:[%s1 + $0xd0] sm:$0xf]
        %v364 = vld [vmem:[%s1 + $0xd4] sm:$0xf]
        %v365 = vld [vmem:[%s1 + $0xd8] sm:$0xf]
        %v366 = vld [vmem:[%s1 + $0xdc] sm:$0xf]
        %v367 = vld [vmem:[%s1 + $0xe0] sm:$0xf]
        %v368 = vld [vmem:[%s1 + $0xe4] sm:$0xf]
        %v369 = vld [vmem:[%s1 + $0xe8] sm:$0xf]
        %v370 = vld [vmem:[%s1 + $0xec] sm:$0xf]
        %v371 = vld [vmem:[%s1 + $0xf0] sm:$0xf]
        %v372 = vld [vmem:[%s1 + $0xf4] sm:$0xf]
        %v373 = vld [vmem:[%s1 + $0xf8] sm:$0xf]
        %v374 = vld [vmem:[%s1 + $0xfc] sm:$0xf]
        %v375 = vld [vmem:[%s2] sm:$0x1]
        %v377 = vlaneseq
        %v378 = vshrl.u32 %v377, 7
        %v379 = vsub.s32 0, %v378
        %v380 = vrot.slane %v375, %v379
        %v414 = vunpack.c.l.b16 %v279
        %v415 = vunpack.c.h.b16 %v279
        %v416 = vunpack.c.l.b16 %v280
        %v417 = vunpack.c.h.b16 %v280
        %v418 = vunpack.c.l.b16 %v281
        %v419 = vunpack.c.h.b16 %v281
        %v420 = vunpack.c.l.b16 %v282
        %v421 = vunpack.c.h.b16 %v282
        %v422 = vunpack.c.l.b16 %v283
        %v423 = vunpack.c.h.b16 %v283
        %v424 = vunpack.c.l.b16 %v284
        %v425 = vunpack.c.h.b16 %v284
        %v426 = vunpack.c.l.b16 %v285
        %v427 = vunpack.c.h.b16 %v285
        %v428 = vunpack.c.l.b16 %v286
        %v429 = vunpack.c.h.b16 %v286
        %v430 = vunpack.c.l.b16 %v287
        %v431 = vunpack.c.h.b16 %v287
        %v432 = vunpack.c.l.b16 %v288
        %v433 = vunpack.c.h.b16 %v288
        %v434 = vunpack.c.l.b16 %v289
        %v435 = vunpack.c.h.b16 %v289
        %v436 = vunpack.c.l.b16 %v290
        %v437 = vunpack.c.h.b16 %v290
        %v438 = vunpack.c.l.b16 %v291
        %v439 = vunpack.c.h.b16 %v291
        %v440 = vunpack.c.l.b16 %v292
        %v441 = vunpack.c.h.b16 %v292
        %v442 = vunpack.c.l.b16 %v293
        %v443 = vunpack.c.h.b16 %v293
        %v444 = vunpack.c.l.b16 %v294
        %v445 = vunpack.c.h.b16 %v294
        %v446 = vunpack.c.l.b16 %v295
        %v447 = vunpack.c.h.b16 %v295
        %v448 = vunpack.c.l.b16 %v296
        %v449 = vunpack.c.h.b16 %v296
        %v450 = vunpack.c.l.b16 %v297
        %v451 = vunpack.c.h.b16 %v297
        %v452 = vunpack.c.l.b16 %v298
        %v453 = vunpack.c.h.b16 %v298
        %v454 = vunpack.c.l.b16 %v299
        %v455 = vunpack.c.h.b16 %v299
        %v456 = vunpack.c.l.b16 %v300
        %v457 = vunpack.c.h.b16 %v300
        %v458 = vunpack.c.l.b16 %v301
        %v459 = vunpack.c.h.b16 %v301
        %v460 = vunpack.c.l.b16 %v302
        %v461 = vunpack.c.h.b16 %v302
        %v462 = vunpack.c.l.b16 %v303
        %v463 = vunpack.c.h.b16 %v303
        %v464 = vunpack.c.l.b16 %v304
        %v465 = vunpack.c.h.b16 %v304
        %v466 = vunpack.c.l.b16 %v305
        %v467 = vunpack.c.h.b16 %v305
        %v468 = vunpack.c.l.b16 %v306
        %v469 = vunpack.c.h.b16 %v306
        %v470 = vunpack.c.l.b16 %v307
        %v471 = vunpack.c.h.b16 %v307
        %v472 = vunpack.c.l.b16 %v308
        %v473 = vunpack.c.h.b16 %v308
        %v474 = vunpack.c.l.b16 %v309
        %v475 = vunpack.c.h.b16 %v309
        %v476 = vunpack.c.l.b16 %v310
        %v477 = vunpack.c.h.b16 %v310
        %v478 = vpack.c.b16 %v418, %v414
        %v479 = vpack.c.b16 %v419, %v415
        %v480 = vpack.c.b16 %v420, %v416
        %v481 = vpack.c.b16 %v421, %v417
        %v482 = vpack.c.b16 %v426, %v422
        %v483 = vpack.c.b16 %v427, %v423
        %v484 = vpack.c.b16 %v428, %v424
        %v485 = vpack.c.b16 %v429, %v425
        %v486 = vpack.c.b16 %v434, %v430
        %v487 = vpack.c.b16 %v435, %v431
        %v488 = vpack.c.b16 %v436, %v432
        %v489 = vpack.c.b16 %v437, %v433
        %v490 = vpack.c.b16 %v442, %v438
        %v491 = vpack.c.b16 %v443, %v439
        %v492 = vpack.c.b16 %v444, %v440
        %v493 = vpack.c.b16 %v445, %v441
        %v494 = vpack.c.b16 %v450, %v446
        %v495 = vpack.c.b16 %v451, %v447
        %v496 = vpack.c.b16 %v452, %v448
        %v497 = vpack.c.b16 %v453, %v449
        %v498 = vpack.c.b16 %v458, %v454
        %v499 = vpack.c.b16 %v459, %v455
        %v500 = vpack.c.b16 %v460, %v456
        %v501 = vpack.c.b16 %v461, %v457
        %v502 = vpack.c.b16 %v466, %v462
        %v503 = vpack.c.b16 %v467, %v463
        %v504 = vpack.c.b16 %v468, %v464
        %v505 = vpack.c.b16 %v469, %v465
        %v506 = vpack.c.b16 %v474, %v470
        %v507 = vpack.c.b16 %v475, %v471
        %v508 = vpack.c.b16 %v476, %v472
        %v509 = vpack.c.b16 %v477, %v473
        %v606 = vunpack.c.l.b16 %v311
        %v607 = vunpack.c.l.b16 %v312
        %v608 = vunpack.c.l.b16 %v313
        %v609 = vunpack.c.l.b16 %v314
        %v610 = vunpack.c.l.b16 %v315
        %v611 = vunpack.c.l.b16 %v316
        %v612 = vunpack.c.l.b16 %v317
        %v613 = vunpack.c.l.b16 %v318
        %v614 = vunpack.c.l.b16 %v319
        %v615 = vunpack.c.l.b16 %v320
        %v616 = vunpack.c.l.b16 %v321
        %v617 = vunpack.c.l.b16 %v322
        %v618 = vunpack.c.l.b16 %v323
        %v619 = vunpack.c.l.b16 %v324
        %v620 = vunpack.c.l.b16 %v325
        %v621 = vunpack.c.l.b16 %v326
        %v622 = vunpack.c.l.b16 %v327
        %v623 = vunpack.c.l.b16 %v328
        %v624 = vunpack.c.l.b16 %v329
        %v625 = vunpack.c.l.b16 %v330
        %v626 = vunpack.c.l.b16 %v331
        %v627 = vunpack.c.l.b16 %v332
        %v628 = vunpack.c.l.b16 %v333
        %v629 = vunpack.c.l.b16 %v334
        %v630 = vunpack.c.l.b16 %v335
        %v631 = vunpack.c.l.b16 %v336
        %v632 = vunpack.c.l.b16 %v337
        %v633 = vunpack.c.l.b16 %v338
        %v634 = vunpack.c.l.b16 %v339
        %v635 = vunpack.c.l.b16 %v340
        %v636 = vunpack.c.l.b16 %v341
        %v637 = vunpack.c.l.b16 %v342
        %v638 = vunpack.c.l.b16 %v343
        %v639 = vunpack.c.l.b16 %v344
        %v640 = vunpack.c.l.b16 %v345
        %v641 = vunpack.c.l.b16 %v346
        %v642 = vunpack.c.l.b16 %v347
        %v643 = vunpack.c.l.b16 %v348
        %v644 = vunpack.c.l.b16 %v349
        %v645 = vunpack.c.l.b16 %v350
        %v646 = vunpack.c.l.b16 %v351
        %v647 = vunpack.c.l.b16 %v352
        %v648 = vunpack.c.l.b16 %v353
        %v649 = vunpack.c.l.b16 %v354
        %v650 = vunpack.c.l.b16 %v355
        %v651 = vunpack.c.l.b16 %v356
        %v652 = vunpack.c.l.b16 %v357
        %v653 = vunpack.c.l.b16 %v358
        %v654 = vunpack.c.l.b16 %v359
        %v655 = vunpack.c.l.b16 %v360
        %v656 = vunpack.c.l.b16 %v361
        %v657 = vunpack.c.l.b16 %v362
        %v658 = vunpack.c.l.b16 %v363
        %v659 = vunpack.c.l.b16 %v364
        %v660 = vunpack.c.l.b16 %v365
        %v661 = vunpack.c.l.b16 %v366
        %v662 = vunpack.c.l.b16 %v367
        %v663 = vunpack.c.l.b16 %v368
        %v664 = vunpack.c.l.b16 %v369
        %v665 = vunpack.c.l.b16 %v370
        %v666 = vunpack.c.l.b16 %v371
        %v667 = vunpack.c.l.b16 %v372
        %v668 = vunpack.c.l.b16 %v373
        %v669 = vunpack.c.l.b16 %v374
        %v670 = vpack.c.b16 %v607, %v606
        %v671 = vpack.c.b16 %v609, %v608
        %v672 = vpack.c.b16 %v611, %v610
        %v673 = vpack.c.b16 %v613, %v612
        %v674 = vpack.c.b16 %v615, %v614
        %v675 = vpack.c.b16 %v617, %v616
        %v676 = vpack.c.b16 %v619, %v618
        %v677 = vpack.c.b16 %v621, %v620
        %v678 = vpack.c.b16 %v623, %v622
        %v679 = vpack.c.b16 %v625, %v624
        %v680 = vpack.c.b16 %v627, %v626
        %v681 = vpack.c.b16 %v629, %v628
        %v682 = vpack.c.b16 %v631, %v630
        %v683 = vpack.c.b16 %v633, %v632
        %v684 = vpack.c.b16 %v635, %v634
        %v685 = vpack.c.b16 %v637, %v636
        %v686 = vpack.c.b16 %v639, %v638
        %v687 = vpack.c.b16 %v641, %v640
        %v688 = vpack.c.b16 %v643, %v642
        %v689 = vpack.c.b16 %v645, %v644
        %v690 = vpack.c.b16 %v647, %v646
        %v691 = vpack.c.b16 %v649, %v648
        %v692 = vpack.c.b16 %v651, %v650
        %v693 = vpack.c.b16 %v653, %v652
        %v694 = vpack.c.b16 %v655, %v654
        %v695 = vpack.c.b16 %v657, %v656
        %v696 = vpack.c.b16 %v659, %v658
        %v697 = vpack.c.b16 %v661, %v660
        %v698 = vpack.c.b16 %v663, %v662
        %v699 = vpack.c.b16 %v665, %v664
        %v700 = vpack.c.b16 %v667, %v666
        %v701 = vpack.c.b16 %v669, %v668
        %734 = vmatprep.subr.bf16.mxu0 0
        %735 = vmatpush1.bf16.msra.mxu0 %v670
        %736 = vmatprep.subr.bf16.mxu0 0
        %737 = vmatpush1.bf16.msra.mxu0 %v671
        %738 = vmatprep.subr.bf16.mxu0 0
        %739 = vmatpush1.bf16.msra.mxu0 %v672
        %740 = vmatprep.subr.bf16.mxu0 0
        %741 = vmatpush1.bf16.msra.mxu0 %v673
        %742 = vmatprep.subr.bf16.mxu0 0
        %743 = vmatpush1.bf16.msra.mxu0 %v674
        %744 = vmatprep.subr.bf16.mxu0 0
        %745 = vmatpush1.bf16.msra.mxu0 %v675
        %746 = vmatprep.subr.bf16.mxu0 0
        %747 = vmatpush1.bf16.msra.mxu0 %v676
        %748 = vmatprep.subr.bf16.mxu0 0
        %749 = vmatpush1.bf16.msra.mxu0 %v677
        %750 = vmatprep.subr.bf16.mxu0 0
        %751 = vmatpush1.bf16.msra.mxu0 %v678
        %752 = vmatprep.subr.bf16.mxu0 0
        %753 = vmatpush1.bf16.msra.mxu0 %v679
        %754 = vmatprep.subr.bf16.mxu0 0
        %755 = vmatpush1.bf16.msra.mxu0 %v680
        %756 = vmatprep.subr.bf16.mxu0 0
        %757 = vmatpush1.bf16.msra.mxu0 %v681
        %758 = vmatprep.subr.bf16.mxu0 0
        %759 = vmatpush1.bf16.msra.mxu0 %v682
        %760 = vmatprep.subr.bf16.mxu0 0
        %761 = vmatpush1.bf16.msra.mxu0 %v683
        %762 = vmatprep.subr.bf16.mxu0 0
        %763 = vmatpush1.bf16.msra.mxu0 %v684
        %764 = vmatprep.subr.bf16.mxu0 0
        %765 = vmatpush1.bf16.msra.mxu0 %v685
        %766 = vmatprep.mubr.bf16.mxu0 %v479
        %767 = vmatmul.mubr.bf16.gmra.mrb[0].mxu0 %v478
        %v768 = vpop.f32.mrb[0].mxu0
        %v769 = vadd.f32 %v380, %v768
        %v770 = vpop.f32.mrb[0].mxu0
        %v771 = vpop.f32.mrb[0].mxu0
        %v772 = vadd.f32 %v380, %v771
        %v773 = vpop.f32.mrb[0].mxu0
        %774 = vmatprep.mubr.bf16.mxu0 %v483
        %775 = vmatmul.mubr.bf16.gmra.mrb[0].mxu0 %v482
        %v776 = vpop.f32.mrb[0].mxu0
        %v777 = vadd.f32 %v380, %v776
        %v778 = vpop.f32.mrb[0].mxu0
        %v779 = vpop.f32.mrb[0].mxu0
        %v780 = vadd.f32 %v380, %v779
        %v781 = vpop.f32.mrb[0].mxu0
        %782 = vmatprep.mubr.bf16.mxu0 %v487
        %783 = vmatmul.mubr.bf16.gmra.mrb[0].mxu0 %v486
        %v784 = vpop.f32.mrb[0].mxu0
        %v785 = vadd.f32 %v380, %v784
        %v786 = vpop.f32.mrb[0].mxu0
        %v787 = vpop.f32.mrb[0].mxu0
        %v788 = vadd.f32 %v380, %v787
        %v789 = vpop.f32.mrb[0].mxu0
        %790 = vmatprep.mubr.bf16.mxu0 %v491
        %791 = vmatmul.mubr.bf16.gmra.mrb[0].mxu0 %v490
        %v792 = vpop.f32.mrb[0].mxu0
        %v793 = vadd.f32 %v380, %v792
        %v794 = vpop.f32.mrb[0].mxu0
        %v795 = vpop.f32.mrb[0].mxu0
        %v796 = vadd.f32 %v380, %v795
        %v797 = vpop.f32.mrb[0].mxu0
        %798 = vmatprep.mubr.bf16.mxu0 %v495
        %799 = vmatmul.mubr.bf16.gmra.mrb[0].mxu0 %v494
        %v800 = vpop.f32.mrb[0].mxu0
        %v801 = vadd.f32 %v380, %v800
        %v802 = vpop.f32.mrb[0].mxu0
        %v803 = vpop.f32.mrb[0].mxu0
        %v804 = vadd.f32 %v380, %v803
        %v805 = vpop.f32.mrb[0].mxu0
        %806 = vmatprep.mubr.bf16.mxu0 %v499
        %807 = vmatmul.mubr.bf16.gmra.mrb[0].mxu0 %v498
        %v808 = vpop.f32.mrb[0].mxu0
        %v809 = vadd.f32 %v380, %v808
        %v810 = vpop.f32.mrb[0].mxu0
        %v811 = vpop.f32.mrb[0].mxu0
        %v812 = vadd.f32 %v380, %v811
        %v813 = vpop.f32.mrb[0].mxu0
        %814 = vmatprep.mubr.bf16.mxu0 %v503
        %815 = vmatmul.mubr.bf16.gmra.mrb[0].mxu0 %v502
        %v816 = vpop.f32.mrb[0].mxu0
        %v817 = vadd.f32 %v380, %v816
        %v818 = vpop.f32.mrb[0].mxu0
        %v819 = vpop.f32.mrb[0].mxu0
        %v820 = vadd.f32 %v380, %v819
        %v821 = vpop.f32.mrb[0].mxu0
        %822 = vmatprep.mubr.bf16.mxu0 %v507
        %823 = vmatmul.mubr.bf16.gmra.mrb[0].mxu0 %v506
        %v824 = vpop.f32.mrb[0].mxu0
        %v825 = vadd.f32 %v380, %v824
        %v826 = vpop.f32.mrb[0].mxu0
        %v827 = vpop.f32.mrb[0].mxu0
        %v828 = vadd.f32 %v380, %v827
        %v829 = vpop.f32.mrb[0].mxu0
        %830 = vdwg.mxu0
        %831 = vmatprep.subr.bf16.mxu0 0
        %832 = vmatpush1.bf16.msra.mxu0 %v686
        %833 = vmatprep.subr.bf16.mxu0 0
        %834 = vmatpush1.bf16.msra.mxu0 %v687
        %835 = vmatprep.subr.bf16.mxu0 0
        %836 = vmatpush1.bf16.msra.mxu0 %v688
        %837 = vmatprep.subr.bf16.mxu0 0
        %838 = vmatpush1.bf16.msra.mxu0 %v689
        %839 = vmatprep.subr.bf16.mxu0 0
        %840 = vmatpush1.bf16.msra.mxu0 %v690
        %841 = vmatprep.subr.bf16.mxu0 0
        %842 = vmatpush1.bf16.msra.mxu0 %v691
        %843 = vmatprep.subr.bf16.mxu0 0
        %844 = vmatpush1.bf16.msra.mxu0 %v692
        %845 = vmatprep.subr.bf16.mxu0 0
        %846 = vmatpush1.bf16.msra.mxu0 %v693
        %847 = vmatprep.subr.bf16.mxu0 0
        %848 = vmatpush1.bf16.msra.mxu0 %v694
        %849 = vmatprep.subr.bf16.mxu0 0
        %850 = vmatpush1.bf16.msra.mxu0 %v695
        %851 = vmatprep.subr.bf16.mxu0 0
        %852 = vmatpush1.bf16.msra.mxu0 %v696
        %853 = vmatprep.subr.bf16.mxu0 0
        %854 = vmatpush1.bf16.msra.mxu0 %v697
        %855 = vmatprep.subr.bf16.mxu0 0
        %856 = vmatpush1.bf16.msra.mxu0 %v698
        %857 = vmatprep.subr.bf16.mxu0 0
        %858 = vmatpush1.bf16.msra.mxu0 %v699
        %859 = vmatprep.subr.bf16.mxu0 0
        %860 = vmatpush1.bf16.msra.mxu0 %v700
        %861 = vmatprep.subr.bf16.mxu0 0
        %862 = vmatpush1.bf16.msra.mxu0 %v701
        %863 = vmatprep.mubr.bf16.mxu0 %v481
        %864 = vmatmul.mubr.bf16.gmra.mrb[0].mxu0 %v480
        %v865 = vpop.f32.mrb[0].mxu0
        %v866 = vadd.f32 %v769, %v865
        %v867 = vpop.f32.mrb[0].mxu0
        %v868 = vpop.f32.mrb[0].mxu0
        %v869 = vadd.f32 %v772, %v868
        %v870 = vpop.f32.mrb[0].mxu0
        %871 = vmatprep.mubr.bf16.mxu0 %v485
        %872 = vmatmul.mubr.bf16.gmra.mrb[0].mxu0 %v484
        %v873 = vpop.f32.mrb[0].mxu0
        %v874 = vadd.f32 %v777, %v873
        %v875 = vpop.f32.mrb[0].mxu0
        %v876 = vpop.f32.mrb[0].mxu0
        %v877 = vadd.f32 %v780, %v876
        %v878 = vpop.f32.mrb[0].mxu0
        %879 = vmatprep.mubr.bf16.mxu0 %v489
        %880 = vmatmul.mubr.bf16.gmra.mrb[0].mxu0 %v488
        %v881 = vpop.f32.mrb[0].mxu0
        %v882 = vadd.f32 %v785, %v881
        %v883 = vpop.f32.mrb[0].mxu0
        %v884 = vpop.f32.mrb[0].mxu0
        %v885 = vadd.f32 %v788, %v884
        %v886 = vpop.f32.mrb[0].mxu0
        %887 = vmatprep.mubr.bf16.mxu0 %v493
        %888 = vmatmul.mubr.bf16.gmra.mrb[0].mxu0 %v492
        %v889 = vpop.f32.mrb[0].mxu0
        %v890 = vadd.f32 %v793, %v889
        %v891 = vpop.f32.mrb[0].mxu0
        %v892 = vpop.f32.mrb[0].mxu0
        %v893 = vadd.f32 %v796, %v892
        %v894 = vpop.f32.mrb[0].mxu0
        %895 = vmatprep.mubr.bf16.mxu0 %v497
        %896 = vmatmul.mubr.bf16.gmra.mrb[0].mxu0 %v496
        %v897 = vpop.f32.mrb[0].mxu0
        %v898 = vadd.f32 %v801, %v897
        %v899 = vpop.f32.mrb[0].mxu0
        %v900 = vpop.f32.mrb[0].mxu0
        %v901 = vadd.f32 %v804, %v900
        %v902 = vpop.f32.mrb[0].mxu0
        %903 = vmatprep.mubr.bf16.mxu0 %v501
        %904 = vmatmul.mubr.bf16.gmra.mrb[0].mxu0 %v500
        %v905 = vpop.f32.mrb[0].mxu0
        %v906 = vadd.f32 %v809, %v905
        %v907 = vpop.f32.mrb[0].mxu0
        %v908 = vpop.f32.mrb[0].mxu0
        %v909 = vadd.f32 %v812, %v908
        %v910 = vpop.f32.mrb[0].mxu0
        %911 = vmatprep.mubr.bf16.mxu0 %v505
        %912 = vmatmul.mubr.bf16.gmra.mrb[0].mxu0 %v504
        %v913 = vpop.f32.mrb[0].mxu0
        %v914 = vadd.f32 %v817, %v913
        %v915 = vpop.f32.mrb[0].mxu0
        %v916 = vpop.f32.mrb[0].mxu0
        %v917 = vadd.f32 %v820, %v916
        %v918 = vpop.f32.mrb[0].mxu0
        %919 = vmatprep.mubr.bf16.mxu0 %v509
        %920 = vmatmul.mubr.bf16.gmra.mrb[0].mxu0 %v508
        %v921 = vpop.f32.mrb[0].mxu0
        %v922 = vadd.f32 %v825, %v921
        %v923 = vpop.f32.mrb[0].mxu0
        %v924 = vpop.f32.mrb[0].mxu0
        %v925 = vadd.f32 %v828, %v924
        %v926 = vpop.f32.mrb[0].mxu0
        %927 = vdwg.mxu0
        %v928 = vld [vmem:[%s275] sm:$0xff]
        %v929 = vld [vmem:[%s275 + $0x8] sm:$0xff]
        %v930 = vld [vmem:[%s275 + $0x10] sm:$0xff]
        %v931 = vld [vmem:[%s275 + $0x18] sm:$0xff]
        %v932 = vld [vmem:[%s275 + $0x20] sm:$0xff]
        %v933 = vld [vmem:[%s275 + $0x28] sm:$0xff]
        %v934 = vld [vmem:[%s275 + $0x30] sm:$0xff]
        %v935 = vld [vmem:[%s275 + $0x38] sm:$0xff]
        %v936 = vld [vmem:[%s275 + $0x40] sm:$0xff]
        %v937 = vld [vmem:[%s275 + $0x48] sm:$0xff]
        %v938 = vld [vmem:[%s275 + $0x50] sm:$0xff]
        %v939 = vld [vmem:[%s275 + $0x58] sm:$0xff]
        %v940 = vld [vmem:[%s275 + $0x60] sm:$0xff]
        %v941 = vld [vmem:[%s275 + $0x68] sm:$0xff]
        %v942 = vld [vmem:[%s275 + $0x70] sm:$0xff]
        %v943 = vld [vmem:[%s275 + $0x78] sm:$0xff]
        %v944 = vadd.f32 %v866, %v928
        %v945 = vadd.f32 %v869, %v929
        %v946 = vadd.f32 %v874, %v930
        %v947 = vadd.f32 %v877, %v931
        %v948 = vadd.f32 %v882, %v932
        %v949 = vadd.f32 %v885, %v933
        %v950 = vadd.f32 %v890, %v934
        %v951 = vadd.f32 %v893, %v935
        %v952 = vadd.f32 %v898, %v936
        %v953 = vadd.f32 %v901, %v937
        %v954 = vadd.f32 %v906, %v938
        %v955 = vadd.f32 %v909, %v939
        %v956 = vadd.f32 %v914, %v940
        %v957 = vadd.f32 %v917, %v941
        %v958 = vadd.f32 %v922, %v942
        %v959 = vadd.f32 %v925, %v943
        %v960 = vld [vmem:[%s4] sm:$0x1]
        %v961 = vld [vmem:[%s5] sm:$0x1]
        %962 = vadd.xlane.f32.xlu0 %v944
        %v963 = vpop.xlane.xlu0 %962
        %964 = vadd.xlane.f32.xlu0 %v945
        %v965 = vpop.xlane.xlu0 %964
        %966 = vadd.xlane.f32.xlu0 %v946
        %v967 = vpop.xlane.xlu0 %966
        %968 = vadd.xlane.f32.xlu0 %v947
        %v969 = vpop.xlane.xlu0 %968
        %970 = vadd.xlane.f32.xlu0 %v948
        %v971 = vpop.xlane.xlu0 %970
        %972 = vadd.xlane.f32.xlu0 %v949
        %v973 = vpop.xlane.xlu0 %972
        %974 = vadd.xlane.f32.xlu0 %v950
        %v975 = vpop.xlane.xlu0 %974
        %976 = vadd.xlane.f32.xlu0 %v951
        %v977 = vpop.xlane.xlu0 %976
        %978 = vadd.xlane.f32.xlu0 %v952
        %v979 = vpop.xlane.xlu0 %978
        %980 = vadd.xlane.f32.xlu0 %v953
        %v981 = vpop.xlane.xlu0 %980
        %982 = vadd.xlane.f32.xlu0 %v954
        %v983 = vpop.xlane.xlu0 %982
        %984 = vadd.xlane.f32.xlu0 %v955
        %v985 = vpop.xlane.xlu0 %984
        %986 = vadd.xlane.f32.xlu0 %v956
        %v987 = vpop.xlane.xlu0 %986
        %988 = vadd.xlane.f32.xlu0 %v957
        %v989 = vpop.xlane.xlu0 %988
        %990 = vadd.xlane.f32.xlu0 %v958
        %v991 = vpop.xlane.xlu0 %990
        %992 = vadd.xlane.f32.xlu0 %v959
        %v993 = vpop.xlane.xlu0 %992
        %v994 = vrcp.pop 128.0
        %v995 = vmul.f32 %v963, %v994
        %v996 = vmul.f32 %v965, %v994
        %v997 = vmul.f32 %v967, %v994
        %v998 = vmul.f32 %v969, %v994
        %v999 = vmul.f32 %v971, %v994
        %v1000 = vmul.f32 %v973, %v994
        %v1001 = vmul.f32 %v975, %v994
        %v1002 = vmul.f32 %v977, %v994
        %v1003 = vmul.f32 %v979, %v994
        %v1004 = vmul.f32 %v981, %v994
        %v1005 = vmul.f32 %v983, %v994
        %v1006 = vmul.f32 %v985, %v994
        %v1007 = vmul.f32 %v987, %v994
        %v1008 = vmul.f32 %v989, %v994
        %v1009 = vmul.f32 %v991, %v994
        %v1010 = vmul.f32 %v993, %v994
        %v1011 = vsub.f32 %v944, %v995
        %v1012 = vsub.f32 %v945, %v996
        %v1013 = vsub.f32 %v946, %v997
        %v1014 = vsub.f32 %v947, %v998
        %v1015 = vsub.f32 %v948, %v999
        %v1016 = vsub.f32 %v949, %v1000
        %v1017 = vsub.f32 %v950, %v1001
        %v1018 = vsub.f32 %v951, %v1002
        %v1019 = vsub.f32 %v952, %v1003
        %v1020 = vsub.f32 %v953, %v1004
        %v1021 = vsub.f32 %v954, %v1005
        %v1022 = vsub.f32 %v955, %v1006
        %v1023 = vsub.f32 %v956, %v1007
        %v1024 = vsub.f32 %v957, %v1008
        %v1025 = vsub.f32 %v958, %v1009
        %v1026 = vsub.f32 %v959, %v1010
        %v1027 = vmul.f32 %v1011, %v1011
        %v1028 = vmul.f32 %v1012, %v1012
        %v1029 = vmul.f32 %v1013, %v1013
        %v1030 = vmul.f32 %v1014, %v1014
        %v1031 = vmul.f32 %v1015, %v1015
        %v1032 = vmul.f32 %v1016, %v1016
        %v1033 = vmul.f32 %v1017, %v1017
        %v1034 = vmul.f32 %v1018, %v1018
        %v1035 = vmul.f32 %v1019, %v1019
        %v1036 = vmul.f32 %v1020, %v1020
        %v1037 = vmul.f32 %v1021, %v1021
        %v1038 = vmul.f32 %v1022, %v1022
        %v1039 = vmul.f32 %v1023, %v1023
        %v1040 = vmul.f32 %v1024, %v1024
        %v1041 = vmul.f32 %v1025, %v1025
        %v1042 = vmul.f32 %v1026, %v1026
        %1043 = vadd.xlane.f32.xlu0 %v1027
        %v1044 = vpop.xlane.xlu0 %1043
        %1045 = vadd.xlane.f32.xlu0 %v1028
        %v1046 = vpop.xlane.xlu0 %1045
        %1047 = vadd.xlane.f32.xlu0 %v1029
        %v1048 = vpop.xlane.xlu0 %1047
        %1049 = vadd.xlane.f32.xlu0 %v1030
        %v1050 = vpop.xlane.xlu0 %1049
        %1051 = vadd.xlane.f32.xlu0 %v1031
        %v1052 = vpop.xlane.xlu0 %1051
        %1053 = vadd.xlane.f32.xlu0 %v1032
        %v1054 = vpop.xlane.xlu0 %1053
        %1055 = vadd.xlane.f32.xlu0 %v1033
        %v1056 = vpop.xlane.xlu0 %1055
        %1057 = vadd.xlane.f32.xlu0 %v1034
        %v1058 = vpop.xlane.xlu0 %1057
        %1059 = vadd.xlane.f32.xlu0 %v1035
        %v1060 = vpop.xlane.xlu0 %1059
        %1061 = vadd.xlane.f32.xlu0 %v1036
        %v1062 = vpop.xlane.xlu0 %1061
        %1063 = vadd.xlane.f32.xlu0 %v1037
        %v1064 = vpop.xlane.xlu0 %1063
        %1065 = vadd.xlane.f32.xlu0 %v1038
        %v1066 = vpop.xlane.xlu0 %1065
        %1067 = vadd.xlane.f32.xlu0 %v1039
        %v1068 = vpop.xlane.xlu0 %1067
        %1069 = vadd.xlane.f32.xlu0 %v1040
        %v1070 = vpop.xlane.xlu0 %1069
        %1071 = vadd.xlane.f32.xlu0 %v1041
        %v1072 = vpop.xlane.xlu0 %1071
        %1073 = vadd.xlane.f32.xlu0 %v1042
        %v1074 = vpop.xlane.xlu0 %1073
        %v1075 = vmul.f32 %v1044, %v994
        %v1076 = vmul.f32 %v1046, %v994
        %v1077 = vmul.f32 %v1048, %v994
        %v1078 = vmul.f32 %v1050, %v994
        %v1079 = vmul.f32 %v1052, %v994
        %v1080 = vmul.f32 %v1054, %v994
        %v1081 = vmul.f32 %v1056, %v994
        %v1082 = vmul.f32 %v1058, %v994
        %v1083 = vmul.f32 %v1060, %v994
        %v1084 = vmul.f32 %v1062, %v994
        %v1085 = vmul.f32 %v1064, %v994
        %v1086 = vmul.f32 %v1066, %v994
        %v1087 = vmul.f32 %v1068, %v994
        %v1088 = vmul.f32 %v1070, %v994
        %v1089 = vmul.f32 %v1072, %v994
        %v1090 = vmul.f32 %v1074, %v994
        %v1091 = vadd.f32 %v1075, 1e-12
        %v1092 = vadd.f32 %v1076, 1e-12
        %v1093 = vadd.f32 %v1077, 1e-12
        %v1094 = vadd.f32 %v1078, 1e-12
        %v1095 = vadd.f32 %v1079, 1e-12
        %v1096 = vadd.f32 %v1080, 1e-12
        %v1097 = vadd.f32 %v1081, 1e-12
        %v1098 = vadd.f32 %v1082, 1e-12
        %v1099 = vadd.f32 %v1083, 1e-12
        %v1100 = vadd.f32 %v1084, 1e-12
        %v1101 = vadd.f32 %v1085, 1e-12
        %v1102 = vadd.f32 %v1086, 1e-12
        %v1103 = vadd.f32 %v1087, 1e-12
        %v1104 = vadd.f32 %v1088, 1e-12
        %v1105 = vadd.f32 %v1089, 1e-12
        %v1106 = vadd.f32 %v1090, 1e-12
        %v1107 = vrsqrt.pop %v1091
        %v1108 = vrsqrt.pop %v1092
        %v1109 = vrsqrt.pop %v1093
        %v1110 = vrsqrt.pop %v1094
        %v1111 = vrsqrt.pop %v1095
        %v1112 = vrsqrt.pop %v1096
        %v1113 = vrsqrt.pop %v1097
        %v1114 = vrsqrt.pop %v1098
        %v1115 = vrsqrt.pop %v1099
        %v1116 = vrsqrt.pop %v1100
        %v1117 = vrsqrt.pop %v1101
        %v1118 = vrsqrt.pop %v1102
        %v1119 = vrsqrt.pop %v1103
        %v1120 = vrsqrt.pop %v1104
        %v1121 = vrsqrt.pop %v1105
        %v1122 = vrsqrt.pop %v1106
        %v1123 = vmul.f32 %v1011, %v1107
        %v1124 = vmul.f32 %v1012, %v1108
        %v1125 = vmul.f32 %v1013, %v1109
        %v1126 = vmul.f32 %v1014, %v1110
        %v1127 = vmul.f32 %v1015, %v1111
        %v1128 = vmul.f32 %v1016, %v1112
        %v1129 = vmul.f32 %v1017, %v1113
        %v1130 = vmul.f32 %v1018, %v1114
        %v1131 = vmul.f32 %v1019, %v1115
        %v1132 = vmul.f32 %v1020, %v1116
        %v1133 = vmul.f32 %v1021, %v1117
        %v1134 = vmul.f32 %v1022, %v1118
        %v1135 = vmul.f32 %v1023, %v1119
        %v1136 = vmul.f32 %v1024, %v1120
        %v1137 = vmul.f32 %v1025, %v1121
        %v1138 = vmul.f32 %v1026, %v1122
        %v1140 = vlaneseq
        %v1141 = vshrl.u32 %v1140, 7
        %v1142 = vsub.s32 0, %v1141
        %v1143 = vrot.slane %v960, %v1142
        %v1145 = vmul.f32 %v1123, %v1143
        %v1146 = vmul.f32 %v1124, %v1143
        %v1147 = vmul.f32 %v1125, %v1143
        %v1148 = vmul.f32 %v1126, %v1143
        %v1149 = vmul.f32 %v1127, %v1143
        %v1150 = vmul.f32 %v1128, %v1143
        %v1151 = vmul.f32 %v1129, %v1143
        %v1152 = vmul.f32 %v1130, %v1143
        %v1153 = vmul.f32 %v1131, %v1143
        %v1154 = vmul.f32 %v1132, %v1143
        %v1155 = vmul.f32 %v1133, %v1143
        %v1156 = vmul.f32 %v1134, %v1143
        %v1157 = vmul.f32 %v1135, %v1143
        %v1158 = vmul.f32 %v1136, %v1143
        %v1159 = vmul.f32 %v1137, %v1143
        %v1160 = vmul.f32 %v1138, %v1143
        %v1162 = vlaneseq
        %v1163 = vshrl.u32 %v1162, 7
        %v1164 = vsub.s32 0, %v1163
        %v1165 = vrot.slane %v961, %v1164
        %v1167 = vadd.f32 %v1145, %v1165
        %v1168 = vadd.f32 %v1146, %v1165
        %v1169 = vadd.f32 %v1147, %v1165
        %v1170 = vadd.f32 %v1148, %v1165
        %v1171 = vadd.f32 %v1149, %v1165
        %v1172 = vadd.f32 %v1150, %v1165
        %v1173 = vadd.f32 %v1151, %v1165
        %v1174 = vadd.f32 %v1152, %v1165
        %v1175 = vadd.f32 %v1153, %v1165
        %v1176 = vadd.f32 %v1154, %v1165
        %v1177 = vadd.f32 %v1155, %v1165
        %v1178 = vadd.f32 %v1156, %v1165
        %v1179 = vadd.f32 %v1157, %v1165
        %v1180 = vadd.f32 %v1158, %v1165
        %v1181 = vadd.f32 %v1159, %v1165
        %v1182 = vadd.f32 %v1160, %v1165
        %1183 = vst [vmem:[%s263] sm:$0xff] %v1167
        %1184 = vst [vmem:[%s263 + $0x8] sm:$0xff] %v1168
        %1185 = vst [vmem:[%s263 + $0x10] sm:$0xff] %v1169
        %1186 = vst [vmem:[%s263 + $0x18] sm:$0xff] %v1170
        %1187 = vst [vmem:[%s263 + $0x20] sm:$0xff] %v1171
        %1188 = vst [vmem:[%s263 + $0x28] sm:$0xff] %v1172
        %1189 = vst [vmem:[%s263 + $0x30] sm:$0xff] %v1173
        %1190 = vst [vmem:[%s263 + $0x38] sm:$0xff] %v1174
        %1191 = vst [vmem:[%s263 + $0x40] sm:$0xff] %v1175
        %1192 = vst [vmem:[%s263 + $0x48] sm:$0xff] %v1176
        %1193 = vst [vmem:[%s263 + $0x50] sm:$0xff] %v1177
        %1194 = vst [vmem:[%s263 + $0x58] sm:$0xff] %v1178
        %1195 = vst [vmem:[%s263 + $0x60] sm:$0xff] %v1179
        %1196 = vst [vmem:[%s263 + $0x68] sm:$0xff] %v1180
        %1197 = vst [vmem:[%s263 + $0x70] sm:$0xff] %v1181
        %1198 = vst [vmem:[%s263 + $0x78] sm:$0xff] %v1182
        %s1199 = sand.u32 %s164, 1
        %s1200 = scalar_lea.sflag [#allocation3], %s1199
        %s1201 = sand.u32 %s164, 1
        %s1202 = smul.addr %s1201, 128
        %s1203 = scalar_lea.vmem [#allocation2], %s1202
        // Predicated region
        $region45: #{encoder_forward.21} parent=43 // pred_check
          %p1204 = pneg %p174
        $region46: #{encoder_forward.21} parent=43 // pred_check_branch
          %1206 = sbr.rel (%p1204) target = $region48
        $region47: #{encoder_forward.21} parent=43 // pred_region
          %s1207 = smul.u32 16, %s20
          %s1209 = ssub.s32 2048, 2048
          %1210 = vsyncadd %s1200, %s1209
          %s1211 = smul.addr %s1207, 128
          %s1212 = scalar_lea.hbm %s6, %s1211
          %s1213 = sshll.u32 %s1203, 4
          %s1214 = int_to_ptr.vmem [resolvable:$true] %s1213
          %1219 = dma.vmem_to_hbm [thread:$0]  %s1214, 2048, %s1212, %s1200, 128, 128, 8
        $region48: #{encoder_forward.21} parent=43 // pred_fallthru
          _
      $region44: #{encoder_forward.21} parent=5 // pred_fallthru
        _
      %p1220 = scmp.le.s32.totalorder 2, %s15
      // Predicated region
      $region49: #{encoder_forward.21} parent=5 // pred_check
        %p1221 = pneg %p1220
      $region50: #{encoder_forward.21} parent=5 // pred_check_branch
        %1223 = sbr.rel (%p1221) target = $region52
      $region51: #{encoder_forward.21} parent=5 // pred_region
        %s1224 = ssub.s32 %s15, 2
        // Predicated region
        $region53: #{encoder_forward.21} parent=51 // pred_check
          %p1225 = pneg %p180
        $region54: #{encoder_forward.21} parent=51 // pred_check_branch
          %1227 = sbr.rel (%p1225) target = $region56
        $region55: #{encoder_forward.21} parent=51 // pred_region
          %s1228 = sand.u32 %s165, 1
          %s1229 = scalar_lea.sflag [#allocation3], %s1228
          %s1230 = sand.u32 %s165, 1
          %s1231 = smul.addr %s1230, 128
          %s1232 = scalar_lea.vmem [#allocation2], %s1231
          %1233 = dma.done %s1229, 2048
        $region56: #{encoder_forward.21} parent=51 // pred_fallthru
          _
      $region52: #{encoder_forward.21} parent=5 // pred_fallthru
        _
    $region6: #{encoder_forward.21} parent=1 // loop_footer
      %s19 = sadd.s32 1, %s15
    $region7: #{encoder_forward.21} parent=1 // loop_footer_branch
      %14 = sbr.rel target = $region3
    $region8: #{encoder_forward.21} parent=1 // loop_exit
      _
    %1234 = vsyncpa [#allocation3], 1
    %s1235 = scalar_lea.sflag [#allocation3], 1
    %1236 = vsyncpa %s1235, 1

</llo_original>
